<compile_context>
chip_gen: v7x
topology: tpu7x:2x2x1
jax: 0.10.0
libtpu: 0.0.40
codegen_flags: <defaults>
</compile_context>

<pallas_src>
import math
from functools import partial

import jax
import jax.numpy as jnp
from jax.experimental import pallas as pl
from jax.experimental.pallas import tpu as pltpu

# ------------------------- model hyper-parameters ---------------------------
VOCAB = 128
D_MODEL = 32
D_FF = 64
N_HEADS = 4
D_HEAD = D_MODEL // N_HEADS
NUM_BUCKETS = 32
MAX_DISTANCE = 128
EPS = 1e-6

# rows inside the packed (8, D_MODEL) RMSNorm array
_E_LN1, _E_LN2, _E_FLN, _D_LN1, _D_LN2, _D_LN3, _D_FLN = range(7)
# base slots inside the packed (12, H, D, D_HEAD) attention-weight array
_ENC_ATT, _DEC_ATT, _CROSS_ATT = 0, 4, 8


# --------------------------- fused Pallas kernel -----------------------------
def _t5_fused_kernel(ids_ref, embed_ref, norms_ref, attn_w_ref,
                     ffn_wi_ref, ffn_wf_ref, bias_enc_ref, bias_dec_ref,
                     logits_ref, loss_ref, *, B, S_enc, S_dec):
    f32 = jnp.float32
    N_enc, N_dec = B * S_enc, B * S_dec
    E = embed_ref[...]                                      # (VOCAB, D) tied

    def rms(x, row):
        # T5 LayerNorm: no mean subtraction, no bias.
        var = jnp.mean(x * x, axis=-1, keepdims=True)
        return x * jax.lax.rsqrt(var + EPS) * norms_ref[row:row + 1, :]

    def attn_block(x_q, x_kv, w_slot, bias, Sq, Sk):
        # Heads on a leading batch axis: all matmuls are batched einsums with
        # batch dim 0 and last/middle-dim contractions (known-good patterns);
        # no lane-offset slices, no lane concats.
        wq = attn_w_ref[w_slot + 0]                          # (H, D, Dh)
        wk = attn_w_ref[w_slot + 1]
        wv = attn_w_ref[w_slot + 2]
        woT = attn_w_ref[w_slot + 3]                         # (H, D, Dh)=Wo_h^T
        out_rows = []
        for b in range(B):                                   # B == 2 unroll
            xq = x_q[b * Sq:(b + 1) * Sq, :]                 # sublane slice
            xkv = x_kv[b * Sk:(b + 1) * Sk, :]
            xq_h = jnp.broadcast_to(xq[None], (N_HEADS, Sq, D_MODEL))
            xkv_h = jnp.broadcast_to(xkv[None], (N_HEADS, Sk, D_MODEL))
            q = jnp.einsum('hsd,hde->hse', xq_h, wq,
                           preferred_element_type=f32)       # (H, Sq, Dh)
            k = jnp.einsum('hsd,hde->hse', xkv_h, wk,
                           preferred_element_type=f32)       # (H, Sk, Dh)
            v = jnp.einsum('hsd,hde->hse', xkv_h, wv,
                           preferred_element_type=f32)       # (H, Sk, Dh)
            # T5 attention has no 1/sqrt(d) scaling (absorbed in the weights).
            s = jnp.einsum('hqd,hkd->hqk', q, k,
                           preferred_element_type=f32)       # (H, Sq, Sk)
            if bias is not None:
                s = s + bias
            m = jnp.max(s, axis=-1, keepdims=True)
            p = jnp.exp(s - m)
            p = p * pl.reciprocal(jnp.sum(p, axis=-1, keepdims=True),
                                  approx=True)
            o = jnp.einsum('hqk,hkd->hqd', p, v,
                           preferred_element_type=f32)       # (H, Sq, Dh)
            # head merge folded into the output projection: sum_h o_h @ Wo_h
            y = jnp.einsum('hqd,hed->hqe', o, woT,
                           preferred_element_type=f32)       # (H, Sq, D)
            out_rows.append(jnp.sum(y, axis=0))              # (Sq, D)
        return jnp.concatenate(out_rows, axis=0)             # sublane concat

    def ffn(x, idx):
        h = jnp.maximum(
            jnp.dot(x, ffn_wi_ref[idx], preferred_element_type=f32), 0.0)
        return jnp.dot(h, ffn_wf_ref[idx], preferred_element_type=f32)

    # ---- merged encoder + decoder embedding lookup (one one-hot matmul) ----
    ids_emb = ids_ref[0:N_enc + N_dec, :]                    # (Ne+Nd, 1) i32
    iota = jax.lax.broadcasted_iota(jnp.int32, (N_enc + N_dec, VOCAB), 1)
    emb = jnp.dot((iota == ids_emb).astype(f32), E,
                  preferred_element_type=f32)                # (Ne+Nd, D)
    x = emb[0:N_enc, :]                                      # encoder stream
    y = emb[N_enc:N_enc + N_dec, :]                          # decoder stream

    # ------------------------------ encoder ---------------------------------
    h = rms(x, _E_LN1)
    x = x + attn_block(h, h, _ENC_ATT, bias_enc_ref[...], S_enc, S_enc)
    x = x + ffn(rms(x, _E_LN2), 0)
    enc_out = rms(x, _E_FLN)

    # ------------------------------ decoder ---------------------------------
    h = rms(y, _D_LN1)
    y = y + attn_block(h, h, _DEC_ATT, bias_dec_ref[...], S_dec, S_dec)
    y = y + attn_block(rms(y, _D_LN2), enc_out, _CROSS_ATT, None,
                       S_dec, S_enc)
    y = y + ffn(rms(y, _D_LN3), 1)
    y = rms(y, _D_FLN)

    # tied LM head: d_model**-0.5 rescale folded onto y, E.T folded into dot.
    logits = jax.lax.dot_general(y * (D_MODEL ** -0.5), E,
                                 (((1,), (1,)), ((), ())),
                                 preferred_element_type=f32)  # (Nd, VOCAB)
    logits_ref[...] = logits                                  # lane-dense

    # cross-entropy with HF ignore_index=-100 semantics (target picked via
    # iota==label; no HBM one-hot).
    labels = ids_ref[N_enc + N_dec:N_enc + 2 * N_dec, :]      # (Nd, 1)
    m = jnp.max(logits, axis=-1, keepdims=True)
    lse = jnp.log(jnp.sum(jnp.exp(logits - m), axis=-1, keepdims=True)) + m
    tgt_iota = jax.lax.broadcasted_iota(jnp.int32, logits.shape, 1)
    tgt = jnp.sum(jnp.where(tgt_iota == labels, logits, 0.0),
                  axis=-1, keepdims=True)
    valid = (labels != -100).astype(f32)
    nll_sum = jnp.sum((lse - tgt) * valid, axis=0, keepdims=True)   # (1, 1)
    cnt = jnp.sum(valid, axis=0, keepdims=True)
    loss_ref[...] = nll_sum / jnp.maximum(cnt, 1.0)


# -------------------------------- JAX glue -----------------------------------
def _relative_position_bucket(rel, bidirectional):
    num_buckets = NUM_BUCKETS
    ret = jnp.zeros_like(rel)
    if bidirectional:
        num_buckets //= 2
        ret = ret + (rel > 0).astype(jnp.int32) * num_buckets
        n = jnp.abs(rel)
    else:
        n = -jnp.minimum(rel, 0)
    max_exact = num_buckets // 2
    is_small = n < max_exact
    val_if_large = max_exact + (
        jnp.log(jnp.maximum(n, 1).astype(jnp.float32) / max_exact)
        / math.log(MAX_DISTANCE / max_exact)
        * (num_buckets - max_exact)).astype(jnp.int32)
    val_if_large = jnp.minimum(val_if_large, num_buckets - 1)
    return ret + jnp.where(is_small, n, val_if_large)


def _rel_bias(rel_emb, Sq, Sk, bidirectional):
    # tiny shape-dependent int bucket math + 32-entry gather; stays in XLA.
    qpos = jnp.arange(Sq)[:, None]
    kpos = jnp.arange(Sk)[None, :]
    buckets = _relative_position_bucket(kpos - qpos, bidirectional)
    bias = rel_emb[buckets]                                   # (Sq, Sk, H)
    return jnp.transpose(bias, (2, 0, 1))                     # (H, Sq, Sk)


def init_params(key):
    def dense(k, shape, scale=0.05):
        return jax.random.normal(k, shape, jnp.float32) * scale

    ks = iter(jax.random.split(key, 24))
    ones = jnp.ones((1, D_MODEL), jnp.float32)
    return {
        "embed": dense(next(ks), (VOCAB, D_MODEL)),
        "enc": {
            "ln1": ones, "ln2": ones,
            "wq": dense(next(ks), (D_MODEL, D_MODEL)),
            "wk": dense(next(ks), (D_MODEL, D_MODEL)),
            "wv": dense(next(ks), (D_MODEL, D_MODEL)),
            "wo": dense(next(ks), (D_MODEL, D_MODEL)),
            "rel": dense(next(ks), (NUM_BUCKETS, N_HEADS)),
            "wi": dense(next(ks), (D_MODEL, D_FF)),
            "wf": dense(next(ks), (D_FF, D_MODEL)),
        },
        "enc_final_ln": ones,
        "dec": {
            "ln1": ones, "ln2": ones, "ln3": ones,
            "wq": dense(next(ks), (D_MODEL, D_MODEL)),
            "wk": dense(next(ks), (D_MODEL, D_MODEL)),
            "wv": dense(next(ks), (D_MODEL, D_MODEL)),
            "wo": dense(next(ks), (D_MODEL, D_MODEL)),
            "rel": dense(next(ks), (NUM_BUCKETS, N_HEADS)),
            "cq": dense(next(ks), (D_MODEL, D_MODEL)),
            "ck": dense(next(ks), (D_MODEL, D_MODEL)),
            "cv": dense(next(ks), (D_MODEL, D_MODEL)),
            "co": dense(next(ks), (D_MODEL, D_MODEL)),
            "wi": dense(next(ks), (D_MODEL, D_FF)),
            "wf": dense(next(ks), (D_FF, D_MODEL)),
        },
        "dec_final_ln": ones,
    }


def t5_forward(params, input_ids, labels):
    """Mirrors T5ForConditionalGeneration(input_ids=..., labels=...):
    returns (loss, logits)."""
    B, S_enc = input_ids.shape
    _, S_dec = labels.shape
    enc, dec = params["enc"], params["dec"]

    # T5 shifts labels right, inserting decoder_start_token_id (= pad = 0).
    dec_ids = jnp.concatenate(
        [jnp.zeros((B, 1), jnp.int32), labels[:, :-1].astype(jnp.int32)],
        axis=1)

    # one packed int32 input: [enc ids | shifted dec ids | labels]
    ids_all = jnp.concatenate(
        [input_ids.reshape(-1).astype(jnp.int32),
         dec_ids.reshape(-1),
         labels.reshape(-1).astype(jnp.int32)]).reshape(-1, 1)

    # relative-position biases (+ causal mask for decoder self-attention).
    # NOTE: forward() passes no attention_mask, so HF defaults it to all-ones
    # (no padding mask); we match that exactly.
    bias_enc = _rel_bias(enc["rel"], S_enc, S_enc, bidirectional=True)
    causal = jnp.where(
        jnp.arange(S_dec)[None, :] > jnp.arange(S_dec)[:, None], -1e9, 0.0)
    bias_dec = (_rel_bias(dec["rel"], S_dec, S_dec, bidirectional=False)
                + causal[None].astype(jnp.float32))

    # ---- pack weights so the kernel sees 8 inputs instead of 25 ------------
    def heads_in(w):          # (D, D) -> (H, D, Dh)
        return w.reshape(D_MODEL, N_HEADS, D_HEAD).transpose(1, 0, 2)

    def heads_outT(w):        # (D, D) -> (H, D, Dh) : per-head transposed Wo
        return w.reshape(N_HEADS, D_HEAD, D_MODEL).transpose(0, 2, 1)

    attn_w = jnp.stack([
        heads_in(enc["wq"]), heads_in(enc["wk"]), heads_in(enc["wv"]),
        heads_outT(enc["wo"]),
        heads_in(dec["wq"]), heads_in(dec["wk"]), heads_in(dec["wv"]),
        heads_outT(dec["wo"]),
        heads_in(dec["cq"]), heads_in(dec["ck"]), heads_in(dec["cv"]),
        heads_outT(dec["co"]),
    ])                                                     # (12, H, D, Dh)
    norms = jnp.concatenate([
        enc["ln1"], enc["ln2"], params["enc_final_ln"],
        dec["ln1"], dec["ln2"], dec["ln3"], params["dec_final_ln"],
        jnp.ones((1, D_MODEL), jnp.float32),               # pad to 8 rows
    ], axis=0)
    ffn_wi = jnp.stack([enc["wi"], dec["wi"]])             # (2, D, D_FF)
    ffn_wf = jnp.stack([enc["wf"], dec["wf"]])             # (2, D_FF, D)

    args = (ids_all, params["embed"], norms, attn_w, ffn_wi, ffn_wf,
            bias_enc, bias_dec)

    # advisory cost estimate for the XLA scheduler
    def attn_flops(sq, sk):
        proj = 2 * (sq + 2 * sk) * D_MODEL * D_MODEL
        mix = 4 * sq * sk * D_MODEL
        out = 2 * sq * D_MODEL * D_MODEL
        return B * (proj + mix + out)

    flops = int(2 * B * (S_enc + S_dec) * VOCAB * D_MODEL
                + attn_flops(S_enc, S_enc) + attn_flops(S_dec, S_dec)
                + attn_flops(S_dec, S_enc)
                + 4 * B * (S_enc + S_dec) * D_MODEL * D_FF
                + 2 * B * S_dec * D_MODEL * VOCAB)
    transcendentals = int(B * N_HEADS * (S_enc * S_enc + S_dec * S_dec
                                         + S_dec * S_enc)
                          + B * S_dec * VOCAB)
    bytes_accessed = int(sum(a.size * a.dtype.itemsize for a in args)
                         + B * S_dec * VOCAB * 4 + 4)

    vmem = pl.BlockSpec(memory_space=pltpu.MemorySpace.VMEM)
    logits, loss = pl.pallas_call(
        partial(_t5_fused_kernel, B=B, S_enc=S_enc, S_dec=S_dec),
        out_shape=(jax.ShapeDtypeStruct((B * S_dec, VOCAB), jnp.float32),
                   jax.ShapeDtypeStruct((1, 1), jnp.float32)),
        in_specs=[vmem] * len(args),
        out_specs=(vmem, vmem),
        cost_estimate=pl.CostEstimate(flops=flops,
                                      transcendentals=transcendentals,
                                      bytes_accessed=bytes_accessed),
    )(*args)
    return loss[0, 0], logits.reshape(B, S_dec, VOCAB)


# --------------------------------- driver ------------------------------------
if __name__ == "__main__":
    # TODO(synk): the HF T5Tokenizer string formatting ("answer: ... context:
    # ... question:<pad>") has no tensor/Pallas equivalent; we start from the
    # token ids it would produce.
    key = jax.random.PRNGKey(0)
    k_par, k_ids, k_lab = jax.random.split(key, 3)

    B, S_ENC, S_DEC = 2, 8, 8
    params = init_params(k_par)
    input_ids = jax.random.randint(k_ids, (B, S_ENC), 1, VOCAB, dtype=jnp.int32)
    labels = jax.random.randint(k_lab, (B, S_DEC), 1, VOCAB, dtype=jnp.int32)

    loss, logits = jax.jit(t5_forward)(params, input_ids, labels)
    jax.block_until_ready((loss, logits))

    assert logits.shape == (B, S_DEC, VOCAB)
    assert jnp.isfinite(loss)
    print("KERNEL_OK")
</pallas_src>

<mosaic_0001>
module attributes {stable_mosaic.version = 11 : i64} {
  func.func @_t5_fused_kernel(%arg0: memref<48x1xi32, #tpu.memory_space<vmem>>, %arg1: memref<128x32xf32, #tpu.memory_space<vmem>>, %arg2: memref<8x32xf32, #tpu.memory_space<vmem>>, %arg3: memref<12x4x32x8xf32, #tpu.memory_space<vmem>>, %arg4: memref<2x32x64xf32, #tpu.memory_space<vmem>>, %arg5: memref<2x64x32xf32, #tpu.memory_space<vmem>>, %arg6: memref<4x8x8xf32, #tpu.memory_space<vmem>>, %arg7: memref<4x8x8xf32, #tpu.memory_space<vmem>>, %arg8: memref<16x128xf32, #tpu.memory_space<vmem>>, %arg9: memref<1x1xf32, #tpu.memory_space<vmem>>) attributes {dimension_semantics = [], scalar_prefetch = 0 : i64, scratch_operands = 0 : i64, tpu.core_type = #tpu.core_type<tc>} {
    %c0 = arith.constant 0 : index
    %c0_0 = arith.constant 0 : index
    %0 = vector.load %arg1[%c0, %c0_0] : memref<128x32xf32, #tpu.memory_space<vmem>>, vector<128x32xf32>
    %c0_1 = arith.constant 0 : index
    %c0_2 = arith.constant 0 : index
    %1 = vector.load %arg0[%c0_1, %c0_2] : memref<48x1xi32, #tpu.memory_space<vmem>>, vector<32x1xi32>
    %2 = tpu.iota {dimensions = array<i32: 1>} : vector<32x128xi32>
    %3 = vector.broadcast %1 : vector<32x1xi32> to vector<32x128xi32>
    %4 = arith.cmpi eq, %2, %3 : vector<32x128xi32>
    %5 = arith.extui %4 : vector<32x128xi1> to vector<32x128xi32>
    %6 = arith.sitofp %5 : vector<32x128xi32> to vector<32x128xf32>
    %cst = arith.constant dense<0.000000e+00> : vector<32x32xf32>
    %7 = tpu.matmul %6, %0, %cst {dimension_numbers = #tpu.dot_dimension_numbers<[1], [0], [0], [1], [0, 0, 1, 1], [], []>} : vector<32x128xf32>, vector<128x32xf32>, vector<32x32xf32> -> vector<32x32xf32>
    %8 = vector.extract_strided_slice %7 {offsets = [0, 0], sizes = [16, 32], strides = [1, 1]} : vector<32x32xf32> to vector<16x32xf32>
    %9 = vector.extract_strided_slice %7 {offsets = [16, 0], sizes = [16, 32], strides = [1, 1]} : vector<32x32xf32> to vector<16x32xf32>
    %10 = arith.mulf %8, %8 : vector<16x32xf32>
    %cst_3 = arith.constant dense<0.000000e+00> : vector<16xf32>
    %11 = vector.multi_reduction <add>, %10, %cst_3 [1] : vector<16x32xf32> to vector<16xf32>
    %12 = vector.shape_cast %11 : vector<16xf32> to vector<16x1xf32>
    %cst_4 = arith.constant 3.200000e+01 : f32
    %13 = vector.broadcast %cst_4 : f32 to vector<16x1xf32>
    %14 = arith.divf %12, %13 : vector<16x1xf32>
    %cst_5 = arith.constant 9.99999997E-7 : f32
    %15 = vector.broadcast %cst_5 : f32 to vector<16x1xf32>
    %16 = arith.addf %14, %15 : vector<16x1xf32>
    %17 = math.rsqrt %16 : vector<16x1xf32>
    %18 = vector.broadcast %17 : vector<16x1xf32> to vector<16x32xf32>
    %19 = arith.mulf %8, %18 : vector<16x32xf32>
    %c0_6 = arith.constant 0 : index
    %c0_7 = arith.constant 0 : index
    %20 = vector.load %arg2[%c0_6, %c0_7] : memref<8x32xf32, #tpu.memory_space<vmem>>, vector<1x32xf32>
    %21 = vector.broadcast %20 : vector<1x32xf32> to vector<16x32xf32>
    %22 = arith.mulf %19, %21 : vector<16x32xf32>
    %c0_8 = arith.constant 0 : index
    %c0_9 = arith.constant 0 : index
    %c0_10 = arith.constant 0 : index
    %23 = vector.load %arg6[%c0_8, %c0_9, %c0_10] : memref<4x8x8xf32, #tpu.memory_space<vmem>>, vector<4x8x8xf32>
    %c0_11 = arith.constant 0 : index
    %c0_12 = arith.constant 0 : index
    %c0_13 = arith.constant 0 : index
    %c0_14 = arith.constant 0 : index
    %24 = vector.load %arg3[%c0_11, %c0_12, %c0_13, %c0_14] : memref<12x4x32x8xf32, #tpu.memory_space<vmem>>, vector<1x4x32x8xf32>
    %25 = vector.shape_cast %24 : vector<1x4x32x8xf32> to vector<4x32x8xf32>
    %c1 = arith.constant 1 : index
    %c0_15 = arith.constant 0 : index
    %c0_16 = arith.constant 0 : index
    %c0_17 = arith.constant 0 : index
    %26 = vector.load %arg3[%c1, %c0_15, %c0_16, %c0_17] : memref<12x4x32x8xf32, #tpu.memory_space<vmem>>, vector<1x4x32x8xf32>
    %27 = vector.shape_cast %26 : vector<1x4x32x8xf32> to vector<4x32x8xf32>
    %c2 = arith.constant 2 : index
    %c0_18 = arith.constant 0 : index
    %c0_19 = arith.constant 0 : index
    %c0_20 = arith.constant 0 : index
    %28 = vector.load %arg3[%c2, %c0_18, %c0_19, %c0_20] : memref<12x4x32x8xf32, #tpu.memory_space<vmem>>, vector<1x4x32x8xf32>
    %29 = vector.shape_cast %28 : vector<1x4x32x8xf32> to vector<4x32x8xf32>
    %c3 = arith.constant 3 : index
    %c0_21 = arith.constant 0 : index
    %c0_22 = arith.constant 0 : index
    %c0_23 = arith.constant 0 : index
    %30 = vector.load %arg3[%c3, %c0_21, %c0_22, %c0_23] : memref<12x4x32x8xf32, #tpu.memory_space<vmem>>, vector<1x4x32x8xf32>
    %31 = vector.shape_cast %30 : vector<1x4x32x8xf32> to vector<4x32x8xf32>
    %32 = vector.extract_strided_slice %22 {offsets = [0, 0], sizes = [8, 32], strides = [1, 1]} : vector<16x32xf32> to vector<8x32xf32>
    %33 = vector.extract_strided_slice %22 {offsets = [0, 0], sizes = [8, 32], strides = [1, 1]} : vector<16x32xf32> to vector<8x32xf32>
    %34 = vector.shape_cast %32 : vector<8x32xf32> to vector<1x8x32xf32>
    %35 = vector.shape_cast %34 : vector<1x8x32xf32> to vector<1x8x32xf32>
    %36 = vector.broadcast %35 : vector<1x8x32xf32> to vector<4x8x32xf32>
    %37 = vector.shape_cast %33 : vector<8x32xf32> to vector<1x8x32xf32>
    %38 = vector.shape_cast %37 : vector<1x8x32xf32> to vector<1x8x32xf32>
    %39 = vector.broadcast %38 : vector<1x8x32xf32> to vector<4x8x32xf32>
    "tpu.trace_start"() <{level = 10 : i32, message = "hsd,hde->hse"}> : () -> ()
    %cst_24 = arith.constant dense<0.000000e+00> : vector<4x8x8xf32>
    %40 = tpu.matmul %36, %25, %cst_24 {dimension_numbers = #tpu.dot_dimension_numbers<[2], [1], [1], [2], [0, 0, 0, 1, 1, 2], [0], [0]>} : vector<4x8x32xf32>, vector<4x32x8xf32>, vector<4x8x8xf32> -> vector<4x8x8xf32>
    %cst_25 = arith.constant dense<0.000000e+00> : vector<4x8x8xf32>
    %41 = tpu.matmul %39, %27, %cst_25 {dimension_numbers = #tpu.dot_dimension_numbers<[2], [1], [1], [2], [0, 0, 0, 1, 1, 2], [0], [0]>} : vector<4x8x32xf32>, vector<4x32x8xf32>, vector<4x8x8xf32> -> vector<4x8x8xf32>
    %cst_26 = arith.constant dense<0.000000e+00> : vector<4x8x8xf32>
    %42 = tpu.matmul %39, %29, %cst_26 {dimension_numbers = #tpu.dot_dimension_numbers<[2], [1], [1], [2], [0, 0, 0, 1, 1, 2], [0], [0]>} : vector<4x8x32xf32>, vector<4x32x8xf32>, vector<4x8x8xf32> -> vector<4x8x8xf32>
    "tpu.trace_stop"() : () -> ()
    "tpu.trace_start"() <{level = 10 : i32, message = "hqd,hkd->hqk"}> : () -> ()
    %cst_27 = arith.constant dense<0.000000e+00> : vector<4x8x8xf32>
    %43 = tpu.matmul %40, %41, %cst_27 {dimension_numbers = #tpu.dot_dimension_numbers<[2], [2], [1], [1], [0, 0, 0, 1, 1, 1], [0], [0]>} : vector<4x8x8xf32>, vector<4x8x8xf32>, vector<4x8x8xf32> -> vector<4x8x8xf32>
    "tpu.trace_stop"() : () -> ()
    %44 = arith.addf %43, %23 : vector<4x8x8xf32>
    %cst_28 = arith.constant dense<0xFF800000> : vector<4x8xf32>
    %45 = vector.multi_reduction <maximumf>, %44, %cst_28 [2] : vector<4x8x8xf32> to vector<4x8xf32>
    %46 = vector.shape_cast %45 : vector<4x8xf32> to vector<4x8x1xf32>
    %47 = vector.broadcast %46 : vector<4x8x1xf32> to vector<4x8x8xf32>
    %48 = arith.subf %44, %47 : vector<4x8x8xf32>
    %49 = math.exp %48 : vector<4x8x8xf32>
    %cst_29 = arith.constant dense<0.000000e+00> : vector<4x8xf32>
    %50 = vector.multi_reduction <add>, %49, %cst_29 [2] : vector<4x8x8xf32> to vector<4x8xf32>
    %51 = vector.shape_cast %50 : vector<4x8xf32> to vector<4x8x1xf32>
    %52 = tpu.reciprocal %51 {approx = true} : vector<4x8x1xf32> -> vector<4x8x1xf32>
    %53 = vector.broadcast %52 : vector<4x8x1xf32> to vector<4x8x8xf32>
    %54 = arith.mulf %49, %53 : vector<4x8x8xf32>
    "tpu.trace_start"() <{level = 10 : i32, message = "hqk,hkd->hqd"}> : () -> ()
    %cst_30 = arith.constant dense<0.000000e+00> : vector<4x8x8xf32>
    %55 = tpu.matmul %54, %42, %cst_30 {dimension_numbers = #tpu.dot_dimension_numbers<[2], [1], [1], [2], [0, 0, 0, 1, 1, 2], [0], [0]>} : vector<4x8x8xf32>, vector<4x8x8xf32>, vector<4x8x8xf32> -> vector<4x8x8xf32>
    "tpu.trace_stop"() : () -> ()
    "tpu.trace_start"() <{level = 10 : i32, message = "hqd,hed->hqe"}> : () -> ()
    %cst_31 = arith.constant dense<0.000000e+00> : vector<4x8x32xf32>
    %56 = tpu.matmul %55, %31, %cst_31 {dimension_numbers = #tpu.dot_dimension_numbers<[2], [2], [1], [1], [0, 0, 0, 1, 1, 1], [0], [0]>} : vector<4x8x8xf32>, vector<4x32x8xf32>, vector<4x8x32xf32> -> vector<4x8x32xf32>
    "tpu.trace_stop"() : () -> ()
    %cst_32 = arith.constant dense<0.000000e+00> : vector<8x32xf32>
    %57 = vector.multi_reduction <add>, %56, %cst_32 [0] : vector<4x8x32xf32> to vector<8x32xf32>
    %58 = vector.extract_strided_slice %22 {offsets = [8, 0], sizes = [8, 32], strides = [1, 1]} : vector<16x32xf32> to vector<8x32xf32>
    %59 = vector.extract_strided_slice %22 {offsets = [8, 0], sizes = [8, 32], strides = [1, 1]} : vector<16x32xf32> to vector<8x32xf32>
    %60 = vector.shape_cast %58 : vector<8x32xf32> to vector<1x8x32xf32>
    %61 = vector.shape_cast %60 : vector<1x8x32xf32> to vector<1x8x32xf32>
    %62 = vector.broadcast %61 : vector<1x8x32xf32> to vector<4x8x32xf32>
    %63 = vector.shape_cast %59 : vector<8x32xf32> to vector<1x8x32xf32>
    %64 = vector.shape_cast %63 : vector<1x8x32xf32> to vector<1x8x32xf32>
    %65 = vector.broadcast %64 : vector<1x8x32xf32> to vector<4x8x32xf32>
    "tpu.trace_start"() <{level = 10 : i32, message = "hsd,hde->hse"}> : () -> ()
    %cst_33 = arith.constant dense<0.000000e+00> : vector<4x8x8xf32>
    %66 = tpu.matmul %62, %25, %cst_33 {dimension_numbers = #tpu.dot_dimension_numbers<[2], [1], [1], [2], [0, 0, 0, 1, 1, 2], [0], [0]>} : vector<4x8x32xf32>, vector<4x32x8xf32>, vector<4x8x8xf32> -> vector<4x8x8xf32>
    %cst_34 = arith.constant dense<0.000000e+00> : vector<4x8x8xf32>
    %67 = tpu.matmul %65, %27, %cst_34 {dimension_numbers = #tpu.dot_dimension_numbers<[2], [1], [1], [2], [0, 0, 0, 1, 1, 2], [0], [0]>} : vector<4x8x32xf32>, vector<4x32x8xf32>, vector<4x8x8xf32> -> vector<4x8x8xf32>
    %cst_35 = arith.constant dense<0.000000e+00> : vector<4x8x8xf32>
    %68 = tpu.matmul %65, %29, %cst_35 {dimension_numbers = #tpu.dot_dimension_numbers<[2], [1], [1], [2], [0, 0, 0, 1, 1, 2], [0], [0]>} : vector<4x8x32xf32>, vector<4x32x8xf32>, vector<4x8x8xf32> -> vector<4x8x8xf32>
    "tpu.trace_stop"() : () -> ()
    "tpu.trace_start"() <{level = 10 : i32, message = "hqd,hkd->hqk"}> : () -> ()
    %cst_36 = arith.constant dense<0.000000e+00> : vector<4x8x8xf32>
    %69 = tpu.matmul %66, %67, %cst_36 {dimension_numbers = #tpu.dot_dimension_numbers<[2], [2], [1], [1], [0, 0, 0, 1, 1, 1], [0], [0]>} : vector<4x8x8xf32>, vector<4x8x8xf32>, vector<4x8x8xf32> -> vector<4x8x8xf32>
    "tpu.trace_stop"() : () -> ()
    %70 = arith.addf %69, %23 : vector<4x8x8xf32>
    %cst_37 = arith.constant dense<0xFF800000> : vector<4x8xf32>
    %71 = vector.multi_reduction <maximumf>, %70, %cst_37 [2] : vector<4x8x8xf32> to vector<4x8xf32>
    %72 = vector.shape_cast %71 : vector<4x8xf32> to vector<4x8x1xf32>
    %73 = vector.broadcast %72 : vector<4x8x1xf32> to vector<4x8x8xf32>
    %74 = arith.subf %70, %73 : vector<4x8x8xf32>
    %75 = math.exp %74 : vector<4x8x8xf32>
    %cst_38 = arith.constant dense<0.000000e+00> : vector<4x8xf32>
    %76 = vector.multi_reduction <add>, %75, %cst_38 [2] : vector<4x8x8xf32> to vector<4x8xf32>
    %77 = vector.shape_cast %76 : vector<4x8xf32> to vector<4x8x1xf32>
    %78 = tpu.reciprocal %77 {approx = true} : vector<4x8x1xf32> -> vector<4x8x1xf32>
    %79 = vector.broadcast %78 : vector<4x8x1xf32> to vector<4x8x8xf32>
    %80 = arith.mulf %75, %79 : vector<4x8x8xf32>
    "tpu.trace_start"() <{level = 10 : i32, message = "hqk,hkd->hqd"}> : () -> ()
    %cst_39 = arith.constant dense<0.000000e+00> : vector<4x8x8xf32>
    %81 = tpu.matmul %80, %68, %cst_39 {dimension_numbers = #tpu.dot_dimension_numbers<[2], [1], [1], [2], [0, 0, 0, 1, 1, 2], [0], [0]>} : vector<4x8x8xf32>, vector<4x8x8xf32>, vector<4x8x8xf32> -> vector<4x8x8xf32>
    "tpu.trace_stop"() : () -> ()
    "tpu.trace_start"() <{level = 10 : i32, message = "hqd,hed->hqe"}> : () -> ()
    %cst_40 = arith.constant dense<0.000000e+00> : vector<4x8x32xf32>
    %82 = tpu.matmul %81, %31, %cst_40 {dimension_numbers = #tpu.dot_dimension_numbers<[2], [2], [1], [1], [0, 0, 0, 1, 1, 1], [0], [0]>} : vector<4x8x8xf32>, vector<4x32x8xf32>, vector<4x8x32xf32> -> vector<4x8x32xf32>
    "tpu.trace_stop"() : () -> ()
    %cst_41 = arith.constant dense<0.000000e+00> : vector<8x32xf32>
    %83 = vector.multi_reduction <add>, %82, %cst_41 [0] : vector<4x8x32xf32> to vector<8x32xf32>
    %84 = tpu.concatenate %57, %83 in 0 : vector<8x32xf32>, vector<8x32xf32> -> vector<16x32xf32>
    %85 = arith.addf %8, %84 : vector<16x32xf32>
    %86 = arith.mulf %85, %85 : vector<16x32xf32>
    %cst_42 = arith.constant dense<0.000000e+00> : vector<16xf32>
    %87 = vector.multi_reduction <add>, %86, %cst_42 [1] : vector<16x32xf32> to vector<16xf32>
    %88 = vector.shape_cast %87 : vector<16xf32> to vector<16x1xf32>
    %cst_43 = arith.constant 3.200000e+01 : f32
    %89 = vector.broadcast %cst_43 : f32 to vector<16x1xf32>
    %90 = arith.divf %88, %89 : vector<16x1xf32>
    %cst_44 = arith.constant 9.99999997E-7 : f32
    %91 = vector.broadcast %cst_44 : f32 to vector<16x1xf32>
    %92 = arith.addf %90, %91 : vector<16x1xf32>
    %93 = math.rsqrt %92 : vector<16x1xf32>
    %94 = vector.broadcast %93 : vector<16x1xf32> to vector<16x32xf32>
    %95 = arith.mulf %85, %94 : vector<16x32xf32>
    %c1_45 = arith.constant 1 : index
    %c0_46 = arith.constant 0 : index
    %96 = vector.load %arg2[%c1_45, %c0_46] : memref<8x32xf32, #tpu.memory_space<vmem>>, vector<1x32xf32>
    %97 = vector.broadcast %96 : vector<1x32xf32> to vector<16x32xf32>
    %98 = arith.mulf %95, %97 : vector<16x32xf32>
    %c0_47 = arith.constant 0 : index
    %c0_48 = arith.constant 0 : index
    %c0_49 = arith.constant 0 : index
    %99 = vector.load %arg4[%c0_47, %c0_48, %c0_49] : memref<2x32x64xf32, #tpu.memory_space<vmem>>, vector<1x32x64xf32>
    %100 = vector.shape_cast %99 : vector<1x32x64xf32> to vector<32x64xf32>
    %cst_50 = arith.constant dense<0.000000e+00> : vector<16x64xf32>
    %101 = tpu.matmul %98, %100, %cst_50 {dimension_numbers = #tpu.dot_dimension_numbers<[1], [0], [0], [1], [0, 0, 1, 1], [], []>} : vector<16x32xf32>, vector<32x64xf32>, vector<16x64xf32> -> vector<16x64xf32>
    %cst_51 = arith.constant 0.000000e+00 : f32
    %102 = vector.broadcast %cst_51 : f32 to vector<16x64xf32>
    %103 = arith.maximumf %101, %102 : vector<16x64xf32>
    %c0_52 = arith.constant 0 : index
    %c0_53 = arith.constant 0 : index
    %c0_54 = arith.constant 0 : index
    %104 = vector.load %arg5[%c0_52, %c0_53, %c0_54] : memref<2x64x32xf32, #tpu.memory_space<vmem>>, vector<1x64x32xf32>
    %105 = vector.shape_cast %104 : vector<1x64x32xf32> to vector<64x32xf32>
    %cst_55 = arith.constant dense<0.000000e+00> : vector<16x32xf32>
    %106 = tpu.matmul %103, %105, %cst_55 {dimension_numbers = #tpu.dot_dimension_numbers<[1], [0], [0], [1], [0, 0, 1, 1], [], []>} : vector<16x64xf32>, vector<64x32xf32>, vector<16x32xf32> -> vector<16x32xf32>
    %107 = arith.addf %85, %106 : vector<16x32xf32>
    %108 = arith.mulf %107, %107 : vector<16x32xf32>
    %cst_56 = arith.constant dense<0.000000e+00> : vector<16xf32>
    %109 = vector.multi_reduction <add>, %108, %cst_56 [1] : vector<16x32xf32> to vector<16xf32>
    %110 = vector.shape_cast %109 : vector<16xf32> to vector<16x1xf32>
    %cst_57 = arith.constant 3.200000e+01 : f32
    %111 = vector.broadcast %cst_57 : f32 to vector<16x1xf32>
    %112 = arith.divf %110, %111 : vector<16x1xf32>
    %cst_58 = arith.constant 9.99999997E-7 : f32
    %113 = vector.broadcast %cst_58 : f32 to vector<16x1xf32>
    %114 = arith.addf %112, %113 : vector<16x1xf32>
    %115 = math.rsqrt %114 : vector<16x1xf32>
    %116 = vector.broadcast %115 : vector<16x1xf32> to vector<16x32xf32>
    %117 = arith.mulf %107, %116 : vector<16x32xf32>
    %c2_59 = arith.constant 2 : index
    %c0_60 = arith.constant 0 : index
    %118 = vector.load %arg2[%c2_59, %c0_60] : memref<8x32xf32, #tpu.memory_space<vmem>>, vector<1x32xf32>
    %119 = vector.broadcast %118 : vector<1x32xf32> to vector<16x32xf32>
    %120 = arith.mulf %117, %119 : vector<16x32xf32>
    %121 = arith.mulf %9, %9 : vector<16x32xf32>
    %cst_61 = arith.constant dense<0.000000e+00> : vector<16xf32>
    %122 = vector.multi_reduction <add>, %121, %cst_61 [1] : vector<16x32xf32> to vector<16xf32>
    %123 = vector.shape_cast %122 : vector<16xf32> to vector<16x1xf32>
    %cst_62 = arith.constant 3.200000e+01 : f32
    %124 = vector.broadcast %cst_62 : f32 to vector<16x1xf32>
    %125 = arith.divf %123, %124 : vector<16x1xf32>
    %cst_63 = arith.constant 9.99999997E-7 : f32
    %126 = vector.broadcast %cst_63 : f32 to vector<16x1xf32>
    %127 = arith.addf %125, %126 : vector<16x1xf32>
    %128 = math.rsqrt %127 : vector<16x1xf32>
    %129 = vector.broadcast %128 : vector<16x1xf32> to vector<16x32xf32>
    %130 = arith.mulf %9, %129 : vector<16x32xf32>
    %c3_64 = arith.constant 3 : index
    %c0_65 = arith.constant 0 : index
    %131 = vector.load %arg2[%c3_64, %c0_65] : memref<8x32xf32, #tpu.memory_space<vmem>>, vector<1x32xf32>
    %132 = vector.broadcast %131 : vector<1x32xf32> to vector<16x32xf32>
    %133 = arith.mulf %130, %132 : vector<16x32xf32>
    %c0_66 = arith.constant 0 : index
    %c0_67 = arith.constant 0 : index
    %c0_68 = arith.constant 0 : index
    %134 = vector.load %arg7[%c0_66, %c0_67, %c0_68] : memref<4x8x8xf32, #tpu.memory_space<vmem>>, vector<4x8x8xf32>
    %c4 = arith.constant 4 : index
    %c0_69 = arith.constant 0 : index
    %c0_70 = arith.constant 0 : index
    %c0_71 = arith.constant 0 : index
    %135 = vector.load %arg3[%c4, %c0_69, %c0_70, %c0_71] : memref<12x4x32x8xf32, #tpu.memory_space<vmem>>, vector<1x4x32x8xf32>
    %136 = vector.shape_cast %135 : vector<1x4x32x8xf32> to vector<4x32x8xf32>
    %c5 = arith.constant 5 : index
    %c0_72 = arith.constant 0 : index
    %c0_73 = arith.constant 0 : index
    %c0_74 = arith.constant 0 : index
    %137 = vector.load %arg3[%c5, %c0_72, %c0_73, %c0_74] : memref<12x4x32x8xf32, #tpu.memory_space<vmem>>, vector<1x4x32x8xf32>
    %138 = vector.shape_cast %137 : vector<1x4x32x8xf32> to vector<4x32x8xf32>
    %c6 = arith.constant 6 : index
    %c0_75 = arith.constant 0 : index
    %c0_76 = arith.constant 0 : index
    %c0_77 = arith.constant 0 : index
    %139 = vector.load %arg3[%c6, %c0_75, %c0_76, %c0_77] : memref<12x4x32x8xf32, #tpu.memory_space<vmem>>, vector<1x4x32x8xf32>
    %140 = vector.shape_cast %139 : vector<1x4x32x8xf32> to vector<4x32x8xf32>
    %c7 = arith.constant 7 : index
    %c0_78 = arith.constant 0 : index
    %c0_79 = arith.constant 0 : index
    %c0_80 = arith.constant 0 : index
    %141 = vector.load %arg3[%c7, %c0_78, %c0_79, %c0_80] : memref<12x4x32x8xf32, #tpu.memory_space<vmem>>, vector<1x4x32x8xf32>
    %142 = vector.shape_cast %141 : vector<1x4x32x8xf32> to vector<4x32x8xf32>
    %143 = vector.extract_strided_slice %133 {offsets = [0, 0], sizes = [8, 32], strides = [1, 1]} : vector<16x32xf32> to vector<8x32xf32>
    %144 = vector.extract_strided_slice %133 {offsets = [0, 0], sizes = [8, 32], strides = [1, 1]} : vector<16x32xf32> to vector<8x32xf32>
    %145 = vector.shape_cast %143 : vector<8x32xf32> to vector<1x8x32xf32>
    %146 = vector.shape_cast %145 : vector<1x8x32xf32> to vector<1x8x32xf32>
    %147 = vector.broadcast %146 : vector<1x8x32xf32> to vector<4x8x32xf32>
    %148 = vector.shape_cast %144 : vector<8x32xf32> to vector<1x8x32xf32>
    %149 = vector.shape_cast %148 : vector<1x8x32xf32> to vector<1x8x32xf32>
    %150 = vector.broadcast %149 : vector<1x8x32xf32> to vector<4x8x32xf32>
    "tpu.trace_start"() <{level = 10 : i32, message = "hsd,hde->hse"}> : () -> ()
    %cst_81 = arith.constant dense<0.000000e+00> : vector<4x8x8xf32>
    %151 = tpu.matmul %147, %136, %cst_81 {dimension_numbers = #tpu.dot_dimension_numbers<[2], [1], [1], [2], [0, 0, 0, 1, 1, 2], [0], [0]>} : vector<4x8x32xf32>, vector<4x32x8xf32>, vector<4x8x8xf32> -> vector<4x8x8xf32>
    %cst_82 = arith.constant dense<0.000000e+00> : vector<4x8x8xf32>
    %152 = tpu.matmul %150, %138, %cst_82 {dimension_numbers = #tpu.dot_dimension_numbers<[2], [1], [1], [2], [0, 0, 0, 1, 1, 2], [0], [0]>} : vector<4x8x32xf32>, vector<4x32x8xf32>, vector<4x8x8xf32> -> vector<4x8x8xf32>
    %cst_83 = arith.constant dense<0.000000e+00> : vector<4x8x8xf32>
    %153 = tpu.matmul %150, %140, %cst_83 {dimension_numbers = #tpu.dot_dimension_numbers<[2], [1], [1], [2], [0, 0, 0, 1, 1, 2], [0], [0]>} : vector<4x8x32xf32>, vector<4x32x8xf32>, vector<4x8x8xf32> -> vector<4x8x8xf32>
    "tpu.trace_stop"() : () -> ()
    "tpu.trace_start"() <{level = 10 : i32, message = "hqd,hkd->hqk"}> : () -> ()
    %cst_84 = arith.constant dense<0.000000e+00> : vector<4x8x8xf32>
    %154 = tpu.matmul %151, %152, %cst_84 {dimension_numbers = #tpu.dot_dimension_numbers<[2], [2], [1], [1], [0, 0, 0, 1, 1, 1], [0], [0]>} : vector<4x8x8xf32>, vector<4x8x8xf32>, vector<4x8x8xf32> -> vector<4x8x8xf32>
    "tpu.trace_stop"() : () -> ()
    %155 = arith.addf %154, %134 : vector<4x8x8xf32>
    %cst_85 = arith.constant dense<0xFF800000> : vector<4x8xf32>
    %156 = vector.multi_reduction <maximumf>, %155, %cst_85 [2] : vector<4x8x8xf32> to vector<4x8xf32>
    %157 = vector.shape_cast %156 : vector<4x8xf32> to vector<4x8x1xf32>
    %158 = vector.broadcast %157 : vector<4x8x1xf32> to vector<4x8x8xf32>
    %159 = arith.subf %155, %158 : vector<4x8x8xf32>
    %160 = math.exp %159 : vector<4x8x8xf32>
    %cst_86 = arith.constant dense<0.000000e+00> : vector<4x8xf32>
    %161 = vector.multi_reduction <add>, %160, %cst_86 [2] : vector<4x8x8xf32> to vector<4x8xf32>
    %162 = vector.shape_cast %161 : vector<4x8xf32> to vector<4x8x1xf32>
    %163 = tpu.reciprocal %162 {approx = true} : vector<4x8x1xf32> -> vector<4x8x1xf32>
    %164 = vector.broadcast %163 : vector<4x8x1xf32> to vector<4x8x8xf32>
    %165 = arith.mulf %160, %164 : vector<4x8x8xf32>
    "tpu.trace_start"() <{level = 10 : i32, message = "hqk,hkd->hqd"}> : () -> ()
    %cst_87 = arith.constant dense<0.000000e+00> : vector<4x8x8xf32>
    %166 = tpu.matmul %165, %153, %cst_87 {dimension_numbers = #tpu.dot_dimension_numbers<[2], [1], [1], [2], [0, 0, 0, 1, 1, 2], [0], [0]>} : vector<4x8x8xf32>, vector<4x8x8xf32>, vector<4x8x8xf32> -> vector<4x8x8xf32>
    "tpu.trace_stop"() : () -> ()
    "tpu.trace_start"() <{level = 10 : i32, message = "hqd,hed->hqe"}> : () -> ()
    %cst_88 = arith.constant dense<0.000000e+00> : vector<4x8x32xf32>
    %167 = tpu.matmul %166, %142, %cst_88 {dimension_numbers = #tpu.dot_dimension_numbers<[2], [2], [1], [1], [0, 0, 0, 1, 1, 1], [0], [0]>} : vector<4x8x8xf32>, vector<4x32x8xf32>, vector<4x8x32xf32> -> vector<4x8x32xf32>
    "tpu.trace_stop"() : () -> ()
    %cst_89 = arith.constant dense<0.000000e+00> : vector<8x32xf32>
    %168 = vector.multi_reduction <add>, %167, %cst_89 [0] : vector<4x8x32xf32> to vector<8x32xf32>
    %169 = vector.extract_strided_slice %133 {offsets = [8, 0], sizes = [8, 32], strides = [1, 1]} : vector<16x32xf32> to vector<8x32xf32>
    %170 = vector.extract_strided_slice %133 {offsets = [8, 0], sizes = [8, 32], strides = [1, 1]} : vector<16x32xf32> to vector<8x32xf32>
    %171 = vector.shape_cast %169 : vector<8x32xf32> to vector<1x8x32xf32>
    %172 = vector.shape_cast %171 : vector<1x8x32xf32> to vector<1x8x32xf32>
    %173 = vector.broadcast %172 : vector<1x8x32xf32> to vector<4x8x32xf32>
    %174 = vector.shape_cast %170 : vector<8x32xf32> to vector<1x8x32xf32>
    %175 = vector.shape_cast %174 : vector<1x8x32xf32> to vector<1x8x32xf32>
    %176 = vector.broadcast %175 : vector<1x8x32xf32> to vector<4x8x32xf32>
    "tpu.trace_start"() <{level = 10 : i32, message = "hsd,hde->hse"}> : () -> ()
    %cst_90 = arith.constant dense<0.000000e+00> : vector<4x8x8xf32>
    %177 = tpu.matmul %173, %136, %cst_90 {dimension_numbers = #tpu.dot_dimension_numbers<[2], [1], [1], [2], [0, 0, 0, 1, 1, 2], [0], [0]>} : vector<4x8x32xf32>, vector<4x32x8xf32>, vector<4x8x8xf32> -> vector<4x8x8xf32>
    %cst_91 = arith.constant dense<0.000000e+00> : vector<4x8x8xf32>
    %178 = tpu.matmul %176, %138, %cst_91 {dimension_numbers = #tpu.dot_dimension_numbers<[2], [1], [1], [2], [0, 0, 0, 1, 1, 2], [0], [0]>} : vector<4x8x32xf32>, vector<4x32x8xf32>, vector<4x8x8xf32> -> vector<4x8x8xf32>
    %cst_92 = arith.constant dense<0.000000e+00> : vector<4x8x8xf32>
    %179 = tpu.matmul %176, %140, %cst_92 {dimension_numbers = #tpu.dot_dimension_numbers<[2], [1], [1], [2], [0, 0, 0, 1, 1, 2], [0], [0]>} : vector<4x8x32xf32>, vector<4x32x8xf32>, vector<4x8x8xf32> -> vector<4x8x8xf32>
    "tpu.trace_stop"() : () -> ()
    "tpu.trace_start"() <{level = 10 : i32, message = "hqd,hkd->hqk"}> : () -> ()
    %cst_93 = arith.constant dense<0.000000e+00> : vector<4x8x8xf32>
    %180 = tpu.matmul %177, %178, %cst_93 {dimension_numbers = #tpu.dot_dimension_numbers<[2], [2], [1], [1], [0, 0, 0, 1, 1, 1], [0], [0]>} : vector<4x8x8xf32>, vector<4x8x8xf32>, vector<4x8x8xf32> -> vector<4x8x8xf32>
    "tpu.trace_stop"() : () -> ()
    %181 = arith.addf %180, %134 : vector<4x8x8xf32>
    %cst_94 = arith.constant dense<0xFF800000> : vector<4x8xf32>
    %182 = vector.multi_reduction <maximumf>, %181, %cst_94 [2] : vector<4x8x8xf32> to vector<4x8xf32>
    %183 = vector.shape_cast %182 : vector<4x8xf32> to vector<4x8x1xf32>
    %184 = vector.broadcast %183 : vector<4x8x1xf32> to vector<4x8x8xf32>
    %185 = arith.subf %181, %184 : vector<4x8x8xf32>
    %186 = math.exp %185 : vector<4x8x8xf32>
    %cst_95 = arith.constant dense<0.000000e+00> : vector<4x8xf32>
    %187 = vector.multi_reduction <add>, %186, %cst_95 [2] : vector<4x8x8xf32> to vector<4x8xf32>
    %188 = vector.shape_cast %187 : vector<4x8xf32> to vector<4x8x1xf32>
    %189 = tpu.reciprocal %188 {approx = true} : vector<4x8x1xf32> -> vector<4x8x1xf32>
    %190 = vector.broadcast %189 : vector<4x8x1xf32> to vector<4x8x8xf32>
    %191 = arith.mulf %186, %190 : vector<4x8x8xf32>
    "tpu.trace_start"() <{level = 10 : i32, message = "hqk,hkd->hqd"}> : () -> ()
    %cst_96 = arith.constant dense<0.000000e+00> : vector<4x8x8xf32>
    %192 = tpu.matmul %191, %179, %cst_96 {dimension_numbers = #tpu.dot_dimension_numbers<[2], [1], [1], [2], [0, 0, 0, 1, 1, 2], [0], [0]>} : vector<4x8x8xf32>, vector<4x8x8xf32>, vector<4x8x8xf32> -> vector<4x8x8xf32>
    "tpu.trace_stop"() : () -> ()
    "tpu.trace_start"() <{level = 10 : i32, message = "hqd,hed->hqe"}> : () -> ()
    %cst_97 = arith.constant dense<0.000000e+00> : vector<4x8x32xf32>
    %193 = tpu.matmul %192, %142, %cst_97 {dimension_numbers = #tpu.dot_dimension_numbers<[2], [2], [1], [1], [0, 0, 0, 1, 1, 1], [0], [0]>} : vector<4x8x8xf32>, vector<4x32x8xf32>, vector<4x8x32xf32> -> vector<4x8x32xf32>
    "tpu.trace_stop"() : () -> ()
    %cst_98 = arith.constant dense<0.000000e+00> : vector<8x32xf32>
    %194 = vector.multi_reduction <add>, %193, %cst_98 [0] : vector<4x8x32xf32> to vector<8x32xf32>
    %195 = tpu.concatenate %168, %194 in 0 : vector<8x32xf32>, vector<8x32xf32> -> vector<16x32xf32>
    %196 = arith.addf %9, %195 : vector<16x32xf32>
    %197 = arith.mulf %196, %196 : vector<16x32xf32>
    %cst_99 = arith.constant dense<0.000000e+00> : vector<16xf32>
    %198 = vector.multi_reduction <add>, %197, %cst_99 [1] : vector<16x32xf32> to vector<16xf32>
    %199 = vector.shape_cast %198 : vector<16xf32> to vector<16x1xf32>
    %cst_100 = arith.constant 3.200000e+01 : f32
    %200 = vector.broadcast %cst_100 : f32 to vector<16x1xf32>
    %201 = arith.divf %199, %200 : vector<16x1xf32>
    %cst_101 = arith.constant 9.99999997E-7 : f32
    %202 = vector.broadcast %cst_101 : f32 to vector<16x1xf32>
    %203 = arith.addf %201, %202 : vector<16x1xf32>
    %204 = math.rsqrt %203 : vector<16x1xf32>
    %205 = vector.broadcast %204 : vector<16x1xf32> to vector<16x32xf32>
    %206 = arith.mulf %196, %205 : vector<16x32xf32>
    %c4_102 = arith.constant 4 : index
    %c0_103 = arith.constant 0 : index
    %207 = vector.load %arg2[%c4_102, %c0_103] : memref<8x32xf32, #tpu.memory_space<vmem>>, vector<1x32xf32>
    %208 = vector.broadcast %207 : vector<1x32xf32> to vector<16x32xf32>
    %209 = arith.mulf %206, %208 : vector<16x32xf32>
    %c8 = arith.constant 8 : index
    %c0_104 = arith.constant 0 : index
    %c0_105 = arith.constant 0 : index
    %c0_106 = arith.constant 0 : index
    %210 = vector.load %arg3[%c8, %c0_104, %c0_105, %c0_106] : memref<12x4x32x8xf32, #tpu.memory_space<vmem>>, vector<1x4x32x8xf32>
    %211 = vector.shape_cast %210 : vector<1x4x32x8xf32> to vector<4x32x8xf32>
    %c9 = arith.constant 9 : index
    %c0_107 = arith.constant 0 : index
    %c0_108 = arith.constant 0 : index
    %c0_109 = arith.constant 0 : index
    %212 = vector.load %arg3[%c9, %c0_107, %c0_108, %c0_109] : memref<12x4x32x8xf32, #tpu.memory_space<vmem>>, vector<1x4x32x8xf32>
    %213 = vector.shape_cast %212 : vector<1x4x32x8xf32> to vector<4x32x8xf32>
    %c10 = arith.constant 10 : index
    %c0_110 = arith.constant 0 : index
    %c0_111 = arith.constant 0 : index
    %c0_112 = arith.constant 0 : index
    %214 = vector.load %arg3[%c10, %c0_110, %c0_111, %c0_112] : memref<12x4x32x8xf32, #tpu.memory_space<vmem>>, vector<1x4x32x8xf32>
    %215 = vector.shape_cast %214 : vector<1x4x32x8xf32> to vector<4x32x8xf32>
    %c11 = arith.constant 11 : index
    %c0_113 = arith.constant 0 : index
    %c0_114 = arith.constant 0 : index
    %c0_115 = arith.constant 0 : index
    %216 = vector.load %arg3[%c11, %c0_113, %c0_114, %c0_115] : memref<12x4x32x8xf32, #tpu.memory_space<vmem>>, vector<1x4x32x8xf32>
    %217 = vector.shape_cast %216 : vector<1x4x32x8xf32> to vector<4x32x8xf32>
    %218 = vector.extract_strided_slice %209 {offsets = [0, 0], sizes = [8, 32], strides = [1, 1]} : vector<16x32xf32> to vector<8x32xf32>
    %219 = vector.extract_strided_slice %120 {offsets = [0, 0], sizes = [8, 32], strides = [1, 1]} : vector<16x32xf32> to vector<8x32xf32>
    %220 = vector.shape_cast %218 : vector<8x32xf32> to vector<1x8x32xf32>
    %221 = vector.shape_cast %220 : vector<1x8x32xf32> to vector<1x8x32xf32>
    %222 = vector.broadcast %221 : vector<1x8x32xf32> to vector<4x8x32xf32>
    %223 = vector.shape_cast %219 : vector<8x32xf32> to vector<1x8x32xf32>
    %224 = vector.shape_cast %223 : vector<1x8x32xf32> to vector<1x8x32xf32>
    %225 = vector.broadcast %224 : vector<1x8x32xf32> to vector<4x8x32xf32>
    "tpu.trace_start"() <{level = 10 : i32, message = "hsd,hde->hse"}> : () -> ()
    %cst_116 = arith.constant dense<0.000000e+00> : vector<4x8x8xf32>
    %226 = tpu.matmul %222, %211, %cst_116 {dimension_numbers = #tpu.dot_dimension_numbers<[2], [1], [1], [2], [0, 0, 0, 1, 1, 2], [0], [0]>} : vector<4x8x32xf32>, vector<4x32x8xf32>, vector<4x8x8xf32> -> vector<4x8x8xf32>
    %cst_117 = arith.constant dense<0.000000e+00> : vector<4x8x8xf32>
    %227 = tpu.matmul %225, %213, %cst_117 {dimension_numbers = #tpu.dot_dimension_numbers<[2], [1], [1], [2], [0, 0, 0, 1, 1, 2], [0], [0]>} : vector<4x8x32xf32>, vector<4x32x8xf32>, vector<4x8x8xf32> -> vector<4x8x8xf32>
    %cst_118 = arith.constant dense<0.000000e+00> : vector<4x8x8xf32>
    %228 = tpu.matmul %225, %215, %cst_118 {dimension_numbers = #tpu.dot_dimension_numbers<[2], [1], [1], [2], [0, 0, 0, 1, 1, 2], [0], [0]>} : vector<4x8x32xf32>, vector<4x32x8xf32>, vector<4x8x8xf32> -> vector<4x8x8xf32>
    "tpu.trace_stop"() : () -> ()
    "tpu.trace_start"() <{level = 10 : i32, message = "hqd,hkd->hqk"}> : () -> ()
    %cst_119 = arith.constant dense<0.000000e+00> : vector<4x8x8xf32>
    %229 = tpu.matmul %226, %227, %cst_119 {dimension_numbers = #tpu.dot_dimension_numbers<[2], [2], [1], [1], [0, 0, 0, 1, 1, 1], [0], [0]>} : vector<4x8x8xf32>, vector<4x8x8xf32>, vector<4x8x8xf32> -> vector<4x8x8xf32>
    "tpu.trace_stop"() : () -> ()
    %cst_120 = arith.constant dense<0xFF800000> : vector<4x8xf32>
    %230 = vector.multi_reduction <maximumf>, %229, %cst_120 [2] : vector<4x8x8xf32> to vector<4x8xf32>
    %231 = vector.shape_cast %230 : vector<4x8xf32> to vector<4x8x1xf32>
    %232 = vector.broadcast %231 : vector<4x8x1xf32> to vector<4x8x8xf32>
    %233 = arith.subf %229, %232 : vector<4x8x8xf32>
    %234 = math.exp %233 : vector<4x8x8xf32>
    %cst_121 = arith.constant dense<0.000000e+00> : vector<4x8xf32>
    %235 = vector.multi_reduction <add>, %234, %cst_121 [2] : vector<4x8x8xf32> to vector<4x8xf32>
    %236 = vector.shape_cast %235 : vector<4x8xf32> to vector<4x8x1xf32>
    %237 = tpu.reciprocal %236 {approx = true} : vector<4x8x1xf32> -> vector<4x8x1xf32>
    %238 = vector.broadcast %237 : vector<4x8x1xf32> to vector<4x8x8xf32>
    %239 = arith.mulf %234, %238 : vector<4x8x8xf32>
    "tpu.trace_start"() <{level = 10 : i32, message = "hqk,hkd->hqd"}> : () -> ()
    %cst_122 = arith.constant dense<0.000000e+00> : vector<4x8x8xf32>
    %240 = tpu.matmul %239, %228, %cst_122 {dimension_numbers = #tpu.dot_dimension_numbers<[2], [1], [1], [2], [0, 0, 0, 1, 1, 2], [0], [0]>} : vector<4x8x8xf32>, vector<4x8x8xf32>, vector<4x8x8xf32> -> vector<4x8x8xf32>
    "tpu.trace_stop"() : () -> ()
    "tpu.trace_start"() <{level = 10 : i32, message = "hqd,hed->hqe"}> : () -> ()
    %cst_123 = arith.constant dense<0.000000e+00> : vector<4x8x32xf32>
    %241 = tpu.matmul %240, %217, %cst_123 {dimension_numbers = #tpu.dot_dimension_numbers<[2], [2], [1], [1], [0, 0, 0, 1, 1, 1], [0], [0]>} : vector<4x8x8xf32>, vector<4x32x8xf32>, vector<4x8x32xf32> -> vector<4x8x32xf32>
    "tpu.trace_stop"() : () -> ()
    %cst_124 = arith.constant dense<0.000000e+00> : vector<8x32xf32>
    %242 = vector.multi_reduction <add>, %241, %cst_124 [0] : vector<4x8x32xf32> to vector<8x32xf32>
    %243 = vector.extract_strided_slice %209 {offsets = [8, 0], sizes = [8, 32], strides = [1, 1]} : vector<16x32xf32> to vector<8x32xf32>
    %244 = vector.extract_strided_slice %120 {offsets = [8, 0], sizes = [8, 32], strides = [1, 1]} : vector<16x32xf32> to vector<8x32xf32>
    %245 = vector.shape_cast %243 : vector<8x32xf32> to vector<1x8x32xf32>
    %246 = vector.shape_cast %245 : vector<1x8x32xf32> to vector<1x8x32xf32>
    %247 = vector.broadcast %246 : vector<1x8x32xf32> to vector<4x8x32xf32>
    %248 = vector.shape_cast %244 : vector<8x32xf32> to vector<1x8x32xf32>
    %249 = vector.shape_cast %248 : vector<1x8x32xf32> to vector<1x8x32xf32>
    %250 = vector.broadcast %249 : vector<1x8x32xf32> to vector<4x8x32xf32>
    "tpu.trace_start"() <{level = 10 : i32, message = "hsd,hde->hse"}> : () -> ()
    %cst_125 = arith.constant dense<0.000000e+00> : vector<4x8x8xf32>
    %251 = tpu.matmul %247, %211, %cst_125 {dimension_numbers = #tpu.dot_dimension_numbers<[2], [1], [1], [2], [0, 0, 0, 1, 1, 2], [0], [0]>} : vector<4x8x32xf32>, vector<4x32x8xf32>, vector<4x8x8xf32> -> vector<4x8x8xf32>
    %cst_126 = arith.constant dense<0.000000e+00> : vector<4x8x8xf32>
    %252 = tpu.matmul %250, %213, %cst_126 {dimension_numbers = #tpu.dot_dimension_numbers<[2], [1], [1], [2], [0, 0, 0, 1, 1, 2], [0], [0]>} : vector<4x8x32xf32>, vector<4x32x8xf32>, vector<4x8x8xf32> -> vector<4x8x8xf32>
    %cst_127 = arith.constant dense<0.000000e+00> : vector<4x8x8xf32>
    %253 = tpu.matmul %250, %215, %cst_127 {dimension_numbers = #tpu.dot_dimension_numbers<[2], [1], [1], [2], [0, 0, 0, 1, 1, 2], [0], [0]>} : vector<4x8x32xf32>, vector<4x32x8xf32>, vector<4x8x8xf32> -> vector<4x8x8xf32>
    "tpu.trace_stop"() : () -> ()
    "tpu.trace_start"() <{level = 10 : i32, message = "hqd,hkd->hqk"}> : () -> ()
    %cst_128 = arith.constant dense<0.000000e+00> : vector<4x8x8xf32>
    %254 = tpu.matmul %251, %252, %cst_128 {dimension_numbers = #tpu.dot_dimension_numbers<[2], [2], [1], [1], [0, 0, 0, 1, 1, 1], [0], [0]>} : vector<4x8x8xf32>, vector<4x8x8xf32>, vector<4x8x8xf32> -> vector<4x8x8xf32>
    "tpu.trace_stop"() : () -> ()
    %cst_129 = arith.constant dense<0xFF800000> : vector<4x8xf32>
    %255 = vector.multi_reduction <maximumf>, %254, %cst_129 [2] : vector<4x8x8xf32> to vector<4x8xf32>
    %256 = vector.shape_cast %255 : vector<4x8xf32> to vector<4x8x1xf32>
    %257 = vector.broadcast %256 : vector<4x8x1xf32> to vector<4x8x8xf32>
    %258 = arith.subf %254, %257 : vector<4x8x8xf32>
    %259 = math.exp %258 : vector<4x8x8xf32>
    %cst_130 = arith.constant dense<0.000000e+00> : vector<4x8xf32>
    %260 = vector.multi_reduction <add>, %259, %cst_130 [2] : vector<4x8x8xf32> to vector<4x8xf32>
    %261 = vector.shape_cast %260 : vector<4x8xf32> to vector<4x8x1xf32>
    %262 = tpu.reciprocal %261 {approx = true} : vector<4x8x1xf32> -> vector<4x8x1xf32>
    %263 = vector.broadcast %262 : vector<4x8x1xf32> to vector<4x8x8xf32>
    %264 = arith.mulf %259, %263 : vector<4x8x8xf32>
    "tpu.trace_start"() <{level = 10 : i32, message = "hqk,hkd->hqd"}> : () -> ()
    %cst_131 = arith.constant dense<0.000000e+00> : vector<4x8x8xf32>
    %265 = tpu.matmul %264, %253, %cst_131 {dimension_numbers = #tpu.dot_dimension_numbers<[2], [1], [1], [2], [0, 0, 0, 1, 1, 2], [0], [0]>} : vector<4x8x8xf32>, vector<4x8x8xf32>, vector<4x8x8xf32> -> vector<4x8x8xf32>
    "tpu.trace_stop"() : () -> ()
    "tpu.trace_start"() <{level = 10 : i32, message = "hqd,hed->hqe"}> : () -> ()
    %cst_132 = arith.constant dense<0.000000e+00> : vector<4x8x32xf32>
    %266 = tpu.matmul %265, %217, %cst_132 {dimension_numbers = #tpu.dot_dimension_numbers<[2], [2], [1], [1], [0, 0, 0, 1, 1, 1], [0], [0]>} : vector<4x8x8xf32>, vector<4x32x8xf32>, vector<4x8x32xf32> -> vector<4x8x32xf32>
    "tpu.trace_stop"() : () -> ()
    %cst_133 = arith.constant dense<0.000000e+00> : vector<8x32xf32>
    %267 = vector.multi_reduction <add>, %266, %cst_133 [0] : vector<4x8x32xf32> to vector<8x32xf32>
    %268 = tpu.concatenate %242, %267 in 0 : vector<8x32xf32>, vector<8x32xf32> -> vector<16x32xf32>
    %269 = arith.addf %196, %268 : vector<16x32xf32>
    %270 = arith.mulf %269, %269 : vector<16x32xf32>
    %cst_134 = arith.constant dense<0.000000e+00> : vector<16xf32>
    %271 = vector.multi_reduction <add>, %270, %cst_134 [1] : vector<16x32xf32> to vector<16xf32>
    %272 = vector.shape_cast %271 : vector<16xf32> to vector<16x1xf32>
    %cst_135 = arith.constant 3.200000e+01 : f32
    %273 = vector.broadcast %cst_135 : f32 to vector<16x1xf32>
    %274 = arith.divf %272, %273 : vector<16x1xf32>
    %cst_136 = arith.constant 9.99999997E-7 : f32
    %275 = vector.broadcast %cst_136 : f32 to vector<16x1xf32>
    %276 = arith.addf %274, %275 : vector<16x1xf32>
    %277 = math.rsqrt %276 : vector<16x1xf32>
    %278 = vector.broadcast %277 : vector<16x1xf32> to vector<16x32xf32>
    %279 = arith.mulf %269, %278 : vector<16x32xf32>
    %c5_137 = arith.constant 5 : index
    %c0_138 = arith.constant 0 : index
    %280 = vector.load %arg2[%c5_137, %c0_138] : memref<8x32xf32, #tpu.memory_space<vmem>>, vector<1x32xf32>
    %281 = vector.broadcast %280 : vector<1x32xf32> to vector<16x32xf32>
    %282 = arith.mulf %279, %281 : vector<16x32xf32>
    %c1_139 = arith.constant 1 : index
    %c0_140 = arith.constant 0 : index
    %c0_141 = arith.constant 0 : index
    %283 = vector.load %arg4[%c1_139, %c0_140, %c0_141] : memref<2x32x64xf32, #tpu.memory_space<vmem>>, vector<1x32x64xf32>
    %284 = vector.shape_cast %283 : vector<1x32x64xf32> to vector<32x64xf32>
    %cst_142 = arith.constant dense<0.000000e+00> : vector<16x64xf32>
    %285 = tpu.matmul %282, %284, %cst_142 {dimension_numbers = #tpu.dot_dimension_numbers<[1], [0], [0], [1], [0, 0, 1, 1], [], []>} : vector<16x32xf32>, vector<32x64xf32>, vector<16x64xf32> -> vector<16x64xf32>
    %cst_143 = arith.constant 0.000000e+00 : f32
    %286 = vector.broadcast %cst_143 : f32 to vector<16x64xf32>
    %287 = arith.maximumf %285, %286 : vector<16x64xf32>
    %c1_144 = arith.constant 1 : index
    %c0_145 = arith.constant 0 : index
    %c0_146 = arith.constant 0 : index
    %288 = vector.load %arg5[%c1_144, %c0_145, %c0_146] : memref<2x64x32xf32, #tpu.memory_space<vmem>>, vector<1x64x32xf32>
    %289 = vector.shape_cast %288 : vector<1x64x32xf32> to vector<64x32xf32>
    %cst_147 = arith.constant dense<0.000000e+00> : vector<16x32xf32>
    %290 = tpu.matmul %287, %289, %cst_147 {dimension_numbers = #tpu.dot_dimension_numbers<[1], [0], [0], [1], [0, 0, 1, 1], [], []>} : vector<16x64xf32>, vector<64x32xf32>, vector<16x32xf32> -> vector<16x32xf32>
    %291 = arith.addf %269, %290 : vector<16x32xf32>
    %292 = arith.mulf %291, %291 : vector<16x32xf32>
    %cst_148 = arith.constant dense<0.000000e+00> : vector<16xf32>
    %293 = vector.multi_reduction <add>, %292, %cst_148 [1] : vector<16x32xf32> to vector<16xf32>
    %294 = vector.shape_cast %293 : vector<16xf32> to vector<16x1xf32>
    %cst_149 = arith.constant 3.200000e+01 : f32
    %295 = vector.broadcast %cst_149 : f32 to vector<16x1xf32>
    %296 = arith.divf %294, %295 : vector<16x1xf32>
    %cst_150 = arith.constant 9.99999997E-7 : f32
    %297 = vector.broadcast %cst_150 : f32 to vector<16x1xf32>
    %298 = arith.addf %296, %297 : vector<16x1xf32>
    %299 = math.rsqrt %298 : vector<16x1xf32>
    %300 = vector.broadcast %299 : vector<16x1xf32> to vector<16x32xf32>
    %301 = arith.mulf %291, %300 : vector<16x32xf32>
    %c6_151 = arith.constant 6 : index
    %c0_152 = arith.constant 0 : index
    %302 = vector.load %arg2[%c6_151, %c0_152] : memref<8x32xf32, #tpu.memory_space<vmem>>, vector<1x32xf32>
    %303 = vector.broadcast %302 : vector<1x32xf32> to vector<16x32xf32>
    %304 = arith.mulf %301, %303 : vector<16x32xf32>
    %cst_153 = arith.constant 0.176776692 : f32
    %305 = vector.broadcast %cst_153 : f32 to vector<16x32xf32>
    %306 = arith.mulf %304, %305 : vector<16x32xf32>
    %cst_154 = arith.constant dense<0.000000e+00> : vector<16x128xf32>
    %307 = tpu.matmul %306, %0, %cst_154 {dimension_numbers = #tpu.dot_dimension_numbers<[1], [1], [0], [0], [0, 0, 1, 0], [], []>} : vector<16x32xf32>, vector<128x32xf32>, vector<16x128xf32> -> vector<16x128xf32>
    %c0_155 = arith.constant 0 : index
    %c0_156 = arith.constant 0 : index
    %308 = vector.load %arg8[%c0_155, %c0_156] : memref<16x128xf32, #tpu.memory_space<vmem>>, vector<16x128xf32>
    tpu.vector_store %arg8[%c0_155, %c0_156], %307 {strides = array<i32>} : memref<16x128xf32, #tpu.memory_space<vmem>>, vector<16x128xf32>,
    %c32 = arith.constant 32 : index
    %c0_157 = arith.constant 0 : index
    %309 = vector.load %arg0[%c32, %c0_157] : memref<48x1xi32, #tpu.memory_space<vmem>>, vector<16x1xi32>
    %cst_158 = arith.constant dense<0xFF800000> : vector<16xf32>
    %310 = vector.multi_reduction <maximumf>, %307, %cst_158 [1] : vector<16x128xf32> to vector<16xf32>
    %311 = vector.shape_cast %310 : vector<16xf32> to vector<16x1xf32>
    %312 = vector.broadcast %311 : vector<16x1xf32> to vector<16x128xf32>
    %313 = arith.subf %307, %312 : vector<16x128xf32>
    %314 = math.exp %313 : vector<16x128xf32>
    %cst_159 = arith.constant dense<0.000000e+00> : vector<16xf32>
    %315 = vector.multi_reduction <add>, %314, %cst_159 [1] : vector<16x128xf32> to vector<16xf32>
    %316 = vector.shape_cast %315 : vector<16xf32> to vector<16x1xf32>
    %317 = math.log %316 : vector<16x1xf32>
    %318 = arith.addf %317, %311 : vector<16x1xf32>
    %319 = tpu.iota {dimensions = array<i32: 1>} : vector<16x128xi32>
    %320 = vector.broadcast %309 : vector<16x1xi32> to vector<16x128xi32>
    %321 = arith.cmpi eq, %319, %320 : vector<16x128xi32>
    %cst_160 = arith.constant 0.000000e+00 : f32
    %322 = vector.broadcast %cst_160 : f32 to vector<16x128xf32>
    %323 = arith.select %321, %307, %322 : vector<16x128xi1>, vector<16x128xf32>
    %cst_161 = arith.constant dense<0.000000e+00> : vector<16xf32>
    %324 = vector.multi_reduction <add>, %323, %cst_161 [1] : vector<16x128xf32> to vector<16xf32>
    %325 = vector.shape_cast %324 : vector<16xf32> to vector<16x1xf32>
    %c-100_i32 = arith.constant -100 : i32
    %326 = vector.broadcast %c-100_i32 : i32 to vector<16x1xi32>
    %327 = arith.cmpi ne, %309, %326 : vector<16x1xi32>
    %328 = arith.extui %327 : vector<16x1xi1> to vector<16x1xi32>
    %329 = arith.sitofp %328 : vector<16x1xi32> to vector<16x1xf32>
    %330 = arith.subf %318, %325 : vector<16x1xf32>
    %331 = arith.mulf %330, %329 : vector<16x1xf32>
    %cst_162 = arith.constant dense<0.000000e+00> : vector<1xf32>
    %332 = vector.multi_reduction <add>, %331, %cst_162 [0] : vector<16x1xf32> to vector<1xf32>
    %333 = vector.shape_cast %332 : vector<1xf32> to vector<1x1xf32>
    %cst_163 = arith.constant dense<0.000000e+00> : vector<1xf32>
    %334 = vector.multi_reduction <add>, %329, %cst_163 [0] : vector<16x1xf32> to vector<1xf32>
    %335 = vector.shape_cast %334 : vector<1xf32> to vector<1x1xf32>
    %cst_164 = arith.constant 1.000000e+00 : f32
    %336 = vector.broadcast %cst_164 : f32 to vector<1x1xf32>
    %337 = arith.maximumf %335, %336 : vector<1x1xf32>
    %338 = arith.divf %333, %337 : vector<1x1xf32>
    %c0_165 = arith.constant 0 : index
    %c0_166 = arith.constant 0 : index
    %339 = vector.load %arg9[%c0_165, %c0_166] : memref<1x1xf32, #tpu.memory_space<vmem>>, vector<1x1xf32>
    tpu.vector_store %arg9[%c0_165, %c0_166], %338 {strides = array<i32>} : memref<1x1xf32, #tpu.memory_space<vmem>>, vector<1x1xf32>,
    return
  }
}

</mosaic_0001>

<llo_original>
// kernel: t5_forward.1
$region0: #{t5_forward.1}
  #allocation0 [shape = 'u32[]', space=smem, size = 0x4, offset = 0x4, fixed_abs, tag = 'smem constant byte address 0x4 - core index']
  #allocation1 [shape = 'u32[144,128]{1,0:T(1,128)}', space=vmem, size = 0x12000, scoped, tag = 'internal scratch']
  %s0 = inlined_call_operand.vmem [shape: s32[48,1], index: 0, kind: input, shape index: {}]
  %s1 = inlined_call_operand.vmem [shape: f32[128,32], index: 1, kind: input, shape index: {}]
  %s2 = inlined_call_operand.vmem [shape: f32[8,32], index: 2, kind: input, shape index: {}]
  %s3 = inlined_call_operand.vmem [shape: f32[12,4,32,8], index: 3, kind: input, shape index: {}]
  %s4 = inlined_call_operand.vmem [shape: f32[2,32,64], index: 4, kind: input, shape index: {}]
  %s5 = inlined_call_operand.vmem [shape: f32[2,64,32], index: 5, kind: input, shape index: {}]
  %s6 = inlined_call_operand.vmem [shape: f32[4,8,8], index: 6, kind: input, shape index: {}]
  %s7 = inlined_call_operand.vmem [shape: f32[4,8,8], index: 7, kind: input, shape index: {}]
  %s8 = inlined_call_operand.hbm [shape: f32[16,128], index: 8, kind: output, shape index: {0}]
  %s9 = inlined_call_operand.hbm [shape: f32[1,1], index: 9, kind: output, shape index: {1}]
  %10 = xla_tuple %s8, %s9
  %s11 = sld [smem:[#allocation0]]
  $region50: #{t5_forward.1} parent=0
    _
  %s13 = ssub.s32 1, %s11
  %s14 = scalar_select 0, %s13, %s11
  $region1: #{t5_forward.1} parent=0
    #allocation2 [shape = 'u8[8192]{0}', space=vmem, size = 0x2000, scoped, tag = 'output window, operand 0, single buffered']
    #allocation3 [shape = 's32[1]{0}', space=sflag, size = 0x4, scoped, tag = 'scoped memory for t5_forward.1']
    #allocation4 [shape = 'u8[512]{0}', space=vmem, size = 0x400, scoped, tag = 'output window, operand 1, single buffered']
    #allocation5 [shape = 's32[1]{0}', space=sflag, size = 0x4, scoped, tag = 'scoped memory for t5_forward.1']
    %15 = vsyncpa [#allocation3], 0
    %16 = vsyncpa [#allocation5], 0
    // Predicated region
    $region2: #{t5_forward.1} parent=1 // pred_check
      _
    $region3: #{t5_forward.1} parent=1 // pred_check_branch
      %18 = sbr.rel (0) target = $region5
    $region4: #{t5_forward.1} parent=1 // pred_region
      _
    $region5: #{t5_forward.1} parent=1 // pred_fallthru
      _
    // Predicated region
    $region6: #{t5_forward.1} parent=1 // pred_check
      _
    $region7: #{t5_forward.1} parent=1 // pred_check_branch
      %20 = sbr.rel (0) target = $region9
    $region8: #{t5_forward.1} parent=1 // pred_region
      _
    $region9: #{t5_forward.1} parent=1 // pred_fallthru
      _
    // Predicated region
    $region10: #{t5_forward.1} parent=1 // pred_check
      _
    $region11: #{t5_forward.1} parent=1 // pred_check_branch
      %22 = sbr.rel (0) target = $region13
    $region12: #{t5_forward.1} parent=1 // pred_region
      _
    $region13: #{t5_forward.1} parent=1 // pred_fallthru
      _
    // Predicated region
    $region14: #{t5_forward.1} parent=1 // pred_check
      _
    $region15: #{t5_forward.1} parent=1 // pred_check_branch
      %24 = sbr.rel (0) target = $region17
    $region16: #{t5_forward.1} parent=1 // pred_region
      _
    $region17: #{t5_forward.1} parent=1 // pred_fallthru
      _
    // Predicated region
    $region18: #{t5_forward.1} parent=1 // pred_check
      _
    $region19: #{t5_forward.1} parent=1 // pred_check_branch
      %26 = sbr.rel (0) target = $region21
    $region20: #{t5_forward.1} parent=1 // pred_region
      _
    $region21: #{t5_forward.1} parent=1 // pred_fallthru
      _
    // Predicated region
    $region22: #{t5_forward.1} parent=1 // pred_check
      _
    $region23: #{t5_forward.1} parent=1 // pred_check_branch
      %28 = sbr.rel (0) target = $region25
    $region24: #{t5_forward.1} parent=1 // pred_region
      _
    $region25: #{t5_forward.1} parent=1 // pred_fallthru
      _
    // Predicated region
    $region26: #{t5_forward.1} parent=1 // pred_check
      _
    $region27: #{t5_forward.1} parent=1 // pred_check_branch
      %30 = sbr.rel (0) target = $region29
    $region28: #{t5_forward.1} parent=1 // pred_region
      _
    $region29: #{t5_forward.1} parent=1 // pred_fallthru
      _
    // Predicated region
    $region30: #{t5_forward.1} parent=1 // pred_check
      _
    $region31: #{t5_forward.1} parent=1 // pred_check_branch
      %32 = sbr.rel (0) target = $region33
    $region32: #{t5_forward.1} parent=1 // pred_region
      _
    $region33: #{t5_forward.1} parent=1 // pred_fallthru
      _
    %v33 = vld [vmem:[%s1] sm:$0xff]
    %v34 = vld [vmem:[%s1 + $0x8] sm:$0xff]
    %v35 = vld [vmem:[%s1 + $0x10] sm:$0xff]
    %v36 = vld [vmem:[%s1 + $0x18] sm:$0xff]
    %v37 = vld [vmem:[%s1 + $0x20] sm:$0xff]
    %v38 = vld [vmem:[%s1 + $0x28] sm:$0xff]
    %v39 = vld [vmem:[%s1 + $0x30] sm:$0xff]
    %v40 = vld [vmem:[%s1 + $0x38] sm:$0xff]
    %v41 = vld [vmem:[%s1 + $0x40] sm:$0xff]
    %v42 = vld [vmem:[%s1 + $0x48] sm:$0xff]
    %v43 = vld [vmem:[%s1 + $0x50] sm:$0xff]
    %v44 = vld [vmem:[%s1 + $0x58] sm:$0xff]
    %v45 = vld [vmem:[%s1 + $0x60] sm:$0xff]
    %v46 = vld [vmem:[%s1 + $0x68] sm:$0xff]
    %v47 = vld [vmem:[%s1 + $0x70] sm:$0xff]
    %v48 = vld [vmem:[%s1 + $0x78] sm:$0xff]
    %v49 = vld [vmem:[%s0] sm:$0xff]
    %v50 = vld [vmem:[%s0 + $0x8] sm:$0xff]
    %v51 = vld [vmem:[%s0 + $0x10] sm:$0xff]
    %v52 = vld [vmem:[%s0 + $0x18] sm:$0xff]
    %v53 = vlaneseq
    %v54 = vand.u32 %v53, 127
    %55 = vset.pattern.permute.xlu0 0
    %56 = vperm.xlu0 %55, %v49
    %v57 = vpop.permute.xlu0 %56
    %58 = vset.pattern.permute.xlu0 0
    %59 = vperm.xlu0 %58, %v50
    %v60 = vpop.permute.xlu0 %59
    %61 = vset.pattern.permute.xlu0 0
    %62 = vperm.xlu0 %61, %v51
    %v63 = vpop.permute.xlu0 %62
    %64 = vset.pattern.permute.xlu0 0
    %65 = vperm.xlu0 %64, %v52
    %v66 = vpop.permute.xlu0 %65
    %vm67 = vcmp.eq.s32.totalorder %v54, %v57
    %vm68 = vcmp.eq.s32.totalorder %v54, %v60
    %vm69 = vcmp.eq.s32.totalorder %v54, %v63
    %vm70 = vcmp.eq.s32.totalorder %v54, %v66
    %v71 = vsel %vm67, 1, 0
    %v72 = vsel %vm68, 1, 0
    %v73 = vsel %vm69, 1, 0
    %v74 = vsel %vm70, 1, 0
    %v75 = vcvt.s32.f32 %v71
    %v76 = vcvt.s32.f32 %v72
    %v77 = vcvt.s32.f32 %v73
    %v78 = vcvt.s32.f32 %v74
    %79 = vmatprep.subr.mxu0 0.0
    %80 = vmatpush1.msra.mxu0 %v33
    %81 = vmatprep.subr.mxu0 0.0
    %82 = vmatpush1.msra.mxu0 %v34
    %83 = vmatprep.subr.mxu0 0.0
    %84 = vmatpush1.msra.mxu0 %v35
    %85 = vmatprep.subr.mxu0 0.0
    %86 = vmatpush1.msra.mxu0 %v36
    %87 = vmatprep.subr.mxu0 0.0
    %88 = vmatpush1.msra.mxu0 %v37
    %89 = vmatprep.subr.mxu0 0.0
    %90 = vmatpush1.msra.mxu0 %v38
    %91 = vmatprep.subr.mxu0 0.0
    %92 = vmatpush1.msra.mxu0 %v39
    %93 = vmatprep.subr.mxu0 0.0
    %94 = vmatpush1.msra.mxu0 %v40
    %95 = vmatprep.subr.mxu0 0.0
    %96 = vmatpush1.msra.mxu0 %v41
    %97 = vmatprep.subr.mxu0 0.0
    %98 = vmatpush1.msra.mxu0 %v42
    %99 = vmatprep.subr.mxu0 0.0
    %100 = vmatpush1.msra.mxu0 %v43
    %101 = vmatprep.subr.mxu0 0.0
    %102 = vmatpush1.msra.mxu0 %v44
    %103 = vmatprep.subr.mxu0 0.0
    %104 = vmatpush1.msra.mxu0 %v45
    %105 = vmatprep.subr.mxu0 0.0
    %106 = vmatpush1.msra.mxu0 %v46
    %107 = vmatprep.subr.mxu0 0.0
    %108 = vmatpush1.msra.mxu0 %v47
    %109 = vmatprep.subr.mxu0 0.0
    %110 = vmatpush1.msra.mxu0 %v48
    %111 = vmatprep.subr.mxu0 0.0
    %112 = vmatpush1.msra.mxu0 0.0
    %113 = vmatprep.subr.mxu0 0.0
    %114 = vmatpush1.msra.mxu0 0.0
    %115 = vmatprep.subr.mxu0 0.0
    %116 = vmatpush1.msra.mxu0 0.0
    %117 = vmatprep.subr.mxu0 0.0
    %118 = vmatpush1.msra.mxu0 0.0
    %119 = vmatprep.subr.mxu0 0.0
    %120 = vmatpush1.msra.mxu0 0.0
    %121 = vmatprep.subr.mxu0 0.0
    %122 = vmatpush1.msra.mxu0 0.0
    %123 = vmatprep.subr.mxu0 0.0
    %124 = vmatpush1.msra.mxu0 0.0
    %125 = vmatprep.subr.mxu0 0.0
    %126 = vmatpush1.msra.mxu0 0.0
    %127 = vmatprep.subr.mxu0 0.0
    %128 = vmatpush1.msra.mxu0 0.0
    %129 = vmatprep.subr.mxu0 0.0
    %130 = vmatpush1.msra.mxu0 0.0
    %131 = vmatprep.subr.mxu0 0.0
    %132 = vmatpush1.msra.mxu0 0.0
    %133 = vmatprep.subr.mxu0 0.0
    %134 = vmatpush1.msra.mxu0 0.0
    %135 = vmatprep.subr.mxu0 0.0
    %136 = vmatpush1.msra.mxu0 0.0
    %137 = vmatprep.subr.mxu0 0.0
    %138 = vmatpush1.msra.mxu0 0.0
    %139 = vmatprep.subr.mxu0 0.0
    %140 = vmatpush1.msra.mxu0 0.0
    %141 = vmatprep.subr.mxu0 0.0
    %142 = vmatpush1.msra.mxu0 0.0
    %143 = vmatprep.mubr.f32.mxu0 0.0
    %144 = vmatmul.mubr.f32.gmra.mrb[0].mxu0 %v75
    %v145 = vpop.f32.mrb[0].mxu0
    %v146 = vadd.f32 0.0, %v145
    %v147 = vpop.f32.mrb[0].mxu0
    %148 = vmatprep.mubr.f32.mxu0 0.0
    %149 = vmatmul.mubr.f32.gmra.mrb[0].mxu0 %v76
    %v150 = vpop.f32.mrb[0].mxu0
    %v151 = vadd.f32 0.0, %v150
    %v152 = vpop.f32.mrb[0].mxu0
    %153 = vmatprep.mubr.f32.mxu0 0.0
    %154 = vmatmul.mubr.f32.gmra.mrb[0].mxu0 %v77
    %v155 = vpop.f32.mrb[0].mxu0
    %v156 = vadd.f32 0.0, %v155
    %v157 = vpop.f32.mrb[0].mxu0
    %158 = vmatprep.mubr.f32.mxu0 0.0
    %159 = vmatmul.mubr.f32.gmra.mrb[0].mxu0 %v78
    %v160 = vpop.f32.mrb[0].mxu0
    %v161 = vadd.f32 0.0, %v160
    %v162 = vpop.f32.mrb[0].mxu0
    %163 = vdwg.mxu0
    %v164 = vmul.f32 %v146, %v146
    %v165 = vmul.f32 %v151, %v151
    %vm166 = vcmask 261120
    %v167 = vsel %vm166, %v164, 0.0
    %168 = vadd.xlane.f32.xlu0 %v167
    %v169 = vpop.xlane.xlu0 %168
    %v170 = vsel %vm166, %v165, 0.0
    %171 = vadd.xlane.f32.xlu0 %v170
    %v172 = vpop.xlane.xlu0 %171
    %v173 = vrcp.pop 32.0
    %v174 = vmul.f32 %v169, %v173
    %v175 = vmul.f32 %v172, %v173
    %v176 = vadd.f32 %v174, 1e-06
    %v177 = vadd.f32 %v175, 1e-06
    %v178 = vrsqrt.pop %v176
    %v179 = vrsqrt.pop %v177
    %v180 = vmul.f32 %v146, %v178
    %v181 = vmul.f32 %v151, %v179
    %v182 = vld [vmem:[%s2] sm:$0x1]
    %v183 = vlaneseq
    %v184 = vshrl.u32 %v183, 7
    %v185 = vsub.s32 0, %v184
    %v186 = vrot.slane %v182, %v185
    %v187 = vmul.f32 %v180, %v186
    %v188 = vmul.f32 %v181, %v186
    %v189 = vld [vmem:[%s6] sm:$0xff]
    %v190 = vld [vmem:[%s6 + $0x8] sm:$0xff]
    %v191 = vld [vmem:[%s6 + $0x10] sm:$0xff]
    %v192 = vld [vmem:[%s6 + $0x18] sm:$0xff]
    %v193 = vld [vmem:[%s3] sm:$0xff]
    %v194 = vld [vmem:[%s3 + $0x8] sm:$0xff]
    %v195 = vld [vmem:[%s3 + $0x10] sm:$0xff]
    %v196 = vld [vmem:[%s3 + $0x18] sm:$0xff]
    %v197 = vld [vmem:[%s3 + $0x20] sm:$0xff]
    %v198 = vld [vmem:[%s3 + $0x28] sm:$0xff]
    %v199 = vld [vmem:[%s3 + $0x30] sm:$0xff]
    %v200 = vld [vmem:[%s3 + $0x38] sm:$0xff]
    %v201 = vld [vmem:[%s3 + $0x40] sm:$0xff]
    %v202 = vld [vmem:[%s3 + $0x48] sm:$0xff]
    %v203 = vld [vmem:[%s3 + $0x50] sm:$0xff]
    %v204 = vld [vmem:[%s3 + $0x58] sm:$0xff]
    %v205 = vld [vmem:[%s3 + $0x60] sm:$0xff]
    %v206 = vld [vmem:[%s3 + $0x68] sm:$0xff]
    %v207 = vld [vmem:[%s3 + $0x70] sm:$0xff]
    %v208 = vld [vmem:[%s3 + $0x78] sm:$0xff]
    %s209 = scalar_lea.vmem %s3, 128
    %v210 = vld [vmem:[%s209] sm:$0xff]
    %v211 = vld [vmem:[%s209 + $0x8] sm:$0xff]
    %v212 = vld [vmem:[%s209 + $0x10] sm:$0xff]
    %v213 = vld [vmem:[%s209 + $0x18] sm:$0xff]
    %v214 = vld [vmem:[%s209 + $0x20] sm:$0xff]
    %v215 = vld [vmem:[%s209 + $0x28] sm:$0xff]
    %v216 = vld [vmem:[%s209 + $0x30] sm:$0xff]
    %v217 = vld [vmem:[%s209 + $0x38] sm:$0xff]
    %v218 = vld [vmem:[%s209 + $0x40] sm:$0xff]
    %v219 = vld [vmem:[%s209 + $0x48] sm:$0xff]
    %v220 = vld [vmem:[%s209 + $0x50] sm:$0xff]
    %v221 = vld [vmem:[%s209 + $0x58] sm:$0xff]
    %v222 = vld [vmem:[%s209 + $0x60] sm:$0xff]
    %v223 = vld [vmem:[%s209 + $0x68] sm:$0xff]
    %v224 = vld [vmem:[%s209 + $0x70] sm:$0xff]
    %v225 = vld [vmem:[%s209 + $0x78] sm:$0xff]
    %s226 = scalar_lea.vmem %s3, 256
    %v227 = vld [vmem:[%s226] sm:$0xff]
    %v228 = vld [vmem:[%s226 + $0x8] sm:$0xff]
    %v229 = vld [vmem:[%s226 + $0x10] sm:$0xff]
    %v230 = vld [vmem:[%s226 + $0x18] sm:$0xff]
    %v231 = vld [vmem:[%s226 + $0x20] sm:$0xff]
    %v232 = vld [vmem:[%s226 + $0x28] sm:$0xff]
    %v233 = vld [vmem:[%s226 + $0x30] sm:$0xff]
    %v234 = vld [vmem:[%s226 + $0x38] sm:$0xff]
    %v235 = vld [vmem:[%s226 + $0x40] sm:$0xff]
    %v236 = vld [vmem:[%s226 + $0x48] sm:$0xff]
    %v237 = vld [vmem:[%s226 + $0x50] sm:$0xff]
    %v238 = vld [vmem:[%s226 + $0x58] sm:$0xff]
    %v239 = vld [vmem:[%s226 + $0x60] sm:$0xff]
    %v240 = vld [vmem:[%s226 + $0x68] sm:$0xff]
    %v241 = vld [vmem:[%s226 + $0x70] sm:$0xff]
    %v242 = vld [vmem:[%s226 + $0x78] sm:$0xff]
    %s243 = scalar_lea.vmem %s3, 384
    %v244 = vld [vmem:[%s243] sm:$0xff]
    %v245 = vld [vmem:[%s243 + $0x8] sm:$0xff]
    %v246 = vld [vmem:[%s243 + $0x10] sm:$0xff]
    %v247 = vld [vmem:[%s243 + $0x18] sm:$0xff]
    %v248 = vld [vmem:[%s243 + $0x20] sm:$0xff]
    %v249 = vld [vmem:[%s243 + $0x28] sm:$0xff]
    %v250 = vld [vmem:[%s243 + $0x30] sm:$0xff]
    %v251 = vld [vmem:[%s243 + $0x38] sm:$0xff]
    %v252 = vld [vmem:[%s243 + $0x40] sm:$0xff]
    %v253 = vld [vmem:[%s243 + $0x48] sm:$0xff]
    %v254 = vld [vmem:[%s243 + $0x50] sm:$0xff]
    %v255 = vld [vmem:[%s243 + $0x58] sm:$0xff]
    %v256 = vld [vmem:[%s243 + $0x60] sm:$0xff]
    %v257 = vld [vmem:[%s243 + $0x68] sm:$0xff]
    %v258 = vld [vmem:[%s243 + $0x70] sm:$0xff]
    %v259 = vld [vmem:[%s243 + $0x78] sm:$0xff]
    %v261 = vsel %vm166, %v187, 0
    %263 = vmatprep.subr.mxu0 0.0
    %264 = vmatpush1.msra.mxu0 %v193
    %265 = vmatprep.subr.mxu0 0.0
    %266 = vmatpush1.msra.mxu0 %v194
    %267 = vmatprep.subr.mxu0 0.0
    %268 = vmatpush1.msra.mxu0 %v195
    %269 = vmatprep.subr.mxu0 0.0
    %270 = vmatpush1.msra.mxu0 %v196
    %271 = vmatprep.subr.mxu0 0.0
    %272 = vmatpush1.msra.mxu0 0.0
    %273 = vmatprep.subr.mxu0 0.0
    %274 = vmatpush1.msra.mxu0 0.0
    %275 = vmatprep.subr.mxu0 0.0
    %276 = vmatpush1.msra.mxu0 0.0
    %277 = vmatprep.subr.mxu0 0.0
    %278 = vmatpush1.msra.mxu0 0.0
    %279 = vmatprep.subr.mxu0 0.0
    %280 = vmatpush1.msra.mxu0 0.0
    %281 = vmatprep.subr.mxu0 0.0
    %282 = vmatpush1.msra.mxu0 0.0
    %283 = vmatprep.subr.mxu0 0.0
    %284 = vmatpush1.msra.mxu0 0.0
    %285 = vmatprep.subr.mxu0 0.0
    %286 = vmatpush1.msra.mxu0 0.0
    %287 = vmatprep.subr.mxu0 0.0
    %288 = vmatpush1.msra.mxu0 0.0
    %289 = vmatprep.subr.mxu0 0.0
    %290 = vmatpush1.msra.mxu0 0.0
    %291 = vmatprep.subr.mxu0 0.0
    %292 = vmatpush1.msra.mxu0 0.0
    %293 = vmatprep.subr.mxu0 0.0
    %294 = vmatpush1.msra.mxu0 0.0
    %295 = vmatprep.subr.mxu0 0.0
    %296 = vmatpush1.msra.mxu0 0.0
    %297 = vmatprep.subr.mxu0 0.0
    %298 = vmatpush1.msra.mxu0 0.0
    %299 = vmatprep.subr.mxu0 0.0
    %300 = vmatpush1.msra.mxu0 0.0
    %301 = vmatprep.subr.mxu0 0.0
    %302 = vmatpush1.msra.mxu0 0.0
    %303 = vmatprep.subr.mxu0 0.0
    %304 = vmatpush1.msra.mxu0 0.0
    %305 = vmatprep.subr.mxu0 0.0
    %306 = vmatpush1.msra.mxu0 0.0
    %307 = vmatprep.subr.mxu0 0.0
    %308 = vmatpush1.msra.mxu0 0.0
    %309 = vmatprep.subr.mxu0 0.0
    %310 = vmatpush1.msra.mxu0 0.0
    %311 = vmatprep.subr.mxu0 0.0
    %312 = vmatpush1.msra.mxu0 0.0
    %313 = vmatprep.subr.mxu0 0.0
    %314 = vmatpush1.msra.mxu0 0.0
    %315 = vmatprep.subr.mxu0 0.0
    %316 = vmatpush1.msra.mxu0 0.0
    %317 = vmatprep.subr.mxu0 0.0
    %318 = vmatpush1.msra.mxu0 0.0
    %319 = vmatprep.subr.mxu0 0.0
    %320 = vmatpush1.msra.mxu0 0.0
    %321 = vmatprep.subr.mxu0 0.0
    %322 = vmatpush1.msra.mxu0 0.0
    %323 = vmatprep.subr.mxu0 0.0
    %324 = vmatpush1.msra.mxu0 0.0
    %325 = vmatprep.subr.mxu0 0.0
    %326 = vmatpush1.msra.mxu0 0.0
    %327 = vmatprep.mubr.f32.mxu0 0.0
    %328 = vmatmul.mubr.f32.gmra.mrb[0].mxu0 %v261
    %v329 = vpop.f32.mrb[0].mxu0
    %v330 = vadd.f32 0.0, %v329
    %v331 = vpop.f32.mrb[0].mxu0
    %332 = vdwg.mxu0
    %333 = vmatprep.subr.mxu0 0.0
    %334 = vmatpush1.msra.mxu0 %v197
    %335 = vmatprep.subr.mxu0 0.0
    %336 = vmatpush1.msra.mxu0 %v198
    %337 = vmatprep.subr.mxu0 0.0
    %338 = vmatpush1.msra.mxu0 %v199
    %339 = vmatprep.subr.mxu0 0.0
    %340 = vmatpush1.msra.mxu0 %v200
    %341 = vmatprep.subr.mxu0 0.0
    %342 = vmatpush1.msra.mxu0 0.0
    %343 = vmatprep.subr.mxu0 0.0
    %344 = vmatpush1.msra.mxu0 0.0
    %345 = vmatprep.subr.mxu0 0.0
    %346 = vmatpush1.msra.mxu0 0.0
    %347 = vmatprep.subr.mxu0 0.0
    %348 = vmatpush1.msra.mxu0 0.0
    %349 = vmatprep.subr.mxu0 0.0
    %350 = vmatpush1.msra.mxu0 0.0
    %351 = vmatprep.subr.mxu0 0.0
    %352 = vmatpush1.msra.mxu0 0.0
    %353 = vmatprep.subr.mxu0 0.0
    %354 = vmatpush1.msra.mxu0 0.0
    %355 = vmatprep.subr.mxu0 0.0
    %356 = vmatpush1.msra.mxu0 0.0
    %357 = vmatprep.subr.mxu0 0.0
    %358 = vmatpush1.msra.mxu0 0.0
    %359 = vmatprep.subr.mxu0 0.0
    %360 = vmatpush1.msra.mxu0 0.0
    %361 = vmatprep.subr.mxu0 0.0
    %362 = vmatpush1.msra.mxu0 0.0
    %363 = vmatprep.subr.mxu0 0.0
    %364 = vmatpush1.msra.mxu0 0.0
    %365 = vmatprep.subr.mxu0 0.0
    %366 = vmatpush1.msra.mxu0 0.0
    %367 = vmatprep.subr.mxu0 0.0
    %368 = vmatpush1.msra.mxu0 0.0
    %369 = vmatprep.subr.mxu0 0.0
    %370 = vmatpush1.msra.mxu0 0.0
    %371 = vmatprep.subr.mxu0 0.0
    %372 = vmatpush1.msra.mxu0 0.0
    %373 = vmatprep.subr.mxu0 0.0
    %374 = vmatpush1.msra.mxu0 0.0
    %375 = vmatprep.subr.mxu0 0.0
    %376 = vmatpush1.msra.mxu0 0.0
    %377 = vmatprep.subr.mxu0 0.0
    %378 = vmatpush1.msra.mxu0 0.0
    %379 = vmatprep.subr.mxu0 0.0
    %380 = vmatpush1.msra.mxu0 0.0
    %381 = vmatprep.subr.mxu0 0.0
    %382 = vmatpush1.msra.mxu0 0.0
    %383 = vmatprep.subr.mxu0 0.0
    %384 = vmatpush1.msra.mxu0 0.0
    %385 = vmatprep.subr.mxu0 0.0
    %386 = vmatpush1.msra.mxu0 0.0
    %387 = vmatprep.subr.mxu0 0.0
    %388 = vmatpush1.msra.mxu0 0.0
    %389 = vmatprep.subr.mxu0 0.0
    %390 = vmatpush1.msra.mxu0 0.0
    %391 = vmatprep.subr.mxu0 0.0
    %392 = vmatpush1.msra.mxu0 0.0
    %393 = vmatprep.subr.mxu0 0.0
    %394 = vmatpush1.msra.mxu0 0.0
    %395 = vmatprep.subr.mxu0 0.0
    %396 = vmatpush1.msra.mxu0 0.0
    %397 = vmatprep.mubr.f32.mxu0 0.0
    %398 = vmatmul.mubr.f32.gmra.mrb[0].mxu0 %v261
    %v399 = vpop.f32.mrb[0].mxu0
    %v400 = vadd.f32 0.0, %v399
    %v401 = vpop.f32.mrb[0].mxu0
    %402 = vdwg.mxu0
    %403 = vmatprep.subr.mxu0 0.0
    %404 = vmatpush1.msra.mxu0 %v201
    %405 = vmatprep.subr.mxu0 0.0
    %406 = vmatpush1.msra.mxu0 %v202
    %407 = vmatprep.subr.mxu0 0.0
    %408 = vmatpush1.msra.mxu0 %v203
    %409 = vmatprep.subr.mxu0 0.0
    %410 = vmatpush1.msra.mxu0 %v204
    %411 = vmatprep.subr.mxu0 0.0
    %412 = vmatpush1.msra.mxu0 0.0
    %413 = vmatprep.subr.mxu0 0.0
    %414 = vmatpush1.msra.mxu0 0.0
    %415 = vmatprep.subr.mxu0 0.0
    %416 = vmatpush1.msra.mxu0 0.0
    %417 = vmatprep.subr.mxu0 0.0
    %418 = vmatpush1.msra.mxu0 0.0
    %419 = vmatprep.subr.mxu0 0.0
    %420 = vmatpush1.msra.mxu0 0.0
    %421 = vmatprep.subr.mxu0 0.0
    %422 = vmatpush1.msra.mxu0 0.0
    %423 = vmatprep.subr.mxu0 0.0
    %424 = vmatpush1.msra.mxu0 0.0
    %425 = vmatprep.subr.mxu0 0.0
    %426 = vmatpush1.msra.mxu0 0.0
    %427 = vmatprep.subr.mxu0 0.0
    %428 = vmatpush1.msra.mxu0 0.0
    %429 = vmatprep.subr.mxu0 0.0
    %430 = vmatpush1.msra.mxu0 0.0
    %431 = vmatprep.subr.mxu0 0.0
    %432 = vmatpush1.msra.mxu0 0.0
    %433 = vmatprep.subr.mxu0 0.0
    %434 = vmatpush1.msra.mxu0 0.0
    %435 = vmatprep.subr.mxu0 0.0
    %436 = vmatpush1.msra.mxu0 0.0
    %437 = vmatprep.subr.mxu0 0.0
    %438 = vmatpush1.msra.mxu0 0.0
    %439 = vmatprep.subr.mxu0 0.0
    %440 = vmatpush1.msra.mxu0 0.0
    %441 = vmatprep.subr.mxu0 0.0
    %442 = vmatpush1.msra.mxu0 0.0
    %443 = vmatprep.subr.mxu0 0.0
    %444 = vmatpush1.msra.mxu0 0.0
    %445 = vmatprep.subr.mxu0 0.0
    %446 = vmatpush1.msra.mxu0 0.0
    %447 = vmatprep.subr.mxu0 0.0
    %448 = vmatpush1.msra.mxu0 0.0
    %449 = vmatprep.subr.mxu0 0.0
    %450 = vmatpush1.msra.mxu0 0.0
    %451 = vmatprep.subr.mxu0 0.0
    %452 = vmatpush1.msra.mxu0 0.0
    %453 = vmatprep.subr.mxu0 0.0
    %454 = vmatpush1.msra.mxu0 0.0
    %455 = vmatprep.subr.mxu0 0.0
    %456 = vmatpush1.msra.mxu0 0.0
    %457 = vmatprep.subr.mxu0 0.0
    %458 = vmatpush1.msra.mxu0 0.0
    %459 = vmatprep.subr.mxu0 0.0
    %460 = vmatpush1.msra.mxu0 0.0
    %461 = vmatprep.subr.mxu0 0.0
    %462 = vmatpush1.msra.mxu0 0.0
    %463 = vmatprep.subr.mxu0 0.0
    %464 = vmatpush1.msra.mxu0 0.0
    %465 = vmatprep.subr.mxu0 0.0
    %466 = vmatpush1.msra.mxu0 0.0
    %467 = vmatprep.mubr.f32.mxu0 0.0
    %468 = vmatmul.mubr.f32.gmra.mrb[0].mxu0 %v261
    %v469 = vpop.f32.mrb[0].mxu0
    %v470 = vadd.f32 0.0, %v469
    %v471 = vpop.f32.mrb[0].mxu0
    %472 = vdwg.mxu0
    %473 = vmatprep.subr.mxu0 0.0
    %474 = vmatpush1.msra.mxu0 %v205
    %475 = vmatprep.subr.mxu0 0.0
    %476 = vmatpush1.msra.mxu0 %v206
    %477 = vmatprep.subr.mxu0 0.0
    %478 = vmatpush1.msra.mxu0 %v207
    %479 = vmatprep.subr.mxu0 0.0
    %480 = vmatpush1.msra.mxu0 %v208
    %481 = vmatprep.subr.mxu0 0.0
    %482 = vmatpush1.msra.mxu0 0.0
    %483 = vmatprep.subr.mxu0 0.0
    %484 = vmatpush1.msra.mxu0 0.0
    %485 = vmatprep.subr.mxu0 0.0
    %486 = vmatpush1.msra.mxu0 0.0
    %487 = vmatprep.subr.mxu0 0.0
    %488 = vmatpush1.msra.mxu0 0.0
    %489 = vmatprep.subr.mxu0 0.0
    %490 = vmatpush1.msra.mxu0 0.0
    %491 = vmatprep.subr.mxu0 0.0
    %492 = vmatpush1.msra.mxu0 0.0
    %493 = vmatprep.subr.mxu0 0.0
    %494 = vmatpush1.msra.mxu0 0.0
    %495 = vmatprep.subr.mxu0 0.0
    %496 = vmatpush1.msra.mxu0 0.0
    %497 = vmatprep.subr.mxu0 0.0
    %498 = vmatpush1.msra.mxu0 0.0
    %499 = vmatprep.subr.mxu0 0.0
    %500 = vmatpush1.msra.mxu0 0.0
    %501 = vmatprep.subr.mxu0 0.0
    %502 = vmatpush1.msra.mxu0 0.0
    %503 = vmatprep.subr.mxu0 0.0
    %504 = vmatpush1.msra.mxu0 0.0
    %505 = vmatprep.subr.mxu0 0.0
    %506 = vmatpush1.msra.mxu0 0.0
    %507 = vmatprep.subr.mxu0 0.0
    %508 = vmatpush1.msra.mxu0 0.0
    %509 = vmatprep.subr.mxu0 0.0
    %510 = vmatpush1.msra.mxu0 0.0
    %511 = vmatprep.subr.mxu0 0.0
    %512 = vmatpush1.msra.mxu0 0.0
    %513 = vmatprep.subr.mxu0 0.0
    %514 = vmatpush1.msra.mxu0 0.0
    %515 = vmatprep.subr.mxu0 0.0
    %516 = vmatpush1.msra.mxu0 0.0
    %517 = vmatprep.subr.mxu0 0.0
    %518 = vmatpush1.msra.mxu0 0.0
    %519 = vmatprep.subr.mxu0 0.0
    %520 = vmatpush1.msra.mxu0 0.0
    %521 = vmatprep.subr.mxu0 0.0
    %522 = vmatpush1.msra.mxu0 0.0
    %523 = vmatprep.subr.mxu0 0.0
    %524 = vmatpush1.msra.mxu0 0.0
    %525 = vmatprep.subr.mxu0 0.0
    %526 = vmatpush1.msra.mxu0 0.0
    %527 = vmatprep.subr.mxu0 0.0
    %528 = vmatpush1.msra.mxu0 0.0
    %529 = vmatprep.subr.mxu0 0.0
    %530 = vmatpush1.msra.mxu0 0.0
    %531 = vmatprep.subr.mxu0 0.0
    %532 = vmatpush1.msra.mxu0 0.0
    %533 = vmatprep.subr.mxu0 0.0
    %534 = vmatpush1.msra.mxu0 0.0
    %535 = vmatprep.subr.mxu0 0.0
    %536 = vmatpush1.msra.mxu0 0.0
    %537 = vmatprep.mubr.f32.mxu0 0.0
    %538 = vmatmul.mubr.f32.gmra.mrb[0].mxu0 %v261
    %v539 = vpop.f32.mrb[0].mxu0
    %v540 = vadd.f32 0.0, %v539
    %v541 = vpop.f32.mrb[0].mxu0
    %542 = vdwg.mxu0
    %543 = vmatprep.subr.mxu0 0.0
    %544 = vmatpush1.msra.mxu0 %v210
    %545 = vmatprep.subr.mxu0 0.0
    %546 = vmatpush1.msra.mxu0 %v211
    %547 = vmatprep.subr.mxu0 0.0
    %548 = vmatpush1.msra.mxu0 %v212
    %549 = vmatprep.subr.mxu0 0.0
    %550 = vmatpush1.msra.mxu0 %v213
    %551 = vmatprep.subr.mxu0 0.0
    %552 = vmatpush1.msra.mxu0 0.0
    %553 = vmatprep.subr.mxu0 0.0
    %554 = vmatpush1.msra.mxu0 0.0
    %555 = vmatprep.subr.mxu0 0.0
    %556 = vmatpush1.msra.mxu0 0.0
    %557 = vmatprep.subr.mxu0 0.0
    %558 = vmatpush1.msra.mxu0 0.0
    %559 = vmatprep.subr.mxu0 0.0
    %560 = vmatpush1.msra.mxu0 0.0
    %561 = vmatprep.subr.mxu0 0.0
    %562 = vmatpush1.msra.mxu0 0.0
    %563 = vmatprep.subr.mxu0 0.0
    %564 = vmatpush1.msra.mxu0 0.0
    %565 = vmatprep.subr.mxu0 0.0
    %566 = vmatpush1.msra.mxu0 0.0
    %567 = vmatprep.subr.mxu0 0.0
    %568 = vmatpush1.msra.mxu0 0.0
    %569 = vmatprep.subr.mxu0 0.0
    %570 = vmatpush1.msra.mxu0 0.0
    %571 = vmatprep.subr.mxu0 0.0
    %572 = vmatpush1.msra.mxu0 0.0
    %573 = vmatprep.subr.mxu0 0.0
    %574 = vmatpush1.msra.mxu0 0.0
    %575 = vmatprep.subr.mxu0 0.0
    %576 = vmatpush1.msra.mxu0 0.0
    %577 = vmatprep.subr.mxu0 0.0
    %578 = vmatpush1.msra.mxu0 0.0
    %579 = vmatprep.subr.mxu0 0.0
    %580 = vmatpush1.msra.mxu0 0.0
    %581 = vmatprep.subr.mxu0 0.0
    %582 = vmatpush1.msra.mxu0 0.0
    %583 = vmatprep.subr.mxu0 0.0
    %584 = vmatpush1.msra.mxu0 0.0
    %585 = vmatprep.subr.mxu0 0.0
    %586 = vmatpush1.msra.mxu0 0.0
    %587 = vmatprep.subr.mxu0 0.0
    %588 = vmatpush1.msra.mxu0 0.0
    %589 = vmatprep.subr.mxu0 0.0
    %590 = vmatpush1.msra.mxu0 0.0
    %591 = vmatprep.subr.mxu0 0.0
    %592 = vmatpush1.msra.mxu0 0.0
    %593 = vmatprep.subr.mxu0 0.0
    %594 = vmatpush1.msra.mxu0 0.0
    %595 = vmatprep.subr.mxu0 0.0
    %596 = vmatpush1.msra.mxu0 0.0
    %597 = vmatprep.subr.mxu0 0.0
    %598 = vmatpush1.msra.mxu0 0.0
    %599 = vmatprep.subr.mxu0 0.0
    %600 = vmatpush1.msra.mxu0 0.0
    %601 = vmatprep.subr.mxu0 0.0
    %602 = vmatpush1.msra.mxu0 0.0
    %603 = vmatprep.subr.mxu0 0.0
    %604 = vmatpush1.msra.mxu0 0.0
    %605 = vmatprep.subr.mxu0 0.0
    %606 = vmatpush1.msra.mxu0 0.0
    %607 = vmatprep.mubr.f32.mxu0 0.0
    %608 = vmatmul.mubr.f32.gmra.mrb[0].mxu0 %v261
    %v609 = vpop.f32.mrb[0].mxu0
    %v610 = vadd.f32 0.0, %v609
    %v611 = vpop.f32.mrb[0].mxu0
    %612 = vdwg.mxu0
    %613 = vmatprep.subr.mxu0 0.0
    %614 = vmatpush1.msra.mxu0 %v214
    %615 = vmatprep.subr.mxu0 0.0
    %616 = vmatpush1.msra.mxu0 %v215
    %617 = vmatprep.subr.mxu0 0.0
    %618 = vmatpush1.msra.mxu0 %v216
    %619 = vmatprep.subr.mxu0 0.0
    %620 = vmatpush1.msra.mxu0 %v217
    %621 = vmatprep.subr.mxu0 0.0
    %622 = vmatpush1.msra.mxu0 0.0
    %623 = vmatprep.subr.mxu0 0.0
    %624 = vmatpush1.msra.mxu0 0.0
    %625 = vmatprep.subr.mxu0 0.0
    %626 = vmatpush1.msra.mxu0 0.0
    %627 = vmatprep.subr.mxu0 0.0
    %628 = vmatpush1.msra.mxu0 0.0
    %629 = vmatprep.subr.mxu0 0.0
    %630 = vmatpush1.msra.mxu0 0.0
    %631 = vmatprep.subr.mxu0 0.0
    %632 = vmatpush1.msra.mxu0 0.0
    %633 = vmatprep.subr.mxu0 0.0
    %634 = vmatpush1.msra.mxu0 0.0
    %635 = vmatprep.subr.mxu0 0.0
    %636 = vmatpush1.msra.mxu0 0.0
    %637 = vmatprep.subr.mxu0 0.0
    %638 = vmatpush1.msra.mxu0 0.0
    %639 = vmatprep.subr.mxu0 0.0
    %640 = vmatpush1.msra.mxu0 0.0
    %641 = vmatprep.subr.mxu0 0.0
    %642 = vmatpush1.msra.mxu0 0.0
    %643 = vmatprep.subr.mxu0 0.0
    %644 = vmatpush1.msra.mxu0 0.0
    %645 = vmatprep.subr.mxu0 0.0
    %646 = vmatpush1.msra.mxu0 0.0
    %647 = vmatprep.subr.mxu0 0.0
    %648 = vmatpush1.msra.mxu0 0.0
    %649 = vmatprep.subr.mxu0 0.0
    %650 = vmatpush1.msra.mxu0 0.0
    %651 = vmatprep.subr.mxu0 0.0
    %652 = vmatpush1.msra.mxu0 0.0
    %653 = vmatprep.subr.mxu0 0.0
    %654 = vmatpush1.msra.mxu0 0.0
    %655 = vmatprep.subr.mxu0 0.0
    %656 = vmatpush1.msra.mxu0 0.0
    %657 = vmatprep.subr.mxu0 0.0
    %658 = vmatpush1.msra.mxu0 0.0
    %659 = vmatprep.subr.mxu0 0.0
    %660 = vmatpush1.msra.mxu0 0.0
    %661 = vmatprep.subr.mxu0 0.0
    %662 = vmatpush1.msra.mxu0 0.0
    %663 = vmatprep.subr.mxu0 0.0
    %664 = vmatpush1.msra.mxu0 0.0
    %665 = vmatprep.subr.mxu0 0.0
    %666 = vmatpush1.msra.mxu0 0.0
    %667 = vmatprep.subr.mxu0 0.0
    %668 = vmatpush1.msra.mxu0 0.0
    %669 = vmatprep.subr.mxu0 0.0
    %670 = vmatpush1.msra.mxu0 0.0
    %671 = vmatprep.subr.mxu0 0.0
    %672 = vmatpush1.msra.mxu0 0.0
    %673 = vmatprep.subr.mxu0 0.0
    %674 = vmatpush1.msra.mxu0 0.0
    %675 = vmatprep.subr.mxu0 0.0
    %676 = vmatpush1.msra.mxu0 0.0
    %677 = vmatprep.mubr.f32.mxu0 0.0
    %678 = vmatmul.mubr.f32.gmra.mrb[0].mxu0 %v261
    %v679 = vpop.f32.mrb[0].mxu0
    %v680 = vadd.f32 0.0, %v679
    %v681 = vpop.f32.mrb[0].mxu0
    %682 = vdwg.mxu0
    %683 = vmatprep.subr.mxu0 0.0
    %684 = vmatpush1.msra.mxu0 %v218
    %685 = vmatprep.subr.mxu0 0.0
    %686 = vmatpush1.msra.mxu0 %v219
    %687 = vmatprep.subr.mxu0 0.0
    %688 = vmatpush1.msra.mxu0 %v220
    %689 = vmatprep.subr.mxu0 0.0
    %690 = vmatpush1.msra.mxu0 %v221
    %691 = vmatprep.subr.mxu0 0.0
    %692 = vmatpush1.msra.mxu0 0.0
    %693 = vmatprep.subr.mxu0 0.0
    %694 = vmatpush1.msra.mxu0 0.0
    %695 = vmatprep.subr.mxu0 0.0
    %696 = vmatpush1.msra.mxu0 0.0
    %697 = vmatprep.subr.mxu0 0.0
    %698 = vmatpush1.msra.mxu0 0.0
    %699 = vmatprep.subr.mxu0 0.0
    %700 = vmatpush1.msra.mxu0 0.0
    %701 = vmatprep.subr.mxu0 0.0
    %702 = vmatpush1.msra.mxu0 0.0
    %703 = vmatprep.subr.mxu0 0.0
    %704 = vmatpush1.msra.mxu0 0.0
    %705 = vmatprep.subr.mxu0 0.0
    %706 = vmatpush1.msra.mxu0 0.0
    %707 = vmatprep.subr.mxu0 0.0
    %708 = vmatpush1.msra.mxu0 0.0
    %709 = vmatprep.subr.mxu0 0.0
    %710 = vmatpush1.msra.mxu0 0.0
    %711 = vmatprep.subr.mxu0 0.0
    %712 = vmatpush1.msra.mxu0 0.0
    %713 = vmatprep.subr.mxu0 0.0
    %714 = vmatpush1.msra.mxu0 0.0
    %715 = vmatprep.subr.mxu0 0.0
    %716 = vmatpush1.msra.mxu0 0.0
    %717 = vmatprep.subr.mxu0 0.0
    %718 = vmatpush1.msra.mxu0 0.0
    %719 = vmatprep.subr.mxu0 0.0
    %720 = vmatpush1.msra.mxu0 0.0
    %721 = vmatprep.subr.mxu0 0.0
    %722 = vmatpush1.msra.mxu0 0.0
    %723 = vmatprep.subr.mxu0 0.0
    %724 = vmatpush1.msra.mxu0 0.0
    %725 = vmatprep.subr.mxu0 0.0
    %726 = vmatpush1.msra.mxu0 0.0
    %727 = vmatprep.subr.mxu0 0.0
    %728 = vmatpush1.msra.mxu0 0.0
    %729 = vmatprep.subr.mxu0 0.0
    %730 = vmatpush1.msra.mxu0 0.0
    %731 = vmatprep.subr.mxu0 0.0
    %732 = vmatpush1.msra.mxu0 0.0
    %733 = vmatprep.subr.mxu0 0.0
    %734 = vmatpush1.msra.mxu0 0.0
    %735 = vmatprep.subr.mxu0 0.0
    %736 = vmatpush1.msra.mxu0 0.0
    %737 = vmatprep.subr.mxu0 0.0
    %738 = vmatpush1.msra.mxu0 0.0
    %739 = vmatprep.subr.mxu0 0.0
    %740 = vmatpush1.msra.mxu0 0.0
    %741 = vmatprep.subr.mxu0 0.0
    %742 = vmatpush1.msra.mxu0 0.0
    %743 = vmatprep.subr.mxu0 0.0
    %744 = vmatpush1.msra.mxu0 0.0
    %745 = vmatprep.subr.mxu0 0.0
    %746 = vmatpush1.msra.mxu0 0.0
    %747 = vmatprep.mubr.f32.mxu0 0.0
    %748 = vmatmul.mubr.f32.gmra.mrb[0].mxu0 %v261
    %v749 = vpop.f32.mrb[0].mxu0
    %v750 = vadd.f32 0.0, %v749
    %v751 = vpop.f32.mrb[0].mxu0
    %752 = vdwg.mxu0
    %753 = vmatprep.subr.mxu0 0.0
    %754 = vmatpush1.msra.mxu0 %v222
    %755 = vmatprep.subr.mxu0 0.0
    %756 = vmatpush1.msra.mxu0 %v223
    %757 = vmatprep.subr.mxu0 0.0
    %758 = vmatpush1.msra.mxu0 %v224
    %759 = vmatprep.subr.mxu0 0.0
    %760 = vmatpush1.msra.mxu0 %v225
    %761 = vmatprep.subr.mxu0 0.0
    %762 = vmatpush1.msra.mxu0 0.0
    %763 = vmatprep.subr.mxu0 0.0
    %764 = vmatpush1.msra.mxu0 0.0
    %765 = vmatprep.subr.mxu0 0.0
    %766 = vmatpush1.msra.mxu0 0.0
    %767 = vmatprep.subr.mxu0 0.0
    %768 = vmatpush1.msra.mxu0 0.0
    %769 = vmatprep.subr.mxu0 0.0
    %770 = vmatpush1.msra.mxu0 0.0
    %771 = vmatprep.subr.mxu0 0.0
    %772 = vmatpush1.msra.mxu0 0.0
    %773 = vmatprep.subr.mxu0 0.0
    %774 = vmatpush1.msra.mxu0 0.0
    %775 = vmatprep.subr.mxu0 0.0
    %776 = vmatpush1.msra.mxu0 0.0
    %777 = vmatprep.subr.mxu0 0.0
    %778 = vmatpush1.msra.mxu0 0.0
    %779 = vmatprep.subr.mxu0 0.0
    %780 = vmatpush1.msra.mxu0 0.0
    %781 = vmatprep.subr.mxu0 0.0
    %782 = vmatpush1.msra.mxu0 0.0
    %783 = vmatprep.subr.mxu0 0.0
    %784 = vmatpush1.msra.mxu0 0.0
    %785 = vmatprep.subr.mxu0 0.0
    %786 = vmatpush1.msra.mxu0 0.0
    %787 = vmatprep.subr.mxu0 0.0
    %788 = vmatpush1.msra.mxu0 0.0
    %789 = vmatprep.subr.mxu0 0.0
    %790 = vmatpush1.msra.mxu0 0.0
    %791 = vmatprep.subr.mxu0 0.0
    %792 = vmatpush1.msra.mxu0 0.0
    %793 = vmatprep.subr.mxu0 0.0
    %794 = vmatpush1.msra.mxu0 0.0
    %795 = vmatprep.subr.mxu0 0.0
    %796 = vmatpush1.msra.mxu0 0.0
    %797 = vmatprep.subr.mxu0 0.0
    %798 = vmatpush1.msra.mxu0 0.0
    %799 = vmatprep.subr.mxu0 0.0
    %800 = vmatpush1.msra.mxu0 0.0
    %801 = vmatprep.subr.mxu0 0.0
    %802 = vmatpush1.msra.mxu0 0.0
    %803 = vmatprep.subr.mxu0 0.0
    %804 = vmatpush1.msra.mxu0 0.0
    %805 = vmatprep.subr.mxu0 0.0
    %806 = vmatpush1.msra.mxu0 0.0
    %807 = vmatprep.subr.mxu0 0.0
    %808 = vmatpush1.msra.mxu0 0.0
    %809 = vmatprep.subr.mxu0 0.0
    %810 = vmatpush1.msra.mxu0 0.0
    %811 = vmatprep.subr.mxu0 0.0
    %812 = vmatpush1.msra.mxu0 0.0
    %813 = vmatprep.subr.mxu0 0.0
    %814 = vmatpush1.msra.mxu0 0.0
    %815 = vmatprep.subr.mxu0 0.0
    %816 = vmatpush1.msra.mxu0 0.0
    %817 = vmatprep.mubr.f32.mxu0 0.0
    %818 = vmatmul.mubr.f32.gmra.mrb[0].mxu0 %v261
    %v819 = vpop.f32.mrb[0].mxu0
    %v820 = vadd.f32 0.0, %v819
    %v821 = vpop.f32.mrb[0].mxu0
    %822 = vdwg.mxu0
    %823 = vmatprep.subr.mxu0 0.0
    %824 = vmatpush1.msra.mxu0 %v227
    %825 = vmatprep.subr.mxu0 0.0
    %826 = vmatpush1.msra.mxu0 %v228
    %827 = vmatprep.subr.mxu0 0.0
    %828 = vmatpush1.msra.mxu0 %v229
    %829 = vmatprep.subr.mxu0 0.0
    %830 = vmatpush1.msra.mxu0 %v230
    %831 = vmatprep.subr.mxu0 0.0
    %832 = vmatpush1.msra.mxu0 0.0
    %833 = vmatprep.subr.mxu0 0.0
    %834 = vmatpush1.msra.mxu0 0.0
    %835 = vmatprep.subr.mxu0 0.0
    %836 = vmatpush1.msra.mxu0 0.0
    %837 = vmatprep.subr.mxu0 0.0
    %838 = vmatpush1.msra.mxu0 0.0
    %839 = vmatprep.subr.mxu0 0.0
    %840 = vmatpush1.msra.mxu0 0.0
    %841 = vmatprep.subr.mxu0 0.0
    %842 = vmatpush1.msra.mxu0 0.0
    %843 = vmatprep.subr.mxu0 0.0
    %844 = vmatpush1.msra.mxu0 0.0
    %845 = vmatprep.subr.mxu0 0.0
    %846 = vmatpush1.msra.mxu0 0.0
    %847 = vmatprep.subr.mxu0 0.0
    %848 = vmatpush1.msra.mxu0 0.0
    %849 = vmatprep.subr.mxu0 0.0
    %850 = vmatpush1.msra.mxu0 0.0
    %851 = vmatprep.subr.mxu0 0.0
    %852 = vmatpush1.msra.mxu0 0.0
    %853 = vmatprep.subr.mxu0 0.0
    %854 = vmatpush1.msra.mxu0 0.0
    %855 = vmatprep.subr.mxu0 0.0
    %856 = vmatpush1.msra.mxu0 0.0
    %857 = vmatprep.subr.mxu0 0.0
    %858 = vmatpush1.msra.mxu0 0.0
    %859 = vmatprep.subr.mxu0 0.0
    %860 = vmatpush1.msra.mxu0 0.0
    %861 = vmatprep.subr.mxu0 0.0
    %862 = vmatpush1.msra.mxu0 0.0
    %863 = vmatprep.subr.mxu0 0.0
    %864 = vmatpush1.msra.mxu0 0.0
    %865 = vmatprep.subr.mxu0 0.0
    %866 = vmatpush1.msra.mxu0 0.0
    %867 = vmatprep.subr.mxu0 0.0
    %868 = vmatpush1.msra.mxu0 0.0
    %869 = vmatprep.subr.mxu0 0.0
    %870 = vmatpush1.msra.mxu0 0.0
    %871 = vmatprep.subr.mxu0 0.0
    %872 = vmatpush1.msra.mxu0 0.0
    %873 = vmatprep.subr.mxu0 0.0
    %874 = vmatpush1.msra.mxu0 0.0
    %875 = vmatprep.subr.mxu0 0.0
    %876 = vmatpush1.msra.mxu0 0.0
    %877 = vmatprep.subr.mxu0 0.0
    %878 = vmatpush1.msra.mxu0 0.0
    %879 = vmatprep.subr.mxu0 0.0
    %880 = vmatpush1.msra.mxu0 0.0
    %881 = vmatprep.subr.mxu0 0.0
    %882 = vmatpush1.msra.mxu0 0.0
    %883 = vmatprep.subr.mxu0 0.0
    %884 = vmatpush1.msra.mxu0 0.0
    %885 = vmatprep.subr.mxu0 0.0
    %886 = vmatpush1.msra.mxu0 0.0
    %887 = vmatprep.mubr.f32.mxu0 0.0
    %888 = vmatmul.mubr.f32.gmra.mrb[0].mxu0 %v261
    %v889 = vpop.f32.mrb[0].mxu0
    %v890 = vadd.f32 0.0, %v889
    %v891 = vpop.f32.mrb[0].mxu0
    %892 = vdwg.mxu0
    %893 = vmatprep.subr.mxu0 0.0
    %894 = vmatpush1.msra.mxu0 %v231
    %895 = vmatprep.subr.mxu0 0.0
    %896 = vmatpush1.msra.mxu0 %v232
    %897 = vmatprep.subr.mxu0 0.0
    %898 = vmatpush1.msra.mxu0 %v233
    %899 = vmatprep.subr.mxu0 0.0
    %900 = vmatpush1.msra.mxu0 %v234
    %901 = vmatprep.subr.mxu0 0.0
    %902 = vmatpush1.msra.mxu0 0.0
    %903 = vmatprep.subr.mxu0 0.0
    %904 = vmatpush1.msra.mxu0 0.0
    %905 = vmatprep.subr.mxu0 0.0
    %906 = vmatpush1.msra.mxu0 0.0
    %907 = vmatprep.subr.mxu0 0.0
    %908 = vmatpush1.msra.mxu0 0.0
    %909 = vmatprep.subr.mxu0 0.0
    %910 = vmatpush1.msra.mxu0 0.0
    %911 = vmatprep.subr.mxu0 0.0
    %912 = vmatpush1.msra.mxu0 0.0
    %913 = vmatprep.subr.mxu0 0.0
    %914 = vmatpush1.msra.mxu0 0.0
    %915 = vmatprep.subr.mxu0 0.0
    %916 = vmatpush1.msra.mxu0 0.0
    %917 = vmatprep.subr.mxu0 0.0
    %918 = vmatpush1.msra.mxu0 0.0
    %919 = vmatprep.subr.mxu0 0.0
    %920 = vmatpush1.msra.mxu0 0.0
    %921 = vmatprep.subr.mxu0 0.0
    %922 = vmatpush1.msra.mxu0 0.0
    %923 = vmatprep.subr.mxu0 0.0
    %924 = vmatpush1.msra.mxu0 0.0
    %925 = vmatprep.subr.mxu0 0.0
    %926 = vmatpush1.msra.mxu0 0.0
    %927 = vmatprep.subr.mxu0 0.0
    %928 = vmatpush1.msra.mxu0 0.0
    %929 = vmatprep.subr.mxu0 0.0
    %930 = vmatpush1.msra.mxu0 0.0
    %931 = vmatprep.subr.mxu0 0.0
    %932 = vmatpush1.msra.mxu0 0.0
    %933 = vmatprep.subr.mxu0 0.0
    %934 = vmatpush1.msra.mxu0 0.0
    %935 = vmatprep.subr.mxu0 0.0
    %936 = vmatpush1.msra.mxu0 0.0
    %937 = vmatprep.subr.mxu0 0.0
    %938 = vmatpush1.msra.mxu0 0.0
    %939 = vmatprep.subr.mxu0 0.0
    %940 = vmatpush1.msra.mxu0 0.0
    %941 = vmatprep.subr.mxu0 0.0
    %942 = vmatpush1.msra.mxu0 0.0
    %943 = vmatprep.subr.mxu0 0.0
    %944 = vmatpush1.msra.mxu0 0.0
    %945 = vmatprep.subr.mxu0 0.0
    %946 = vmatpush1.msra.mxu0 0.0
    %947 = vmatprep.subr.mxu0 0.0
    %948 = vmatpush1.msra.mxu0 0.0
    %949 = vmatprep.subr.mxu0 0.0
    %950 = vmatpush1.msra.mxu0 0.0
    %951 = vmatprep.subr.mxu0 0.0
    %952 = vmatpush1.msra.mxu0 0.0
    %953 = vmatprep.subr.mxu0 0.0
    %954 = vmatpush1.msra.mxu0 0.0
    %955 = vmatprep.subr.mxu0 0.0
    %956 = vmatpush1.msra.mxu0 0.0
    %957 = vmatprep.mubr.f32.mxu0 0.0
    %958 = vmatmul.mubr.f32.gmra.mrb[0].mxu0 %v261
    %v959 = vpop.f32.mrb[0].mxu0
    %v960 = vadd.f32 0.0, %v959
    %v961 = vpop.f32.mrb[0].mxu0
    %962 = vdwg.mxu0
    %963 = vmatprep.subr.mxu0 0.0
    %964 = vmatpush1.msra.mxu0 %v235
    %965 = vmatprep.subr.mxu0 0.0
    %966 = vmatpush1.msra.mxu0 %v236
    %967 = vmatprep.subr.mxu0 0.0
    %968 = vmatpush1.msra.mxu0 %v237
    %969 = vmatprep.subr.mxu0 0.0
    %970 = vmatpush1.msra.mxu0 %v238
    %971 = vmatprep.subr.mxu0 0.0
    %972 = vmatpush1.msra.mxu0 0.0
    %973 = vmatprep.subr.mxu0 0.0
    %974 = vmatpush1.msra.mxu0 0.0
    %975 = vmatprep.subr.mxu0 0.0
    %976 = vmatpush1.msra.mxu0 0.0
    %977 = vmatprep.subr.mxu0 0.0
    %978 = vmatpush1.msra.mxu0 0.0
    %979 = vmatprep.subr.mxu0 0.0
    %980 = vmatpush1.msra.mxu0 0.0
    %981 = vmatprep.subr.mxu0 0.0
    %982 = vmatpush1.msra.mxu0 0.0
    %983 = vmatprep.subr.mxu0 0.0
    %984 = vmatpush1.msra.mxu0 0.0
    %985 = vmatprep.subr.mxu0 0.0
    %986 = vmatpush1.msra.mxu0 0.0
    %987 = vmatprep.subr.mxu0 0.0
    %988 = vmatpush1.msra.mxu0 0.0
    %989 = vmatprep.subr.mxu0 0.0
    %990 = vmatpush1.msra.mxu0 0.0
    %991 = vmatprep.subr.mxu0 0.0
    %992 = vmatpush1.msra.mxu0 0.0
    %993 = vmatprep.subr.mxu0 0.0
    %994 = vmatpush1.msra.mxu0 0.0
    %995 = vmatprep.subr.mxu0 0.0
    %996 = vmatpush1.msra.mxu0 0.0
    %997 = vmatprep.subr.mxu0 0.0
    %998 = vmatpush1.msra.mxu0 0.0
    %999 = vmatprep.subr.mxu0 0.0
    %1000 = vmatpush1.msra.mxu0 0.0
    %1001 = vmatprep.subr.mxu0 0.0
    %1002 = vmatpush1.msra.mxu0 0.0
    %1003 = vmatprep.subr.mxu0 0.0
    %1004 = vmatpush1.msra.mxu0 0.0
    %1005 = vmatprep.subr.mxu0 0.0
    %1006 = vmatpush1.msra.mxu0 0.0
    %1007 = vmatprep.subr.mxu0 0.0
    %1008 = vmatpush1.msra.mxu0 0.0
    %1009 = vmatprep.subr.mxu0 0.0
    %1010 = vmatpush1.msra.mxu0 0.0
    %1011 = vmatprep.subr.mxu0 0.0
    %1012 = vmatpush1.msra.mxu0 0.0
    %1013 = vmatprep.subr.mxu0 0.0
    %1014 = vmatpush1.msra.mxu0 0.0
    %1015 = vmatprep.subr.mxu0 0.0
    %1016 = vmatpush1.msra.mxu0 0.0
    %1017 = vmatprep.subr.mxu0 0.0
    %1018 = vmatpush1.msra.mxu0 0.0
    %1019 = vmatprep.subr.mxu0 0.0
    %1020 = vmatpush1.msra.mxu0 0.0
    %1021 = vmatprep.subr.mxu0 0.0
    %1022 = vmatpush1.msra.mxu0 0.0
    %1023 = vmatprep.subr.mxu0 0.0
    %1024 = vmatpush1.msra.mxu0 0.0
    %1025 = vmatprep.subr.mxu0 0.0
    %1026 = vmatpush1.msra.mxu0 0.0
    %1027 = vmatprep.mubr.f32.mxu0 0.0
    %1028 = vmatmul.mubr.f32.gmra.mrb[0].mxu0 %v261
    %v1029 = vpop.f32.mrb[0].mxu0
    %v1030 = vadd.f32 0.0, %v1029
    %v1031 = vpop.f32.mrb[0].mxu0
    %1032 = vdwg.mxu0
    %1033 = vmatprep.subr.mxu0 0.0
    %1034 = vmatpush1.msra.mxu0 %v239
    %1035 = vmatprep.subr.mxu0 0.0
    %1036 = vmatpush1.msra.mxu0 %v240
    %1037 = vmatprep.subr.mxu0 0.0
    %1038 = vmatpush1.msra.mxu0 %v241
    %1039 = vmatprep.subr.mxu0 0.0
    %1040 = vmatpush1.msra.mxu0 %v242
    %1041 = vmatprep.subr.mxu0 0.0
    %1042 = vmatpush1.msra.mxu0 0.0
    %1043 = vmatprep.subr.mxu0 0.0
    %1044 = vmatpush1.msra.mxu0 0.0
    %1045 = vmatprep.subr.mxu0 0.0
    %1046 = vmatpush1.msra.mxu0 0.0
    %1047 = vmatprep.subr.mxu0 0.0
    %1048 = vmatpush1.msra.mxu0 0.0
    %1049 = vmatprep.subr.mxu0 0.0
    %1050 = vmatpush1.msra.mxu0 0.0
    %1051 = vmatprep.subr.mxu0 0.0
    %1052 = vmatpush1.msra.mxu0 0.0
    %1053 = vmatprep.subr.mxu0 0.0
    %1054 = vmatpush1.msra.mxu0 0.0
    %1055 = vmatprep.subr.mxu0 0.0
    %1056 = vmatpush1.msra.mxu0 0.0
    %1057 = vmatprep.subr.mxu0 0.0
    %1058 = vmatpush1.msra.mxu0 0.0
    %1059 = vmatprep.subr.mxu0 0.0
    %1060 = vmatpush1.msra.mxu0 0.0
    %1061 = vmatprep.subr.mxu0 0.0
    %1062 = vmatpush1.msra.mxu0 0.0
    %1063 = vmatprep.subr.mxu0 0.0
    %1064 = vmatpush1.msra.mxu0 0.0
    %1065 = vmatprep.subr.mxu0 0.0
    %1066 = vmatpush1.msra.mxu0 0.0
    %1067 = vmatprep.subr.mxu0 0.0
    %1068 = vmatpush1.msra.mxu0 0.0
    %1069 = vmatprep.subr.mxu0 0.0
    %1070 = vmatpush1.msra.mxu0 0.0
    %1071 = vmatprep.subr.mxu0 0.0
    %1072 = vmatpush1.msra.mxu0 0.0
    %1073 = vmatprep.subr.mxu0 0.0
    %1074 = vmatpush1.msra.mxu0 0.0
    %1075 = vmatprep.subr.mxu0 0.0
    %1076 = vmatpush1.msra.mxu0 0.0
    %1077 = vmatprep.subr.mxu0 0.0
    %1078 = vmatpush1.msra.mxu0 0.0
    %1079 = vmatprep.subr.mxu0 0.0
    %1080 = vmatpush1.msra.mxu0 0.0
    %1081 = vmatprep.subr.mxu0 0.0
    %1082 = vmatpush1.msra.mxu0 0.0
    %1083 = vmatprep.subr.mxu0 0.0
    %1084 = vmatpush1.msra.mxu0 0.0
    %1085 = vmatprep.subr.mxu0 0.0
    %1086 = vmatpush1.msra.mxu0 0.0
    %1087 = vmatprep.subr.mxu0 0.0
    %1088 = vmatpush1.msra.mxu0 0.0
    %1089 = vmatprep.subr.mxu0 0.0
    %1090 = vmatpush1.msra.mxu0 0.0
    %1091 = vmatprep.subr.mxu0 0.0
    %1092 = vmatpush1.msra.mxu0 0.0
    %1093 = vmatprep.subr.mxu0 0.0
    %1094 = vmatpush1.msra.mxu0 0.0
    %1095 = vmatprep.subr.mxu0 0.0
    %1096 = vmatpush1.msra.mxu0 0.0
    %1097 = vmatprep.mubr.f32.mxu0 0.0
    %1098 = vmatmul.mubr.f32.gmra.mrb[0].mxu0 %v261
    %v1099 = vpop.f32.mrb[0].mxu0
    %v1100 = vadd.f32 0.0, %v1099
    %v1101 = vpop.f32.mrb[0].mxu0
    %1102 = vdwg.mxu0
    %vm1103 = vcmask 64512
    %v1105 = vsel %vm1103, %v330, 0
    %v1108 = vsel %vm1103, %v610, 0
    %1110 = vmatprep.subr.mxu0 0.0
    %1111 = vmatpush1.xpose.msra.mxu0 %v1108
    %1112 = vmatprep.subr.mxu0 0.0
    %1113 = vmatpush1.xpose.msra.mxu0 0.0
    %1114 = vmatprep.subr.mxu0 0.0
    %1115 = vmatpush1.xpose.msra.mxu0 0.0
    %1116 = vmatprep.subr.mxu0 0.0
    %1117 = vmatpush1.xpose.msra.mxu0 0.0
    %1118 = vmatprep.subr.mxu0 0.0
    %1119 = vmatpush1.xpose.msra.mxu0 0.0
    %1120 = vmatprep.subr.mxu0 0.0
    %1121 = vmatpush1.xpose.msra.mxu0 0.0
    %1122 = vmatprep.subr.mxu0 0.0
    %1123 = vmatpush1.xpose.msra.mxu0 0.0
    %1124 = vmatprep.subr.mxu0 0.0
    %1125 = vmatpush1.xpose.msra.mxu0 0.0
    %1126 = vmatprep.subr.mxu0 0.0
    %1127 = vmatpush1.xpose.msra.mxu0 0.0
    %1128 = vmatprep.subr.mxu0 0.0
    %1129 = vmatpush1.xpose.msra.mxu0 0.0
    %1130 = vmatprep.subr.mxu0 0.0
    %1131 = vmatpush1.xpose.msra.mxu0 0.0
    %1132 = vmatprep.subr.mxu0 0.0
    %1133 = vmatpush1.xpose.msra.mxu0 0.0
    %1134 = vmatprep.subr.mxu0 0.0
    %1135 = vmatpush1.xpose.msra.mxu0 0.0
    %1136 = vmatprep.subr.mxu0 0.0
    %1137 = vmatpush1.xpose.msra.mxu0 0.0
    %1138 = vmatprep.subr.mxu0 0.0
    %1139 = vmatpush1.xpose.msra.mxu0 0.0
    %1140 = vmatprep.subr.mxu0 0.0
    %1141 = vmatpush1.xpose.msra.mxu0 0.0
    %1142 = vmatprep.subr.mxu0 0.0
    %1143 = vmatpush1.xpose.msra.mxu0 0.0
    %1144 = vmatprep.subr.mxu0 0.0
    %1145 = vmatpush1.xpose.msra.mxu0 0.0
    %1146 = vmatprep.subr.mxu0 0.0
    %1147 = vmatpush1.xpose.msra.mxu0 0.0
    %1148 = vmatprep.subr.mxu0 0.0
    %1149 = vmatpush1.xpose.msra.mxu0 0.0
    %1150 = vmatprep.subr.mxu0 0.0
    %1151 = vmatpush1.xpose.msra.mxu0 0.0
    %1152 = vmatprep.subr.mxu0 0.0
    %1153 = vmatpush1.xpose.msra.mxu0 0.0
    %1154 = vmatprep.subr.mxu0 0.0
    %1155 = vmatpush1.xpose.msra.mxu0 0.0
    %1156 = vmatprep.subr.mxu0 0.0
    %1157 = vmatpush1.xpose.msra.mxu0 0.0
    %1158 = vmatprep.subr.mxu0 0.0
    %1159 = vmatpush1.xpose.msra.mxu0 0.0
    %1160 = vmatprep.subr.mxu0 0.0
    %1161 = vmatpush1.xpose.msra.mxu0 0.0
    %1162 = vmatprep.subr.mxu0 0.0
    %1163 = vmatpush1.xpose.msra.mxu0 0.0
    %1164 = vmatprep.subr.mxu0 0.0
    %1165 = vmatpush1.xpose.msra.mxu0 0.0
    %1166 = vmatprep.subr.mxu0 0.0
    %1167 = vmatpush1.xpose.msra.mxu0 0.0
    %1168 = vmatprep.subr.mxu0 0.0
    %1169 = vmatpush1.xpose.msra.mxu0 0.0
    %1170 = vmatprep.subr.mxu0 0.0
    %1171 = vmatpush1.xpose.msra.mxu0 0.0
    %1172 = vmatprep.subr.mxu0 0.0
    %1173 = vmatpush1.xpose.msra.mxu0 0.0
    %1174 = vmatprep.mubr.f32.mxu0 0.0
    %1175 = vmatmul.mubr.f32.gmra.mrb[0].mxu0 %v1105
    %v1176 = vpop.f32.mrb[0].mxu0
    %v1177 = vadd.f32 %v189, %v1176
    %v1178 = vpop.f32.mrb[0].mxu0
    %1179 = vdwg.mxu0
    %v1181 = vsel %vm1103, %v400, 0
    %v1184 = vsel %vm1103, %v680, 0
    %1186 = vmatprep.subr.mxu0 0.0
    %1187 = vmatpush1.xpose.msra.mxu0 %v1184
    %1188 = vmatprep.subr.mxu0 0.0
    %1189 = vmatpush1.xpose.msra.mxu0 0.0
    %1190 = vmatprep.subr.mxu0 0.0
    %1191 = vmatpush1.xpose.msra.mxu0 0.0
    %1192 = vmatprep.subr.mxu0 0.0
    %1193 = vmatpush1.xpose.msra.mxu0 0.0
    %1194 = vmatprep.subr.mxu0 0.0
    %1195 = vmatpush1.xpose.msra.mxu0 0.0
    %1196 = vmatprep.subr.mxu0 0.0
    %1197 = vmatpush1.xpose.msra.mxu0 0.0
    %1198 = vmatprep.subr.mxu0 0.0
    %1199 = vmatpush1.xpose.msra.mxu0 0.0
    %1200 = vmatprep.subr.mxu0 0.0
    %1201 = vmatpush1.xpose.msra.mxu0 0.0
    %1202 = vmatprep.subr.mxu0 0.0
    %1203 = vmatpush1.xpose.msra.mxu0 0.0
    %1204 = vmatprep.subr.mxu0 0.0
    %1205 = vmatpush1.xpose.msra.mxu0 0.0
    %1206 = vmatprep.subr.mxu0 0.0
    %1207 = vmatpush1.xpose.msra.mxu0 0.0
    %1208 = vmatprep.subr.mxu0 0.0
    %1209 = vmatpush1.xpose.msra.mxu0 0.0
    %1210 = vmatprep.subr.mxu0 0.0
    %1211 = vmatpush1.xpose.msra.mxu0 0.0
    %1212 = vmatprep.subr.mxu0 0.0
    %1213 = vmatpush1.xpose.msra.mxu0 0.0
    %1214 = vmatprep.subr.mxu0 0.0
    %1215 = vmatpush1.xpose.msra.mxu0 0.0
    %1216 = vmatprep.subr.mxu0 0.0
    %1217 = vmatpush1.xpose.msra.mxu0 0.0
    %1218 = vmatprep.subr.mxu0 0.0
    %1219 = vmatpush1.xpose.msra.mxu0 0.0
    %1220 = vmatprep.subr.mxu0 0.0
    %1221 = vmatpush1.xpose.msra.mxu0 0.0
    %1222 = vmatprep.subr.mxu0 0.0
    %1223 = vmatpush1.xpose.msra.mxu0 0.0
    %1224 = vmatprep.subr.mxu0 0.0
    %1225 = vmatpush1.xpose.msra.mxu0 0.0
    %1226 = vmatprep.subr.mxu0 0.0
    %1227 = vmatpush1.xpose.msra.mxu0 0.0
    %1228 = vmatprep.subr.mxu0 0.0
    %1229 = vmatpush1.xpose.msra.mxu0 0.0
    %1230 = vmatprep.subr.mxu0 0.0
    %1231 = vmatpush1.xpose.msra.mxu0 0.0
    %1232 = vmatprep.subr.mxu0 0.0
    %1233 = vmatpush1.xpose.msra.mxu0 0.0
    %1234 = vmatprep.subr.mxu0 0.0
    %1235 = vmatpush1.xpose.msra.mxu0 0.0
    %1236 = vmatprep.subr.mxu0 0.0
    %1237 = vmatpush1.xpose.msra.mxu0 0.0
    %1238 = vmatprep.subr.mxu0 0.0
    %1239 = vmatpush1.xpose.msra.mxu0 0.0
    %1240 = vmatprep.subr.mxu0 0.0
    %1241 = vmatpush1.xpose.msra.mxu0 0.0
    %1242 = vmatprep.subr.mxu0 0.0
    %1243 = vmatpush1.xpose.msra.mxu0 0.0
    %1244 = vmatprep.subr.mxu0 0.0
    %1245 = vmatpush1.xpose.msra.mxu0 0.0
    %1246 = vmatprep.subr.mxu0 0.0
    %1247 = vmatpush1.xpose.msra.mxu0 0.0
    %1248 = vmatprep.subr.mxu0 0.0
    %1249 = vmatpush1.xpose.msra.mxu0 0.0
    %1250 = vmatprep.mubr.f32.mxu0 0.0
    %1251 = vmatmul.mubr.f32.gmra.mrb[0].mxu0 %v1181
    %v1252 = vpop.f32.mrb[0].mxu0
    %v1253 = vadd.f32 %v190, %v1252
    %v1254 = vpop.f32.mrb[0].mxu0
    %1255 = vdwg.mxu0
    %v1257 = vsel %vm1103, %v470, 0
    %v1260 = vsel %vm1103, %v750, 0
    %1262 = vmatprep.subr.mxu0 0.0
    %1263 = vmatpush1.xpose.msra.mxu0 %v1260
    %1264 = vmatprep.subr.mxu0 0.0
    %1265 = vmatpush1.xpose.msra.mxu0 0.0
    %1266 = vmatprep.subr.mxu0 0.0
    %1267 = vmatpush1.xpose.msra.mxu0 0.0
    %1268 = vmatprep.subr.mxu0 0.0
    %1269 = vmatpush1.xpose.msra.mxu0 0.0
    %1270 = vmatprep.subr.mxu0 0.0
    %1271 = vmatpush1.xpose.msra.mxu0 0.0
    %1272 = vmatprep.subr.mxu0 0.0
    %1273 = vmatpush1.xpose.msra.mxu0 0.0
    %1274 = vmatprep.subr.mxu0 0.0
    %1275 = vmatpush1.xpose.msra.mxu0 0.0
    %1276 = vmatprep.subr.mxu0 0.0
    %1277 = vmatpush1.xpose.msra.mxu0 0.0
    %1278 = vmatprep.subr.mxu0 0.0
    %1279 = vmatpush1.xpose.msra.mxu0 0.0
    %1280 = vmatprep.subr.mxu0 0.0
    %1281 = vmatpush1.xpose.msra.mxu0 0.0
    %1282 = vmatprep.subr.mxu0 0.0
    %1283 = vmatpush1.xpose.msra.mxu0 0.0
    %1284 = vmatprep.subr.mxu0 0.0
    %1285 = vmatpush1.xpose.msra.mxu0 0.0
    %1286 = vmatprep.subr.mxu0 0.0
    %1287 = vmatpush1.xpose.msra.mxu0 0.0
    %1288 = vmatprep.subr.mxu0 0.0
    %1289 = vmatpush1.xpose.msra.mxu0 0.0
    %1290 = vmatprep.subr.mxu0 0.0
    %1291 = vmatpush1.xpose.msra.mxu0 0.0
    %1292 = vmatprep.subr.mxu0 0.0
    %1293 = vmatpush1.xpose.msra.mxu0 0.0
    %1294 = vmatprep.subr.mxu0 0.0
    %1295 = vmatpush1.xpose.msra.mxu0 0.0
    %1296 = vmatprep.subr.mxu0 0.0
    %1297 = vmatpush1.xpose.msra.mxu0 0.0
    %1298 = vmatprep.subr.mxu0 0.0
    %1299 = vmatpush1.xpose.msra.mxu0 0.0
    %1300 = vmatprep.subr.mxu0 0.0
    %1301 = vmatpush1.xpose.msra.mxu0 0.0
    %1302 = vmatprep.subr.mxu0 0.0
    %1303 = vmatpush1.xpose.msra.mxu0 0.0
    %1304 = vmatprep.subr.mxu0 0.0
    %1305 = vmatpush1.xpose.msra.mxu0 0.0
    %1306 = vmatprep.subr.mxu0 0.0
    %1307 = vmatpush1.xpose.msra.mxu0 0.0
    %1308 = vmatprep.subr.mxu0 0.0
    %1309 = vmatpush1.xpose.msra.mxu0 0.0
    %1310 = vmatprep.subr.mxu0 0.0
    %1311 = vmatpush1.xpose.msra.mxu0 0.0
    %1312 = vmatprep.subr.mxu0 0.0
    %1313 = vmatpush1.xpose.msra.mxu0 0.0
    %1314 = vmatprep.subr.mxu0 0.0
    %1315 = vmatpush1.xpose.msra.mxu0 0.0
    %1316 = vmatprep.subr.mxu0 0.0
    %1317 = vmatpush1.xpose.msra.mxu0 0.0
    %1318 = vmatprep.subr.mxu0 0.0
    %1319 = vmatpush1.xpose.msra.mxu0 0.0
    %1320 = vmatprep.subr.mxu0 0.0
    %1321 = vmatpush1.xpose.msra.mxu0 0.0
    %1322 = vmatprep.subr.mxu0 0.0
    %1323 = vmatpush1.xpose.msra.mxu0 0.0
    %1324 = vmatprep.subr.mxu0 0.0
    %1325 = vmatpush1.xpose.msra.mxu0 0.0
    %1326 = vmatprep.mubr.f32.mxu0 0.0
    %1327 = vmatmul.mubr.f32.gmra.mrb[0].mxu0 %v1257
    %v1328 = vpop.f32.mrb[0].mxu0
    %v1329 = vadd.f32 %v191, %v1328
    %v1330 = vpop.f32.mrb[0].mxu0
    %1331 = vdwg.mxu0
    %v1333 = vsel %vm1103, %v540, 0
    %v1336 = vsel %vm1103, %v820, 0
    %1338 = vmatprep.subr.mxu0 0.0
    %1339 = vmatpush1.xpose.msra.mxu0 %v1336
    %1340 = vmatprep.subr.mxu0 0.0
    %1341 = vmatpush1.xpose.msra.mxu0 0.0
    %1342 = vmatprep.subr.mxu0 0.0
    %1343 = vmatpush1.xpose.msra.mxu0 0.0
    %1344 = vmatprep.subr.mxu0 0.0
    %1345 = vmatpush1.xpose.msra.mxu0 0.0
    %1346 = vmatprep.subr.mxu0 0.0
    %1347 = vmatpush1.xpose.msra.mxu0 0.0
    %1348 = vmatprep.subr.mxu0 0.0
    %1349 = vmatpush1.xpose.msra.mxu0 0.0
    %1350 = vmatprep.subr.mxu0 0.0
    %1351 = vmatpush1.xpose.msra.mxu0 0.0
    %1352 = vmatprep.subr.mxu0 0.0
    %1353 = vmatpush1.xpose.msra.mxu0 0.0
    %1354 = vmatprep.subr.mxu0 0.0
    %1355 = vmatpush1.xpose.msra.mxu0 0.0
    %1356 = vmatprep.subr.mxu0 0.0
    %1357 = vmatpush1.xpose.msra.mxu0 0.0
    %1358 = vmatprep.subr.mxu0 0.0
    %1359 = vmatpush1.xpose.msra.mxu0 0.0
    %1360 = vmatprep.subr.mxu0 0.0
    %1361 = vmatpush1.xpose.msra.mxu0 0.0
    %1362 = vmatprep.subr.mxu0 0.0
    %1363 = vmatpush1.xpose.msra.mxu0 0.0
    %1364 = vmatprep.subr.mxu0 0.0
    %1365 = vmatpush1.xpose.msra.mxu0 0.0
    %1366 = vmatprep.subr.mxu0 0.0
    %1367 = vmatpush1.xpose.msra.mxu0 0.0
    %1368 = vmatprep.subr.mxu0 0.0
    %1369 = vmatpush1.xpose.msra.mxu0 0.0
    %1370 = vmatprep.subr.mxu0 0.0
    %1371 = vmatpush1.xpose.msra.mxu0 0.0
    %1372 = vmatprep.subr.mxu0 0.0
    %1373 = vmatpush1.xpose.msra.mxu0 0.0
    %1374 = vmatprep.subr.mxu0 0.0
    %1375 = vmatpush1.xpose.msra.mxu0 0.0
    %1376 = vmatprep.subr.mxu0 0.0
    %1377 = vmatpush1.xpose.msra.mxu0 0.0
    %1378 = vmatprep.subr.mxu0 0.0
    %1379 = vmatpush1.xpose.msra.mxu0 0.0
    %1380 = vmatprep.subr.mxu0 0.0
    %1381 = vmatpush1.xpose.msra.mxu0 0.0
    %1382 = vmatprep.subr.mxu0 0.0
    %1383 = vmatpush1.xpose.msra.mxu0 0.0
    %1384 = vmatprep.subr.mxu0 0.0
    %1385 = vmatpush1.xpose.msra.mxu0 0.0
    %1386 = vmatprep.subr.mxu0 0.0
    %1387 = vmatpush1.xpose.msra.mxu0 0.0
    %1388 = vmatprep.subr.mxu0 0.0
    %1389 = vmatpush1.xpose.msra.mxu0 0.0
    %1390 = vmatprep.subr.mxu0 0.0
    %1391 = vmatpush1.xpose.msra.mxu0 0.0
    %1392 = vmatprep.subr.mxu0 0.0
    %1393 = vmatpush1.xpose.msra.mxu0 0.0
    %1394 = vmatprep.subr.mxu0 0.0
    %1395 = vmatpush1.xpose.msra.mxu0 0.0
    %1396 = vmatprep.subr.mxu0 0.0
    %1397 = vmatpush1.xpose.msra.mxu0 0.0
    %1398 = vmatprep.subr.mxu0 0.0
    %1399 = vmatpush1.xpose.msra.mxu0 0.0
    %1400 = vmatprep.subr.mxu0 0.0
    %1401 = vmatpush1.xpose.msra.mxu0 0.0
    %1402 = vmatprep.mubr.f32.mxu0 0.0
    %1403 = vmatmul.mubr.f32.gmra.mrb[0].mxu0 %v1333
    %v1404 = vpop.f32.mrb[0].mxu0
    %v1405 = vadd.f32 %v192, %v1404
    %v1406 = vpop.f32.mrb[0].mxu0
    %1407 = vdwg.mxu0
    %v1408 = vsel %vm1103, %v1177, -inf
    %1409 = vmax.xlane.f32.xlu0 %v1408
    %v1410 = vpop.xlane.xlu0 %1409
    %v1411 = vsel %vm1103, %v1253, -inf
    %1412 = vmax.xlane.f32.xlu0 %v1411
    %v1413 = vpop.xlane.xlu0 %1412
    %v1414 = vsel %vm1103, %v1329, -inf
    %1415 = vmax.xlane.f32.xlu0 %v1414
    %v1416 = vpop.xlane.xlu0 %1415
    %v1417 = vsel %vm1103, %v1405, -inf
    %1418 = vmax.xlane.f32.xlu0 %v1417
    %v1419 = vpop.xlane.xlu0 %1418
    %v1420 = vsub.f32 %v1177, %v1410
    %v1421 = vsub.f32 %v1253, %v1413
    %v1422 = vsub.f32 %v1329, %v1416
    %v1423 = vsub.f32 %v1405, %v1419
    %v1424 = vmul.f32 %v1420, 1.442695
    %v1425 = vpow.pop %v1424
    %v1426 = vmul.f32 %v1421, 1.442695
    %v1427 = vpow.pop %v1426
    %v1428 = vmul.f32 %v1422, 1.442695
    %v1429 = vpow.pop %v1428
    %v1430 = vmul.f32 %v1423, 1.442695
    %v1431 = vpow.pop %v1430
    %v1432 = vsel %vm1103, %v1425, 0.0
    %1433 = vadd.xlane.f32.xlu0 %v1432
    %v1434 = vpop.xlane.xlu0 %1433
    %v1435 = vsel %vm1103, %v1427, 0.0
    %1436 = vadd.xlane.f32.xlu0 %v1435
    %v1437 = vpop.xlane.xlu0 %1436
    %v1438 = vsel %vm1103, %v1429, 0.0
    %1439 = vadd.xlane.f32.xlu0 %v1438
    %v1440 = vpop.xlane.xlu0 %1439
    %v1441 = vsel %vm1103, %v1431, 0.0
    %1442 = vadd.xlane.f32.xlu0 %v1441
    %v1443 = vpop.xlane.xlu0 %1442
    %v1444 = vrcp.pop %v1434
    %v1445 = vrcp.pop %v1437
    %v1446 = vrcp.pop %v1440
    %v1447 = vrcp.pop %v1443
    %v1448 = vmul.f32 %v1425, %v1444
    %v1449 = vmul.f32 %v1427, %v1445
    %v1450 = vmul.f32 %v1429, %v1446
    %v1451 = vmul.f32 %v1431, %v1447
    %v1453 = vsel %vm1103, %v1448, 0
    %1455 = vmatprep.subr.mxu0 0.0
    %1456 = vmatpush1.msra.mxu0 %v890
    %1457 = vmatprep.subr.mxu0 0.0
    %1458 = vmatpush1.msra.mxu0 0.0
    %1459 = vmatprep.subr.mxu0 0.0
    %1460 = vmatpush1.msra.mxu0 0.0
    %1461 = vmatprep.subr.mxu0 0.0
    %1462 = vmatpush1.msra.mxu0 0.0
    %1463 = vmatprep.subr.mxu0 0.0
    %1464 = vmatpush1.msra.mxu0 0.0
    %1465 = vmatprep.subr.mxu0 0.0
    %1466 = vmatpush1.msra.mxu0 0.0
    %1467 = vmatprep.subr.mxu0 0.0
    %1468 = vmatpush1.msra.mxu0 0.0
    %1469 = vmatprep.subr.mxu0 0.0
    %1470 = vmatpush1.msra.mxu0 0.0
    %1471 = vmatprep.subr.mxu0 0.0
    %1472 = vmatpush1.msra.mxu0 0.0
    %1473 = vmatprep.subr.mxu0 0.0
    %1474 = vmatpush1.msra.mxu0 0.0
    %1475 = vmatprep.subr.mxu0 0.0
    %1476 = vmatpush1.msra.mxu0 0.0
    %1477 = vmatprep.subr.mxu0 0.0
    %1478 = vmatpush1.msra.mxu0 0.0
    %1479 = vmatprep.subr.mxu0 0.0
    %1480 = vmatpush1.msra.mxu0 0.0
    %1481 = vmatprep.subr.mxu0 0.0
    %1482 = vmatpush1.msra.mxu0 0.0
    %1483 = vmatprep.subr.mxu0 0.0
    %1484 = vmatpush1.msra.mxu0 0.0
    %1485 = vmatprep.subr.mxu0 0.0
    %1486 = vmatpush1.msra.mxu0 0.0
    %1487 = vmatprep.subr.mxu0 0.0
    %1488 = vmatpush1.msra.mxu0 0.0
    %1489 = vmatprep.subr.mxu0 0.0
    %1490 = vmatpush1.msra.mxu0 0.0
    %1491 = vmatprep.subr.mxu0 0.0
    %1492 = vmatpush1.msra.mxu0 0.0
    %1493 = vmatprep.subr.mxu0 0.0
    %1494 = vmatpush1.msra.mxu0 0.0
    %1495 = vmatprep.subr.mxu0 0.0
    %1496 = vmatpush1.msra.mxu0 0.0
    %1497 = vmatprep.subr.mxu0 0.0
    %1498 = vmatpush1.msra.mxu0 0.0
    %1499 = vmatprep.subr.mxu0 0.0
    %1500 = vmatpush1.msra.mxu0 0.0
    %1501 = vmatprep.subr.mxu0 0.0
    %1502 = vmatpush1.msra.mxu0 0.0
    %1503 = vmatprep.subr.mxu0 0.0
    %1504 = vmatpush1.msra.mxu0 0.0
    %1505 = vmatprep.subr.mxu0 0.0
    %1506 = vmatpush1.msra.mxu0 0.0
    %1507 = vmatprep.subr.mxu0 0.0
    %1508 = vmatpush1.msra.mxu0 0.0
    %1509 = vmatprep.subr.mxu0 0.0
    %1510 = vmatpush1.msra.mxu0 0.0
    %1511 = vmatprep.subr.mxu0 0.0
    %1512 = vmatpush1.msra.mxu0 0.0
    %1513 = vmatprep.subr.mxu0 0.0
    %1514 = vmatpush1.msra.mxu0 0.0
    %1515 = vmatprep.subr.mxu0 0.0
    %1516 = vmatpush1.msra.mxu0 0.0
    %1517 = vmatprep.subr.mxu0 0.0
    %1518 = vmatpush1.msra.mxu0 0.0
    %1519 = vmatprep.mubr.f32.mxu0 0.0
    %1520 = vmatmul.mubr.f32.gmra.mrb[0].mxu0 %v1453
    %v1521 = vpop.f32.mrb[0].mxu0
    %v1522 = vadd.f32 0.0, %v1521
    %v1523 = vpop.f32.mrb[0].mxu0
    %1524 = vdwg.mxu0
    %v1526 = vsel %vm1103, %v1449, 0
    %1528 = vmatprep.subr.mxu0 0.0
    %1529 = vmatpush1.msra.mxu0 %v960
    %1530 = vmatprep.subr.mxu0 0.0
    %1531 = vmatpush1.msra.mxu0 0.0
    %1532 = vmatprep.subr.mxu0 0.0
    %1533 = vmatpush1.msra.mxu0 0.0
    %1534 = vmatprep.subr.mxu0 0.0
    %1535 = vmatpush1.msra.mxu0 0.0
    %1536 = vmatprep.subr.mxu0 0.0
    %1537 = vmatpush1.msra.mxu0 0.0
    %1538 = vmatprep.subr.mxu0 0.0
    %1539 = vmatpush1.msra.mxu0 0.0
    %1540 = vmatprep.subr.mxu0 0.0
    %1541 = vmatpush1.msra.mxu0 0.0
    %1542 = vmatprep.subr.mxu0 0.0
    %1543 = vmatpush1.msra.mxu0 0.0
    %1544 = vmatprep.subr.mxu0 0.0
    %1545 = vmatpush1.msra.mxu0 0.0
    %1546 = vmatprep.subr.mxu0 0.0
    %1547 = vmatpush1.msra.mxu0 0.0
    %1548 = vmatprep.subr.mxu0 0.0
    %1549 = vmatpush1.msra.mxu0 0.0
    %1550 = vmatprep.subr.mxu0 0.0
    %1551 = vmatpush1.msra.mxu0 0.0
    %1552 = vmatprep.subr.mxu0 0.0
    %1553 = vmatpush1.msra.mxu0 0.0
    %1554 = vmatprep.subr.mxu0 0.0
    %1555 = vmatpush1.msra.mxu0 0.0
    %1556 = vmatprep.subr.mxu0 0.0
    %1557 = vmatpush1.msra.mxu0 0.0
    %1558 = vmatprep.subr.mxu0 0.0
    %1559 = vmatpush1.msra.mxu0 0.0
    %1560 = vmatprep.subr.mxu0 0.0
    %1561 = vmatpush1.msra.mxu0 0.0
    %1562 = vmatprep.subr.mxu0 0.0
    %1563 = vmatpush1.msra.mxu0 0.0
    %1564 = vmatprep.subr.mxu0 0.0
    %1565 = vmatpush1.msra.mxu0 0.0
    %1566 = vmatprep.subr.mxu0 0.0
    %1567 = vmatpush1.msra.mxu0 0.0
    %1568 = vmatprep.subr.mxu0 0.0
    %1569 = vmatpush1.msra.mxu0 0.0
    %1570 = vmatprep.subr.mxu0 0.0
    %1571 = vmatpush1.msra.mxu0 0.0
    %1572 = vmatprep.subr.mxu0 0.0
    %1573 = vmatpush1.msra.mxu0 0.0
    %1574 = vmatprep.subr.mxu0 0.0
    %1575 = vmatpush1.msra.mxu0 0.0
    %1576 = vmatprep.subr.mxu0 0.0
    %1577 = vmatpush1.msra.mxu0 0.0
    %1578 = vmatprep.subr.mxu0 0.0
    %1579 = vmatpush1.msra.mxu0 0.0
    %1580 = vmatprep.subr.mxu0 0.0
    %1581 = vmatpush1.msra.mxu0 0.0
    %1582 = vmatprep.subr.mxu0 0.0
    %1583 = vmatpush1.msra.mxu0 0.0
    %1584 = vmatprep.subr.mxu0 0.0
    %1585 = vmatpush1.msra.mxu0 0.0
    %1586 = vmatprep.subr.mxu0 0.0
    %1587 = vmatpush1.msra.mxu0 0.0
    %1588 = vmatprep.subr.mxu0 0.0
    %1589 = vmatpush1.msra.mxu0 0.0
    %1590 = vmatprep.subr.mxu0 0.0
    %1591 = vmatpush1.msra.mxu0 0.0
    %1592 = vmatprep.mubr.f32.mxu0 0.0
    %1593 = vmatmul.mubr.f32.gmra.mrb[0].mxu0 %v1526
    %v1594 = vpop.f32.mrb[0].mxu0
    %v1595 = vadd.f32 0.0, %v1594
    %v1596 = vpop.f32.mrb[0].mxu0
    %1597 = vdwg.mxu0
    %v1599 = vsel %vm1103, %v1450, 0
    %1601 = vmatprep.subr.mxu0 0.0
    %1602 = vmatpush1.msra.mxu0 %v1030
    %1603 = vmatprep.subr.mxu0 0.0
    %1604 = vmatpush1.msra.mxu0 0.0
    %1605 = vmatprep.subr.mxu0 0.0
    %1606 = vmatpush1.msra.mxu0 0.0
    %1607 = vmatprep.subr.mxu0 0.0
    %1608 = vmatpush1.msra.mxu0 0.0
    %1609 = vmatprep.subr.mxu0 0.0
    %1610 = vmatpush1.msra.mxu0 0.0
    %1611 = vmatprep.subr.mxu0 0.0
    %1612 = vmatpush1.msra.mxu0 0.0
    %1613 = vmatprep.subr.mxu0 0.0
    %1614 = vmatpush1.msra.mxu0 0.0
    %1615 = vmatprep.subr.mxu0 0.0
    %1616 = vmatpush1.msra.mxu0 0.0
    %1617 = vmatprep.subr.mxu0 0.0
    %1618 = vmatpush1.msra.mxu0 0.0
    %1619 = vmatprep.subr.mxu0 0.0
    %1620 = vmatpush1.msra.mxu0 0.0
    %1621 = vmatprep.subr.mxu0 0.0
    %1622 = vmatpush1.msra.mxu0 0.0
    %1623 = vmatprep.subr.mxu0 0.0
    %1624 = vmatpush1.msra.mxu0 0.0
    %1625 = vmatprep.subr.mxu0 0.0
    %1626 = vmatpush1.msra.mxu0 0.0
    %1627 = vmatprep.subr.mxu0 0.0
    %1628 = vmatpush1.msra.mxu0 0.0
    %1629 = vmatprep.subr.mxu0 0.0
    %1630 = vmatpush1.msra.mxu0 0.0
    %1631 = vmatprep.subr.mxu0 0.0
    %1632 = vmatpush1.msra.mxu0 0.0
    %1633 = vmatprep.subr.mxu0 0.0
    %1634 = vmatpush1.msra.mxu0 0.0
    %1635 = vmatprep.subr.mxu0 0.0
    %1636 = vmatpush1.msra.mxu0 0.0
    %1637 = vmatprep.subr.mxu0 0.0
    %1638 = vmatpush1.msra.mxu0 0.0
    %1639 = vmatprep.subr.mxu0 0.0
    %1640 = vmatpush1.msra.mxu0 0.0
    %1641 = vmatprep.subr.mxu0 0.0
    %1642 = vmatpush1.msra.mxu0 0.0
    %1643 = vmatprep.subr.mxu0 0.0
    %1644 = vmatpush1.msra.mxu0 0.0
    %1645 = vmatprep.subr.mxu0 0.0
    %1646 = vmatpush1.msra.mxu0 0.0
    %1647 = vmatprep.subr.mxu0 0.0
    %1648 = vmatpush1.msra.mxu0 0.0
    %1649 = vmatprep.subr.mxu0 0.0
    %1650 = vmatpush1.msra.mxu0 0.0
    %1651 = vmatprep.subr.mxu0 0.0
    %1652 = vmatpush1.msra.mxu0 0.0
    %1653 = vmatprep.subr.mxu0 0.0
    %1654 = vmatpush1.msra.mxu0 0.0
    %1655 = vmatprep.subr.mxu0 0.0
    %1656 = vmatpush1.msra.mxu0 0.0
    %1657 = vmatprep.subr.mxu0 0.0
    %1658 = vmatpush1.msra.mxu0 0.0
    %1659 = vmatprep.subr.mxu0 0.0
    %1660 = vmatpush1.msra.mxu0 0.0
    %1661 = vmatprep.subr.mxu0 0.0
    %1662 = vmatpush1.msra.mxu0 0.0
    %1663 = vmatprep.subr.mxu0 0.0
    %1664 = vmatpush1.msra.mxu0 0.0
    %1665 = vmatprep.mubr.f32.mxu0 0.0
    %1666 = vmatmul.mubr.f32.gmra.mrb[0].mxu0 %v1599
    %v1667 = vpop.f32.mrb[0].mxu0
    %v1668 = vadd.f32 0.0, %v1667
    %v1669 = vpop.f32.mrb[0].mxu0
    %1670 = vdwg.mxu0
    %v1672 = vsel %vm1103, %v1451, 0
    %1674 = vmatprep.subr.mxu0 0.0
    %1675 = vmatpush1.msra.mxu0 %v1100
    %1676 = vmatprep.subr.mxu0 0.0
    %1677 = vmatpush1.msra.mxu0 0.0
    %1678 = vmatprep.subr.mxu0 0.0
    %1679 = vmatpush1.msra.mxu0 0.0
    %1680 = vmatprep.subr.mxu0 0.0
    %1681 = vmatpush1.msra.mxu0 0.0
    %1682 = vmatprep.subr.mxu0 0.0
    %1683 = vmatpush1.msra.mxu0 0.0
    %1684 = vmatprep.subr.mxu0 0.0
    %1685 = vmatpush1.msra.mxu0 0.0
    %1686 = vmatprep.subr.mxu0 0.0
    %1687 = vmatpush1.msra.mxu0 0.0
    %1688 = vmatprep.subr.mxu0 0.0
    %1689 = vmatpush1.msra.mxu0 0.0
    %1690 = vmatprep.subr.mxu0 0.0
    %1691 = vmatpush1.msra.mxu0 0.0
    %1692 = vmatprep.subr.mxu0 0.0
    %1693 = vmatpush1.msra.mxu0 0.0
    %1694 = vmatprep.subr.mxu0 0.0
    %1695 = vmatpush1.msra.mxu0 0.0
    %1696 = vmatprep.subr.mxu0 0.0
    %1697 = vmatpush1.msra.mxu0 0.0
    %1698 = vmatprep.subr.mxu0 0.0
    %1699 = vmatpush1.msra.mxu0 0.0
    %1700 = vmatprep.subr.mxu0 0.0
    %1701 = vmatpush1.msra.mxu0 0.0
    %1702 = vmatprep.subr.mxu0 0.0
    %1703 = vmatpush1.msra.mxu0 0.0
    %1704 = vmatprep.subr.mxu0 0.0
    %1705 = vmatpush1.msra.mxu0 0.0
    %1706 = vmatprep.subr.mxu0 0.0
    %1707 = vmatpush1.msra.mxu0 0.0
    %1708 = vmatprep.subr.mxu0 0.0
    %1709 = vmatpush1.msra.mxu0 0.0
    %1710 = vmatprep.subr.mxu0 0.0
    %1711 = vmatpush1.msra.mxu0 0.0
    %1712 = vmatprep.subr.mxu0 0.0
    %1713 = vmatpush1.msra.mxu0 0.0
    %1714 = vmatprep.subr.mxu0 0.0
    %1715 = vmatpush1.msra.mxu0 0.0
    %1716 = vmatprep.subr.mxu0 0.0
    %1717 = vmatpush1.msra.mxu0 0.0
    %1718 = vmatprep.subr.mxu0 0.0
    %1719 = vmatpush1.msra.mxu0 0.0
    %1720 = vmatprep.subr.mxu0 0.0
    %1721 = vmatpush1.msra.mxu0 0.0
    %1722 = vmatprep.subr.mxu0 0.0
    %1723 = vmatpush1.msra.mxu0 0.0
    %1724 = vmatprep.subr.mxu0 0.0
    %1725 = vmatpush1.msra.mxu0 0.0
    %1726 = vmatprep.subr.mxu0 0.0
    %1727 = vmatpush1.msra.mxu0 0.0
    %1728 = vmatprep.subr.mxu0 0.0
    %1729 = vmatpush1.msra.mxu0 0.0
    %1730 = vmatprep.subr.mxu0 0.0
    %1731 = vmatpush1.msra.mxu0 0.0
    %1732 = vmatprep.subr.mxu0 0.0
    %1733 = vmatpush1.msra.mxu0 0.0
    %1734 = vmatprep.subr.mxu0 0.0
    %1735 = vmatpush1.msra.mxu0 0.0
    %1736 = vmatprep.subr.mxu0 0.0
    %1737 = vmatpush1.msra.mxu0 0.0
    %1738 = vmatprep.mubr.f32.mxu0 0.0
    %1739 = vmatmul.mubr.f32.gmra.mrb[0].mxu0 %v1672
    %v1740 = vpop.f32.mrb[0].mxu0
    %v1741 = vadd.f32 0.0, %v1740
    %v1742 = vpop.f32.mrb[0].mxu0
    %1743 = vdwg.mxu0
    %v1745 = vsel %vm1103, %v1522, 0
    %v1748 = vsel %vm1103, %v244, 0
    %v1751 = vsel %vm1103, %v245, 0
    %v1754 = vsel %vm1103, %v246, 0
    %v1757 = vsel %vm1103, %v247, 0
    %1759 = vmatprep.subr.mxu0 0.0
    %1760 = vmatpush1.xpose.msra.mxu0 %v1748
    %1761 = vmatprep.subr.mxu0 0.0
    %1762 = vmatpush1.xpose.msra.mxu0 %v1751
    %1763 = vmatprep.subr.mxu0 0.0
    %1764 = vmatpush1.xpose.msra.mxu0 %v1754
    %1765 = vmatprep.subr.mxu0 0.0
    %1766 = vmatpush1.xpose.msra.mxu0 %v1757
    %1767 = vmatprep.subr.mxu0 0.0
    %1768 = vmatpush1.xpose.msra.mxu0 0.0
    %1769 = vmatprep.subr.mxu0 0.0
    %1770 = vmatpush1.xpose.msra.mxu0 0.0
    %1771 = vmatprep.subr.mxu0 0.0
    %1772 = vmatpush1.xpose.msra.mxu0 0.0
    %1773 = vmatprep.subr.mxu0 0.0
    %1774 = vmatpush1.xpose.msra.mxu0 0.0
    %1775 = vmatprep.subr.mxu0 0.0
    %1776 = vmatpush1.xpose.msra.mxu0 0.0
    %1777 = vmatprep.subr.mxu0 0.0
    %1778 = vmatpush1.xpose.msra.mxu0 0.0
    %1779 = vmatprep.subr.mxu0 0.0
    %1780 = vmatpush1.xpose.msra.mxu0 0.0
    %1781 = vmatprep.subr.mxu0 0.0
    %1782 = vmatpush1.xpose.msra.mxu0 0.0
    %1783 = vmatprep.subr.mxu0 0.0
    %1784 = vmatpush1.xpose.msra.mxu0 0.0
    %1785 = vmatprep.subr.mxu0 0.0
    %1786 = vmatpush1.xpose.msra.mxu0 0.0
    %1787 = vmatprep.subr.mxu0 0.0
    %1788 = vmatpush1.xpose.msra.mxu0 0.0
    %1789 = vmatprep.subr.mxu0 0.0
    %1790 = vmatpush1.xpose.msra.mxu0 0.0
    %1791 = vmatprep.subr.mxu0 0.0
    %1792 = vmatpush1.xpose.msra.mxu0 0.0
    %1793 = vmatprep.subr.mxu0 0.0
    %1794 = vmatpush1.xpose.msra.mxu0 0.0
    %1795 = vmatprep.subr.mxu0 0.0
    %1796 = vmatpush1.xpose.msra.mxu0 0.0
    %1797 = vmatprep.subr.mxu0 0.0
    %1798 = vmatpush1.xpose.msra.mxu0 0.0
    %1799 = vmatprep.subr.mxu0 0.0
    %1800 = vmatpush1.xpose.msra.mxu0 0.0
    %1801 = vmatprep.subr.mxu0 0.0
    %1802 = vmatpush1.xpose.msra.mxu0 0.0
    %1803 = vmatprep.subr.mxu0 0.0
    %1804 = vmatpush1.xpose.msra.mxu0 0.0
    %1805 = vmatprep.subr.mxu0 0.0
    %1806 = vmatpush1.xpose.msra.mxu0 0.0
    %1807 = vmatprep.subr.mxu0 0.0
    %1808 = vmatpush1.xpose.msra.mxu0 0.0
    %1809 = vmatprep.subr.mxu0 0.0
    %1810 = vmatpush1.xpose.msra.mxu0 0.0
    %1811 = vmatprep.subr.mxu0 0.0
    %1812 = vmatpush1.xpose.msra.mxu0 0.0
    %1813 = vmatprep.subr.mxu0 0.0
    %1814 = vmatpush1.xpose.msra.mxu0 0.0
    %1815 = vmatprep.subr.mxu0 0.0
    %1816 = vmatpush1.xpose.msra.mxu0 0.0
    %1817 = vmatprep.subr.mxu0 0.0
    %1818 = vmatpush1.xpose.msra.mxu0 0.0
    %1819 = vmatprep.subr.mxu0 0.0
    %1820 = vmatpush1.xpose.msra.mxu0 0.0
    %1821 = vmatprep.subr.mxu0 0.0
    %1822 = vmatpush1.xpose.msra.mxu0 0.0
    %1823 = vmatprep.mubr.f32.mxu0 0.0
    %1824 = vmatmul.mubr.f32.gmra.mrb[0].mxu0 %v1745
    %v1825 = vpop.f32.mrb[0].mxu0
    %v1826 = vadd.f32 0.0, %v1825
    %v1827 = vpop.f32.mrb[0].mxu0
    %1828 = vdwg.mxu0
    %v1830 = vsel %vm1103, %v1595, 0
    %v1833 = vsel %vm1103, %v248, 0
    %v1836 = vsel %vm1103, %v249, 0
    %v1839 = vsel %vm1103, %v250, 0
    %v1842 = vsel %vm1103, %v251, 0
    %1844 = vmatprep.subr.mxu0 0.0
    %1845 = vmatpush1.xpose.msra.mxu0 %v1833
    %1846 = vmatprep.subr.mxu0 0.0
    %1847 = vmatpush1.xpose.msra.mxu0 %v1836
    %1848 = vmatprep.subr.mxu0 0.0
    %1849 = vmatpush1.xpose.msra.mxu0 %v1839
    %1850 = vmatprep.subr.mxu0 0.0
    %1851 = vmatpush1.xpose.msra.mxu0 %v1842
    %1852 = vmatprep.subr.mxu0 0.0
    %1853 = vmatpush1.xpose.msra.mxu0 0.0
    %1854 = vmatprep.subr.mxu0 0.0
    %1855 = vmatpush1.xpose.msra.mxu0 0.0
    %1856 = vmatprep.subr.mxu0 0.0
    %1857 = vmatpush1.xpose.msra.mxu0 0.0
    %1858 = vmatprep.subr.mxu0 0.0
    %1859 = vmatpush1.xpose.msra.mxu0 0.0
    %1860 = vmatprep.subr.mxu0 0.0
    %1861 = vmatpush1.xpose.msra.mxu0 0.0
    %1862 = vmatprep.subr.mxu0 0.0
    %1863 = vmatpush1.xpose.msra.mxu0 0.0
    %1864 = vmatprep.subr.mxu0 0.0
    %1865 = vmatpush1.xpose.msra.mxu0 0.0
    %1866 = vmatprep.subr.mxu0 0.0
    %1867 = vmatpush1.xpose.msra.mxu0 0.0
    %1868 = vmatprep.subr.mxu0 0.0
    %1869 = vmatpush1.xpose.msra.mxu0 0.0
    %1870 = vmatprep.subr.mxu0 0.0
    %1871 = vmatpush1.xpose.msra.mxu0 0.0
    %1872 = vmatprep.subr.mxu0 0.0
    %1873 = vmatpush1.xpose.msra.mxu0 0.0
    %1874 = vmatprep.subr.mxu0 0.0
    %1875 = vmatpush1.xpose.msra.mxu0 0.0
    %1876 = vmatprep.subr.mxu0 0.0
    %1877 = vmatpush1.xpose.msra.mxu0 0.0
    %1878 = vmatprep.subr.mxu0 0.0
    %1879 = vmatpush1.xpose.msra.mxu0 0.0
    %1880 = vmatprep.subr.mxu0 0.0
    %1881 = vmatpush1.xpose.msra.mxu0 0.0
    %1882 = vmatprep.subr.mxu0 0.0
    %1883 = vmatpush1.xpose.msra.mxu0 0.0
    %1884 = vmatprep.subr.mxu0 0.0
    %1885 = vmatpush1.xpose.msra.mxu0 0.0
    %1886 = vmatprep.subr.mxu0 0.0
    %1887 = vmatpush1.xpose.msra.mxu0 0.0
    %1888 = vmatprep.subr.mxu0 0.0
    %1889 = vmatpush1.xpose.msra.mxu0 0.0
    %1890 = vmatprep.subr.mxu0 0.0
    %1891 = vmatpush1.xpose.msra.mxu0 0.0
    %1892 = vmatprep.subr.mxu0 0.0
    %1893 = vmatpush1.xpose.msra.mxu0 0.0
    %1894 = vmatprep.subr.mxu0 0.0
    %1895 = vmatpush1.xpose.msra.mxu0 0.0
    %1896 = vmatprep.subr.mxu0 0.0
    %1897 = vmatpush1.xpose.msra.mxu0 0.0
    %1898 = vmatprep.subr.mxu0 0.0
    %1899 = vmatpush1.xpose.msra.mxu0 0.0
    %1900 = vmatprep.subr.mxu0 0.0
    %1901 = vmatpush1.xpose.msra.mxu0 0.0
    %1902 = vmatprep.subr.mxu0 0.0
    %1903 = vmatpush1.xpose.msra.mxu0 0.0
    %1904 = vmatprep.subr.mxu0 0.0
    %1905 = vmatpush1.xpose.msra.mxu0 0.0
    %1906 = vmatprep.subr.mxu0 0.0
    %1907 = vmatpush1.xpose.msra.mxu0 0.0
    %1908 = vmatprep.mubr.f32.mxu0 0.0
    %1909 = vmatmul.mubr.f32.gmra.mrb[0].mxu0 %v1830
    %v1910 = vpop.f32.mrb[0].mxu0
    %v1911 = vadd.f32 0.0, %v1910
    %v1912 = vpop.f32.mrb[0].mxu0
    %1913 = vdwg.mxu0
    %v1915 = vsel %vm1103, %v1668, 0
    %v1918 = vsel %vm1103, %v252, 0
    %v1921 = vsel %vm1103, %v253, 0
    %v1924 = vsel %vm1103, %v254, 0
    %v1927 = vsel %vm1103, %v255, 0
    %1929 = vmatprep.subr.mxu0 0.0
    %1930 = vmatpush1.xpose.msra.mxu0 %v1918
    %1931 = vmatprep.subr.mxu0 0.0
    %1932 = vmatpush1.xpose.msra.mxu0 %v1921
    %1933 = vmatprep.subr.mxu0 0.0
    %1934 = vmatpush1.xpose.msra.mxu0 %v1924
    %1935 = vmatprep.subr.mxu0 0.0
    %1936 = vmatpush1.xpose.msra.mxu0 %v1927
    %1937 = vmatprep.subr.mxu0 0.0
    %1938 = vmatpush1.xpose.msra.mxu0 0.0
    %1939 = vmatprep.subr.mxu0 0.0
    %1940 = vmatpush1.xpose.msra.mxu0 0.0
    %1941 = vmatprep.subr.mxu0 0.0
    %1942 = vmatpush1.xpose.msra.mxu0 0.0
    %1943 = vmatprep.subr.mxu0 0.0
    %1944 = vmatpush1.xpose.msra.mxu0 0.0
    %1945 = vmatprep.subr.mxu0 0.0
    %1946 = vmatpush1.xpose.msra.mxu0 0.0
    %1947 = vmatprep.subr.mxu0 0.0
    %1948 = vmatpush1.xpose.msra.mxu0 0.0
    %1949 = vmatprep.subr.mxu0 0.0
    %1950 = vmatpush1.xpose.msra.mxu0 0.0
    %1951 = vmatprep.subr.mxu0 0.0
    %1952 = vmatpush1.xpose.msra.mxu0 0.0
    %1953 = vmatprep.subr.mxu0 0.0
    %1954 = vmatpush1.xpose.msra.mxu0 0.0
    %1955 = vmatprep.subr.mxu0 0.0
    %1956 = vmatpush1.xpose.msra.mxu0 0.0
    %1957 = vmatprep.subr.mxu0 0.0
    %1958 = vmatpush1.xpose.msra.mxu0 0.0
    %1959 = vmatprep.subr.mxu0 0.0
    %1960 = vmatpush1.xpose.msra.mxu0 0.0
    %1961 = vmatprep.subr.mxu0 0.0
    %1962 = vmatpush1.xpose.msra.mxu0 0.0
    %1963 = vmatprep.subr.mxu0 0.0
    %1964 = vmatpush1.xpose.msra.mxu0 0.0
    %1965 = vmatprep.subr.mxu0 0.0
    %1966 = vmatpush1.xpose.msra.mxu0 0.0
    %1967 = vmatprep.subr.mxu0 0.0
    %1968 = vmatpush1.xpose.msra.mxu0 0.0
    %1969 = vmatprep.subr.mxu0 0.0
    %1970 = vmatpush1.xpose.msra.mxu0 0.0
    %1971 = vmatprep.subr.mxu0 0.0
    %1972 = vmatpush1.xpose.msra.mxu0 0.0
    %1973 = vmatprep.subr.mxu0 0.0
    %1974 = vmatpush1.xpose.msra.mxu0 0.0
    %1975 = vmatprep.subr.mxu0 0.0
    %1976 = vmatpush1.xpose.msra.mxu0 0.0
    %1977 = vmatprep.subr.mxu0 0.0
    %1978 = vmatpush1.xpose.msra.mxu0 0.0
    %1979 = vmatprep.subr.mxu0 0.0
    %1980 = vmatpush1.xpose.msra.mxu0 0.0
    %1981 = vmatprep.subr.mxu0 0.0
    %1982 = vmatpush1.xpose.msra.mxu0 0.0
    %1983 = vmatprep.subr.mxu0 0.0
    %1984 = vmatpush1.xpose.msra.mxu0 0.0
    %1985 = vmatprep.subr.mxu0 0.0
    %1986 = vmatpush1.xpose.msra.mxu0 0.0
    %1987 = vmatprep.subr.mxu0 0.0
    %1988 = vmatpush1.xpose.msra.mxu0 0.0
    %1989 = vmatprep.subr.mxu0 0.0
    %1990 = vmatpush1.xpose.msra.mxu0 0.0
    %1991 = vmatprep.subr.mxu0 0.0
    %1992 = vmatpush1.xpose.msra.mxu0 0.0
    %1993 = vmatprep.mubr.f32.mxu0 0.0
    %1994 = vmatmul.mubr.f32.gmra.mrb[0].mxu0 %v1915
    %v1995 = vpop.f32.mrb[0].mxu0
    %v1996 = vadd.f32 0.0, %v1995
    %v1997 = vpop.f32.mrb[0].mxu0
    %1998 = vdwg.mxu0
    %v2000 = vsel %vm1103, %v1741, 0
    %v2003 = vsel %vm1103, %v256, 0
    %v2006 = vsel %vm1103, %v257, 0
    %v2009 = vsel %vm1103, %v258, 0
    %v2012 = vsel %vm1103, %v259, 0
    %2014 = vmatprep.subr.mxu0 0.0
    %2015 = vmatpush1.xpose.msra.mxu0 %v2003
    %2016 = vmatprep.subr.mxu0 0.0
    %2017 = vmatpush1.xpose.msra.mxu0 %v2006
    %2018 = vmatprep.subr.mxu0 0.0
    %2019 = vmatpush1.xpose.msra.mxu0 %v2009
    %2020 = vmatprep.subr.mxu0 0.0
    %2021 = vmatpush1.xpose.msra.mxu0 %v2012
    %2022 = vmatprep.subr.mxu0 0.0
    %2023 = vmatpush1.xpose.msra.mxu0 0.0
    %2024 = vmatprep.subr.mxu0 0.0
    %2025 = vmatpush1.xpose.msra.mxu0 0.0
    %2026 = vmatprep.subr.mxu0 0.0
    %2027 = vmatpush1.xpose.msra.mxu0 0.0
    %2028 = vmatprep.subr.mxu0 0.0
    %2029 = vmatpush1.xpose.msra.mxu0 0.0
    %2030 = vmatprep.subr.mxu0 0.0
    %2031 = vmatpush1.xpose.msra.mxu0 0.0
    %2032 = vmatprep.subr.mxu0 0.0
    %2033 = vmatpush1.xpose.msra.mxu0 0.0
    %2034 = vmatprep.subr.mxu0 0.0
    %2035 = vmatpush1.xpose.msra.mxu0 0.0
    %2036 = vmatprep.subr.mxu0 0.0
    %2037 = vmatpush1.xpose.msra.mxu0 0.0
    %2038 = vmatprep.subr.mxu0 0.0
    %2039 = vmatpush1.xpose.msra.mxu0 0.0
    %2040 = vmatprep.subr.mxu0 0.0
    %2041 = vmatpush1.xpose.msra.mxu0 0.0
    %2042 = vmatprep.subr.mxu0 0.0
    %2043 = vmatpush1.xpose.msra.mxu0 0.0
    %2044 = vmatprep.subr.mxu0 0.0
    %2045 = vmatpush1.xpose.msra.mxu0 0.0
    %2046 = vmatprep.subr.mxu0 0.0
    %2047 = vmatpush1.xpose.msra.mxu0 0.0
    %2048 = vmatprep.subr.mxu0 0.0
    %2049 = vmatpush1.xpose.msra.mxu0 0.0
    %2050 = vmatprep.subr.mxu0 0.0
    %2051 = vmatpush1.xpose.msra.mxu0 0.0
    %2052 = vmatprep.subr.mxu0 0.0
    %2053 = vmatpush1.xpose.msra.mxu0 0.0
    %2054 = vmatprep.subr.mxu0 0.0
    %2055 = vmatpush1.xpose.msra.mxu0 0.0
    %2056 = vmatprep.subr.mxu0 0.0
    %2057 = vmatpush1.xpose.msra.mxu0 0.0
    %2058 = vmatprep.subr.mxu0 0.0
    %2059 = vmatpush1.xpose.msra.mxu0 0.0
    %2060 = vmatprep.subr.mxu0 0.0
    %2061 = vmatpush1.xpose.msra.mxu0 0.0
    %2062 = vmatprep.subr.mxu0 0.0
    %2063 = vmatpush1.xpose.msra.mxu0 0.0
    %2064 = vmatprep.subr.mxu0 0.0
    %2065 = vmatpush1.xpose.msra.mxu0 0.0
    %2066 = vmatprep.subr.mxu0 0.0
    %2067 = vmatpush1.xpose.msra.mxu0 0.0
    %2068 = vmatprep.subr.mxu0 0.0
    %2069 = vmatpush1.xpose.msra.mxu0 0.0
    %2070 = vmatprep.subr.mxu0 0.0
    %2071 = vmatpush1.xpose.msra.mxu0 0.0
    %2072 = vmatprep.subr.mxu0 0.0
    %2073 = vmatpush1.xpose.msra.mxu0 0.0
    %2074 = vmatprep.subr.mxu0 0.0
    %2075 = vmatpush1.xpose.msra.mxu0 0.0
    %2076 = vmatprep.subr.mxu0 0.0
    %2077 = vmatpush1.xpose.msra.mxu0 0.0
    %2078 = vmatprep.mubr.f32.mxu0 0.0
    %2079 = vmatmul.mubr.f32.gmra.mrb[0].mxu0 %v2000
    %v2080 = vpop.f32.mrb[0].mxu0
    %v2081 = vadd.f32 0.0, %v2080
    %v2082 = vpop.f32.mrb[0].mxu0
    %2083 = vdwg.mxu0
    %v2084 = vsel %vm166, %v1826, 0.0
    %v2085 = vsel %vm166, %v1911, 0.0
    %v2086 = vadd.f32 %v2084, %v2085
    %v2087 = vsel %vm166, %v1996, 0.0
    %v2088 = vadd.f32 %v2086, %v2087
    %v2089 = vsel %vm166, %v2081, 0.0
    %v2090 = vadd.f32 %v2088, %v2089
    %v2092 = vsel %vm166, %v188, 0
    %2094 = vmatprep.subr.mxu0 0.0
    %2095 = vmatpush1.msra.mxu0 %v193
    %2096 = vmatprep.subr.mxu0 0.0
    %2097 = vmatpush1.msra.mxu0 %v194
    %2098 = vmatprep.subr.mxu0 0.0
    %2099 = vmatpush1.msra.mxu0 %v195
    %2100 = vmatprep.subr.mxu0 0.0
    %2101 = vmatpush1.msra.mxu0 %v196
    %2102 = vmatprep.subr.mxu0 0.0
    %2103 = vmatpush1.msra.mxu0 0.0
    %2104 = vmatprep.subr.mxu0 0.0
    %2105 = vmatpush1.msra.mxu0 0.0
    %2106 = vmatprep.subr.mxu0 0.0
    %2107 = vmatpush1.msra.mxu0 0.0
    %2108 = vmatprep.subr.mxu0 0.0
    %2109 = vmatpush1.msra.mxu0 0.0
    %2110 = vmatprep.subr.mxu0 0.0
    %2111 = vmatpush1.msra.mxu0 0.0
    %2112 = vmatprep.subr.mxu0 0.0
    %2113 = vmatpush1.msra.mxu0 0.0
    %2114 = vmatprep.subr.mxu0 0.0
    %2115 = vmatpush1.msra.mxu0 0.0
    %2116 = vmatprep.subr.mxu0 0.0
    %2117 = vmatpush1.msra.mxu0 0.0
    %2118 = vmatprep.subr.mxu0 0.0
    %2119 = vmatpush1.msra.mxu0 0.0
    %2120 = vmatprep.subr.mxu0 0.0
    %2121 = vmatpush1.msra.mxu0 0.0
    %2122 = vmatprep.subr.mxu0 0.0
    %2123 = vmatpush1.msra.mxu0 0.0
    %2124 = vmatprep.subr.mxu0 0.0
    %2125 = vmatpush1.msra.mxu0 0.0
    %2126 = vmatprep.subr.mxu0 0.0
    %2127 = vmatpush1.msra.mxu0 0.0
    %2128 = vmatprep.subr.mxu0 0.0
    %2129 = vmatpush1.msra.mxu0 0.0
    %2130 = vmatprep.subr.mxu0 0.0
    %2131 = vmatpush1.msra.mxu0 0.0
    %2132 = vmatprep.subr.mxu0 0.0
    %2133 = vmatpush1.msra.mxu0 0.0
    %2134 = vmatprep.subr.mxu0 0.0
    %2135 = vmatpush1.msra.mxu0 0.0
    %2136 = vmatprep.subr.mxu0 0.0
    %2137 = vmatpush1.msra.mxu0 0.0
    %2138 = vmatprep.subr.mxu0 0.0
    %2139 = vmatpush1.msra.mxu0 0.0
    %2140 = vmatprep.subr.mxu0 0.0
    %2141 = vmatpush1.msra.mxu0 0.0
    %2142 = vmatprep.subr.mxu0 0.0
    %2143 = vmatpush1.msra.mxu0 0.0
    %2144 = vmatprep.subr.mxu0 0.0
    %2145 = vmatpush1.msra.mxu0 0.0
    %2146 = vmatprep.subr.mxu0 0.0
    %2147 = vmatpush1.msra.mxu0 0.0
    %2148 = vmatprep.subr.mxu0 0.0
    %2149 = vmatpush1.msra.mxu0 0.0
    %2150 = vmatprep.subr.mxu0 0.0
    %2151 = vmatpush1.msra.mxu0 0.0
    %2152 = vmatprep.subr.mxu0 0.0
    %2153 = vmatpush1.msra.mxu0 0.0
    %2154 = vmatprep.subr.mxu0 0.0
    %2155 = vmatpush1.msra.mxu0 0.0
    %2156 = vmatprep.subr.mxu0 0.0
    %2157 = vmatpush1.msra.mxu0 0.0
    %2158 = vmatprep.mubr.f32.mxu0 0.0
    %2159 = vmatmul.mubr.f32.gmra.mrb[0].mxu0 %v2092
    %v2160 = vpop.f32.mrb[0].mxu0
    %v2161 = vadd.f32 0.0, %v2160
    %v2162 = vpop.f32.mrb[0].mxu0
    %2163 = vdwg.mxu0
    %2164 = vmatprep.subr.mxu0 0.0
    %2165 = vmatpush1.msra.mxu0 %v197
    %2166 = vmatprep.subr.mxu0 0.0
    %2167 = vmatpush1.msra.mxu0 %v198
    %2168 = vmatprep.subr.mxu0 0.0
    %2169 = vmatpush1.msra.mxu0 %v199
    %2170 = vmatprep.subr.mxu0 0.0
    %2171 = vmatpush1.msra.mxu0 %v200
    %2172 = vmatprep.subr.mxu0 0.0
    %2173 = vmatpush1.msra.mxu0 0.0
    %2174 = vmatprep.subr.mxu0 0.0
    %2175 = vmatpush1.msra.mxu0 0.0
    %2176 = vmatprep.subr.mxu0 0.0
    %2177 = vmatpush1.msra.mxu0 0.0
    %2178 = vmatprep.subr.mxu0 0.0
    %2179 = vmatpush1.msra.mxu0 0.0
    %2180 = vmatprep.subr.mxu0 0.0
    %2181 = vmatpush1.msra.mxu0 0.0
    %2182 = vmatprep.subr.mxu0 0.0
    %2183 = vmatpush1.msra.mxu0 0.0
    %2184 = vmatprep.subr.mxu0 0.0
    %2185 = vmatpush1.msra.mxu0 0.0
    %2186 = vmatprep.subr.mxu0 0.0
    %2187 = vmatpush1.msra.mxu0 0.0
    %2188 = vmatprep.subr.mxu0 0.0
    %2189 = vmatpush1.msra.mxu0 0.0
    %2190 = vmatprep.subr.mxu0 0.0
    %2191 = vmatpush1.msra.mxu0 0.0
    %2192 = vmatprep.subr.mxu0 0.0
    %2193 = vmatpush1.msra.mxu0 0.0
    %2194 = vmatprep.subr.mxu0 0.0
    %2195 = vmatpush1.msra.mxu0 0.0
    %2196 = vmatprep.subr.mxu0 0.0
    %2197 = vmatpush1.msra.mxu0 0.0
    %2198 = vmatprep.subr.mxu0 0.0
    %2199 = vmatpush1.msra.mxu0 0.0
    %2200 = vmatprep.subr.mxu0 0.0
    %2201 = vmatpush1.msra.mxu0 0.0
    %2202 = vmatprep.subr.mxu0 0.0
    %2203 = vmatpush1.msra.mxu0 0.0
    %2204 = vmatprep.subr.mxu0 0.0
    %2205 = vmatpush1.msra.mxu0 0.0
    %2206 = vmatprep.subr.mxu0 0.0
    %2207 = vmatpush1.msra.mxu0 0.0
    %2208 = vmatprep.subr.mxu0 0.0
    %2209 = vmatpush1.msra.mxu0 0.0
    %2210 = vmatprep.subr.mxu0 0.0
    %2211 = vmatpush1.msra.mxu0 0.0
    %2212 = vmatprep.subr.mxu0 0.0
    %2213 = vmatpush1.msra.mxu0 0.0
    %2214 = vmatprep.subr.mxu0 0.0
    %2215 = vmatpush1.msra.mxu0 0.0
    %2216 = vmatprep.subr.mxu0 0.0
    %2217 = vmatpush1.msra.mxu0 0.0
    %2218 = vmatprep.subr.mxu0 0.0
    %2219 = vmatpush1.msra.mxu0 0.0
    %2220 = vmatprep.subr.mxu0 0.0
    %2221 = vmatpush1.msra.mxu0 0.0
    %2222 = vmatprep.subr.mxu0 0.0
    %2223 = vmatpush1.msra.mxu0 0.0
    %2224 = vmatprep.subr.mxu0 0.0
    %2225 = vmatpush1.msra.mxu0 0.0
    %2226 = vmatprep.subr.mxu0 0.0
    %2227 = vmatpush1.msra.mxu0 0.0
    %2228 = vmatprep.mubr.f32.mxu0 0.0
    %2229 = vmatmul.mubr.f32.gmra.mrb[0].mxu0 %v2092
    %v2230 = vpop.f32.mrb[0].mxu0
    %v2231 = vadd.f32 0.0, %v2230
    %v2232 = vpop.f32.mrb[0].mxu0
    %2233 = vdwg.mxu0
    %2234 = vmatprep.subr.mxu0 0.0
    %2235 = vmatpush1.msra.mxu0 %v201
    %2236 = vmatprep.subr.mxu0 0.0
    %2237 = vmatpush1.msra.mxu0 %v202
    %2238 = vmatprep.subr.mxu0 0.0
    %2239 = vmatpush1.msra.mxu0 %v203
    %2240 = vmatprep.subr.mxu0 0.0
    %2241 = vmatpush1.msra.mxu0 %v204
    %2242 = vmatprep.subr.mxu0 0.0
    %2243 = vmatpush1.msra.mxu0 0.0
    %2244 = vmatprep.subr.mxu0 0.0
    %2245 = vmatpush1.msra.mxu0 0.0
    %2246 = vmatprep.subr.mxu0 0.0
    %2247 = vmatpush1.msra.mxu0 0.0
    %2248 = vmatprep.subr.mxu0 0.0
    %2249 = vmatpush1.msra.mxu0 0.0
    %2250 = vmatprep.subr.mxu0 0.0
    %2251 = vmatpush1.msra.mxu0 0.0
    %2252 = vmatprep.subr.mxu0 0.0
    %2253 = vmatpush1.msra.mxu0 0.0
    %2254 = vmatprep.subr.mxu0 0.0
    %2255 = vmatpush1.msra.mxu0 0.0
    %2256 = vmatprep.subr.mxu0 0.0
    %2257 = vmatpush1.msra.mxu0 0.0
    %2258 = vmatprep.subr.mxu0 0.0
    %2259 = vmatpush1.msra.mxu0 0.0
    %2260 = vmatprep.subr.mxu0 0.0
    %2261 = vmatpush1.msra.mxu0 0.0
    %2262 = vmatprep.subr.mxu0 0.0
    %2263 = vmatpush1.msra.mxu0 0.0
    %2264 = vmatprep.subr.mxu0 0.0
    %2265 = vmatpush1.msra.mxu0 0.0
    %2266 = vmatprep.subr.mxu0 0.0
    %2267 = vmatpush1.msra.mxu0 0.0
    %2268 = vmatprep.subr.mxu0 0.0
    %2269 = vmatpush1.msra.mxu0 0.0
    %2270 = vmatprep.subr.mxu0 0.0
    %2271 = vmatpush1.msra.mxu0 0.0
    %2272 = vmatprep.subr.mxu0 0.0
    %2273 = vmatpush1.msra.mxu0 0.0
    %2274 = vmatprep.subr.mxu0 0.0
    %2275 = vmatpush1.msra.mxu0 0.0
    %2276 = vmatprep.subr.mxu0 0.0
    %2277 = vmatpush1.msra.mxu0 0.0
    %2278 = vmatprep.subr.mxu0 0.0
    %2279 = vmatpush1.msra.mxu0 0.0
    %2280 = vmatprep.subr.mxu0 0.0
    %2281 = vmatpush1.msra.mxu0 0.0
    %2282 = vmatprep.subr.mxu0 0.0
    %2283 = vmatpush1.msra.mxu0 0.0
    %2284 = vmatprep.subr.mxu0 0.0
    %2285 = vmatpush1.msra.mxu0 0.0
    %2286 = vmatprep.subr.mxu0 0.0
    %2287 = vmatpush1.msra.mxu0 0.0
    %2288 = vmatprep.subr.mxu0 0.0
    %2289 = vmatpush1.msra.mxu0 0.0
    %2290 = vmatprep.subr.mxu0 0.0
    %2291 = vmatpush1.msra.mxu0 0.0
    %2292 = vmatprep.subr.mxu0 0.0
    %2293 = vmatpush1.msra.mxu0 0.0
    %2294 = vmatprep.subr.mxu0 0.0
    %2295 = vmatpush1.msra.mxu0 0.0
    %2296 = vmatprep.subr.mxu0 0.0
    %2297 = vmatpush1.msra.mxu0 0.0
    %2298 = vmatprep.mubr.f32.mxu0 0.0
    %2299 = vmatmul.mubr.f32.gmra.mrb[0].mxu0 %v2092
    %v2300 = vpop.f32.mrb[0].mxu0
    %v2301 = vadd.f32 0.0, %v2300
    %v2302 = vpop.f32.mrb[0].mxu0
    %2303 = vdwg.mxu0
    %2304 = vmatprep.subr.mxu0 0.0
    %2305 = vmatpush1.msra.mxu0 %v205
    %2306 = vmatprep.subr.mxu0 0.0
    %2307 = vmatpush1.msra.mxu0 %v206
    %2308 = vmatprep.subr.mxu0 0.0
    %2309 = vmatpush1.msra.mxu0 %v207
    %2310 = vmatprep.subr.mxu0 0.0
    %2311 = vmatpush1.msra.mxu0 %v208
    %2312 = vmatprep.subr.mxu0 0.0
    %2313 = vmatpush1.msra.mxu0 0.0
    %2314 = vmatprep.subr.mxu0 0.0
    %2315 = vmatpush1.msra.mxu0 0.0
    %2316 = vmatprep.subr.mxu0 0.0
    %2317 = vmatpush1.msra.mxu0 0.0
    %2318 = vmatprep.subr.mxu0 0.0
    %2319 = vmatpush1.msra.mxu0 0.0
    %2320 = vmatprep.subr.mxu0 0.0
    %2321 = vmatpush1.msra.mxu0 0.0
    %2322 = vmatprep.subr.mxu0 0.0
    %2323 = vmatpush1.msra.mxu0 0.0
    %2324 = vmatprep.subr.mxu0 0.0
    %2325 = vmatpush1.msra.mxu0 0.0
    %2326 = vmatprep.subr.mxu0 0.0
    %2327 = vmatpush1.msra.mxu0 0.0
    %2328 = vmatprep.subr.mxu0 0.0
    %2329 = vmatpush1.msra.mxu0 0.0
    %2330 = vmatprep.subr.mxu0 0.0
    %2331 = vmatpush1.msra.mxu0 0.0
    %2332 = vmatprep.subr.mxu0 0.0
    %2333 = vmatpush1.msra.mxu0 0.0
    %2334 = vmatprep.subr.mxu0 0.0
    %2335 = vmatpush1.msra.mxu0 0.0
    %2336 = vmatprep.subr.mxu0 0.0
    %2337 = vmatpush1.msra.mxu0 0.0
    %2338 = vmatprep.subr.mxu0 0.0
    %2339 = vmatpush1.msra.mxu0 0.0
    %2340 = vmatprep.subr.mxu0 0.0
    %2341 = vmatpush1.msra.mxu0 0.0
    %2342 = vmatprep.subr.mxu0 0.0
    %2343 = vmatpush1.msra.mxu0 0.0
    %2344 = vmatprep.subr.mxu0 0.0
    %2345 = vmatpush1.msra.mxu0 0.0
    %2346 = vmatprep.subr.mxu0 0.0
    %2347 = vmatpush1.msra.mxu0 0.0
    %2348 = vmatprep.subr.mxu0 0.0
    %2349 = vmatpush1.msra.mxu0 0.0
    %2350 = vmatprep.subr.mxu0 0.0
    %2351 = vmatpush1.msra.mxu0 0.0
    %2352 = vmatprep.subr.mxu0 0.0
    %2353 = vmatpush1.msra.mxu0 0.0
    %2354 = vmatprep.subr.mxu0 0.0
    %2355 = vmatpush1.msra.mxu0 0.0
    %2356 = vmatprep.subr.mxu0 0.0
    %2357 = vmatpush1.msra.mxu0 0.0
    %2358 = vmatprep.subr.mxu0 0.0
    %2359 = vmatpush1.msra.mxu0 0.0
    %2360 = vmatprep.subr.mxu0 0.0
    %2361 = vmatpush1.msra.mxu0 0.0
    %2362 = vmatprep.subr.mxu0 0.0
    %2363 = vmatpush1.msra.mxu0 0.0
    %2364 = vmatprep.subr.mxu0 0.0
    %2365 = vmatpush1.msra.mxu0 0.0
    %2366 = vmatprep.subr.mxu0 0.0
    %2367 = vmatpush1.msra.mxu0 0.0
    %2368 = vmatprep.mubr.f32.mxu0 0.0
    %2369 = vmatmul.mubr.f32.gmra.mrb[0].mxu0 %v2092
    %v2370 = vpop.f32.mrb[0].mxu0
    %v2371 = vadd.f32 0.0, %v2370
    %v2372 = vpop.f32.mrb[0].mxu0
    %2373 = vdwg.mxu0
    %2374 = vmatprep.subr.mxu0 0.0
    %2375 = vmatpush1.msra.mxu0 %v210
    %2376 = vmatprep.subr.mxu0 0.0
    %2377 = vmatpush1.msra.mxu0 %v211
    %2378 = vmatprep.subr.mxu0 0.0
    %2379 = vmatpush1.msra.mxu0 %v212
    %2380 = vmatprep.subr.mxu0 0.0
    %2381 = vmatpush1.msra.mxu0 %v213
    %2382 = vmatprep.subr.mxu0 0.0
    %2383 = vmatpush1.msra.mxu0 0.0
    %2384 = vmatprep.subr.mxu0 0.0
    %2385 = vmatpush1.msra.mxu0 0.0
    %2386 = vmatprep.subr.mxu0 0.0
    %2387 = vmatpush1.msra.mxu0 0.0
    %2388 = vmatprep.subr.mxu0 0.0
    %2389 = vmatpush1.msra.mxu0 0.0
    %2390 = vmatprep.subr.mxu0 0.0
    %2391 = vmatpush1.msra.mxu0 0.0
    %2392 = vmatprep.subr.mxu0 0.0
    %2393 = vmatpush1.msra.mxu0 0.0
    %2394 = vmatprep.subr.mxu0 0.0
    %2395 = vmatpush1.msra.mxu0 0.0
    %2396 = vmatprep.subr.mxu0 0.0
    %2397 = vmatpush1.msra.mxu0 0.0
    %2398 = vmatprep.subr.mxu0 0.0
    %2399 = vmatpush1.msra.mxu0 0.0
    %2400 = vmatprep.subr.mxu0 0.0
    %2401 = vmatpush1.msra.mxu0 0.0
    %2402 = vmatprep.subr.mxu0 0.0
    %2403 = vmatpush1.msra.mxu0 0.0
    %2404 = vmatprep.subr.mxu0 0.0
    %2405 = vmatpush1.msra.mxu0 0.0
    %2406 = vmatprep.subr.mxu0 0.0
    %2407 = vmatpush1.msra.mxu0 0.0
    %2408 = vmatprep.subr.mxu0 0.0
    %2409 = vmatpush1.msra.mxu0 0.0
    %2410 = vmatprep.subr.mxu0 0.0
    %2411 = vmatpush1.msra.mxu0 0.0
    %2412 = vmatprep.subr.mxu0 0.0
    %2413 = vmatpush1.msra.mxu0 0.0
    %2414 = vmatprep.subr.mxu0 0.0
    %2415 = vmatpush1.msra.mxu0 0.0
    %2416 = vmatprep.subr.mxu0 0.0
    %2417 = vmatpush1.msra.mxu0 0.0
    %2418 = vmatprep.subr.mxu0 0.0
    %2419 = vmatpush1.msra.mxu0 0.0
    %2420 = vmatprep.subr.mxu0 0.0
    %2421 = vmatpush1.msra.mxu0 0.0
    %2422 = vmatprep.subr.mxu0 0.0
    %2423 = vmatpush1.msra.mxu0 0.0
    %2424 = vmatprep.subr.mxu0 0.0
    %2425 = vmatpush1.msra.mxu0 0.0
    %2426 = vmatprep.subr.mxu0 0.0
    %2427 = vmatpush1.msra.mxu0 0.0
    %2428 = vmatprep.subr.mxu0 0.0
    %2429 = vmatpush1.msra.mxu0 0.0
    %2430 = vmatprep.subr.mxu0 0.0
    %2431 = vmatpush1.msra.mxu0 0.0
    %2432 = vmatprep.subr.mxu0 0.0
    %2433 = vmatpush1.msra.mxu0 0.0
    %2434 = vmatprep.subr.mxu0 0.0
    %2435 = vmatpush1.msra.mxu0 0.0
    %2436 = vmatprep.subr.mxu0 0.0
    %2437 = vmatpush1.msra.mxu0 0.0
    %2438 = vmatprep.mubr.f32.mxu0 0.0
    %2439 = vmatmul.mubr.f32.gmra.mrb[0].mxu0 %v2092
    %v2440 = vpop.f32.mrb[0].mxu0
    %v2441 = vadd.f32 0.0, %v2440
    %v2442 = vpop.f32.mrb[0].mxu0
    %2443 = vdwg.mxu0
    %2444 = vmatprep.subr.mxu0 0.0
    %2445 = vmatpush1.msra.mxu0 %v214
    %2446 = vmatprep.subr.mxu0 0.0
    %2447 = vmatpush1.msra.mxu0 %v215
    %2448 = vmatprep.subr.mxu0 0.0
    %2449 = vmatpush1.msra.mxu0 %v216
    %2450 = vmatprep.subr.mxu0 0.0
    %2451 = vmatpush1.msra.mxu0 %v217
    %2452 = vmatprep.subr.mxu0 0.0
    %2453 = vmatpush1.msra.mxu0 0.0
    %2454 = vmatprep.subr.mxu0 0.0
    %2455 = vmatpush1.msra.mxu0 0.0
    %2456 = vmatprep.subr.mxu0 0.0
    %2457 = vmatpush1.msra.mxu0 0.0
    %2458 = vmatprep.subr.mxu0 0.0
    %2459 = vmatpush1.msra.mxu0 0.0
    %2460 = vmatprep.subr.mxu0 0.0
    %2461 = vmatpush1.msra.mxu0 0.0
    %2462 = vmatprep.subr.mxu0 0.0
    %2463 = vmatpush1.msra.mxu0 0.0
    %2464 = vmatprep.subr.mxu0 0.0
    %2465 = vmatpush1.msra.mxu0 0.0
    %2466 = vmatprep.subr.mxu0 0.0
    %2467 = vmatpush1.msra.mxu0 0.0
    %2468 = vmatprep.subr.mxu0 0.0
    %2469 = vmatpush1.msra.mxu0 0.0
    %2470 = vmatprep.subr.mxu0 0.0
    %2471 = vmatpush1.msra.mxu0 0.0
    %2472 = vmatprep.subr.mxu0 0.0
    %2473 = vmatpush1.msra.mxu0 0.0
    %2474 = vmatprep.subr.mxu0 0.0
    %2475 = vmatpush1.msra.mxu0 0.0
    %2476 = vmatprep.subr.mxu0 0.0
    %2477 = vmatpush1.msra.mxu0 0.0
    %2478 = vmatprep.subr.mxu0 0.0
    %2479 = vmatpush1.msra.mxu0 0.0
    %2480 = vmatprep.subr.mxu0 0.0
    %2481 = vmatpush1.msra.mxu0 0.0
    %2482 = vmatprep.subr.mxu0 0.0
    %2483 = vmatpush1.msra.mxu0 0.0
    %2484 = vmatprep.subr.mxu0 0.0
    %2485 = vmatpush1.msra.mxu0 0.0
    %2486 = vmatprep.subr.mxu0 0.0
    %2487 = vmatpush1.msra.mxu0 0.0
    %2488 = vmatprep.subr.mxu0 0.0
    %2489 = vmatpush1.msra.mxu0 0.0
    %2490 = vmatprep.subr.mxu0 0.0
    %2491 = vmatpush1.msra.mxu0 0.0
    %2492 = vmatprep.subr.mxu0 0.0
    %2493 = vmatpush1.msra.mxu0 0.0
    %2494 = vmatprep.subr.mxu0 0.0
    %2495 = vmatpush1.msra.mxu0 0.0
    %2496 = vmatprep.subr.mxu0 0.0
    %2497 = vmatpush1.msra.mxu0 0.0
    %2498 = vmatprep.subr.mxu0 0.0
    %2499 = vmatpush1.msra.mxu0 0.0
    %2500 = vmatprep.subr.mxu0 0.0
    %2501 = vmatpush1.msra.mxu0 0.0
    %2502 = vmatprep.subr.mxu0 0.0
    %2503 = vmatpush1.msra.mxu0 0.0
    %2504 = vmatprep.subr.mxu0 0.0
    %2505 = vmatpush1.msra.mxu0 0.0
    %2506 = vmatprep.subr.mxu0 0.0
    %2507 = vmatpush1.msra.mxu0 0.0
    %2508 = vmatprep.mubr.f32.mxu0 0.0
    %2509 = vmatmul.mubr.f32.gmra.mrb[0].mxu0 %v2092
    %v2510 = vpop.f32.mrb[0].mxu0
    %v2511 = vadd.f32 0.0, %v2510
    %v2512 = vpop.f32.mrb[0].mxu0
    %2513 = vdwg.mxu0
    %2514 = vmatprep.subr.mxu0 0.0
    %2515 = vmatpush1.msra.mxu0 %v218
    %2516 = vmatprep.subr.mxu0 0.0
    %2517 = vmatpush1.msra.mxu0 %v219
    %2518 = vmatprep.subr.mxu0 0.0
    %2519 = vmatpush1.msra.mxu0 %v220
    %2520 = vmatprep.subr.mxu0 0.0
    %2521 = vmatpush1.msra.mxu0 %v221
    %2522 = vmatprep.subr.mxu0 0.0
    %2523 = vmatpush1.msra.mxu0 0.0
    %2524 = vmatprep.subr.mxu0 0.0
    %2525 = vmatpush1.msra.mxu0 0.0
    %2526 = vmatprep.subr.mxu0 0.0
    %2527 = vmatpush1.msra.mxu0 0.0
    %2528 = vmatprep.subr.mxu0 0.0
    %2529 = vmatpush1.msra.mxu0 0.0
    %2530 = vmatprep.subr.mxu0 0.0
    %2531 = vmatpush1.msra.mxu0 0.0
    %2532 = vmatprep.subr.mxu0 0.0
    %2533 = vmatpush1.msra.mxu0 0.0
    %2534 = vmatprep.subr.mxu0 0.0
    %2535 = vmatpush1.msra.mxu0 0.0
    %2536 = vmatprep.subr.mxu0 0.0
    %2537 = vmatpush1.msra.mxu0 0.0
    %2538 = vmatprep.subr.mxu0 0.0
    %2539 = vmatpush1.msra.mxu0 0.0
    %2540 = vmatprep.subr.mxu0 0.0
    %2541 = vmatpush1.msra.mxu0 0.0
    %2542 = vmatprep.subr.mxu0 0.0
    %2543 = vmatpush1.msra.mxu0 0.0
    %2544 = vmatprep.subr.mxu0 0.0
    %2545 = vmatpush1.msra.mxu0 0.0
    %2546 = vmatprep.subr.mxu0 0.0
    %2547 = vmatpush1.msra.mxu0 0.0
    %2548 = vmatprep.subr.mxu0 0.0
    %2549 = vmatpush1.msra.mxu0 0.0
    %2550 = vmatprep.subr.mxu0 0.0
    %2551 = vmatpush1.msra.mxu0 0.0
    %2552 = vmatprep.subr.mxu0 0.0
    %2553 = vmatpush1.msra.mxu0 0.0
    %2554 = vmatprep.subr.mxu0 0.0
    %2555 = vmatpush1.msra.mxu0 0.0
    %2556 = vmatprep.subr.mxu0 0.0
    %2557 = vmatpush1.msra.mxu0 0.0
    %2558 = vmatprep.subr.mxu0 0.0
    %2559 = vmatpush1.msra.mxu0 0.0
    %2560 = vmatprep.subr.mxu0 0.0
    %2561 = vmatpush1.msra.mxu0 0.0
    %2562 = vmatprep.subr.mxu0 0.0
    %2563 = vmatpush1.msra.mxu0 0.0
    %2564 = vmatprep.subr.mxu0 0.0
    %2565 = vmatpush1.msra.mxu0 0.0
    %2566 = vmatprep.subr.mxu0 0.0
    %2567 = vmatpush1.msra.mxu0 0.0
    %2568 = vmatprep.subr.mxu0 0.0
    %2569 = vmatpush1.msra.mxu0 0.0
    %2570 = vmatprep.subr.mxu0 0.0
    %2571 = vmatpush1.msra.mxu0 0.0
    %2572 = vmatprep.subr.mxu0 0.0
    %2573 = vmatpush1.msra.mxu0 0.0
    %2574 = vmatprep.subr.mxu0 0.0
    %2575 = vmatpush1.msra.mxu0 0.0
    %2576 = vmatprep.subr.mxu0 0.0
    %2577 = vmatpush1.msra.mxu0 0.0
    %2578 = vmatprep.mubr.f32.mxu0 0.0
    %2579 = vmatmul.mubr.f32.gmra.mrb[0].mxu0 %v2092
    %v2580 = vpop.f32.mrb[0].mxu0
    %v2581 = vadd.f32 0.0, %v2580
    %v2582 = vpop.f32.mrb[0].mxu0
    %2583 = vdwg.mxu0
    %2584 = vmatprep.subr.mxu0 0.0
    %2585 = vmatpush1.msra.mxu0 %v222
    %2586 = vmatprep.subr.mxu0 0.0
    %2587 = vmatpush1.msra.mxu0 %v223
    %2588 = vmatprep.subr.mxu0 0.0
    %2589 = vmatpush1.msra.mxu0 %v224
    %2590 = vmatprep.subr.mxu0 0.0
    %2591 = vmatpush1.msra.mxu0 %v225
    %2592 = vmatprep.subr.mxu0 0.0
    %2593 = vmatpush1.msra.mxu0 0.0
    %2594 = vmatprep.subr.mxu0 0.0
    %2595 = vmatpush1.msra.mxu0 0.0
    %2596 = vmatprep.subr.mxu0 0.0
    %2597 = vmatpush1.msra.mxu0 0.0
    %2598 = vmatprep.subr.mxu0 0.0
    %2599 = vmatpush1.msra.mxu0 0.0
    %2600 = vmatprep.subr.mxu0 0.0
    %2601 = vmatpush1.msra.mxu0 0.0
    %2602 = vmatprep.subr.mxu0 0.0
    %2603 = vmatpush1.msra.mxu0 0.0
    %2604 = vmatprep.subr.mxu0 0.0
    %2605 = vmatpush1.msra.mxu0 0.0
    %2606 = vmatprep.subr.mxu0 0.0
    %2607 = vmatpush1.msra.mxu0 0.0
    %2608 = vmatprep.subr.mxu0 0.0
    %2609 = vmatpush1.msra.mxu0 0.0
    %2610 = vmatprep.subr.mxu0 0.0
    %2611 = vmatpush1.msra.mxu0 0.0
    %2612 = vmatprep.subr.mxu0 0.0
    %2613 = vmatpush1.msra.mxu0 0.0
    %2614 = vmatprep.subr.mxu0 0.0
    %2615 = vmatpush1.msra.mxu0 0.0
    %2616 = vmatprep.subr.mxu0 0.0
    %2617 = vmatpush1.msra.mxu0 0.0
    %2618 = vmatprep.subr.mxu0 0.0
    %2619 = vmatpush1.msra.mxu0 0.0
    %2620 = vmatprep.subr.mxu0 0.0
    %2621 = vmatpush1.msra.mxu0 0.0
    %2622 = vmatprep.subr.mxu0 0.0
    %2623 = vmatpush1.msra.mxu0 0.0
    %2624 = vmatprep.subr.mxu0 0.0
    %2625 = vmatpush1.msra.mxu0 0.0
    %2626 = vmatprep.subr.mxu0 0.0
    %2627 = vmatpush1.msra.mxu0 0.0
    %2628 = vmatprep.subr.mxu0 0.0
    %2629 = vmatpush1.msra.mxu0 0.0
    %2630 = vmatprep.subr.mxu0 0.0
    %2631 = vmatpush1.msra.mxu0 0.0
    %2632 = vmatprep.subr.mxu0 0.0
    %2633 = vmatpush1.msra.mxu0 0.0
    %2634 = vmatprep.subr.mxu0 0.0
    %2635 = vmatpush1.msra.mxu0 0.0
    %2636 = vmatprep.subr.mxu0 0.0
    %2637 = vmatpush1.msra.mxu0 0.0
    %2638 = vmatprep.subr.mxu0 0.0
    %2639 = vmatpush1.msra.mxu0 0.0
    %2640 = vmatprep.subr.mxu0 0.0
    %2641 = vmatpush1.msra.mxu0 0.0
    %2642 = vmatprep.subr.mxu0 0.0
    %2643 = vmatpush1.msra.mxu0 0.0
    %2644 = vmatprep.subr.mxu0 0.0
    %2645 = vmatpush1.msra.mxu0 0.0
    %2646 = vmatprep.subr.mxu0 0.0
    %2647 = vmatpush1.msra.mxu0 0.0
    %2648 = vmatprep.mubr.f32.mxu0 0.0
    %2649 = vmatmul.mubr.f32.gmra.mrb[0].mxu0 %v2092
    %v2650 = vpop.f32.mrb[0].mxu0
    %v2651 = vadd.f32 0.0, %v2650
    %v2652 = vpop.f32.mrb[0].mxu0
    %2653 = vdwg.mxu0
    %2654 = vmatprep.subr.mxu0 0.0
    %2655 = vmatpush1.msra.mxu0 %v227
    %2656 = vmatprep.subr.mxu0 0.0
    %2657 = vmatpush1.msra.mxu0 %v228
    %2658 = vmatprep.subr.mxu0 0.0
    %2659 = vmatpush1.msra.mxu0 %v229
    %2660 = vmatprep.subr.mxu0 0.0
    %2661 = vmatpush1.msra.mxu0 %v230
    %2662 = vmatprep.subr.mxu0 0.0
    %2663 = vmatpush1.msra.mxu0 0.0
    %2664 = vmatprep.subr.mxu0 0.0
    %2665 = vmatpush1.msra.mxu0 0.0
    %2666 = vmatprep.subr.mxu0 0.0
    %2667 = vmatpush1.msra.mxu0 0.0
    %2668 = vmatprep.subr.mxu0 0.0
    %2669 = vmatpush1.msra.mxu0 0.0
    %2670 = vmatprep.subr.mxu0 0.0
    %2671 = vmatpush1.msra.mxu0 0.0
    %2672 = vmatprep.subr.mxu0 0.0
    %2673 = vmatpush1.msra.mxu0 0.0
    %2674 = vmatprep.subr.mxu0 0.0
    %2675 = vmatpush1.msra.mxu0 0.0
    %2676 = vmatprep.subr.mxu0 0.0
    %2677 = vmatpush1.msra.mxu0 0.0
    %2678 = vmatprep.subr.mxu0 0.0
    %2679 = vmatpush1.msra.mxu0 0.0
    %2680 = vmatprep.subr.mxu0 0.0
    %2681 = vmatpush1.msra.mxu0 0.0
    %2682 = vmatprep.subr.mxu0 0.0
    %2683 = vmatpush1.msra.mxu0 0.0
    %2684 = vmatprep.subr.mxu0 0.0
    %2685 = vmatpush1.msra.mxu0 0.0
    %2686 = vmatprep.subr.mxu0 0.0
    %2687 = vmatpush1.msra.mxu0 0.0
    %2688 = vmatprep.subr.mxu0 0.0
    %2689 = vmatpush1.msra.mxu0 0.0
    %2690 = vmatprep.subr.mxu0 0.0
    %2691 = vmatpush1.msra.mxu0 0.0
    %2692 = vmatprep.subr.mxu0 0.0
    %2693 = vmatpush1.msra.mxu0 0.0
    %2694 = vmatprep.subr.mxu0 0.0
    %2695 = vmatpush1.msra.mxu0 0.0
    %2696 = vmatprep.subr.mxu0 0.0
    %2697 = vmatpush1.msra.mxu0 0.0
    %2698 = vmatprep.subr.mxu0 0.0
    %2699 = vmatpush1.msra.mxu0 0.0
    %2700 = vmatprep.subr.mxu0 0.0
    %2701 = vmatpush1.msra.mxu0 0.0
    %2702 = vmatprep.subr.mxu0 0.0
    %2703 = vmatpush1.msra.mxu0 0.0
    %2704 = vmatprep.subr.mxu0 0.0
    %2705 = vmatpush1.msra.mxu0 0.0
    %2706 = vmatprep.subr.mxu0 0.0
    %2707 = vmatpush1.msra.mxu0 0.0
    %2708 = vmatprep.subr.mxu0 0.0
    %2709 = vmatpush1.msra.mxu0 0.0
    %2710 = vmatprep.subr.mxu0 0.0
    %2711 = vmatpush1.msra.mxu0 0.0
    %2712 = vmatprep.subr.mxu0 0.0
    %2713 = vmatpush1.msra.mxu0 0.0
    %2714 = vmatprep.subr.mxu0 0.0
    %2715 = vmatpush1.msra.mxu0 0.0
    %2716 = vmatprep.subr.mxu0 0.0
    %2717 = vmatpush1.msra.mxu0 0.0
    %2718 = vmatprep.mubr.f32.mxu0 0.0
    %2719 = vmatmul.mubr.f32.gmra.mrb[0].mxu0 %v2092
    %v2720 = vpop.f32.mrb[0].mxu0
    %v2721 = vadd.f32 0.0, %v2720
    %v2722 = vpop.f32.mrb[0].mxu0
    %2723 = vdwg.mxu0
    %2724 = vmatprep.subr.mxu0 0.0
    %2725 = vmatpush1.msra.mxu0 %v231
    %2726 = vmatprep.subr.mxu0 0.0
    %2727 = vmatpush1.msra.mxu0 %v232
    %2728 = vmatprep.subr.mxu0 0.0
    %2729 = vmatpush1.msra.mxu0 %v233
    %2730 = vmatprep.subr.mxu0 0.0
    %2731 = vmatpush1.msra.mxu0 %v234
    %2732 = vmatprep.subr.mxu0 0.0
    %2733 = vmatpush1.msra.mxu0 0.0
    %2734 = vmatprep.subr.mxu0 0.0
    %2735 = vmatpush1.msra.mxu0 0.0
    %2736 = vmatprep.subr.mxu0 0.0
    %2737 = vmatpush1.msra.mxu0 0.0
    %2738 = vmatprep.subr.mxu0 0.0
    %2739 = vmatpush1.msra.mxu0 0.0
    %2740 = vmatprep.subr.mxu0 0.0
    %2741 = vmatpush1.msra.mxu0 0.0
    %2742 = vmatprep.subr.mxu0 0.0
    %2743 = vmatpush1.msra.mxu0 0.0
    %2744 = vmatprep.subr.mxu0 0.0
    %2745 = vmatpush1.msra.mxu0 0.0
    %2746 = vmatprep.subr.mxu0 0.0
    %2747 = vmatpush1.msra.mxu0 0.0
    %2748 = vmatprep.subr.mxu0 0.0
    %2749 = vmatpush1.msra.mxu0 0.0
    %2750 = vmatprep.subr.mxu0 0.0
    %2751 = vmatpush1.msra.mxu0 0.0
    %2752 = vmatprep.subr.mxu0 0.0
    %2753 = vmatpush1.msra.mxu0 0.0
    %2754 = vmatprep.subr.mxu0 0.0
    %2755 = vmatpush1.msra.mxu0 0.0
    %2756 = vmatprep.subr.mxu0 0.0
    %2757 = vmatpush1.msra.mxu0 0.0
    %2758 = vmatprep.subr.mxu0 0.0
    %2759 = vmatpush1.msra.mxu0 0.0
    %2760 = vmatprep.subr.mxu0 0.0
    %2761 = vmatpush1.msra.mxu0 0.0
    %2762 = vmatprep.subr.mxu0 0.0
    %2763 = vmatpush1.msra.mxu0 0.0
    %2764 = vmatprep.subr.mxu0 0.0
    %2765 = vmatpush1.msra.mxu0 0.0
    %2766 = vmatprep.subr.mxu0 0.0
    %2767 = vmatpush1.msra.mxu0 0.0
    %2768 = vmatprep.subr.mxu0 0.0
    %2769 = vmatpush1.msra.mxu0 0.0
    %2770 = vmatprep.subr.mxu0 0.0
    %2771 = vmatpush1.msra.mxu0 0.0
    %2772 = vmatprep.subr.mxu0 0.0
    %2773 = vmatpush1.msra.mxu0 0.0
    %2774 = vmatprep.subr.mxu0 0.0
    %2775 = vmatpush1.msra.mxu0 0.0
    %2776 = vmatprep.subr.mxu0 0.0
    %2777 = vmatpush1.msra.mxu0 0.0
    %2778 = vmatprep.subr.mxu0 0.0
    %2779 = vmatpush1.msra.mxu0 0.0
    %2780 = vmatprep.subr.mxu0 0.0
    %2781 = vmatpush1.msra.mxu0 0.0
    %2782 = vmatprep.subr.mxu0 0.0
    %2783 = vmatpush1.msra.mxu0 0.0
    %2784 = vmatprep.subr.mxu0 0.0
    %2785 = vmatpush1.msra.mxu0 0.0
    %2786 = vmatprep.subr.mxu0 0.0
    %2787 = vmatpush1.msra.mxu0 0.0
    %2788 = vmatprep.mubr.f32.mxu0 0.0
    %2789 = vmatmul.mubr.f32.gmra.mrb[0].mxu0 %v2092
    %v2790 = vpop.f32.mrb[0].mxu0
    %v2791 = vadd.f32 0.0, %v2790
    %v2792 = vpop.f32.mrb[0].mxu0
    %2793 = vdwg.mxu0
    %2794 = vmatprep.subr.mxu0 0.0
    %2795 = vmatpush1.msra.mxu0 %v235
    %2796 = vmatprep.subr.mxu0 0.0
    %2797 = vmatpush1.msra.mxu0 %v236
    %2798 = vmatprep.subr.mxu0 0.0
    %2799 = vmatpush1.msra.mxu0 %v237
    %2800 = vmatprep.subr.mxu0 0.0
    %2801 = vmatpush1.msra.mxu0 %v238
    %2802 = vmatprep.subr.mxu0 0.0
    %2803 = vmatpush1.msra.mxu0 0.0
    %2804 = vmatprep.subr.mxu0 0.0
    %2805 = vmatpush1.msra.mxu0 0.0
    %2806 = vmatprep.subr.mxu0 0.0
    %2807 = vmatpush1.msra.mxu0 0.0
    %2808 = vmatprep.subr.mxu0 0.0
    %2809 = vmatpush1.msra.mxu0 0.0
    %2810 = vmatprep.subr.mxu0 0.0
    %2811 = vmatpush1.msra.mxu0 0.0
    %2812 = vmatprep.subr.mxu0 0.0
    %2813 = vmatpush1.msra.mxu0 0.0
    %2814 = vmatprep.subr.mxu0 0.0
    %2815 = vmatpush1.msra.mxu0 0.0
    %2816 = vmatprep.subr.mxu0 0.0
    %2817 = vmatpush1.msra.mxu0 0.0
    %2818 = vmatprep.subr.mxu0 0.0
    %2819 = vmatpush1.msra.mxu0 0.0
    %2820 = vmatprep.subr.mxu0 0.0
    %2821 = vmatpush1.msra.mxu0 0.0
    %2822 = vmatprep.subr.mxu0 0.0
    %2823 = vmatpush1.msra.mxu0 0.0
    %2824 = vmatprep.subr.mxu0 0.0
    %2825 = vmatpush1.msra.mxu0 0.0
    %2826 = vmatprep.subr.mxu0 0.0
    %2827 = vmatpush1.msra.mxu0 0.0
    %2828 = vmatprep.subr.mxu0 0.0
    %2829 = vmatpush1.msra.mxu0 0.0
    %2830 = vmatprep.subr.mxu0 0.0
    %2831 = vmatpush1.msra.mxu0 0.0
    %2832 = vmatprep.subr.mxu0 0.0
    %2833 = vmatpush1.msra.mxu0 0.0
    %2834 = vmatprep.subr.mxu0 0.0
    %2835 = vmatpush1.msra.mxu0 0.0
    %2836 = vmatprep.subr.mxu0 0.0
    %2837 = vmatpush1.msra.mxu0 0.0
    %2838 = vmatprep.subr.mxu0 0.0
    %2839 = vmatpush1.msra.mxu0 0.0
    %2840 = vmatprep.subr.mxu0 0.0
    %2841 = vmatpush1.msra.mxu0 0.0
    %2842 = vmatprep.subr.mxu0 0.0
    %2843 = vmatpush1.msra.mxu0 0.0
    %2844 = vmatprep.subr.mxu0 0.0
    %2845 = vmatpush1.msra.mxu0 0.0
    %2846 = vmatprep.subr.mxu0 0.0
    %2847 = vmatpush1.msra.mxu0 0.0
    %2848 = vmatprep.subr.mxu0 0.0
    %2849 = vmatpush1.msra.mxu0 0.0
    %2850 = vmatprep.subr.mxu0 0.0
    %2851 = vmatpush1.msra.mxu0 0.0
    %2852 = vmatprep.subr.mxu0 0.0
    %2853 = vmatpush1.msra.mxu0 0.0
    %2854 = vmatprep.subr.mxu0 0.0
    %2855 = vmatpush1.msra.mxu0 0.0
    %2856 = vmatprep.subr.mxu0 0.0
    %2857 = vmatpush1.msra.mxu0 0.0
    %2858 = vmatprep.mubr.f32.mxu0 0.0
    %2859 = vmatmul.mubr.f32.gmra.mrb[0].mxu0 %v2092
    %v2860 = vpop.f32.mrb[0].mxu0
    %v2861 = vadd.f32 0.0, %v2860
    %v2862 = vpop.f32.mrb[0].mxu0
    %2863 = vdwg.mxu0
    %2864 = vmatprep.subr.mxu0 0.0
    %2865 = vmatpush1.msra.mxu0 %v239
    %2866 = vmatprep.subr.mxu0 0.0
    %2867 = vmatpush1.msra.mxu0 %v240
    %2868 = vmatprep.subr.mxu0 0.0
    %2869 = vmatpush1.msra.mxu0 %v241
    %2870 = vmatprep.subr.mxu0 0.0
    %2871 = vmatpush1.msra.mxu0 %v242
    %2872 = vmatprep.subr.mxu0 0.0
    %2873 = vmatpush1.msra.mxu0 0.0
    %2874 = vmatprep.subr.mxu0 0.0
    %2875 = vmatpush1.msra.mxu0 0.0
    %2876 = vmatprep.subr.mxu0 0.0
    %2877 = vmatpush1.msra.mxu0 0.0
    %2878 = vmatprep.subr.mxu0 0.0
    %2879 = vmatpush1.msra.mxu0 0.0
    %2880 = vmatprep.subr.mxu0 0.0
    %2881 = vmatpush1.msra.mxu0 0.0
    %2882 = vmatprep.subr.mxu0 0.0
    %2883 = vmatpush1.msra.mxu0 0.0
    %2884 = vmatprep.subr.mxu0 0.0
    %2885 = vmatpush1.msra.mxu0 0.0
    %2886 = vmatprep.subr.mxu0 0.0
    %2887 = vmatpush1.msra.mxu0 0.0
    %2888 = vmatprep.subr.mxu0 0.0
    %2889 = vmatpush1.msra.mxu0 0.0
    %2890 = vmatprep.subr.mxu0 0.0
    %2891 = vmatpush1.msra.mxu0 0.0
    %2892 = vmatprep.subr.mxu0 0.0
    %2893 = vmatpush1.msra.mxu0 0.0
    %2894 = vmatprep.subr.mxu0 0.0
    %2895 = vmatpush1.msra.mxu0 0.0
    %2896 = vmatprep.subr.mxu0 0.0
    %2897 = vmatpush1.msra.mxu0 0.0
    %2898 = vmatprep.subr.mxu0 0.0
    %2899 = vmatpush1.msra.mxu0 0.0
    %2900 = vmatprep.subr.mxu0 0.0
    %2901 = vmatpush1.msra.mxu0 0.0
    %2902 = vmatprep.subr.mxu0 0.0
    %2903 = vmatpush1.msra.mxu0 0.0
    %2904 = vmatprep.subr.mxu0 0.0
    %2905 = vmatpush1.msra.mxu0 0.0
    %2906 = vmatprep.subr.mxu0 0.0
    %2907 = vmatpush1.msra.mxu0 0.0
    %2908 = vmatprep.subr.mxu0 0.0
    %2909 = vmatpush1.msra.mxu0 0.0
    %2910 = vmatprep.subr.mxu0 0.0
    %2911 = vmatpush1.msra.mxu0 0.0
    %2912 = vmatprep.subr.mxu0 0.0
    %2913 = vmatpush1.msra.mxu0 0.0
    %2914 = vmatprep.subr.mxu0 0.0
    %2915 = vmatpush1.msra.mxu0 0.0
    %2916 = vmatprep.subr.mxu0 0.0
    %2917 = vmatpush1.msra.mxu0 0.0
    %2918 = vmatprep.subr.mxu0 0.0
    %2919 = vmatpush1.msra.mxu0 0.0
    %2920 = vmatprep.subr.mxu0 0.0
    %2921 = vmatpush1.msra.mxu0 0.0
    %2922 = vmatprep.subr.mxu0 0.0
    %2923 = vmatpush1.msra.mxu0 0.0
    %2924 = vmatprep.subr.mxu0 0.0
    %2925 = vmatpush1.msra.mxu0 0.0
    %2926 = vmatprep.subr.mxu0 0.0
    %2927 = vmatpush1.msra.mxu0 0.0
    %2928 = vmatprep.mubr.f32.mxu0 0.0
    %2929 = vmatmul.mubr.f32.gmra.mrb[0].mxu0 %v2092
    %v2930 = vpop.f32.mrb[0].mxu0
    %v2931 = vadd.f32 0.0, %v2930
    %v2932 = vpop.f32.mrb[0].mxu0
    %2933 = vdwg.mxu0
    %v2935 = vsel %vm1103, %v2161, 0
    %v2938 = vsel %vm1103, %v2441, 0
    %2940 = vmatprep.subr.mxu0 0.0
    %2941 = vmatpush1.xpose.msra.mxu0 %v2938
    %2942 = vmatprep.subr.mxu0 0.0
    %2943 = vmatpush1.xpose.msra.mxu0 0.0
    %2944 = vmatprep.subr.mxu0 0.0
    %2945 = vmatpush1.xpose.msra.mxu0 0.0
    %2946 = vmatprep.subr.mxu0 0.0
    %2947 = vmatpush1.xpose.msra.mxu0 0.0
    %2948 = vmatprep.subr.mxu0 0.0
    %2949 = vmatpush1.xpose.msra.mxu0 0.0
    %2950 = vmatprep.subr.mxu0 0.0
    %2951 = vmatpush1.xpose.msra.mxu0 0.0
    %2952 = vmatprep.subr.mxu0 0.0
    %2953 = vmatpush1.xpose.msra.mxu0 0.0
    %2954 = vmatprep.subr.mxu0 0.0
    %2955 = vmatpush1.xpose.msra.mxu0 0.0
    %2956 = vmatprep.subr.mxu0 0.0
    %2957 = vmatpush1.xpose.msra.mxu0 0.0
    %2958 = vmatprep.subr.mxu0 0.0
    %2959 = vmatpush1.xpose.msra.mxu0 0.0
    %2960 = vmatprep.subr.mxu0 0.0
    %2961 = vmatpush1.xpose.msra.mxu0 0.0
    %2962 = vmatprep.subr.mxu0 0.0
    %2963 = vmatpush1.xpose.msra.mxu0 0.0
    %2964 = vmatprep.subr.mxu0 0.0
    %2965 = vmatpush1.xpose.msra.mxu0 0.0
    %2966 = vmatprep.subr.mxu0 0.0
    %2967 = vmatpush1.xpose.msra.mxu0 0.0
    %2968 = vmatprep.subr.mxu0 0.0
    %2969 = vmatpush1.xpose.msra.mxu0 0.0
    %2970 = vmatprep.subr.mxu0 0.0
    %2971 = vmatpush1.xpose.msra.mxu0 0.0
    %2972 = vmatprep.subr.mxu0 0.0
    %2973 = vmatpush1.xpose.msra.mxu0 0.0
    %2974 = vmatprep.subr.mxu0 0.0
    %2975 = vmatpush1.xpose.msra.mxu0 0.0
    %2976 = vmatprep.subr.mxu0 0.0
    %2977 = vmatpush1.xpose.msra.mxu0 0.0
    %2978 = vmatprep.subr.mxu0 0.0
    %2979 = vmatpush1.xpose.msra.mxu0 0.0
    %2980 = vmatprep.subr.mxu0 0.0
    %2981 = vmatpush1.xpose.msra.mxu0 0.0
    %2982 = vmatprep.subr.mxu0 0.0
    %2983 = vmatpush1.xpose.msra.mxu0 0.0
    %2984 = vmatprep.subr.mxu0 0.0
    %2985 = vmatpush1.xpose.msra.mxu0 0.0
    %2986 = vmatprep.subr.mxu0 0.0
    %2987 = vmatpush1.xpose.msra.mxu0 0.0
    %2988 = vmatprep.subr.mxu0 0.0
    %2989 = vmatpush1.xpose.msra.mxu0 0.0
    %2990 = vmatprep.subr.mxu0 0.0
    %2991 = vmatpush1.xpose.msra.mxu0 0.0
    %2992 = vmatprep.subr.mxu0 0.0
    %2993 = vmatpush1.xpose.msra.mxu0 0.0
    %2994 = vmatprep.subr.mxu0 0.0
    %2995 = vmatpush1.xpose.msra.mxu0 0.0
    %2996 = vmatprep.subr.mxu0 0.0
    %2997 = vmatpush1.xpose.msra.mxu0 0.0
    %2998 = vmatprep.subr.mxu0 0.0
    %2999 = vmatpush1.xpose.msra.mxu0 0.0
    %3000 = vmatprep.subr.mxu0 0.0
    %3001 = vmatpush1.xpose.msra.mxu0 0.0
    %3002 = vmatprep.subr.mxu0 0.0
    %3003 = vmatpush1.xpose.msra.mxu0 0.0
    %3004 = vmatprep.mubr.f32.mxu0 0.0
    %3005 = vmatmul.mubr.f32.gmra.mrb[0].mxu0 %v2935
    %v3006 = vpop.f32.mrb[0].mxu0
    %v3007 = vadd.f32 %v189, %v3006
    %v3008 = vpop.f32.mrb[0].mxu0
    %3009 = vdwg.mxu0
    %v3011 = vsel %vm1103, %v2231, 0
    %v3014 = vsel %vm1103, %v2511, 0
    %3016 = vmatprep.subr.mxu0 0.0
    %3017 = vmatpush1.xpose.msra.mxu0 %v3014
    %3018 = vmatprep.subr.mxu0 0.0
    %3019 = vmatpush1.xpose.msra.mxu0 0.0
    %3020 = vmatprep.subr.mxu0 0.0
    %3021 = vmatpush1.xpose.msra.mxu0 0.0
    %3022 = vmatprep.subr.mxu0 0.0
    %3023 = vmatpush1.xpose.msra.mxu0 0.0
    %3024 = vmatprep.subr.mxu0 0.0
    %3025 = vmatpush1.xpose.msra.mxu0 0.0
    %3026 = vmatprep.subr.mxu0 0.0
    %3027 = vmatpush1.xpose.msra.mxu0 0.0
    %3028 = vmatprep.subr.mxu0 0.0
    %3029 = vmatpush1.xpose.msra.mxu0 0.0
    %3030 = vmatprep.subr.mxu0 0.0
    %3031 = vmatpush1.xpose.msra.mxu0 0.0
    %3032 = vmatprep.subr.mxu0 0.0
    %3033 = vmatpush1.xpose.msra.mxu0 0.0
    %3034 = vmatprep.subr.mxu0 0.0
    %3035 = vmatpush1.xpose.msra.mxu0 0.0
    %3036 = vmatprep.subr.mxu0 0.0
    %3037 = vmatpush1.xpose.msra.mxu0 0.0
    %3038 = vmatprep.subr.mxu0 0.0
    %3039 = vmatpush1.xpose.msra.mxu0 0.0
    %3040 = vmatprep.subr.mxu0 0.0
    %3041 = vmatpush1.xpose.msra.mxu0 0.0
    %3042 = vmatprep.subr.mxu0 0.0
    %3043 = vmatpush1.xpose.msra.mxu0 0.0
    %3044 = vmatprep.subr.mxu0 0.0
    %3045 = vmatpush1.xpose.msra.mxu0 0.0
    %3046 = vmatprep.subr.mxu0 0.0
    %3047 = vmatpush1.xpose.msra.mxu0 0.0
    %3048 = vmatprep.subr.mxu0 0.0
    %3049 = vmatpush1.xpose.msra.mxu0 0.0
    %3050 = vmatprep.subr.mxu0 0.0
    %3051 = vmatpush1.xpose.msra.mxu0 0.0
    %3052 = vmatprep.subr.mxu0 0.0
    %3053 = vmatpush1.xpose.msra.mxu0 0.0
    %3054 = vmatprep.subr.mxu0 0.0
    %3055 = vmatpush1.xpose.msra.mxu0 0.0
    %3056 = vmatprep.subr.mxu0 0.0
    %3057 = vmatpush1.xpose.msra.mxu0 0.0
    %3058 = vmatprep.subr.mxu0 0.0
    %3059 = vmatpush1.xpose.msra.mxu0 0.0
    %3060 = vmatprep.subr.mxu0 0.0
    %3061 = vmatpush1.xpose.msra.mxu0 0.0
    %3062 = vmatprep.subr.mxu0 0.0
    %3063 = vmatpush1.xpose.msra.mxu0 0.0
    %3064 = vmatprep.subr.mxu0 0.0
    %3065 = vmatpush1.xpose.msra.mxu0 0.0
    %3066 = vmatprep.subr.mxu0 0.0
    %3067 = vmatpush1.xpose.msra.mxu0 0.0
    %3068 = vmatprep.subr.mxu0 0.0
    %3069 = vmatpush1.xpose.msra.mxu0 0.0
    %3070 = vmatprep.subr.mxu0 0.0
    %3071 = vmatpush1.xpose.msra.mxu0 0.0
    %3072 = vmatprep.subr.mxu0 0.0
    %3073 = vmatpush1.xpose.msra.mxu0 0.0
    %3074 = vmatprep.subr.mxu0 0.0
    %3075 = vmatpush1.xpose.msra.mxu0 0.0
    %3076 = vmatprep.subr.mxu0 0.0
    %3077 = vmatpush1.xpose.msra.mxu0 0.0
    %3078 = vmatprep.subr.mxu0 0.0
    %3079 = vmatpush1.xpose.msra.mxu0 0.0
    %3080 = vmatprep.mubr.f32.mxu0 0.0
    %3081 = vmatmul.mubr.f32.gmra.mrb[0].mxu0 %v3011
    %v3082 = vpop.f32.mrb[0].mxu0
    %v3083 = vadd.f32 %v190, %v3082
    %v3084 = vpop.f32.mrb[0].mxu0
    %3085 = vdwg.mxu0
    %v3087 = vsel %vm1103, %v2301, 0
    %v3090 = vsel %vm1103, %v2581, 0
    %3092 = vmatprep.subr.mxu0 0.0
    %3093 = vmatpush1.xpose.msra.mxu0 %v3090
    %3094 = vmatprep.subr.mxu0 0.0
    %3095 = vmatpush1.xpose.msra.mxu0 0.0
    %3096 = vmatprep.subr.mxu0 0.0
    %3097 = vmatpush1.xpose.msra.mxu0 0.0
    %3098 = vmatprep.subr.mxu0 0.0
    %3099 = vmatpush1.xpose.msra.mxu0 0.0
    %3100 = vmatprep.subr.mxu0 0.0
    %3101 = vmatpush1.xpose.msra.mxu0 0.0
    %3102 = vmatprep.subr.mxu0 0.0
    %3103 = vmatpush1.xpose.msra.mxu0 0.0
    %3104 = vmatprep.subr.mxu0 0.0
    %3105 = vmatpush1.xpose.msra.mxu0 0.0
    %3106 = vmatprep.subr.mxu0 0.0
    %3107 = vmatpush1.xpose.msra.mxu0 0.0
    %3108 = vmatprep.subr.mxu0 0.0
    %3109 = vmatpush1.xpose.msra.mxu0 0.0
    %3110 = vmatprep.subr.mxu0 0.0
    %3111 = vmatpush1.xpose.msra.mxu0 0.0
    %3112 = vmatprep.subr.mxu0 0.0
    %3113 = vmatpush1.xpose.msra.mxu0 0.0
    %3114 = vmatprep.subr.mxu0 0.0
    %3115 = vmatpush1.xpose.msra.mxu0 0.0
    %3116 = vmatprep.subr.mxu0 0.0
    %3117 = vmatpush1.xpose.msra.mxu0 0.0
    %3118 = vmatprep.subr.mxu0 0.0
    %3119 = vmatpush1.xpose.msra.mxu0 0.0
    %3120 = vmatprep.subr.mxu0 0.0
    %3121 = vmatpush1.xpose.msra.mxu0 0.0
    %3122 = vmatprep.subr.mxu0 0.0
    %3123 = vmatpush1.xpose.msra.mxu0 0.0
    %3124 = vmatprep.subr.mxu0 0.0
    %3125 = vmatpush1.xpose.msra.mxu0 0.0
    %3126 = vmatprep.subr.mxu0 0.0
    %3127 = vmatpush1.xpose.msra.mxu0 0.0
    %3128 = vmatprep.subr.mxu0 0.0
    %3129 = vmatpush1.xpose.msra.mxu0 0.0
    %3130 = vmatprep.subr.mxu0 0.0
    %3131 = vmatpush1.xpose.msra.mxu0 0.0
    %3132 = vmatprep.subr.mxu0 0.0
    %3133 = vmatpush1.xpose.msra.mxu0 0.0
    %3134 = vmatprep.subr.mxu0 0.0
    %3135 = vmatpush1.xpose.msra.mxu0 0.0
    %3136 = vmatprep.subr.mxu0 0.0
    %3137 = vmatpush1.xpose.msra.mxu0 0.0
    %3138 = vmatprep.subr.mxu0 0.0
    %3139 = vmatpush1.xpose.msra.mxu0 0.0
    %3140 = vmatprep.subr.mxu0 0.0
    %3141 = vmatpush1.xpose.msra.mxu0 0.0
    %3142 = vmatprep.subr.mxu0 0.0
    %3143 = vmatpush1.xpose.msra.mxu0 0.0
    %3144 = vmatprep.subr.mxu0 0.0
    %3145 = vmatpush1.xpose.msra.mxu0 0.0
    %3146 = vmatprep.subr.mxu0 0.0
    %3147 = vmatpush1.xpose.msra.mxu0 0.0
    %3148 = vmatprep.subr.mxu0 0.0
    %3149 = vmatpush1.xpose.msra.mxu0 0.0
    %3150 = vmatprep.subr.mxu0 0.0
    %3151 = vmatpush1.xpose.msra.mxu0 0.0
    %3152 = vmatprep.subr.mxu0 0.0
    %3153 = vmatpush1.xpose.msra.mxu0 0.0
    %3154 = vmatprep.subr.mxu0 0.0
    %3155 = vmatpush1.xpose.msra.mxu0 0.0
    %3156 = vmatprep.mubr.f32.mxu0 0.0
    %3157 = vmatmul.mubr.f32.gmra.mrb[0].mxu0 %v3087
    %v3158 = vpop.f32.mrb[0].mxu0
    %v3159 = vadd.f32 %v191, %v3158
    %v3160 = vpop.f32.mrb[0].mxu0
    %3161 = vdwg.mxu0
    %v3163 = vsel %vm1103, %v2371, 0
    %v3166 = vsel %vm1103, %v2651, 0
    %3168 = vmatprep.subr.mxu0 0.0
    %3169 = vmatpush1.xpose.msra.mxu0 %v3166
    %3170 = vmatprep.subr.mxu0 0.0
    %3171 = vmatpush1.xpose.msra.mxu0 0.0
    %3172 = vmatprep.subr.mxu0 0.0
    %3173 = vmatpush1.xpose.msra.mxu0 0.0
    %3174 = vmatprep.subr.mxu0 0.0
    %3175 = vmatpush1.xpose.msra.mxu0 0.0
    %3176 = vmatprep.subr.mxu0 0.0
    %3177 = vmatpush1.xpose.msra.mxu0 0.0
    %3178 = vmatprep.subr.mxu0 0.0
    %3179 = vmatpush1.xpose.msra.mxu0 0.0
    %3180 = vmatprep.subr.mxu0 0.0
    %3181 = vmatpush1.xpose.msra.mxu0 0.0
    %3182 = vmatprep.subr.mxu0 0.0
    %3183 = vmatpush1.xpose.msra.mxu0 0.0
    %3184 = vmatprep.subr.mxu0 0.0
    %3185 = vmatpush1.xpose.msra.mxu0 0.0
    %3186 = vmatprep.subr.mxu0 0.0
    %3187 = vmatpush1.xpose.msra.mxu0 0.0
    %3188 = vmatprep.subr.mxu0 0.0
    %3189 = vmatpush1.xpose.msra.mxu0 0.0
    %3190 = vmatprep.subr.mxu0 0.0
    %3191 = vmatpush1.xpose.msra.mxu0 0.0
    %3192 = vmatprep.subr.mxu0 0.0
    %3193 = vmatpush1.xpose.msra.mxu0 0.0
    %3194 = vmatprep.subr.mxu0 0.0
    %3195 = vmatpush1.xpose.msra.mxu0 0.0
    %3196 = vmatprep.subr.mxu0 0.0
    %3197 = vmatpush1.xpose.msra.mxu0 0.0
    %3198 = vmatprep.subr.mxu0 0.0
    %3199 = vmatpush1.xpose.msra.mxu0 0.0
    %3200 = vmatprep.subr.mxu0 0.0
    %3201 = vmatpush1.xpose.msra.mxu0 0.0
    %3202 = vmatprep.subr.mxu0 0.0
    %3203 = vmatpush1.xpose.msra.mxu0 0.0
    %3204 = vmatprep.subr.mxu0 0.0
    %3205 = vmatpush1.xpose.msra.mxu0 0.0
    %3206 = vmatprep.subr.mxu0 0.0
    %3207 = vmatpush1.xpose.msra.mxu0 0.0
    %3208 = vmatprep.subr.mxu0 0.0
    %3209 = vmatpush1.xpose.msra.mxu0 0.0
    %3210 = vmatprep.subr.mxu0 0.0
    %3211 = vmatpush1.xpose.msra.mxu0 0.0
    %3212 = vmatprep.subr.mxu0 0.0
    %3213 = vmatpush1.xpose.msra.mxu0 0.0
    %3214 = vmatprep.subr.mxu0 0.0
    %3215 = vmatpush1.xpose.msra.mxu0 0.0
    %3216 = vmatprep.subr.mxu0 0.0
    %3217 = vmatpush1.xpose.msra.mxu0 0.0
    %3218 = vmatprep.subr.mxu0 0.0
    %3219 = vmatpush1.xpose.msra.mxu0 0.0
    %3220 = vmatprep.subr.mxu0 0.0
    %3221 = vmatpush1.xpose.msra.mxu0 0.0
    %3222 = vmatprep.subr.mxu0 0.0
    %3223 = vmatpush1.xpose.msra.mxu0 0.0
    %3224 = vmatprep.subr.mxu0 0.0
    %3225 = vmatpush1.xpose.msra.mxu0 0.0
    %3226 = vmatprep.subr.mxu0 0.0
    %3227 = vmatpush1.xpose.msra.mxu0 0.0
    %3228 = vmatprep.subr.mxu0 0.0
    %3229 = vmatpush1.xpose.msra.mxu0 0.0
    %3230 = vmatprep.subr.mxu0 0.0
    %3231 = vmatpush1.xpose.msra.mxu0 0.0
    %3232 = vmatprep.mubr.f32.mxu0 0.0
    %3233 = vmatmul.mubr.f32.gmra.mrb[0].mxu0 %v3163
    %v3234 = vpop.f32.mrb[0].mxu0
    %v3235 = vadd.f32 %v192, %v3234
    %v3236 = vpop.f32.mrb[0].mxu0
    %3237 = vdwg.mxu0
    %v3238 = vsel %vm1103, %v3007, -inf
    %3239 = vmax.xlane.f32.xlu0 %v3238
    %v3240 = vpop.xlane.xlu0 %3239
    %v3241 = vsel %vm1103, %v3083, -inf
    %3242 = vmax.xlane.f32.xlu0 %v3241
    %v3243 = vpop.xlane.xlu0 %3242
    %v3244 = vsel %vm1103, %v3159, -inf
    %3245 = vmax.xlane.f32.xlu0 %v3244
    %v3246 = vpop.xlane.xlu0 %3245
    %v3247 = vsel %vm1103, %v3235, -inf
    %3248 = vmax.xlane.f32.xlu0 %v3247
    %v3249 = vpop.xlane.xlu0 %3248
    %v3250 = vsub.f32 %v3007, %v3240
    %v3251 = vsub.f32 %v3083, %v3243
    %v3252 = vsub.f32 %v3159, %v3246
    %v3253 = vsub.f32 %v3235, %v3249
    %v3254 = vmul.f32 %v3250, 1.442695
    %v3255 = vpow.pop %v3254
    %v3256 = vmul.f32 %v3251, 1.442695
    %v3257 = vpow.pop %v3256
    %v3258 = vmul.f32 %v3252, 1.442695
    %v3259 = vpow.pop %v3258
    %v3260 = vmul.f32 %v3253, 1.442695
    %v3261 = vpow.pop %v3260
    %v3262 = vsel %vm1103, %v3255, 0.0
    %3263 = vadd.xlane.f32.xlu0 %v3262
    %v3264 = vpop.xlane.xlu0 %3263
    %v3265 = vsel %vm1103, %v3257, 0.0
    %3266 = vadd.xlane.f32.xlu0 %v3265
    %v3267 = vpop.xlane.xlu0 %3266
    %v3268 = vsel %vm1103, %v3259, 0.0
    %3269 = vadd.xlane.f32.xlu0 %v3268
    %v3270 = vpop.xlane.xlu0 %3269
    %v3271 = vsel %vm1103, %v3261, 0.0
    %3272 = vadd.xlane.f32.xlu0 %v3271
    %v3273 = vpop.xlane.xlu0 %3272
    %v3274 = vrcp.pop %v3264
    %v3275 = vrcp.pop %v3267
    %v3276 = vrcp.pop %v3270
    %v3277 = vrcp.pop %v3273
    %v3278 = vmul.f32 %v3255, %v3274
    %v3279 = vmul.f32 %v3257, %v3275
    %v3280 = vmul.f32 %v3259, %v3276
    %v3281 = vmul.f32 %v3261, %v3277
    %v3283 = vsel %vm1103, %v3278, 0
    %3285 = vmatprep.subr.mxu0 0.0
    %3286 = vmatpush1.msra.mxu0 %v2721
    %3287 = vmatprep.subr.mxu0 0.0
    %3288 = vmatpush1.msra.mxu0 0.0
    %3289 = vmatprep.subr.mxu0 0.0
    %3290 = vmatpush1.msra.mxu0 0.0
    %3291 = vmatprep.subr.mxu0 0.0
    %3292 = vmatpush1.msra.mxu0 0.0
    %3293 = vmatprep.subr.mxu0 0.0
    %3294 = vmatpush1.msra.mxu0 0.0
    %3295 = vmatprep.subr.mxu0 0.0
    %3296 = vmatpush1.msra.mxu0 0.0
    %3297 = vmatprep.subr.mxu0 0.0
    %3298 = vmatpush1.msra.mxu0 0.0
    %3299 = vmatprep.subr.mxu0 0.0
    %3300 = vmatpush1.msra.mxu0 0.0
    %3301 = vmatprep.subr.mxu0 0.0
    %3302 = vmatpush1.msra.mxu0 0.0
    %3303 = vmatprep.subr.mxu0 0.0
    %3304 = vmatpush1.msra.mxu0 0.0
    %3305 = vmatprep.subr.mxu0 0.0
    %3306 = vmatpush1.msra.mxu0 0.0
    %3307 = vmatprep.subr.mxu0 0.0
    %3308 = vmatpush1.msra.mxu0 0.0
    %3309 = vmatprep.subr.mxu0 0.0
    %3310 = vmatpush1.msra.mxu0 0.0
    %3311 = vmatprep.subr.mxu0 0.0
    %3312 = vmatpush1.msra.mxu0 0.0
    %3313 = vmatprep.subr.mxu0 0.0
    %3314 = vmatpush1.msra.mxu0 0.0
    %3315 = vmatprep.subr.mxu0 0.0
    %3316 = vmatpush1.msra.mxu0 0.0
    %3317 = vmatprep.subr.mxu0 0.0
    %3318 = vmatpush1.msra.mxu0 0.0
    %3319 = vmatprep.subr.mxu0 0.0
    %3320 = vmatpush1.msra.mxu0 0.0
    %3321 = vmatprep.subr.mxu0 0.0
    %3322 = vmatpush1.msra.mxu0 0.0
    %3323 = vmatprep.subr.mxu0 0.0
    %3324 = vmatpush1.msra.mxu0 0.0
    %3325 = vmatprep.subr.mxu0 0.0
    %3326 = vmatpush1.msra.mxu0 0.0
    %3327 = vmatprep.subr.mxu0 0.0
    %3328 = vmatpush1.msra.mxu0 0.0
    %3329 = vmatprep.subr.mxu0 0.0
    %3330 = vmatpush1.msra.mxu0 0.0
    %3331 = vmatprep.subr.mxu0 0.0
    %3332 = vmatpush1.msra.mxu0 0.0
    %3333 = vmatprep.subr.mxu0 0.0
    %3334 = vmatpush1.msra.mxu0 0.0
    %3335 = vmatprep.subr.mxu0 0.0
    %3336 = vmatpush1.msra.mxu0 0.0
    %3337 = vmatprep.subr.mxu0 0.0
    %3338 = vmatpush1.msra.mxu0 0.0
    %3339 = vmatprep.subr.mxu0 0.0
    %3340 = vmatpush1.msra.mxu0 0.0
    %3341 = vmatprep.subr.mxu0 0.0
    %3342 = vmatpush1.msra.mxu0 0.0
    %3343 = vmatprep.subr.mxu0 0.0
    %3344 = vmatpush1.msra.mxu0 0.0
    %3345 = vmatprep.subr.mxu0 0.0
    %3346 = vmatpush1.msra.mxu0 0.0
    %3347 = vmatprep.subr.mxu0 0.0
    %3348 = vmatpush1.msra.mxu0 0.0
    %3349 = vmatprep.mubr.f32.mxu0 0.0
    %3350 = vmatmul.mubr.f32.gmra.mrb[0].mxu0 %v3283
    %v3351 = vpop.f32.mrb[0].mxu0
    %v3352 = vadd.f32 0.0, %v3351
    %v3353 = vpop.f32.mrb[0].mxu0
    %3354 = vdwg.mxu0
    %v3356 = vsel %vm1103, %v3279, 0
    %3358 = vmatprep.subr.mxu0 0.0
    %3359 = vmatpush1.msra.mxu0 %v2791
    %3360 = vmatprep.subr.mxu0 0.0
    %3361 = vmatpush1.msra.mxu0 0.0
    %3362 = vmatprep.subr.mxu0 0.0
    %3363 = vmatpush1.msra.mxu0 0.0
    %3364 = vmatprep.subr.mxu0 0.0
    %3365 = vmatpush1.msra.mxu0 0.0
    %3366 = vmatprep.subr.mxu0 0.0
    %3367 = vmatpush1.msra.mxu0 0.0
    %3368 = vmatprep.subr.mxu0 0.0
    %3369 = vmatpush1.msra.mxu0 0.0
    %3370 = vmatprep.subr.mxu0 0.0
    %3371 = vmatpush1.msra.mxu0 0.0
    %3372 = vmatprep.subr.mxu0 0.0
    %3373 = vmatpush1.msra.mxu0 0.0
    %3374 = vmatprep.subr.mxu0 0.0
    %3375 = vmatpush1.msra.mxu0 0.0
    %3376 = vmatprep.subr.mxu0 0.0
    %3377 = vmatpush1.msra.mxu0 0.0
    %3378 = vmatprep.subr.mxu0 0.0
    %3379 = vmatpush1.msra.mxu0 0.0
    %3380 = vmatprep.subr.mxu0 0.0
    %3381 = vmatpush1.msra.mxu0 0.0
    %3382 = vmatprep.subr.mxu0 0.0
    %3383 = vmatpush1.msra.mxu0 0.0
    %3384 = vmatprep.subr.mxu0 0.0
    %3385 = vmatpush1.msra.mxu0 0.0
    %3386 = vmatprep.subr.mxu0 0.0
    %3387 = vmatpush1.msra.mxu0 0.0
    %3388 = vmatprep.subr.mxu0 0.0
    %3389 = vmatpush1.msra.mxu0 0.0
    %3390 = vmatprep.subr.mxu0 0.0
    %3391 = vmatpush1.msra.mxu0 0.0
    %3392 = vmatprep.subr.mxu0 0.0
    %3393 = vmatpush1.msra.mxu0 0.0
    %3394 = vmatprep.subr.mxu0 0.0
    %3395 = vmatpush1.msra.mxu0 0.0
    %3396 = vmatprep.subr.mxu0 0.0
    %3397 = vmatpush1.msra.mxu0 0.0
    %3398 = vmatprep.subr.mxu0 0.0
    %3399 = vmatpush1.msra.mxu0 0.0
    %3400 = vmatprep.subr.mxu0 0.0
    %3401 = vmatpush1.msra.mxu0 0.0
    %3402 = vmatprep.subr.mxu0 0.0
    %3403 = vmatpush1.msra.mxu0 0.0
    %3404 = vmatprep.subr.mxu0 0.0
    %3405 = vmatpush1.msra.mxu0 0.0
    %3406 = vmatprep.subr.mxu0 0.0
    %3407 = vmatpush1.msra.mxu0 0.0
    %3408 = vmatprep.subr.mxu0 0.0
    %3409 = vmatpush1.msra.mxu0 0.0
    %3410 = vmatprep.subr.mxu0 0.0
    %3411 = vmatpush1.msra.mxu0 0.0
    %3412 = vmatprep.subr.mxu0 0.0
    %3413 = vmatpush1.msra.mxu0 0.0
    %3414 = vmatprep.subr.mxu0 0.0
    %3415 = vmatpush1.msra.mxu0 0.0
    %3416 = vmatprep.subr.mxu0 0.0
    %3417 = vmatpush1.msra.mxu0 0.0
    %3418 = vmatprep.subr.mxu0 0.0
    %3419 = vmatpush1.msra.mxu0 0.0
    %3420 = vmatprep.subr.mxu0 0.0
    %3421 = vmatpush1.msra.mxu0 0.0
    %3422 = vmatprep.mubr.f32.mxu0 0.0
    %3423 = vmatmul.mubr.f32.gmra.mrb[0].mxu0 %v3356
    %v3424 = vpop.f32.mrb[0].mxu0
    %v3425 = vadd.f32 0.0, %v3424
    %v3426 = vpop.f32.mrb[0].mxu0
    %3427 = vdwg.mxu0
    %v3429 = vsel %vm1103, %v3280, 0
    %3431 = vmatprep.subr.mxu0 0.0
    %3432 = vmatpush1.msra.mxu0 %v2861
    %3433 = vmatprep.subr.mxu0 0.0
    %3434 = vmatpush1.msra.mxu0 0.0
    %3435 = vmatprep.subr.mxu0 0.0
    %3436 = vmatpush1.msra.mxu0 0.0
    %3437 = vmatprep.subr.mxu0 0.0
    %3438 = vmatpush1.msra.mxu0 0.0
    %3439 = vmatprep.subr.mxu0 0.0
    %3440 = vmatpush1.msra.mxu0 0.0
    %3441 = vmatprep.subr.mxu0 0.0
    %3442 = vmatpush1.msra.mxu0 0.0
    %3443 = vmatprep.subr.mxu0 0.0
    %3444 = vmatpush1.msra.mxu0 0.0
    %3445 = vmatprep.subr.mxu0 0.0
    %3446 = vmatpush1.msra.mxu0 0.0
    %3447 = vmatprep.subr.mxu0 0.0
    %3448 = vmatpush1.msra.mxu0 0.0
    %3449 = vmatprep.subr.mxu0 0.0
    %3450 = vmatpush1.msra.mxu0 0.0
    %3451 = vmatprep.subr.mxu0 0.0
    %3452 = vmatpush1.msra.mxu0 0.0
    %3453 = vmatprep.subr.mxu0 0.0
    %3454 = vmatpush1.msra.mxu0 0.0
    %3455 = vmatprep.subr.mxu0 0.0
    %3456 = vmatpush1.msra.mxu0 0.0
    %3457 = vmatprep.subr.mxu0 0.0
    %3458 = vmatpush1.msra.mxu0 0.0
    %3459 = vmatprep.subr.mxu0 0.0
    %3460 = vmatpush1.msra.mxu0 0.0
    %3461 = vmatprep.subr.mxu0 0.0
    %3462 = vmatpush1.msra.mxu0 0.0
    %3463 = vmatprep.subr.mxu0 0.0
    %3464 = vmatpush1.msra.mxu0 0.0
    %3465 = vmatprep.subr.mxu0 0.0
    %3466 = vmatpush1.msra.mxu0 0.0
    %3467 = vmatprep.subr.mxu0 0.0
    %3468 = vmatpush1.msra.mxu0 0.0
    %3469 = vmatprep.subr.mxu0 0.0
    %3470 = vmatpush1.msra.mxu0 0.0
    %3471 = vmatprep.subr.mxu0 0.0
    %3472 = vmatpush1.msra.mxu0 0.0
    %3473 = vmatprep.subr.mxu0 0.0
    %3474 = vmatpush1.msra.mxu0 0.0
    %3475 = vmatprep.subr.mxu0 0.0
    %3476 = vmatpush1.msra.mxu0 0.0
    %3477 = vmatprep.subr.mxu0 0.0
    %3478 = vmatpush1.msra.mxu0 0.0
    %3479 = vmatprep.subr.mxu0 0.0
    %3480 = vmatpush1.msra.mxu0 0.0
    %3481 = vmatprep.subr.mxu0 0.0
    %3482 = vmatpush1.msra.mxu0 0.0
    %3483 = vmatprep.subr.mxu0 0.0
    %3484 = vmatpush1.msra.mxu0 0.0
    %3485 = vmatprep.subr.mxu0 0.0
    %3486 = vmatpush1.msra.mxu0 0.0
    %3487 = vmatprep.subr.mxu0 0.0
    %3488 = vmatpush1.msra.mxu0 0.0
    %3489 = vmatprep.subr.mxu0 0.0
    %3490 = vmatpush1.msra.mxu0 0.0
    %3491 = vmatprep.subr.mxu0 0.0
    %3492 = vmatpush1.msra.mxu0 0.0
    %3493 = vmatprep.subr.mxu0 0.0
    %3494 = vmatpush1.msra.mxu0 0.0
    %3495 = vmatprep.mubr.f32.mxu0 0.0
    %3496 = vmatmul.mubr.f32.gmra.mrb[0].mxu0 %v3429
    %v3497 = vpop.f32.mrb[0].mxu0
    %v3498 = vadd.f32 0.0, %v3497
    %v3499 = vpop.f32.mrb[0].mxu0
    %3500 = vdwg.mxu0
    %v3502 = vsel %vm1103, %v3281, 0
    %3504 = vmatprep.subr.mxu0 0.0
    %3505 = vmatpush1.msra.mxu0 %v2931
    %3506 = vmatprep.subr.mxu0 0.0
    %3507 = vmatpush1.msra.mxu0 0.0
    %3508 = vmatprep.subr.mxu0 0.0
    %3509 = vmatpush1.msra.mxu0 0.0
    %3510 = vmatprep.subr.mxu0 0.0
    %3511 = vmatpush1.msra.mxu0 0.0
    %3512 = vmatprep.subr.mxu0 0.0
    %3513 = vmatpush1.msra.mxu0 0.0
    %3514 = vmatprep.subr.mxu0 0.0
    %3515 = vmatpush1.msra.mxu0 0.0
    %3516 = vmatprep.subr.mxu0 0.0
    %3517 = vmatpush1.msra.mxu0 0.0
    %3518 = vmatprep.subr.mxu0 0.0
    %3519 = vmatpush1.msra.mxu0 0.0
    %3520 = vmatprep.subr.mxu0 0.0
    %3521 = vmatpush1.msra.mxu0 0.0
    %3522 = vmatprep.subr.mxu0 0.0
    %3523 = vmatpush1.msra.mxu0 0.0
    %3524 = vmatprep.subr.mxu0 0.0
    %3525 = vmatpush1.msra.mxu0 0.0
    %3526 = vmatprep.subr.mxu0 0.0
    %3527 = vmatpush1.msra.mxu0 0.0
    %3528 = vmatprep.subr.mxu0 0.0
    %3529 = vmatpush1.msra.mxu0 0.0
    %3530 = vmatprep.subr.mxu0 0.0
    %3531 = vmatpush1.msra.mxu0 0.0
    %3532 = vmatprep.subr.mxu0 0.0
    %3533 = vmatpush1.msra.mxu0 0.0
    %3534 = vmatprep.subr.mxu0 0.0
    %3535 = vmatpush1.msra.mxu0 0.0
    %3536 = vmatprep.subr.mxu0 0.0
    %3537 = vmatpush1.msra.mxu0 0.0
    %3538 = vmatprep.subr.mxu0 0.0
    %3539 = vmatpush1.msra.mxu0 0.0
    %3540 = vmatprep.subr.mxu0 0.0
    %3541 = vmatpush1.msra.mxu0 0.0
    %3542 = vmatprep.subr.mxu0 0.0
    %3543 = vmatpush1.msra.mxu0 0.0
    %3544 = vmatprep.subr.mxu0 0.0
    %3545 = vmatpush1.msra.mxu0 0.0
    %3546 = vmatprep.subr.mxu0 0.0
    %3547 = vmatpush1.msra.mxu0 0.0
    %3548 = vmatprep.subr.mxu0 0.0
    %3549 = vmatpush1.msra.mxu0 0.0
    %3550 = vmatprep.subr.mxu0 0.0
    %3551 = vmatpush1.msra.mxu0 0.0
    %3552 = vmatprep.subr.mxu0 0.0
    %3553 = vmatpush1.msra.mxu0 0.0
    %3554 = vmatprep.subr.mxu0 0.0
    %3555 = vmatpush1.msra.mxu0 0.0
    %3556 = vmatprep.subr.mxu0 0.0
    %3557 = vmatpush1.msra.mxu0 0.0
    %3558 = vmatprep.subr.mxu0 0.0
    %3559 = vmatpush1.msra.mxu0 0.0
    %3560 = vmatprep.subr.mxu0 0.0
    %3561 = vmatpush1.msra.mxu0 0.0
    %3562 = vmatprep.subr.mxu0 0.0
    %3563 = vmatpush1.msra.mxu0 0.0
    %3564 = vmatprep.subr.mxu0 0.0
    %3565 = vmatpush1.msra.mxu0 0.0
    %3566 = vmatprep.subr.mxu0 0.0
    %3567 = vmatpush1.msra.mxu0 0.0
    %3568 = vmatprep.mubr.f32.mxu0 0.0
    %3569 = vmatmul.mubr.f32.gmra.mrb[0].mxu0 %v3502
    %v3570 = vpop.f32.mrb[0].mxu0
    %v3571 = vadd.f32 0.0, %v3570
    %v3572 = vpop.f32.mrb[0].mxu0
    %3573 = vdwg.mxu0
    %v3575 = vsel %vm1103, %v3352, 0
    %3577 = vmatprep.subr.mxu0 0.0
    %3578 = vmatpush1.xpose.msra.mxu0 %v1748
    %3579 = vmatprep.subr.mxu0 0.0
    %3580 = vmatpush1.xpose.msra.mxu0 %v1751
    %3581 = vmatprep.subr.mxu0 0.0
    %3582 = vmatpush1.xpose.msra.mxu0 %v1754
    %3583 = vmatprep.subr.mxu0 0.0
    %3584 = vmatpush1.xpose.msra.mxu0 %v1757
    %3585 = vmatprep.subr.mxu0 0.0
    %3586 = vmatpush1.xpose.msra.mxu0 0.0
    %3587 = vmatprep.subr.mxu0 0.0
    %3588 = vmatpush1.xpose.msra.mxu0 0.0
    %3589 = vmatprep.subr.mxu0 0.0
    %3590 = vmatpush1.xpose.msra.mxu0 0.0
    %3591 = vmatprep.subr.mxu0 0.0
    %3592 = vmatpush1.xpose.msra.mxu0 0.0
    %3593 = vmatprep.subr.mxu0 0.0
    %3594 = vmatpush1.xpose.msra.mxu0 0.0
    %3595 = vmatprep.subr.mxu0 0.0
    %3596 = vmatpush1.xpose.msra.mxu0 0.0
    %3597 = vmatprep.subr.mxu0 0.0
    %3598 = vmatpush1.xpose.msra.mxu0 0.0
    %3599 = vmatprep.subr.mxu0 0.0
    %3600 = vmatpush1.xpose.msra.mxu0 0.0
    %3601 = vmatprep.subr.mxu0 0.0
    %3602 = vmatpush1.xpose.msra.mxu0 0.0
    %3603 = vmatprep.subr.mxu0 0.0
    %3604 = vmatpush1.xpose.msra.mxu0 0.0
    %3605 = vmatprep.subr.mxu0 0.0
    %3606 = vmatpush1.xpose.msra.mxu0 0.0
    %3607 = vmatprep.subr.mxu0 0.0
    %3608 = vmatpush1.xpose.msra.mxu0 0.0
    %3609 = vmatprep.subr.mxu0 0.0
    %3610 = vmatpush1.xpose.msra.mxu0 0.0
    %3611 = vmatprep.subr.mxu0 0.0
    %3612 = vmatpush1.xpose.msra.mxu0 0.0
    %3613 = vmatprep.subr.mxu0 0.0
    %3614 = vmatpush1.xpose.msra.mxu0 0.0
    %3615 = vmatprep.subr.mxu0 0.0
    %3616 = vmatpush1.xpose.msra.mxu0 0.0
    %3617 = vmatprep.subr.mxu0 0.0
    %3618 = vmatpush1.xpose.msra.mxu0 0.0
    %3619 = vmatprep.subr.mxu0 0.0
    %3620 = vmatpush1.xpose.msra.mxu0 0.0
    %3621 = vmatprep.subr.mxu0 0.0
    %3622 = vmatpush1.xpose.msra.mxu0 0.0
    %3623 = vmatprep.subr.mxu0 0.0
    %3624 = vmatpush1.xpose.msra.mxu0 0.0
    %3625 = vmatprep.subr.mxu0 0.0
    %3626 = vmatpush1.xpose.msra.mxu0 0.0
    %3627 = vmatprep.subr.mxu0 0.0
    %3628 = vmatpush1.xpose.msra.mxu0 0.0
    %3629 = vmatprep.subr.mxu0 0.0
    %3630 = vmatpush1.xpose.msra.mxu0 0.0
    %3631 = vmatprep.subr.mxu0 0.0
    %3632 = vmatpush1.xpose.msra.mxu0 0.0
    %3633 = vmatprep.subr.mxu0 0.0
    %3634 = vmatpush1.xpose.msra.mxu0 0.0
    %3635 = vmatprep.subr.mxu0 0.0
    %3636 = vmatpush1.xpose.msra.mxu0 0.0
    %3637 = vmatprep.subr.mxu0 0.0
    %3638 = vmatpush1.xpose.msra.mxu0 0.0
    %3639 = vmatprep.subr.mxu0 0.0
    %3640 = vmatpush1.xpose.msra.mxu0 0.0
    %3641 = vmatprep.mubr.f32.mxu0 0.0
    %3642 = vmatmul.mubr.f32.gmra.mrb[0].mxu0 %v3575
    %v3643 = vpop.f32.mrb[0].mxu0
    %v3644 = vadd.f32 0.0, %v3643
    %v3645 = vpop.f32.mrb[0].mxu0
    %3646 = vdwg.mxu0
    %v3648 = vsel %vm1103, %v3425, 0
    %3650 = vmatprep.subr.mxu0 0.0
    %3651 = vmatpush1.xpose.msra.mxu0 %v1833
    %3652 = vmatprep.subr.mxu0 0.0
    %3653 = vmatpush1.xpose.msra.mxu0 %v1836
    %3654 = vmatprep.subr.mxu0 0.0
    %3655 = vmatpush1.xpose.msra.mxu0 %v1839
    %3656 = vmatprep.subr.mxu0 0.0
    %3657 = vmatpush1.xpose.msra.mxu0 %v1842
    %3658 = vmatprep.subr.mxu0 0.0
    %3659 = vmatpush1.xpose.msra.mxu0 0.0
    %3660 = vmatprep.subr.mxu0 0.0
    %3661 = vmatpush1.xpose.msra.mxu0 0.0
    %3662 = vmatprep.subr.mxu0 0.0
    %3663 = vmatpush1.xpose.msra.mxu0 0.0
    %3664 = vmatprep.subr.mxu0 0.0
    %3665 = vmatpush1.xpose.msra.mxu0 0.0
    %3666 = vmatprep.subr.mxu0 0.0
    %3667 = vmatpush1.xpose.msra.mxu0 0.0
    %3668 = vmatprep.subr.mxu0 0.0
    %3669 = vmatpush1.xpose.msra.mxu0 0.0
    %3670 = vmatprep.subr.mxu0 0.0
    %3671 = vmatpush1.xpose.msra.mxu0 0.0
    %3672 = vmatprep.subr.mxu0 0.0
    %3673 = vmatpush1.xpose.msra.mxu0 0.0
    %3674 = vmatprep.subr.mxu0 0.0
    %3675 = vmatpush1.xpose.msra.mxu0 0.0
    %3676 = vmatprep.subr.mxu0 0.0
    %3677 = vmatpush1.xpose.msra.mxu0 0.0
    %3678 = vmatprep.subr.mxu0 0.0
    %3679 = vmatpush1.xpose.msra.mxu0 0.0
    %3680 = vmatprep.subr.mxu0 0.0
    %3681 = vmatpush1.xpose.msra.mxu0 0.0
    %3682 = vmatprep.subr.mxu0 0.0
    %3683 = vmatpush1.xpose.msra.mxu0 0.0
    %3684 = vmatprep.subr.mxu0 0.0
    %3685 = vmatpush1.xpose.msra.mxu0 0.0
    %3686 = vmatprep.subr.mxu0 0.0
    %3687 = vmatpush1.xpose.msra.mxu0 0.0
    %3688 = vmatprep.subr.mxu0 0.0
    %3689 = vmatpush1.xpose.msra.mxu0 0.0
    %3690 = vmatprep.subr.mxu0 0.0
    %3691 = vmatpush1.xpose.msra.mxu0 0.0
    %3692 = vmatprep.subr.mxu0 0.0
    %3693 = vmatpush1.xpose.msra.mxu0 0.0
    %3694 = vmatprep.subr.mxu0 0.0
    %3695 = vmatpush1.xpose.msra.mxu0 0.0
    %3696 = vmatprep.subr.mxu0 0.0
    %3697 = vmatpush1.xpose.msra.mxu0 0.0
    %3698 = vmatprep.subr.mxu0 0.0
    %3699 = vmatpush1.xpose.msra.mxu0 0.0
    %3700 = vmatprep.subr.mxu0 0.0
    %3701 = vmatpush1.xpose.msra.mxu0 0.0
    %3702 = vmatprep.subr.mxu0 0.0
    %3703 = vmatpush1.xpose.msra.mxu0 0.0
    %3704 = vmatprep.subr.mxu0 0.0
    %3705 = vmatpush1.xpose.msra.mxu0 0.0
    %3706 = vmatprep.subr.mxu0 0.0
    %3707 = vmatpush1.xpose.msra.mxu0 0.0
    %3708 = vmatprep.subr.mxu0 0.0
    %3709 = vmatpush1.xpose.msra.mxu0 0.0
    %3710 = vmatprep.subr.mxu0 0.0
    %3711 = vmatpush1.xpose.msra.mxu0 0.0
    %3712 = vmatprep.subr.mxu0 0.0
    %3713 = vmatpush1.xpose.msra.mxu0 0.0
    %3714 = vmatprep.mubr.f32.mxu0 0.0
    %3715 = vmatmul.mubr.f32.gmra.mrb[0].mxu0 %v3648
    %v3716 = vpop.f32.mrb[0].mxu0
    %v3717 = vadd.f32 0.0, %v3716
    %v3718 = vpop.f32.mrb[0].mxu0
    %3719 = vdwg.mxu0
    %v3721 = vsel %vm1103, %v3498, 0
    %3723 = vmatprep.subr.mxu0 0.0
    %3724 = vmatpush1.xpose.msra.mxu0 %v1918
    %3725 = vmatprep.subr.mxu0 0.0
    %3726 = vmatpush1.xpose.msra.mxu0 %v1921
    %3727 = vmatprep.subr.mxu0 0.0
    %3728 = vmatpush1.xpose.msra.mxu0 %v1924
    %3729 = vmatprep.subr.mxu0 0.0
    %3730 = vmatpush1.xpose.msra.mxu0 %v1927
    %3731 = vmatprep.subr.mxu0 0.0
    %3732 = vmatpush1.xpose.msra.mxu0 0.0
    %3733 = vmatprep.subr.mxu0 0.0
    %3734 = vmatpush1.xpose.msra.mxu0 0.0
    %3735 = vmatprep.subr.mxu0 0.0
    %3736 = vmatpush1.xpose.msra.mxu0 0.0
    %3737 = vmatprep.subr.mxu0 0.0
    %3738 = vmatpush1.xpose.msra.mxu0 0.0
    %3739 = vmatprep.subr.mxu0 0.0
    %3740 = vmatpush1.xpose.msra.mxu0 0.0
    %3741 = vmatprep.subr.mxu0 0.0
    %3742 = vmatpush1.xpose.msra.mxu0 0.0
    %3743 = vmatprep.subr.mxu0 0.0
    %3744 = vmatpush1.xpose.msra.mxu0 0.0
    %3745 = vmatprep.subr.mxu0 0.0
    %3746 = vmatpush1.xpose.msra.mxu0 0.0
    %3747 = vmatprep.subr.mxu0 0.0
    %3748 = vmatpush1.xpose.msra.mxu0 0.0
    %3749 = vmatprep.subr.mxu0 0.0
    %3750 = vmatpush1.xpose.msra.mxu0 0.0
    %3751 = vmatprep.subr.mxu0 0.0
    %3752 = vmatpush1.xpose.msra.mxu0 0.0
    %3753 = vmatprep.subr.mxu0 0.0
    %3754 = vmatpush1.xpose.msra.mxu0 0.0
    %3755 = vmatprep.subr.mxu0 0.0
    %3756 = vmatpush1.xpose.msra.mxu0 0.0
    %3757 = vmatprep.subr.mxu0 0.0
    %3758 = vmatpush1.xpose.msra.mxu0 0.0
    %3759 = vmatprep.subr.mxu0 0.0
    %3760 = vmatpush1.xpose.msra.mxu0 0.0
    %3761 = vmatprep.subr.mxu0 0.0
    %3762 = vmatpush1.xpose.msra.mxu0 0.0
    %3763 = vmatprep.subr.mxu0 0.0
    %3764 = vmatpush1.xpose.msra.mxu0 0.0
    %3765 = vmatprep.subr.mxu0 0.0
    %3766 = vmatpush1.xpose.msra.mxu0 0.0
    %3767 = vmatprep.subr.mxu0 0.0
    %3768 = vmatpush1.xpose.msra.mxu0 0.0
    %3769 = vmatprep.subr.mxu0 0.0
    %3770 = vmatpush1.xpose.msra.mxu0 0.0
    %3771 = vmatprep.subr.mxu0 0.0
    %3772 = vmatpush1.xpose.msra.mxu0 0.0
    %3773 = vmatprep.subr.mxu0 0.0
    %3774 = vmatpush1.xpose.msra.mxu0 0.0
    %3775 = vmatprep.subr.mxu0 0.0
    %3776 = vmatpush1.xpose.msra.mxu0 0.0
    %3777 = vmatprep.subr.mxu0 0.0
    %3778 = vmatpush1.xpose.msra.mxu0 0.0
    %3779 = vmatprep.subr.mxu0 0.0
    %3780 = vmatpush1.xpose.msra.mxu0 0.0
    %3781 = vmatprep.subr.mxu0 0.0
    %3782 = vmatpush1.xpose.msra.mxu0 0.0
    %3783 = vmatprep.subr.mxu0 0.0
    %3784 = vmatpush1.xpose.msra.mxu0 0.0
    %3785 = vmatprep.subr.mxu0 0.0
    %3786 = vmatpush1.xpose.msra.mxu0 0.0
    %3787 = vmatprep.mubr.f32.mxu0 0.0
    %3788 = vmatmul.mubr.f32.gmra.mrb[0].mxu0 %v3721
    %v3789 = vpop.f32.mrb[0].mxu0
    %v3790 = vadd.f32 0.0, %v3789
    %v3791 = vpop.f32.mrb[0].mxu0
    %3792 = vdwg.mxu0
    %v3794 = vsel %vm1103, %v3571, 0
    %3796 = vmatprep.subr.mxu0 0.0
    %3797 = vmatpush1.xpose.msra.mxu0 %v2003
    %3798 = vmatprep.subr.mxu0 0.0
    %3799 = vmatpush1.xpose.msra.mxu0 %v2006
    %3800 = vmatprep.subr.mxu0 0.0
    %3801 = vmatpush1.xpose.msra.mxu0 %v2009
    %3802 = vmatprep.subr.mxu0 0.0
    %3803 = vmatpush1.xpose.msra.mxu0 %v2012
    %3804 = vmatprep.subr.mxu0 0.0
    %3805 = vmatpush1.xpose.msra.mxu0 0.0
    %3806 = vmatprep.subr.mxu0 0.0
    %3807 = vmatpush1.xpose.msra.mxu0 0.0
    %3808 = vmatprep.subr.mxu0 0.0
    %3809 = vmatpush1.xpose.msra.mxu0 0.0
    %3810 = vmatprep.subr.mxu0 0.0
    %3811 = vmatpush1.xpose.msra.mxu0 0.0
    %3812 = vmatprep.subr.mxu0 0.0
    %3813 = vmatpush1.xpose.msra.mxu0 0.0
    %3814 = vmatprep.subr.mxu0 0.0
    %3815 = vmatpush1.xpose.msra.mxu0 0.0
    %3816 = vmatprep.subr.mxu0 0.0
    %3817 = vmatpush1.xpose.msra.mxu0 0.0
    %3818 = vmatprep.subr.mxu0 0.0
    %3819 = vmatpush1.xpose.msra.mxu0 0.0
    %3820 = vmatprep.subr.mxu0 0.0
    %3821 = vmatpush1.xpose.msra.mxu0 0.0
    %3822 = vmatprep.subr.mxu0 0.0
    %3823 = vmatpush1.xpose.msra.mxu0 0.0
    %3824 = vmatprep.subr.mxu0 0.0
    %3825 = vmatpush1.xpose.msra.mxu0 0.0
    %3826 = vmatprep.subr.mxu0 0.0
    %3827 = vmatpush1.xpose.msra.mxu0 0.0
    %3828 = vmatprep.subr.mxu0 0.0
    %3829 = vmatpush1.xpose.msra.mxu0 0.0
    %3830 = vmatprep.subr.mxu0 0.0
    %3831 = vmatpush1.xpose.msra.mxu0 0.0
    %3832 = vmatprep.subr.mxu0 0.0
    %3833 = vmatpush1.xpose.msra.mxu0 0.0
    %3834 = vmatprep.subr.mxu0 0.0
    %3835 = vmatpush1.xpose.msra.mxu0 0.0
    %3836 = vmatprep.subr.mxu0 0.0
    %3837 = vmatpush1.xpose.msra.mxu0 0.0
    %3838 = vmatprep.subr.mxu0 0.0
    %3839 = vmatpush1.xpose.msra.mxu0 0.0
    %3840 = vmatprep.subr.mxu0 0.0
    %3841 = vmatpush1.xpose.msra.mxu0 0.0
    %3842 = vmatprep.subr.mxu0 0.0
    %3843 = vmatpush1.xpose.msra.mxu0 0.0
    %3844 = vmatprep.subr.mxu0 0.0
    %3845 = vmatpush1.xpose.msra.mxu0 0.0
    %3846 = vmatprep.subr.mxu0 0.0
    %3847 = vmatpush1.xpose.msra.mxu0 0.0
    %3848 = vmatprep.subr.mxu0 0.0
    %3849 = vmatpush1.xpose.msra.mxu0 0.0
    %3850 = vmatprep.subr.mxu0 0.0
    %3851 = vmatpush1.xpose.msra.mxu0 0.0
    %3852 = vmatprep.subr.mxu0 0.0
    %3853 = vmatpush1.xpose.msra.mxu0 0.0
    %3854 = vmatprep.subr.mxu0 0.0
    %3855 = vmatpush1.xpose.msra.mxu0 0.0
    %3856 = vmatprep.subr.mxu0 0.0
    %3857 = vmatpush1.xpose.msra.mxu0 0.0
    %3858 = vmatprep.subr.mxu0 0.0
    %3859 = vmatpush1.xpose.msra.mxu0 0.0
    %3860 = vmatprep.mubr.f32.mxu0 0.0
    %3861 = vmatmul.mubr.f32.gmra.mrb[0].mxu0 %v3794
    %v3862 = vpop.f32.mrb[0].mxu0
    %v3863 = vadd.f32 0.0, %v3862
    %v3864 = vpop.f32.mrb[0].mxu0
    %3865 = vdwg.mxu0
    %v3866 = vsel %vm166, %v3644, 0.0
    %v3867 = vsel %vm166, %v3717, 0.0
    %v3868 = vadd.f32 %v3866, %v3867
    %v3869 = vsel %vm166, %v3790, 0.0
    %v3870 = vadd.f32 %v3868, %v3869
    %v3871 = vsel %vm166, %v3863, 0.0
    %v3872 = vadd.f32 %v3870, %v3871
    %v3873 = vadd.f32 %v146, %v2090
    %v3874 = vadd.f32 %v151, %v3872
    %v3875 = vmul.f32 %v3873, %v3873
    %v3876 = vmul.f32 %v3874, %v3874
    %v3877 = vsel %vm166, %v3875, 0.0
    %3878 = vadd.xlane.f32.xlu0 %v3877
    %v3879 = vpop.xlane.xlu0 %3878
    %v3880 = vsel %vm166, %v3876, 0.0
    %3881 = vadd.xlane.f32.xlu0 %v3880
    %v3882 = vpop.xlane.xlu0 %3881
    %v3883 = vmul.f32 %v3879, %v173
    %v3884 = vmul.f32 %v3882, %v173
    %v3885 = vadd.f32 %v3883, 1e-06
    %v3886 = vadd.f32 %v3884, 1e-06
    %v3887 = vrsqrt.pop %v3885
    %v3888 = vrsqrt.pop %v3886
    %v3889 = vmul.f32 %v3873, %v3887
    %v3890 = vmul.f32 %v3874, %v3888
    %v3891 = vld [vmem:[%s2 + $0x1] sm:$0x1]
    %v3892 = vlaneseq
    %v3893 = vshrl.u32 %v3892, 7
    %v3894 = vsub.s32 0, %v3893
    %v3895 = vrot.slane %v3891, %v3894
    %v3896 = vmul.f32 %v3889, %v3895
    %v3897 = vmul.f32 %v3890, %v3895
    %v3898 = vld [vmem:[%s4] sm:$0xff]
    %v3899 = vld [vmem:[%s4 + $0x8] sm:$0xff]
    %v3900 = vld [vmem:[%s4 + $0x10] sm:$0xff]
    %v3901 = vld [vmem:[%s4 + $0x18] sm:$0xff]
    %v3903 = vsel %vm166, %v3896, 0
    %v3906 = vsel %vm166, %v3897, 0
    %3908 = vmatprep.subr.mxu0 0.0
    %3909 = vmatpush1.msra.mxu0 %v3898
    %3910 = vmatprep.subr.mxu0 0.0
    %3911 = vmatpush1.msra.mxu0 %v3899
    %3912 = vmatprep.subr.mxu0 0.0
    %3913 = vmatpush1.msra.mxu0 %v3900
    %3914 = vmatprep.subr.mxu0 0.0
    %3915 = vmatpush1.msra.mxu0 %v3901
    %3916 = vmatprep.subr.mxu0 0.0
    %3917 = vmatpush1.msra.mxu0 0.0
    %3918 = vmatprep.subr.mxu0 0.0
    %3919 = vmatpush1.msra.mxu0 0.0
    %3920 = vmatprep.subr.mxu0 0.0
    %3921 = vmatpush1.msra.mxu0 0.0
    %3922 = vmatprep.subr.mxu0 0.0
    %3923 = vmatpush1.msra.mxu0 0.0
    %3924 = vmatprep.subr.mxu0 0.0
    %3925 = vmatpush1.msra.mxu0 0.0
    %3926 = vmatprep.subr.mxu0 0.0
    %3927 = vmatpush1.msra.mxu0 0.0
    %3928 = vmatprep.subr.mxu0 0.0
    %3929 = vmatpush1.msra.mxu0 0.0
    %3930 = vmatprep.subr.mxu0 0.0
    %3931 = vmatpush1.msra.mxu0 0.0
    %3932 = vmatprep.subr.mxu0 0.0
    %3933 = vmatpush1.msra.mxu0 0.0
    %3934 = vmatprep.subr.mxu0 0.0
    %3935 = vmatpush1.msra.mxu0 0.0
    %3936 = vmatprep.subr.mxu0 0.0
    %3937 = vmatpush1.msra.mxu0 0.0
    %3938 = vmatprep.subr.mxu0 0.0
    %3939 = vmatpush1.msra.mxu0 0.0
    %3940 = vmatprep.subr.mxu0 0.0
    %3941 = vmatpush1.msra.mxu0 0.0
    %3942 = vmatprep.subr.mxu0 0.0
    %3943 = vmatpush1.msra.mxu0 0.0
    %3944 = vmatprep.subr.mxu0 0.0
    %3945 = vmatpush1.msra.mxu0 0.0
    %3946 = vmatprep.subr.mxu0 0.0
    %3947 = vmatpush1.msra.mxu0 0.0
    %3948 = vmatprep.subr.mxu0 0.0
    %3949 = vmatpush1.msra.mxu0 0.0
    %3950 = vmatprep.subr.mxu0 0.0
    %3951 = vmatpush1.msra.mxu0 0.0
    %3952 = vmatprep.subr.mxu0 0.0
    %3953 = vmatpush1.msra.mxu0 0.0
    %3954 = vmatprep.subr.mxu0 0.0
    %3955 = vmatpush1.msra.mxu0 0.0
    %3956 = vmatprep.subr.mxu0 0.0
    %3957 = vmatpush1.msra.mxu0 0.0
    %3958 = vmatprep.subr.mxu0 0.0
    %3959 = vmatpush1.msra.mxu0 0.0
    %3960 = vmatprep.subr.mxu0 0.0
    %3961 = vmatpush1.msra.mxu0 0.0
    %3962 = vmatprep.subr.mxu0 0.0
    %3963 = vmatpush1.msra.mxu0 0.0
    %3964 = vmatprep.subr.mxu0 0.0
    %3965 = vmatpush1.msra.mxu0 0.0
    %3966 = vmatprep.subr.mxu0 0.0
    %3967 = vmatpush1.msra.mxu0 0.0
    %3968 = vmatprep.subr.mxu0 0.0
    %3969 = vmatpush1.msra.mxu0 0.0
    %3970 = vmatprep.subr.mxu0 0.0
    %3971 = vmatpush1.msra.mxu0 0.0
    %3972 = vmatprep.mubr.f32.mxu0 0.0
    %3973 = vmatmul.mubr.f32.gmra.mrb[0].mxu0 %v3903
    %v3974 = vpop.f32.mrb[0].mxu0
    %v3975 = vadd.f32 0.0, %v3974
    %v3976 = vpop.f32.mrb[0].mxu0
    %3977 = vmatprep.mubr.f32.mxu0 0.0
    %3978 = vmatmul.mubr.f32.gmra.mrb[0].mxu0 %v3906
    %v3979 = vpop.f32.mrb[0].mxu0
    %v3980 = vadd.f32 0.0, %v3979
    %v3981 = vpop.f32.mrb[0].mxu0
    %3982 = vdwg.mxu0
    %v3983 = vmax.f32 %v3975, 0.0
    %v3984 = vmax.f32 %v3980, 0.0
    %v3985 = vld [vmem:[%s5] sm:$0xff]
    %v3986 = vld [vmem:[%s5 + $0x8] sm:$0xff]
    %v3987 = vld [vmem:[%s5 + $0x10] sm:$0xff]
    %v3988 = vld [vmem:[%s5 + $0x18] sm:$0xff]
    %v3989 = vld [vmem:[%s5 + $0x20] sm:$0xff]
    %v3990 = vld [vmem:[%s5 + $0x28] sm:$0xff]
    %v3991 = vld [vmem:[%s5 + $0x30] sm:$0xff]
    %v3992 = vld [vmem:[%s5 + $0x38] sm:$0xff]
    %vm3993 = vcmask 523264
    %v3995 = vsel %vm3993, %v3983, 0
    %v3998 = vsel %vm3993, %v3984, 0
    %4000 = vmatprep.subr.mxu0 0.0
    %4001 = vmatpush1.msra.mxu0 %v3985
    %4002 = vmatprep.subr.mxu0 0.0
    %4003 = vmatpush1.msra.mxu0 %v3986
    %4004 = vmatprep.subr.mxu0 0.0
    %4005 = vmatpush1.msra.mxu0 %v3987
    %4006 = vmatprep.subr.mxu0 0.0
    %4007 = vmatpush1.msra.mxu0 %v3988
    %4008 = vmatprep.subr.mxu0 0.0
    %4009 = vmatpush1.msra.mxu0 %v3989
    %4010 = vmatprep.subr.mxu0 0.0
    %4011 = vmatpush1.msra.mxu0 %v3990
    %4012 = vmatprep.subr.mxu0 0.0
    %4013 = vmatpush1.msra.mxu0 %v3991
    %4014 = vmatprep.subr.mxu0 0.0
    %4015 = vmatpush1.msra.mxu0 %v3992
    %4016 = vmatprep.subr.mxu0 0.0
    %4017 = vmatpush1.msra.mxu0 0.0
    %4018 = vmatprep.subr.mxu0 0.0
    %4019 = vmatpush1.msra.mxu0 0.0
    %4020 = vmatprep.subr.mxu0 0.0
    %4021 = vmatpush1.msra.mxu0 0.0
    %4022 = vmatprep.subr.mxu0 0.0
    %4023 = vmatpush1.msra.mxu0 0.0
    %4024 = vmatprep.subr.mxu0 0.0
    %4025 = vmatpush1.msra.mxu0 0.0
    %4026 = vmatprep.subr.mxu0 0.0
    %4027 = vmatpush1.msra.mxu0 0.0
    %4028 = vmatprep.subr.mxu0 0.0
    %4029 = vmatpush1.msra.mxu0 0.0
    %4030 = vmatprep.subr.mxu0 0.0
    %4031 = vmatpush1.msra.mxu0 0.0
    %4032 = vmatprep.subr.mxu0 0.0
    %4033 = vmatpush1.msra.mxu0 0.0
    %4034 = vmatprep.subr.mxu0 0.0
    %4035 = vmatpush1.msra.mxu0 0.0
    %4036 = vmatprep.subr.mxu0 0.0
    %4037 = vmatpush1.msra.mxu0 0.0
    %4038 = vmatprep.subr.mxu0 0.0
    %4039 = vmatpush1.msra.mxu0 0.0
    %4040 = vmatprep.subr.mxu0 0.0
    %4041 = vmatpush1.msra.mxu0 0.0
    %4042 = vmatprep.subr.mxu0 0.0
    %4043 = vmatpush1.msra.mxu0 0.0
    %4044 = vmatprep.subr.mxu0 0.0
    %4045 = vmatpush1.msra.mxu0 0.0
    %4046 = vmatprep.subr.mxu0 0.0
    %4047 = vmatpush1.msra.mxu0 0.0
    %4048 = vmatprep.subr.mxu0 0.0
    %4049 = vmatpush1.msra.mxu0 0.0
    %4050 = vmatprep.subr.mxu0 0.0
    %4051 = vmatpush1.msra.mxu0 0.0
    %4052 = vmatprep.subr.mxu0 0.0
    %4053 = vmatpush1.msra.mxu0 0.0
    %4054 = vmatprep.subr.mxu0 0.0
    %4055 = vmatpush1.msra.mxu0 0.0
    %4056 = vmatprep.subr.mxu0 0.0
    %4057 = vmatpush1.msra.mxu0 0.0
    %4058 = vmatprep.subr.mxu0 0.0
    %4059 = vmatpush1.msra.mxu0 0.0
    %4060 = vmatprep.subr.mxu0 0.0
    %4061 = vmatpush1.msra.mxu0 0.0
    %4062 = vmatprep.subr.mxu0 0.0
    %4063 = vmatpush1.msra.mxu0 0.0
    %4064 = vmatprep.mubr.f32.mxu0 0.0
    %4065 = vmatmul.mubr.f32.gmra.mrb[0].mxu0 %v3995
    %v4066 = vpop.f32.mrb[0].mxu0
    %v4067 = vadd.f32 0.0, %v4066
    %v4068 = vpop.f32.mrb[0].mxu0
    %4069 = vmatprep.mubr.f32.mxu0 0.0
    %4070 = vmatmul.mubr.f32.gmra.mrb[0].mxu0 %v3998
    %v4071 = vpop.f32.mrb[0].mxu0
    %v4072 = vadd.f32 0.0, %v4071
    %v4073 = vpop.f32.mrb[0].mxu0
    %4074 = vdwg.mxu0
    %v4075 = vadd.f32 %v3873, %v4067
    %v4076 = vadd.f32 %v3874, %v4072
    %v4077 = vmul.f32 %v4075, %v4075
    %v4078 = vmul.f32 %v4076, %v4076
    %v4079 = vsel %vm166, %v4077, 0.0
    %4080 = vadd.xlane.f32.xlu0 %v4079
    %v4081 = vpop.xlane.xlu0 %4080
    %v4082 = vsel %vm166, %v4078, 0.0
    %4083 = vadd.xlane.f32.xlu0 %v4082
    %v4084 = vpop.xlane.xlu0 %4083
    %v4085 = vmul.f32 %v4081, %v173
    %v4086 = vmul.f32 %v4084, %v173
    %v4087 = vadd.f32 %v4085, 1e-06
    %v4088 = vadd.f32 %v4086, 1e-06
    %v4089 = vrsqrt.pop %v4087
    %v4090 = vrsqrt.pop %v4088
    %v4091 = vmul.f32 %v4075, %v4089
    %v4092 = vmul.f32 %v4076, %v4090
    %v4093 = vld [vmem:[%s2 + $0x2] sm:$0x1]
    %v4094 = vlaneseq
    %v4095 = vshrl.u32 %v4094, 7
    %v4096 = vsub.s32 0, %v4095
    %v4097 = vrot.slane %v4093, %v4096
    %v4098 = vmul.f32 %v4091, %v4097
    %v4099 = vmul.f32 %v4092, %v4097
    %v4100 = vmul.f32 %v156, %v156
    %v4101 = vmul.f32 %v161, %v161
    %v4102 = vsel %vm166, %v4100, 0.0
    %4103 = vadd.xlane.f32.xlu0 %v4102
    %v4104 = vpop.xlane.xlu0 %4103
    %v4105 = vsel %vm166, %v4101, 0.0
    %4106 = vadd.xlane.f32.xlu0 %v4105
    %v4107 = vpop.xlane.xlu0 %4106
    %v4108 = vmul.f32 %v4104, %v173
    %v4109 = vmul.f32 %v4107, %v173
    %v4110 = vadd.f32 %v4108, 1e-06
    %v4111 = vadd.f32 %v4109, 1e-06
    %v4112 = vrsqrt.pop %v4110
    %v4113 = vrsqrt.pop %v4111
    %v4114 = vmul.f32 %v156, %v4112
    %v4115 = vmul.f32 %v161, %v4113
    %v4116 = vld [vmem:[%s2 + $0x3] sm:$0x1]
    %v4117 = vlaneseq
    %v4118 = vshrl.u32 %v4117, 7
    %v4119 = vsub.s32 0, %v4118
    %v4120 = vrot.slane %v4116, %v4119
    %v4121 = vmul.f32 %v4114, %v4120
    %v4122 = vmul.f32 %v4115, %v4120
    %v4123 = vld [vmem:[%s7] sm:$0xff]
    %v4124 = vld [vmem:[%s7 + $0x8] sm:$0xff]
    %v4125 = vld [vmem:[%s7 + $0x10] sm:$0xff]
    %v4126 = vld [vmem:[%s7 + $0x18] sm:$0xff]
    %s4127 = scalar_lea.vmem %s3, 512
    %v4128 = vld [vmem:[%s4127] sm:$0xff]
    %v4129 = vld [vmem:[%s4127 + $0x8] sm:$0xff]
    %v4130 = vld [vmem:[%s4127 + $0x10] sm:$0xff]
    %v4131 = vld [vmem:[%s4127 + $0x18] sm:$0xff]
    %v4132 = vld [vmem:[%s4127 + $0x20] sm:$0xff]
    %v4133 = vld [vmem:[%s4127 + $0x28] sm:$0xff]
    %v4134 = vld [vmem:[%s4127 + $0x30] sm:$0xff]
    %v4135 = vld [vmem:[%s4127 + $0x38] sm:$0xff]
    %v4136 = vld [vmem:[%s4127 + $0x40] sm:$0xff]
    %v4137 = vld [vmem:[%s4127 + $0x48] sm:$0xff]
    %v4138 = vld [vmem:[%s4127 + $0x50] sm:$0xff]
    %v4139 = vld [vmem:[%s4127 + $0x58] sm:$0xff]
    %v4140 = vld [vmem:[%s4127 + $0x60] sm:$0xff]
    %v4141 = vld [vmem:[%s4127 + $0x68] sm:$0xff]
    %v4142 = vld [vmem:[%s4127 + $0x70] sm:$0xff]
    %v4143 = vld [vmem:[%s4127 + $0x78] sm:$0xff]
    %s4144 = scalar_lea.vmem %s3, 640
    %v4145 = vld [vmem:[%s4144] sm:$0xff]
    %v4146 = vld [vmem:[%s4144 + $0x8] sm:$0xff]
    %v4147 = vld [vmem:[%s4144 + $0x10] sm:$0xff]
    %v4148 = vld [vmem:[%s4144 + $0x18] sm:$0xff]
    %v4149 = vld [vmem:[%s4144 + $0x20] sm:$0xff]
    %v4150 = vld [vmem:[%s4144 + $0x28] sm:$0xff]
    %v4151 = vld [vmem:[%s4144 + $0x30] sm:$0xff]
    %v4152 = vld [vmem:[%s4144 + $0x38] sm:$0xff]
    %v4153 = vld [vmem:[%s4144 + $0x40] sm:$0xff]
    %v4154 = vld [vmem:[%s4144 + $0x48] sm:$0xff]
    %v4155 = vld [vmem:[%s4144 + $0x50] sm:$0xff]
    %v4156 = vld [vmem:[%s4144 + $0x58] sm:$0xff]
    %v4157 = vld [vmem:[%s4144 + $0x60] sm:$0xff]
    %v4158 = vld [vmem:[%s4144 + $0x68] sm:$0xff]
    %v4159 = vld [vmem:[%s4144 + $0x70] sm:$0xff]
    %v4160 = vld [vmem:[%s4144 + $0x78] sm:$0xff]
    %s4161 = scalar_lea.vmem %s3, 768
    %v4162 = vld [vmem:[%s4161] sm:$0xff]
    %v4163 = vld [vmem:[%s4161 + $0x8] sm:$0xff]
    %v4164 = vld [vmem:[%s4161 + $0x10] sm:$0xff]
    %v4165 = vld [vmem:[%s4161 + $0x18] sm:$0xff]
    %v4166 = vld [vmem:[%s4161 + $0x20] sm:$0xff]
    %v4167 = vld [vmem:[%s4161 + $0x28] sm:$0xff]
    %v4168 = vld [vmem:[%s4161 + $0x30] sm:$0xff]
    %v4169 = vld [vmem:[%s4161 + $0x38] sm:$0xff]
    %v4170 = vld [vmem:[%s4161 + $0x40] sm:$0xff]
    %v4171 = vld [vmem:[%s4161 + $0x48] sm:$0xff]
    %v4172 = vld [vmem:[%s4161 + $0x50] sm:$0xff]
    %v4173 = vld [vmem:[%s4161 + $0x58] sm:$0xff]
    %v4174 = vld [vmem:[%s4161 + $0x60] sm:$0xff]
    %v4175 = vld [vmem:[%s4161 + $0x68] sm:$0xff]
    %v4176 = vld [vmem:[%s4161 + $0x70] sm:$0xff]
    %v4177 = vld [vmem:[%s4161 + $0x78] sm:$0xff]
    %s4178 = scalar_lea.vmem %s3, 896
    %v4179 = vld [vmem:[%s4178] sm:$0xff]
    %v4180 = vld [vmem:[%s4178 + $0x8] sm:$0xff]
    %v4181 = vld [vmem:[%s4178 + $0x10] sm:$0xff]
    %v4182 = vld [vmem:[%s4178 + $0x18] sm:$0xff]
    %v4183 = vld [vmem:[%s4178 + $0x20] sm:$0xff]
    %v4184 = vld [vmem:[%s4178 + $0x28] sm:$0xff]
    %v4185 = vld [vmem:[%s4178 + $0x30] sm:$0xff]
    %v4186 = vld [vmem:[%s4178 + $0x38] sm:$0xff]
    %v4187 = vld [vmem:[%s4178 + $0x40] sm:$0xff]
    %v4188 = vld [vmem:[%s4178 + $0x48] sm:$0xff]
    %v4189 = vld [vmem:[%s4178 + $0x50] sm:$0xff]
    %v4190 = vld [vmem:[%s4178 + $0x58] sm:$0xff]
    %v4191 = vld [vmem:[%s4178 + $0x60] sm:$0xff]
    %v4192 = vld [vmem:[%s4178 + $0x68] sm:$0xff]
    %v4193 = vld [vmem:[%s4178 + $0x70] sm:$0xff]
    %v4194 = vld [vmem:[%s4178 + $0x78] sm:$0xff]
    %v4196 = vsel %vm166, %v4121, 0
    %4198 = vmatprep.subr.mxu0 0.0
    %4199 = vmatpush1.msra.mxu0 %v4128
    %4200 = vmatprep.subr.mxu0 0.0
    %4201 = vmatpush1.msra.mxu0 %v4129
    %4202 = vmatprep.subr.mxu0 0.0
    %4203 = vmatpush1.msra.mxu0 %v4130
    %4204 = vmatprep.subr.mxu0 0.0
    %4205 = vmatpush1.msra.mxu0 %v4131
    %4206 = vmatprep.subr.mxu0 0.0
    %4207 = vmatpush1.msra.mxu0 0.0
    %4208 = vmatprep.subr.mxu0 0.0
    %4209 = vmatpush1.msra.mxu0 0.0
    %4210 = vmatprep.subr.mxu0 0.0
    %4211 = vmatpush1.msra.mxu0 0.0
    %4212 = vmatprep.subr.mxu0 0.0
    %4213 = vmatpush1.msra.mxu0 0.0
    %4214 = vmatprep.subr.mxu0 0.0
    %4215 = vmatpush1.msra.mxu0 0.0
    %4216 = vmatprep.subr.mxu0 0.0
    %4217 = vmatpush1.msra.mxu0 0.0
    %4218 = vmatprep.subr.mxu0 0.0
    %4219 = vmatpush1.msra.mxu0 0.0
    %4220 = vmatprep.subr.mxu0 0.0
    %4221 = vmatpush1.msra.mxu0 0.0
    %4222 = vmatprep.subr.mxu0 0.0
    %4223 = vmatpush1.msra.mxu0 0.0
    %4224 = vmatprep.subr.mxu0 0.0
    %4225 = vmatpush1.msra.mxu0 0.0
    %4226 = vmatprep.subr.mxu0 0.0
    %4227 = vmatpush1.msra.mxu0 0.0
    %4228 = vmatprep.subr.mxu0 0.0
    %4229 = vmatpush1.msra.mxu0 0.0
    %4230 = vmatprep.subr.mxu0 0.0
    %4231 = vmatpush1.msra.mxu0 0.0
    %4232 = vmatprep.subr.mxu0 0.0
    %4233 = vmatpush1.msra.mxu0 0.0
    %4234 = vmatprep.subr.mxu0 0.0
    %4235 = vmatpush1.msra.mxu0 0.0
    %4236 = vmatprep.subr.mxu0 0.0
    %4237 = vmatpush1.msra.mxu0 0.0
    %4238 = vmatprep.subr.mxu0 0.0
    %4239 = vmatpush1.msra.mxu0 0.0
    %4240 = vmatprep.subr.mxu0 0.0
    %4241 = vmatpush1.msra.mxu0 0.0
    %4242 = vmatprep.subr.mxu0 0.0
    %4243 = vmatpush1.msra.mxu0 0.0
    %4244 = vmatprep.subr.mxu0 0.0
    %4245 = vmatpush1.msra.mxu0 0.0
    %4246 = vmatprep.subr.mxu0 0.0
    %4247 = vmatpush1.msra.mxu0 0.0
    %4248 = vmatprep.subr.mxu0 0.0
    %4249 = vmatpush1.msra.mxu0 0.0
    %4250 = vmatprep.subr.mxu0 0.0
    %4251 = vmatpush1.msra.mxu0 0.0
    %4252 = vmatprep.subr.mxu0 0.0
    %4253 = vmatpush1.msra.mxu0 0.0
    %4254 = vmatprep.subr.mxu0 0.0
    %4255 = vmatpush1.msra.mxu0 0.0
    %4256 = vmatprep.subr.mxu0 0.0
    %4257 = vmatpush1.msra.mxu0 0.0
    %4258 = vmatprep.subr.mxu0 0.0
    %4259 = vmatpush1.msra.mxu0 0.0
    %4260 = vmatprep.subr.mxu0 0.0
    %4261 = vmatpush1.msra.mxu0 0.0
    %4262 = vmatprep.mubr.f32.mxu0 0.0
    %4263 = vmatmul.mubr.f32.gmra.mrb[0].mxu0 %v4196
    %v4264 = vpop.f32.mrb[0].mxu0
    %v4265 = vadd.f32 0.0, %v4264
    %v4266 = vpop.f32.mrb[0].mxu0
    %4267 = vdwg.mxu0
    %4268 = vmatprep.subr.mxu0 0.0
    %4269 = vmatpush1.msra.mxu0 %v4132
    %4270 = vmatprep.subr.mxu0 0.0
    %4271 = vmatpush1.msra.mxu0 %v4133
    %4272 = vmatprep.subr.mxu0 0.0
    %4273 = vmatpush1.msra.mxu0 %v4134
    %4274 = vmatprep.subr.mxu0 0.0
    %4275 = vmatpush1.msra.mxu0 %v4135
    %4276 = vmatprep.subr.mxu0 0.0
    %4277 = vmatpush1.msra.mxu0 0.0
    %4278 = vmatprep.subr.mxu0 0.0
    %4279 = vmatpush1.msra.mxu0 0.0
    %4280 = vmatprep.subr.mxu0 0.0
    %4281 = vmatpush1.msra.mxu0 0.0
    %4282 = vmatprep.subr.mxu0 0.0
    %4283 = vmatpush1.msra.mxu0 0.0
    %4284 = vmatprep.subr.mxu0 0.0
    %4285 = vmatpush1.msra.mxu0 0.0
    %4286 = vmatprep.subr.mxu0 0.0
    %4287 = vmatpush1.msra.mxu0 0.0
    %4288 = vmatprep.subr.mxu0 0.0
    %4289 = vmatpush1.msra.mxu0 0.0
    %4290 = vmatprep.subr.mxu0 0.0
    %4291 = vmatpush1.msra.mxu0 0.0
    %4292 = vmatprep.subr.mxu0 0.0
    %4293 = vmatpush1.msra.mxu0 0.0
    %4294 = vmatprep.subr.mxu0 0.0
    %4295 = vmatpush1.msra.mxu0 0.0
    %4296 = vmatprep.subr.mxu0 0.0
    %4297 = vmatpush1.msra.mxu0 0.0
    %4298 = vmatprep.subr.mxu0 0.0
    %4299 = vmatpush1.msra.mxu0 0.0
    %4300 = vmatprep.subr.mxu0 0.0
    %4301 = vmatpush1.msra.mxu0 0.0
    %4302 = vmatprep.subr.mxu0 0.0
    %4303 = vmatpush1.msra.mxu0 0.0
    %4304 = vmatprep.subr.mxu0 0.0
    %4305 = vmatpush1.msra.mxu0 0.0
    %4306 = vmatprep.subr.mxu0 0.0
    %4307 = vmatpush1.msra.mxu0 0.0
    %4308 = vmatprep.subr.mxu0 0.0
    %4309 = vmatpush1.msra.mxu0 0.0
    %4310 = vmatprep.subr.mxu0 0.0
    %4311 = vmatpush1.msra.mxu0 0.0
    %4312 = vmatprep.subr.mxu0 0.0
    %4313 = vmatpush1.msra.mxu0 0.0
    %4314 = vmatprep.subr.mxu0 0.0
    %4315 = vmatpush1.msra.mxu0 0.0
    %4316 = vmatprep.subr.mxu0 0.0
    %4317 = vmatpush1.msra.mxu0 0.0
    %4318 = vmatprep.subr.mxu0 0.0
    %4319 = vmatpush1.msra.mxu0 0.0
    %4320 = vmatprep.subr.mxu0 0.0
    %4321 = vmatpush1.msra.mxu0 0.0
    %4322 = vmatprep.subr.mxu0 0.0
    %4323 = vmatpush1.msra.mxu0 0.0
    %4324 = vmatprep.subr.mxu0 0.0
    %4325 = vmatpush1.msra.mxu0 0.0
    %4326 = vmatprep.subr.mxu0 0.0
    %4327 = vmatpush1.msra.mxu0 0.0
    %4328 = vmatprep.subr.mxu0 0.0
    %4329 = vmatpush1.msra.mxu0 0.0
    %4330 = vmatprep.subr.mxu0 0.0
    %4331 = vmatpush1.msra.mxu0 0.0
    %4332 = vmatprep.mubr.f32.mxu0 0.0
    %4333 = vmatmul.mubr.f32.gmra.mrb[0].mxu0 %v4196
    %v4334 = vpop.f32.mrb[0].mxu0
    %v4335 = vadd.f32 0.0, %v4334
    %v4336 = vpop.f32.mrb[0].mxu0
    %4337 = vdwg.mxu0
    %4338 = vmatprep.subr.mxu0 0.0
    %4339 = vmatpush1.msra.mxu0 %v4136
    %4340 = vmatprep.subr.mxu0 0.0
    %4341 = vmatpush1.msra.mxu0 %v4137
    %4342 = vmatprep.subr.mxu0 0.0
    %4343 = vmatpush1.msra.mxu0 %v4138
    %4344 = vmatprep.subr.mxu0 0.0
    %4345 = vmatpush1.msra.mxu0 %v4139
    %4346 = vmatprep.subr.mxu0 0.0
    %4347 = vmatpush1.msra.mxu0 0.0
    %4348 = vmatprep.subr.mxu0 0.0
    %4349 = vmatpush1.msra.mxu0 0.0
    %4350 = vmatprep.subr.mxu0 0.0
    %4351 = vmatpush1.msra.mxu0 0.0
    %4352 = vmatprep.subr.mxu0 0.0
    %4353 = vmatpush1.msra.mxu0 0.0
    %4354 = vmatprep.subr.mxu0 0.0
    %4355 = vmatpush1.msra.mxu0 0.0
    %4356 = vmatprep.subr.mxu0 0.0
    %4357 = vmatpush1.msra.mxu0 0.0
    %4358 = vmatprep.subr.mxu0 0.0
    %4359 = vmatpush1.msra.mxu0 0.0
    %4360 = vmatprep.subr.mxu0 0.0
    %4361 = vmatpush1.msra.mxu0 0.0
    %4362 = vmatprep.subr.mxu0 0.0
    %4363 = vmatpush1.msra.mxu0 0.0
    %4364 = vmatprep.subr.mxu0 0.0
    %4365 = vmatpush1.msra.mxu0 0.0
    %4366 = vmatprep.subr.mxu0 0.0
    %4367 = vmatpush1.msra.mxu0 0.0
    %4368 = vmatprep.subr.mxu0 0.0
    %4369 = vmatpush1.msra.mxu0 0.0
    %4370 = vmatprep.subr.mxu0 0.0
    %4371 = vmatpush1.msra.mxu0 0.0
    %4372 = vmatprep.subr.mxu0 0.0
    %4373 = vmatpush1.msra.mxu0 0.0
    %4374 = vmatprep.subr.mxu0 0.0
    %4375 = vmatpush1.msra.mxu0 0.0
    %4376 = vmatprep.subr.mxu0 0.0
    %4377 = vmatpush1.msra.mxu0 0.0
    %4378 = vmatprep.subr.mxu0 0.0
    %4379 = vmatpush1.msra.mxu0 0.0
    %4380 = vmatprep.subr.mxu0 0.0
    %4381 = vmatpush1.msra.mxu0 0.0
    %4382 = vmatprep.subr.mxu0 0.0
    %4383 = vmatpush1.msra.mxu0 0.0
    %4384 = vmatprep.subr.mxu0 0.0
    %4385 = vmatpush1.msra.mxu0 0.0
    %4386 = vmatprep.subr.mxu0 0.0
    %4387 = vmatpush1.msra.mxu0 0.0
    %4388 = vmatprep.subr.mxu0 0.0
    %4389 = vmatpush1.msra.mxu0 0.0
    %4390 = vmatprep.subr.mxu0 0.0
    %4391 = vmatpush1.msra.mxu0 0.0
    %4392 = vmatprep.subr.mxu0 0.0
    %4393 = vmatpush1.msra.mxu0 0.0
    %4394 = vmatprep.subr.mxu0 0.0
    %4395 = vmatpush1.msra.mxu0 0.0
    %4396 = vmatprep.subr.mxu0 0.0
    %4397 = vmatpush1.msra.mxu0 0.0
    %4398 = vmatprep.subr.mxu0 0.0
    %4399 = vmatpush1.msra.mxu0 0.0
    %4400 = vmatprep.subr.mxu0 0.0
    %4401 = vmatpush1.msra.mxu0 0.0
    %4402 = vmatprep.mubr.f32.mxu0 0.0
    %4403 = vmatmul.mubr.f32.gmra.mrb[0].mxu0 %v4196
    %v4404 = vpop.f32.mrb[0].mxu0
    %v4405 = vadd.f32 0.0, %v4404
    %v4406 = vpop.f32.mrb[0].mxu0
    %4407 = vdwg.mxu0
    %4408 = vmatprep.subr.mxu0 0.0
    %4409 = vmatpush1.msra.mxu0 %v4140
    %4410 = vmatprep.subr.mxu0 0.0
    %4411 = vmatpush1.msra.mxu0 %v4141
    %4412 = vmatprep.subr.mxu0 0.0
    %4413 = vmatpush1.msra.mxu0 %v4142
    %4414 = vmatprep.subr.mxu0 0.0
    %4415 = vmatpush1.msra.mxu0 %v4143
    %4416 = vmatprep.subr.mxu0 0.0
    %4417 = vmatpush1.msra.mxu0 0.0
    %4418 = vmatprep.subr.mxu0 0.0
    %4419 = vmatpush1.msra.mxu0 0.0
    %4420 = vmatprep.subr.mxu0 0.0
    %4421 = vmatpush1.msra.mxu0 0.0
    %4422 = vmatprep.subr.mxu0 0.0
    %4423 = vmatpush1.msra.mxu0 0.0
    %4424 = vmatprep.subr.mxu0 0.0
    %4425 = vmatpush1.msra.mxu0 0.0
    %4426 = vmatprep.subr.mxu0 0.0
    %4427 = vmatpush1.msra.mxu0 0.0
    %4428 = vmatprep.subr.mxu0 0.0
    %4429 = vmatpush1.msra.mxu0 0.0
    %4430 = vmatprep.subr.mxu0 0.0
    %4431 = vmatpush1.msra.mxu0 0.0
    %4432 = vmatprep.subr.mxu0 0.0
    %4433 = vmatpush1.msra.mxu0 0.0
    %4434 = vmatprep.subr.mxu0 0.0
    %4435 = vmatpush1.msra.mxu0 0.0
    %4436 = vmatprep.subr.mxu0 0.0
    %4437 = vmatpush1.msra.mxu0 0.0
    %4438 = vmatprep.subr.mxu0 0.0
    %4439 = vmatpush1.msra.mxu0 0.0
    %4440 = vmatprep.subr.mxu0 0.0
    %4441 = vmatpush1.msra.mxu0 0.0
    %4442 = vmatprep.subr.mxu0 0.0
    %4443 = vmatpush1.msra.mxu0 0.0
    %4444 = vmatprep.subr.mxu0 0.0
    %4445 = vmatpush1.msra.mxu0 0.0
    %4446 = vmatprep.subr.mxu0 0.0
    %4447 = vmatpush1.msra.mxu0 0.0
    %4448 = vmatprep.subr.mxu0 0.0
    %4449 = vmatpush1.msra.mxu0 0.0
    %4450 = vmatprep.subr.mxu0 0.0
    %4451 = vmatpush1.msra.mxu0 0.0
    %4452 = vmatprep.subr.mxu0 0.0
    %4453 = vmatpush1.msra.mxu0 0.0
    %4454 = vmatprep.subr.mxu0 0.0
    %4455 = vmatpush1.msra.mxu0 0.0
    %4456 = vmatprep.subr.mxu0 0.0
    %4457 = vmatpush1.msra.mxu0 0.0
    %4458 = vmatprep.subr.mxu0 0.0
    %4459 = vmatpush1.msra.mxu0 0.0
    %4460 = vmatprep.subr.mxu0 0.0
    %4461 = vmatpush1.msra.mxu0 0.0
    %4462 = vmatprep.subr.mxu0 0.0
    %4463 = vmatpush1.msra.mxu0 0.0
    %4464 = vmatprep.subr.mxu0 0.0
    %4465 = vmatpush1.msra.mxu0 0.0
    %4466 = vmatprep.subr.mxu0 0.0
    %4467 = vmatpush1.msra.mxu0 0.0
    %4468 = vmatprep.subr.mxu0 0.0
    %4469 = vmatpush1.msra.mxu0 0.0
    %4470 = vmatprep.subr.mxu0 0.0
    %4471 = vmatpush1.msra.mxu0 0.0
    %4472 = vmatprep.mubr.f32.mxu0 0.0
    %4473 = vmatmul.mubr.f32.gmra.mrb[0].mxu0 %v4196
    %v4474 = vpop.f32.mrb[0].mxu0
    %v4475 = vadd.f32 0.0, %v4474
    %v4476 = vpop.f32.mrb[0].mxu0
    %4477 = vdwg.mxu0
    %4478 = vmatprep.subr.mxu0 0.0
    %4479 = vmatpush1.msra.mxu0 %v4145
    %4480 = vmatprep.subr.mxu0 0.0
    %4481 = vmatpush1.msra.mxu0 %v4146
    %4482 = vmatprep.subr.mxu0 0.0
    %4483 = vmatpush1.msra.mxu0 %v4147
    %4484 = vmatprep.subr.mxu0 0.0
    %4485 = vmatpush1.msra.mxu0 %v4148
    %4486 = vmatprep.subr.mxu0 0.0
    %4487 = vmatpush1.msra.mxu0 0.0
    %4488 = vmatprep.subr.mxu0 0.0
    %4489 = vmatpush1.msra.mxu0 0.0
    %4490 = vmatprep.subr.mxu0 0.0
    %4491 = vmatpush1.msra.mxu0 0.0
    %4492 = vmatprep.subr.mxu0 0.0
    %4493 = vmatpush1.msra.mxu0 0.0
    %4494 = vmatprep.subr.mxu0 0.0
    %4495 = vmatpush1.msra.mxu0 0.0
    %4496 = vmatprep.subr.mxu0 0.0
    %4497 = vmatpush1.msra.mxu0 0.0
    %4498 = vmatprep.subr.mxu0 0.0
    %4499 = vmatpush1.msra.mxu0 0.0
    %4500 = vmatprep.subr.mxu0 0.0
    %4501 = vmatpush1.msra.mxu0 0.0
    %4502 = vmatprep.subr.mxu0 0.0
    %4503 = vmatpush1.msra.mxu0 0.0
    %4504 = vmatprep.subr.mxu0 0.0
    %4505 = vmatpush1.msra.mxu0 0.0
    %4506 = vmatprep.subr.mxu0 0.0
    %4507 = vmatpush1.msra.mxu0 0.0
    %4508 = vmatprep.subr.mxu0 0.0
    %4509 = vmatpush1.msra.mxu0 0.0
    %4510 = vmatprep.subr.mxu0 0.0
    %4511 = vmatpush1.msra.mxu0 0.0
    %4512 = vmatprep.subr.mxu0 0.0
    %4513 = vmatpush1.msra.mxu0 0.0
    %4514 = vmatprep.subr.mxu0 0.0
    %4515 = vmatpush1.msra.mxu0 0.0
    %4516 = vmatprep.subr.mxu0 0.0
    %4517 = vmatpush1.msra.mxu0 0.0
    %4518 = vmatprep.subr.mxu0 0.0
    %4519 = vmatpush1.msra.mxu0 0.0
    %4520 = vmatprep.subr.mxu0 0.0
    %4521 = vmatpush1.msra.mxu0 0.0
    %4522 = vmatprep.subr.mxu0 0.0
    %4523 = vmatpush1.msra.mxu0 0.0
    %4524 = vmatprep.subr.mxu0 0.0
    %4525 = vmatpush1.msra.mxu0 0.0
    %4526 = vmatprep.subr.mxu0 0.0
    %4527 = vmatpush1.msra.mxu0 0.0
    %4528 = vmatprep.subr.mxu0 0.0
    %4529 = vmatpush1.msra.mxu0 0.0
    %4530 = vmatprep.subr.mxu0 0.0
    %4531 = vmatpush1.msra.mxu0 0.0
    %4532 = vmatprep.subr.mxu0 0.0
    %4533 = vmatpush1.msra.mxu0 0.0
    %4534 = vmatprep.subr.mxu0 0.0
    %4535 = vmatpush1.msra.mxu0 0.0
    %4536 = vmatprep.subr.mxu0 0.0
    %4537 = vmatpush1.msra.mxu0 0.0
    %4538 = vmatprep.subr.mxu0 0.0
    %4539 = vmatpush1.msra.mxu0 0.0
    %4540 = vmatprep.subr.mxu0 0.0
    %4541 = vmatpush1.msra.mxu0 0.0
    %4542 = vmatprep.mubr.f32.mxu0 0.0
    %4543 = vmatmul.mubr.f32.gmra.mrb[0].mxu0 %v4196
    %v4544 = vpop.f32.mrb[0].mxu0
    %v4545 = vadd.f32 0.0, %v4544
    %v4546 = vpop.f32.mrb[0].mxu0
    %4547 = vdwg.mxu0
    %4548 = vmatprep.subr.mxu0 0.0
    %4549 = vmatpush1.msra.mxu0 %v4149
    %4550 = vmatprep.subr.mxu0 0.0
    %4551 = vmatpush1.msra.mxu0 %v4150
    %4552 = vmatprep.subr.mxu0 0.0
    %4553 = vmatpush1.msra.mxu0 %v4151
    %4554 = vmatprep.subr.mxu0 0.0
    %4555 = vmatpush1.msra.mxu0 %v4152
    %4556 = vmatprep.subr.mxu0 0.0
    %4557 = vmatpush1.msra.mxu0 0.0
    %4558 = vmatprep.subr.mxu0 0.0
    %4559 = vmatpush1.msra.mxu0 0.0
    %4560 = vmatprep.subr.mxu0 0.0
    %4561 = vmatpush1.msra.mxu0 0.0
    %4562 = vmatprep.subr.mxu0 0.0
    %4563 = vmatpush1.msra.mxu0 0.0
    %4564 = vmatprep.subr.mxu0 0.0
    %4565 = vmatpush1.msra.mxu0 0.0
    %4566 = vmatprep.subr.mxu0 0.0
    %4567 = vmatpush1.msra.mxu0 0.0
    %4568 = vmatprep.subr.mxu0 0.0
    %4569 = vmatpush1.msra.mxu0 0.0
    %4570 = vmatprep.subr.mxu0 0.0
    %4571 = vmatpush1.msra.mxu0 0.0
    %4572 = vmatprep.subr.mxu0 0.0
    %4573 = vmatpush1.msra.mxu0 0.0
    %4574 = vmatprep.subr.mxu0 0.0
    %4575 = vmatpush1.msra.mxu0 0.0
    %4576 = vmatprep.subr.mxu0 0.0
    %4577 = vmatpush1.msra.mxu0 0.0
    %4578 = vmatprep.subr.mxu0 0.0
    %4579 = vmatpush1.msra.mxu0 0.0
    %4580 = vmatprep.subr.mxu0 0.0
    %4581 = vmatpush1.msra.mxu0 0.0
    %4582 = vmatprep.subr.mxu0 0.0
    %4583 = vmatpush1.msra.mxu0 0.0
    %4584 = vmatprep.subr.mxu0 0.0
    %4585 = vmatpush1.msra.mxu0 0.0
    %4586 = vmatprep.subr.mxu0 0.0
    %4587 = vmatpush1.msra.mxu0 0.0
    %4588 = vmatprep.subr.mxu0 0.0
    %4589 = vmatpush1.msra.mxu0 0.0
    %4590 = vmatprep.subr.mxu0 0.0
    %4591 = vmatpush1.msra.mxu0 0.0
    %4592 = vmatprep.subr.mxu0 0.0
    %4593 = vmatpush1.msra.mxu0 0.0
    %4594 = vmatprep.subr.mxu0 0.0
    %4595 = vmatpush1.msra.mxu0 0.0
    %4596 = vmatprep.subr.mxu0 0.0
    %4597 = vmatpush1.msra.mxu0 0.0
    %4598 = vmatprep.subr.mxu0 0.0
    %4599 = vmatpush1.msra.mxu0 0.0
    %4600 = vmatprep.subr.mxu0 0.0
    %4601 = vmatpush1.msra.mxu0 0.0
    %4602 = vmatprep.subr.mxu0 0.0
    %4603 = vmatpush1.msra.mxu0 0.0
    %4604 = vmatprep.subr.mxu0 0.0
    %4605 = vmatpush1.msra.mxu0 0.0
    %4606 = vmatprep.subr.mxu0 0.0
    %4607 = vmatpush1.msra.mxu0 0.0
    %4608 = vmatprep.subr.mxu0 0.0
    %4609 = vmatpush1.msra.mxu0 0.0
    %4610 = vmatprep.subr.mxu0 0.0
    %4611 = vmatpush1.msra.mxu0 0.0
    %4612 = vmatprep.mubr.f32.mxu0 0.0
    %4613 = vmatmul.mubr.f32.gmra.mrb[0].mxu0 %v4196
    %v4614 = vpop.f32.mrb[0].mxu0
    %v4615 = vadd.f32 0.0, %v4614
    %v4616 = vpop.f32.mrb[0].mxu0
    %4617 = vdwg.mxu0
    %4618 = vmatprep.subr.mxu0 0.0
    %4619 = vmatpush1.msra.mxu0 %v4153
    %4620 = vmatprep.subr.mxu0 0.0
    %4621 = vmatpush1.msra.mxu0 %v4154
    %4622 = vmatprep.subr.mxu0 0.0
    %4623 = vmatpush1.msra.mxu0 %v4155
    %4624 = vmatprep.subr.mxu0 0.0
    %4625 = vmatpush1.msra.mxu0 %v4156
    %4626 = vmatprep.subr.mxu0 0.0
    %4627 = vmatpush1.msra.mxu0 0.0
    %4628 = vmatprep.subr.mxu0 0.0
    %4629 = vmatpush1.msra.mxu0 0.0
    %4630 = vmatprep.subr.mxu0 0.0
    %4631 = vmatpush1.msra.mxu0 0.0
    %4632 = vmatprep.subr.mxu0 0.0
    %4633 = vmatpush1.msra.mxu0 0.0
    %4634 = vmatprep.subr.mxu0 0.0
    %4635 = vmatpush1.msra.mxu0 0.0
    %4636 = vmatprep.subr.mxu0 0.0
    %4637 = vmatpush1.msra.mxu0 0.0
    %4638 = vmatprep.subr.mxu0 0.0
    %4639 = vmatpush1.msra.mxu0 0.0
    %4640 = vmatprep.subr.mxu0 0.0
    %4641 = vmatpush1.msra.mxu0 0.0
    %4642 = vmatprep.subr.mxu0 0.0
    %4643 = vmatpush1.msra.mxu0 0.0
    %4644 = vmatprep.subr.mxu0 0.0
    %4645 = vmatpush1.msra.mxu0 0.0
    %4646 = vmatprep.subr.mxu0 0.0
    %4647 = vmatpush1.msra.mxu0 0.0
    %4648 = vmatprep.subr.mxu0 0.0
    %4649 = vmatpush1.msra.mxu0 0.0
    %4650 = vmatprep.subr.mxu0 0.0
    %4651 = vmatpush1.msra.mxu0 0.0
    %4652 = vmatprep.subr.mxu0 0.0
    %4653 = vmatpush1.msra.mxu0 0.0
    %4654 = vmatprep.subr.mxu0 0.0
    %4655 = vmatpush1.msra.mxu0 0.0
    %4656 = vmatprep.subr.mxu0 0.0
    %4657 = vmatpush1.msra.mxu0 0.0
    %4658 = vmatprep.subr.mxu0 0.0
    %4659 = vmatpush1.msra.mxu0 0.0
    %4660 = vmatprep.subr.mxu0 0.0
    %4661 = vmatpush1.msra.mxu0 0.0
    %4662 = vmatprep.subr.mxu0 0.0
    %4663 = vmatpush1.msra.mxu0 0.0
    %4664 = vmatprep.subr.mxu0 0.0
    %4665 = vmatpush1.msra.mxu0 0.0
    %4666 = vmatprep.subr.mxu0 0.0
    %4667 = vmatpush1.msra.mxu0 0.0
    %4668 = vmatprep.subr.mxu0 0.0
    %4669 = vmatpush1.msra.mxu0 0.0
    %4670 = vmatprep.subr.mxu0 0.0
    %4671 = vmatpush1.msra.mxu0 0.0
    %4672 = vmatprep.subr.mxu0 0.0
    %4673 = vmatpush1.msra.mxu0 0.0
    %4674 = vmatprep.subr.mxu0 0.0
    %4675 = vmatpush1.msra.mxu0 0.0
    %4676 = vmatprep.subr.mxu0 0.0
    %4677 = vmatpush1.msra.mxu0 0.0
    %4678 = vmatprep.subr.mxu0 0.0
    %4679 = vmatpush1.msra.mxu0 0.0
    %4680 = vmatprep.subr.mxu0 0.0
    %4681 = vmatpush1.msra.mxu0 0.0
    %4682 = vmatprep.mubr.f32.mxu0 0.0
    %4683 = vmatmul.mubr.f32.gmra.mrb[0].mxu0 %v4196
    %v4684 = vpop.f32.mrb[0].mxu0
    %v4685 = vadd.f32 0.0, %v4684
    %v4686 = vpop.f32.mrb[0].mxu0
    %4687 = vdwg.mxu0
    %4688 = vmatprep.subr.mxu0 0.0
    %4689 = vmatpush1.msra.mxu0 %v4157
    %4690 = vmatprep.subr.mxu0 0.0
    %4691 = vmatpush1.msra.mxu0 %v4158
    %4692 = vmatprep.subr.mxu0 0.0
    %4693 = vmatpush1.msra.mxu0 %v4159
    %4694 = vmatprep.subr.mxu0 0.0
    %4695 = vmatpush1.msra.mxu0 %v4160
    %4696 = vmatprep.subr.mxu0 0.0
    %4697 = vmatpush1.msra.mxu0 0.0
    %4698 = vmatprep.subr.mxu0 0.0
    %4699 = vmatpush1.msra.mxu0 0.0
    %4700 = vmatprep.subr.mxu0 0.0
    %4701 = vmatpush1.msra.mxu0 0.0
    %4702 = vmatprep.subr.mxu0 0.0
    %4703 = vmatpush1.msra.mxu0 0.0
    %4704 = vmatprep.subr.mxu0 0.0
    %4705 = vmatpush1.msra.mxu0 0.0
    %4706 = vmatprep.subr.mxu0 0.0
    %4707 = vmatpush1.msra.mxu0 0.0
    %4708 = vmatprep.subr.mxu0 0.0
    %4709 = vmatpush1.msra.mxu0 0.0
    %4710 = vmatprep.subr.mxu0 0.0
    %4711 = vmatpush1.msra.mxu0 0.0
    %4712 = vmatprep.subr.mxu0 0.0
    %4713 = vmatpush1.msra.mxu0 0.0
    %4714 = vmatprep.subr.mxu0 0.0
    %4715 = vmatpush1.msra.mxu0 0.0
    %4716 = vmatprep.subr.mxu0 0.0
    %4717 = vmatpush1.msra.mxu0 0.0
    %4718 = vmatprep.subr.mxu0 0.0
    %4719 = vmatpush1.msra.mxu0 0.0
    %4720 = vmatprep.subr.mxu0 0.0
    %4721 = vmatpush1.msra.mxu0 0.0
    %4722 = vmatprep.subr.mxu0 0.0
    %4723 = vmatpush1.msra.mxu0 0.0
    %4724 = vmatprep.subr.mxu0 0.0
    %4725 = vmatpush1.msra.mxu0 0.0
    %4726 = vmatprep.subr.mxu0 0.0
    %4727 = vmatpush1.msra.mxu0 0.0
    %4728 = vmatprep.subr.mxu0 0.0
    %4729 = vmatpush1.msra.mxu0 0.0
    %4730 = vmatprep.subr.mxu0 0.0
    %4731 = vmatpush1.msra.mxu0 0.0
    %4732 = vmatprep.subr.mxu0 0.0
    %4733 = vmatpush1.msra.mxu0 0.0
    %4734 = vmatprep.subr.mxu0 0.0
    %4735 = vmatpush1.msra.mxu0 0.0
    %4736 = vmatprep.subr.mxu0 0.0
    %4737 = vmatpush1.msra.mxu0 0.0
    %4738 = vmatprep.subr.mxu0 0.0
    %4739 = vmatpush1.msra.mxu0 0.0
    %4740 = vmatprep.subr.mxu0 0.0
    %4741 = vmatpush1.msra.mxu0 0.0
    %4742 = vmatprep.subr.mxu0 0.0
    %4743 = vmatpush1.msra.mxu0 0.0
    %4744 = vmatprep.subr.mxu0 0.0
    %4745 = vmatpush1.msra.mxu0 0.0
    %4746 = vmatprep.subr.mxu0 0.0
    %4747 = vmatpush1.msra.mxu0 0.0
    %4748 = vmatprep.subr.mxu0 0.0
    %4749 = vmatpush1.msra.mxu0 0.0
    %4750 = vmatprep.subr.mxu0 0.0
    %4751 = vmatpush1.msra.mxu0 0.0
    %4752 = vmatprep.mubr.f32.mxu0 0.0
    %4753 = vmatmul.mubr.f32.gmra.mrb[0].mxu0 %v4196
    %v4754 = vpop.f32.mrb[0].mxu0
    %v4755 = vadd.f32 0.0, %v4754
    %v4756 = vpop.f32.mrb[0].mxu0
    %4757 = vdwg.mxu0
    %4758 = vmatprep.subr.mxu0 0.0
    %4759 = vmatpush1.msra.mxu0 %v4162
    %4760 = vmatprep.subr.mxu0 0.0
    %4761 = vmatpush1.msra.mxu0 %v4163
    %4762 = vmatprep.subr.mxu0 0.0
    %4763 = vmatpush1.msra.mxu0 %v4164
    %4764 = vmatprep.subr.mxu0 0.0
    %4765 = vmatpush1.msra.mxu0 %v4165
    %4766 = vmatprep.subr.mxu0 0.0
    %4767 = vmatpush1.msra.mxu0 0.0
    %4768 = vmatprep.subr.mxu0 0.0
    %4769 = vmatpush1.msra.mxu0 0.0
    %4770 = vmatprep.subr.mxu0 0.0
    %4771 = vmatpush1.msra.mxu0 0.0
    %4772 = vmatprep.subr.mxu0 0.0
    %4773 = vmatpush1.msra.mxu0 0.0
    %4774 = vmatprep.subr.mxu0 0.0
    %4775 = vmatpush1.msra.mxu0 0.0
    %4776 = vmatprep.subr.mxu0 0.0
    %4777 = vmatpush1.msra.mxu0 0.0
    %4778 = vmatprep.subr.mxu0 0.0
    %4779 = vmatpush1.msra.mxu0 0.0
    %4780 = vmatprep.subr.mxu0 0.0
    %4781 = vmatpush1.msra.mxu0 0.0
    %4782 = vmatprep.subr.mxu0 0.0
    %4783 = vmatpush1.msra.mxu0 0.0
    %4784 = vmatprep.subr.mxu0 0.0
    %4785 = vmatpush1.msra.mxu0 0.0
    %4786 = vmatprep.subr.mxu0 0.0
    %4787 = vmatpush1.msra.mxu0 0.0
    %4788 = vmatprep.subr.mxu0 0.0
    %4789 = vmatpush1.msra.mxu0 0.0
    %4790 = vmatprep.subr.mxu0 0.0
    %4791 = vmatpush1.msra.mxu0 0.0
    %4792 = vmatprep.subr.mxu0 0.0
    %4793 = vmatpush1.msra.mxu0 0.0
    %4794 = vmatprep.subr.mxu0 0.0
    %4795 = vmatpush1.msra.mxu0 0.0
    %4796 = vmatprep.subr.mxu0 0.0
    %4797 = vmatpush1.msra.mxu0 0.0
    %4798 = vmatprep.subr.mxu0 0.0
    %4799 = vmatpush1.msra.mxu0 0.0
    %4800 = vmatprep.subr.mxu0 0.0
    %4801 = vmatpush1.msra.mxu0 0.0
    %4802 = vmatprep.subr.mxu0 0.0
    %4803 = vmatpush1.msra.mxu0 0.0
    %4804 = vmatprep.subr.mxu0 0.0
    %4805 = vmatpush1.msra.mxu0 0.0
    %4806 = vmatprep.subr.mxu0 0.0
    %4807 = vmatpush1.msra.mxu0 0.0
    %4808 = vmatprep.subr.mxu0 0.0
    %4809 = vmatpush1.msra.mxu0 0.0
    %4810 = vmatprep.subr.mxu0 0.0
    %4811 = vmatpush1.msra.mxu0 0.0
    %4812 = vmatprep.subr.mxu0 0.0
    %4813 = vmatpush1.msra.mxu0 0.0
    %4814 = vmatprep.subr.mxu0 0.0
    %4815 = vmatpush1.msra.mxu0 0.0
    %4816 = vmatprep.subr.mxu0 0.0
    %4817 = vmatpush1.msra.mxu0 0.0
    %4818 = vmatprep.subr.mxu0 0.0
    %4819 = vmatpush1.msra.mxu0 0.0
    %4820 = vmatprep.subr.mxu0 0.0
    %4821 = vmatpush1.msra.mxu0 0.0
    %4822 = vmatprep.mubr.f32.mxu0 0.0
    %4823 = vmatmul.mubr.f32.gmra.mrb[0].mxu0 %v4196
    %v4824 = vpop.f32.mrb[0].mxu0
    %v4825 = vadd.f32 0.0, %v4824
    %v4826 = vpop.f32.mrb[0].mxu0
    %4827 = vdwg.mxu0
    %4828 = vmatprep.subr.mxu0 0.0
    %4829 = vmatpush1.msra.mxu0 %v4166
    %4830 = vmatprep.subr.mxu0 0.0
    %4831 = vmatpush1.msra.mxu0 %v4167
    %4832 = vmatprep.subr.mxu0 0.0
    %4833 = vmatpush1.msra.mxu0 %v4168
    %4834 = vmatprep.subr.mxu0 0.0
    %4835 = vmatpush1.msra.mxu0 %v4169
    %4836 = vmatprep.subr.mxu0 0.0
    %4837 = vmatpush1.msra.mxu0 0.0
    %4838 = vmatprep.subr.mxu0 0.0
    %4839 = vmatpush1.msra.mxu0 0.0
    %4840 = vmatprep.subr.mxu0 0.0
    %4841 = vmatpush1.msra.mxu0 0.0
    %4842 = vmatprep.subr.mxu0 0.0
    %4843 = vmatpush1.msra.mxu0 0.0
    %4844 = vmatprep.subr.mxu0 0.0
    %4845 = vmatpush1.msra.mxu0 0.0
    %4846 = vmatprep.subr.mxu0 0.0
    %4847 = vmatpush1.msra.mxu0 0.0
    %4848 = vmatprep.subr.mxu0 0.0
    %4849 = vmatpush1.msra.mxu0 0.0
    %4850 = vmatprep.subr.mxu0 0.0
    %4851 = vmatpush1.msra.mxu0 0.0
    %4852 = vmatprep.subr.mxu0 0.0
    %4853 = vmatpush1.msra.mxu0 0.0
    %4854 = vmatprep.subr.mxu0 0.0
    %4855 = vmatpush1.msra.mxu0 0.0
    %4856 = vmatprep.subr.mxu0 0.0
    %4857 = vmatpush1.msra.mxu0 0.0
    %4858 = vmatprep.subr.mxu0 0.0
    %4859 = vmatpush1.msra.mxu0 0.0
    %4860 = vmatprep.subr.mxu0 0.0
    %4861 = vmatpush1.msra.mxu0 0.0
    %4862 = vmatprep.subr.mxu0 0.0
    %4863 = vmatpush1.msra.mxu0 0.0
    %4864 = vmatprep.subr.mxu0 0.0
    %4865 = vmatpush1.msra.mxu0 0.0
    %4866 = vmatprep.subr.mxu0 0.0
    %4867 = vmatpush1.msra.mxu0 0.0
    %4868 = vmatprep.subr.mxu0 0.0
    %4869 = vmatpush1.msra.mxu0 0.0
    %4870 = vmatprep.subr.mxu0 0.0
    %4871 = vmatpush1.msra.mxu0 0.0
    %4872 = vmatprep.subr.mxu0 0.0
    %4873 = vmatpush1.msra.mxu0 0.0
    %4874 = vmatprep.subr.mxu0 0.0
    %4875 = vmatpush1.msra.mxu0 0.0
    %4876 = vmatprep.subr.mxu0 0.0
    %4877 = vmatpush1.msra.mxu0 0.0
    %4878 = vmatprep.subr.mxu0 0.0
    %4879 = vmatpush1.msra.mxu0 0.0
    %4880 = vmatprep.subr.mxu0 0.0
    %4881 = vmatpush1.msra.mxu0 0.0
    %4882 = vmatprep.subr.mxu0 0.0
    %4883 = vmatpush1.msra.mxu0 0.0
    %4884 = vmatprep.subr.mxu0 0.0
    %4885 = vmatpush1.msra.mxu0 0.0
    %4886 = vmatprep.subr.mxu0 0.0
    %4887 = vmatpush1.msra.mxu0 0.0
    %4888 = vmatprep.subr.mxu0 0.0
    %4889 = vmatpush1.msra.mxu0 0.0
    %4890 = vmatprep.subr.mxu0 0.0
    %4891 = vmatpush1.msra.mxu0 0.0
    %4892 = vmatprep.mubr.f32.mxu0 0.0
    %4893 = vmatmul.mubr.f32.gmra.mrb[0].mxu0 %v4196
    %v4894 = vpop.f32.mrb[0].mxu0
    %v4895 = vadd.f32 0.0, %v4894
    %v4896 = vpop.f32.mrb[0].mxu0
    %4897 = vdwg.mxu0
    %4898 = vmatprep.subr.mxu0 0.0
    %4899 = vmatpush1.msra.mxu0 %v4170
    %4900 = vmatprep.subr.mxu0 0.0
    %4901 = vmatpush1.msra.mxu0 %v4171
    %4902 = vmatprep.subr.mxu0 0.0
    %4903 = vmatpush1.msra.mxu0 %v4172
    %4904 = vmatprep.subr.mxu0 0.0
    %4905 = vmatpush1.msra.mxu0 %v4173
    %4906 = vmatprep.subr.mxu0 0.0
    %4907 = vmatpush1.msra.mxu0 0.0
    %4908 = vmatprep.subr.mxu0 0.0
    %4909 = vmatpush1.msra.mxu0 0.0
    %4910 = vmatprep.subr.mxu0 0.0
    %4911 = vmatpush1.msra.mxu0 0.0
    %4912 = vmatprep.subr.mxu0 0.0
    %4913 = vmatpush1.msra.mxu0 0.0
    %4914 = vmatprep.subr.mxu0 0.0
    %4915 = vmatpush1.msra.mxu0 0.0
    %4916 = vmatprep.subr.mxu0 0.0
    %4917 = vmatpush1.msra.mxu0 0.0
    %4918 = vmatprep.subr.mxu0 0.0
    %4919 = vmatpush1.msra.mxu0 0.0
    %4920 = vmatprep.subr.mxu0 0.0
    %4921 = vmatpush1.msra.mxu0 0.0
    %4922 = vmatprep.subr.mxu0 0.0
    %4923 = vmatpush1.msra.mxu0 0.0
    %4924 = vmatprep.subr.mxu0 0.0
    %4925 = vmatpush1.msra.mxu0 0.0
    %4926 = vmatprep.subr.mxu0 0.0
    %4927 = vmatpush1.msra.mxu0 0.0
    %4928 = vmatprep.subr.mxu0 0.0
    %4929 = vmatpush1.msra.mxu0 0.0
    %4930 = vmatprep.subr.mxu0 0.0
    %4931 = vmatpush1.msra.mxu0 0.0
    %4932 = vmatprep.subr.mxu0 0.0
    %4933 = vmatpush1.msra.mxu0 0.0
    %4934 = vmatprep.subr.mxu0 0.0
    %4935 = vmatpush1.msra.mxu0 0.0
    %4936 = vmatprep.subr.mxu0 0.0
    %4937 = vmatpush1.msra.mxu0 0.0
    %4938 = vmatprep.subr.mxu0 0.0
    %4939 = vmatpush1.msra.mxu0 0.0
    %4940 = vmatprep.subr.mxu0 0.0
    %4941 = vmatpush1.msra.mxu0 0.0
    %4942 = vmatprep.subr.mxu0 0.0
    %4943 = vmatpush1.msra.mxu0 0.0
    %4944 = vmatprep.subr.mxu0 0.0
    %4945 = vmatpush1.msra.mxu0 0.0
    %4946 = vmatprep.subr.mxu0 0.0
    %4947 = vmatpush1.msra.mxu0 0.0
    %4948 = vmatprep.subr.mxu0 0.0
    %4949 = vmatpush1.msra.mxu0 0.0
    %4950 = vmatprep.subr.mxu0 0.0
    %4951 = vmatpush1.msra.mxu0 0.0
    %4952 = vmatprep.subr.mxu0 0.0
    %4953 = vmatpush1.msra.mxu0 0.0
    %4954 = vmatprep.subr.mxu0 0.0
    %4955 = vmatpush1.msra.mxu0 0.0
    %4956 = vmatprep.subr.mxu0 0.0
    %4957 = vmatpush1.msra.mxu0 0.0
    %4958 = vmatprep.subr.mxu0 0.0
    %4959 = vmatpush1.msra.mxu0 0.0
    %4960 = vmatprep.subr.mxu0 0.0
    %4961 = vmatpush1.msra.mxu0 0.0
    %4962 = vmatprep.mubr.f32.mxu0 0.0
    %4963 = vmatmul.mubr.f32.gmra.mrb[0].mxu0 %v4196
    %v4964 = vpop.f32.mrb[0].mxu0
    %v4965 = vadd.f32 0.0, %v4964
    %v4966 = vpop.f32.mrb[0].mxu0
    %4967 = vdwg.mxu0
    %4968 = vmatprep.subr.mxu0 0.0
    %4969 = vmatpush1.msra.mxu0 %v4174
    %4970 = vmatprep.subr.mxu0 0.0
    %4971 = vmatpush1.msra.mxu0 %v4175
    %4972 = vmatprep.subr.mxu0 0.0
    %4973 = vmatpush1.msra.mxu0 %v4176
    %4974 = vmatprep.subr.mxu0 0.0
    %4975 = vmatpush1.msra.mxu0 %v4177
    %4976 = vmatprep.subr.mxu0 0.0
    %4977 = vmatpush1.msra.mxu0 0.0
    %4978 = vmatprep.subr.mxu0 0.0
    %4979 = vmatpush1.msra.mxu0 0.0
    %4980 = vmatprep.subr.mxu0 0.0
    %4981 = vmatpush1.msra.mxu0 0.0
    %4982 = vmatprep.subr.mxu0 0.0
    %4983 = vmatpush1.msra.mxu0 0.0
    %4984 = vmatprep.subr.mxu0 0.0
    %4985 = vmatpush1.msra.mxu0 0.0
    %4986 = vmatprep.subr.mxu0 0.0
    %4987 = vmatpush1.msra.mxu0 0.0
    %4988 = vmatprep.subr.mxu0 0.0
    %4989 = vmatpush1.msra.mxu0 0.0
    %4990 = vmatprep.subr.mxu0 0.0
    %4991 = vmatpush1.msra.mxu0 0.0
    %4992 = vmatprep.subr.mxu0 0.0
    %4993 = vmatpush1.msra.mxu0 0.0
    %4994 = vmatprep.subr.mxu0 0.0
    %4995 = vmatpush1.msra.mxu0 0.0
    %4996 = vmatprep.subr.mxu0 0.0
    %4997 = vmatpush1.msra.mxu0 0.0
    %4998 = vmatprep.subr.mxu0 0.0
    %4999 = vmatpush1.msra.mxu0 0.0
    %5000 = vmatprep.subr.mxu0 0.0
    %5001 = vmatpush1.msra.mxu0 0.0
    %5002 = vmatprep.subr.mxu0 0.0
    %5003 = vmatpush1.msra.mxu0 0.0
    %5004 = vmatprep.subr.mxu0 0.0
    %5005 = vmatpush1.msra.mxu0 0.0
    %5006 = vmatprep.subr.mxu0 0.0
    %5007 = vmatpush1.msra.mxu0 0.0
    %5008 = vmatprep.subr.mxu0 0.0
    %5009 = vmatpush1.msra.mxu0 0.0
    %5010 = vmatprep.subr.mxu0 0.0
    %5011 = vmatpush1.msra.mxu0 0.0
    %5012 = vmatprep.subr.mxu0 0.0
    %5013 = vmatpush1.msra.mxu0 0.0
    %5014 = vmatprep.subr.mxu0 0.0
    %5015 = vmatpush1.msra.mxu0 0.0
    %5016 = vmatprep.subr.mxu0 0.0
    %5017 = vmatpush1.msra.mxu0 0.0
    %5018 = vmatprep.subr.mxu0 0.0
    %5019 = vmatpush1.msra.mxu0 0.0
    %5020 = vmatprep.subr.mxu0 0.0
    %5021 = vmatpush1.msra.mxu0 0.0
    %5022 = vmatprep.subr.mxu0 0.0
    %5023 = vmatpush1.msra.mxu0 0.0
    %5024 = vmatprep.subr.mxu0 0.0
    %5025 = vmatpush1.msra.mxu0 0.0
    %5026 = vmatprep.subr.mxu0 0.0
    %5027 = vmatpush1.msra.mxu0 0.0
    %5028 = vmatprep.subr.mxu0 0.0
    %5029 = vmatpush1.msra.mxu0 0.0
    %5030 = vmatprep.subr.mxu0 0.0
    %5031 = vmatpush1.msra.mxu0 0.0
    %5032 = vmatprep.mubr.f32.mxu0 0.0
    %5033 = vmatmul.mubr.f32.gmra.mrb[0].mxu0 %v4196
    %v5034 = vpop.f32.mrb[0].mxu0
    %v5035 = vadd.f32 0.0, %v5034
    %v5036 = vpop.f32.mrb[0].mxu0
    %5037 = vdwg.mxu0
    %v5039 = vsel %vm1103, %v4265, 0
    %v5042 = vsel %vm1103, %v4545, 0
    %5044 = vmatprep.subr.mxu0 0.0
    %5045 = vmatpush1.xpose.msra.mxu0 %v5042
    %5046 = vmatprep.subr.mxu0 0.0
    %5047 = vmatpush1.xpose.msra.mxu0 0.0
    %5048 = vmatprep.subr.mxu0 0.0
    %5049 = vmatpush1.xpose.msra.mxu0 0.0
    %5050 = vmatprep.subr.mxu0 0.0
    %5051 = vmatpush1.xpose.msra.mxu0 0.0
    %5052 = vmatprep.subr.mxu0 0.0
    %5053 = vmatpush1.xpose.msra.mxu0 0.0
    %5054 = vmatprep.subr.mxu0 0.0
    %5055 = vmatpush1.xpose.msra.mxu0 0.0
    %5056 = vmatprep.subr.mxu0 0.0
    %5057 = vmatpush1.xpose.msra.mxu0 0.0
    %5058 = vmatprep.subr.mxu0 0.0
    %5059 = vmatpush1.xpose.msra.mxu0 0.0
    %5060 = vmatprep.subr.mxu0 0.0
    %5061 = vmatpush1.xpose.msra.mxu0 0.0
    %5062 = vmatprep.subr.mxu0 0.0
    %5063 = vmatpush1.xpose.msra.mxu0 0.0
    %5064 = vmatprep.subr.mxu0 0.0
    %5065 = vmatpush1.xpose.msra.mxu0 0.0
    %5066 = vmatprep.subr.mxu0 0.0
    %5067 = vmatpush1.xpose.msra.mxu0 0.0
    %5068 = vmatprep.subr.mxu0 0.0
    %5069 = vmatpush1.xpose.msra.mxu0 0.0
    %5070 = vmatprep.subr.mxu0 0.0
    %5071 = vmatpush1.xpose.msra.mxu0 0.0
    %5072 = vmatprep.subr.mxu0 0.0
    %5073 = vmatpush1.xpose.msra.mxu0 0.0
    %5074 = vmatprep.subr.mxu0 0.0
    %5075 = vmatpush1.xpose.msra.mxu0 0.0
    %5076 = vmatprep.subr.mxu0 0.0
    %5077 = vmatpush1.xpose.msra.mxu0 0.0
    %5078 = vmatprep.subr.mxu0 0.0
    %5079 = vmatpush1.xpose.msra.mxu0 0.0
    %5080 = vmatprep.subr.mxu0 0.0
    %5081 = vmatpush1.xpose.msra.mxu0 0.0
    %5082 = vmatprep.subr.mxu0 0.0
    %5083 = vmatpush1.xpose.msra.mxu0 0.0
    %5084 = vmatprep.subr.mxu0 0.0
    %5085 = vmatpush1.xpose.msra.mxu0 0.0
    %5086 = vmatprep.subr.mxu0 0.0
    %5087 = vmatpush1.xpose.msra.mxu0 0.0
    %5088 = vmatprep.subr.mxu0 0.0
    %5089 = vmatpush1.xpose.msra.mxu0 0.0
    %5090 = vmatprep.subr.mxu0 0.0
    %5091 = vmatpush1.xpose.msra.mxu0 0.0
    %5092 = vmatprep.subr.mxu0 0.0
    %5093 = vmatpush1.xpose.msra.mxu0 0.0
    %5094 = vmatprep.subr.mxu0 0.0
    %5095 = vmatpush1.xpose.msra.mxu0 0.0
    %5096 = vmatprep.subr.mxu0 0.0
    %5097 = vmatpush1.xpose.msra.mxu0 0.0
    %5098 = vmatprep.subr.mxu0 0.0
    %5099 = vmatpush1.xpose.msra.mxu0 0.0
    %5100 = vmatprep.subr.mxu0 0.0
    %5101 = vmatpush1.xpose.msra.mxu0 0.0
    %5102 = vmatprep.subr.mxu0 0.0
    %5103 = vmatpush1.xpose.msra.mxu0 0.0
    %5104 = vmatprep.subr.mxu0 0.0
    %5105 = vmatpush1.xpose.msra.mxu0 0.0
    %5106 = vmatprep.subr.mxu0 0.0
    %5107 = vmatpush1.xpose.msra.mxu0 0.0
    %5108 = vmatprep.mubr.f32.mxu0 0.0
    %5109 = vmatmul.mubr.f32.gmra.mrb[0].mxu0 %v5039
    %v5110 = vpop.f32.mrb[0].mxu0
    %v5111 = vadd.f32 %v4123, %v5110
    %v5112 = vpop.f32.mrb[0].mxu0
    %5113 = vdwg.mxu0
    %v5115 = vsel %vm1103, %v4335, 0
    %v5118 = vsel %vm1103, %v4615, 0
    %5120 = vmatprep.subr.mxu0 0.0
    %5121 = vmatpush1.xpose.msra.mxu0 %v5118
    %5122 = vmatprep.subr.mxu0 0.0
    %5123 = vmatpush1.xpose.msra.mxu0 0.0
    %5124 = vmatprep.subr.mxu0 0.0
    %5125 = vmatpush1.xpose.msra.mxu0 0.0
    %5126 = vmatprep.subr.mxu0 0.0
    %5127 = vmatpush1.xpose.msra.mxu0 0.0
    %5128 = vmatprep.subr.mxu0 0.0
    %5129 = vmatpush1.xpose.msra.mxu0 0.0
    %5130 = vmatprep.subr.mxu0 0.0
    %5131 = vmatpush1.xpose.msra.mxu0 0.0
    %5132 = vmatprep.subr.mxu0 0.0
    %5133 = vmatpush1.xpose.msra.mxu0 0.0
    %5134 = vmatprep.subr.mxu0 0.0
    %5135 = vmatpush1.xpose.msra.mxu0 0.0
    %5136 = vmatprep.subr.mxu0 0.0
    %5137 = vmatpush1.xpose.msra.mxu0 0.0
    %5138 = vmatprep.subr.mxu0 0.0
    %5139 = vmatpush1.xpose.msra.mxu0 0.0
    %5140 = vmatprep.subr.mxu0 0.0
    %5141 = vmatpush1.xpose.msra.mxu0 0.0
    %5142 = vmatprep.subr.mxu0 0.0
    %5143 = vmatpush1.xpose.msra.mxu0 0.0
    %5144 = vmatprep.subr.mxu0 0.0
    %5145 = vmatpush1.xpose.msra.mxu0 0.0
    %5146 = vmatprep.subr.mxu0 0.0
    %5147 = vmatpush1.xpose.msra.mxu0 0.0
    %5148 = vmatprep.subr.mxu0 0.0
    %5149 = vmatpush1.xpose.msra.mxu0 0.0
    %5150 = vmatprep.subr.mxu0 0.0
    %5151 = vmatpush1.xpose.msra.mxu0 0.0
    %5152 = vmatprep.subr.mxu0 0.0
    %5153 = vmatpush1.xpose.msra.mxu0 0.0
    %5154 = vmatprep.subr.mxu0 0.0
    %5155 = vmatpush1.xpose.msra.mxu0 0.0
    %5156 = vmatprep.subr.mxu0 0.0
    %5157 = vmatpush1.xpose.msra.mxu0 0.0
    %5158 = vmatprep.subr.mxu0 0.0
    %5159 = vmatpush1.xpose.msra.mxu0 0.0
    %5160 = vmatprep.subr.mxu0 0.0
    %5161 = vmatpush1.xpose.msra.mxu0 0.0
    %5162 = vmatprep.subr.mxu0 0.0
    %5163 = vmatpush1.xpose.msra.mxu0 0.0
    %5164 = vmatprep.subr.mxu0 0.0
    %5165 = vmatpush1.xpose.msra.mxu0 0.0
    %5166 = vmatprep.subr.mxu0 0.0
    %5167 = vmatpush1.xpose.msra.mxu0 0.0
    %5168 = vmatprep.subr.mxu0 0.0
    %5169 = vmatpush1.xpose.msra.mxu0 0.0
    %5170 = vmatprep.subr.mxu0 0.0
    %5171 = vmatpush1.xpose.msra.mxu0 0.0
    %5172 = vmatprep.subr.mxu0 0.0
    %5173 = vmatpush1.xpose.msra.mxu0 0.0
    %5174 = vmatprep.subr.mxu0 0.0
    %5175 = vmatpush1.xpose.msra.mxu0 0.0
    %5176 = vmatprep.subr.mxu0 0.0
    %5177 = vmatpush1.xpose.msra.mxu0 0.0
    %5178 = vmatprep.subr.mxu0 0.0
    %5179 = vmatpush1.xpose.msra.mxu0 0.0
    %5180 = vmatprep.subr.mxu0 0.0
    %5181 = vmatpush1.xpose.msra.mxu0 0.0
    %5182 = vmatprep.subr.mxu0 0.0
    %5183 = vmatpush1.xpose.msra.mxu0 0.0
    %5184 = vmatprep.mubr.f32.mxu0 0.0
    %5185 = vmatmul.mubr.f32.gmra.mrb[0].mxu0 %v5115
    %v5186 = vpop.f32.mrb[0].mxu0
    %v5187 = vadd.f32 %v4124, %v5186
    %v5188 = vpop.f32.mrb[0].mxu0
    %5189 = vdwg.mxu0
    %v5191 = vsel %vm1103, %v4405, 0
    %v5194 = vsel %vm1103, %v4685, 0
    %5196 = vmatprep.subr.mxu0 0.0
    %5197 = vmatpush1.xpose.msra.mxu0 %v5194
    %5198 = vmatprep.subr.mxu0 0.0
    %5199 = vmatpush1.xpose.msra.mxu0 0.0
    %5200 = vmatprep.subr.mxu0 0.0
    %5201 = vmatpush1.xpose.msra.mxu0 0.0
    %5202 = vmatprep.subr.mxu0 0.0
    %5203 = vmatpush1.xpose.msra.mxu0 0.0
    %5204 = vmatprep.subr.mxu0 0.0
    %5205 = vmatpush1.xpose.msra.mxu0 0.0
    %5206 = vmatprep.subr.mxu0 0.0
    %5207 = vmatpush1.xpose.msra.mxu0 0.0
    %5208 = vmatprep.subr.mxu0 0.0
    %5209 = vmatpush1.xpose.msra.mxu0 0.0
    %5210 = vmatprep.subr.mxu0 0.0
    %5211 = vmatpush1.xpose.msra.mxu0 0.0
    %5212 = vmatprep.subr.mxu0 0.0
    %5213 = vmatpush1.xpose.msra.mxu0 0.0
    %5214 = vmatprep.subr.mxu0 0.0
    %5215 = vmatpush1.xpose.msra.mxu0 0.0
    %5216 = vmatprep.subr.mxu0 0.0
    %5217 = vmatpush1.xpose.msra.mxu0 0.0
    %5218 = vmatprep.subr.mxu0 0.0
    %5219 = vmatpush1.xpose.msra.mxu0 0.0
    %5220 = vmatprep.subr.mxu0 0.0
    %5221 = vmatpush1.xpose.msra.mxu0 0.0
    %5222 = vmatprep.subr.mxu0 0.0
    %5223 = vmatpush1.xpose.msra.mxu0 0.0
    %5224 = vmatprep.subr.mxu0 0.0
    %5225 = vmatpush1.xpose.msra.mxu0 0.0
    %5226 = vmatprep.subr.mxu0 0.0
    %5227 = vmatpush1.xpose.msra.mxu0 0.0
    %5228 = vmatprep.subr.mxu0 0.0
    %5229 = vmatpush1.xpose.msra.mxu0 0.0
    %5230 = vmatprep.subr.mxu0 0.0
    %5231 = vmatpush1.xpose.msra.mxu0 0.0
    %5232 = vmatprep.subr.mxu0 0.0
    %5233 = vmatpush1.xpose.msra.mxu0 0.0
    %5234 = vmatprep.subr.mxu0 0.0
    %5235 = vmatpush1.xpose.msra.mxu0 0.0
    %5236 = vmatprep.subr.mxu0 0.0
    %5237 = vmatpush1.xpose.msra.mxu0 0.0
    %5238 = vmatprep.subr.mxu0 0.0
    %5239 = vmatpush1.xpose.msra.mxu0 0.0
    %5240 = vmatprep.subr.mxu0 0.0
    %5241 = vmatpush1.xpose.msra.mxu0 0.0
    %5242 = vmatprep.subr.mxu0 0.0
    %5243 = vmatpush1.xpose.msra.mxu0 0.0
    %5244 = vmatprep.subr.mxu0 0.0
    %5245 = vmatpush1.xpose.msra.mxu0 0.0
    %5246 = vmatprep.subr.mxu0 0.0
    %5247 = vmatpush1.xpose.msra.mxu0 0.0
    %5248 = vmatprep.subr.mxu0 0.0
    %5249 = vmatpush1.xpose.msra.mxu0 0.0
    %5250 = vmatprep.subr.mxu0 0.0
    %5251 = vmatpush1.xpose.msra.mxu0 0.0
    %5252 = vmatprep.subr.mxu0 0.0
    %5253 = vmatpush1.xpose.msra.mxu0 0.0
    %5254 = vmatprep.subr.mxu0 0.0
    %5255 = vmatpush1.xpose.msra.mxu0 0.0
    %5256 = vmatprep.subr.mxu0 0.0
    %5257 = vmatpush1.xpose.msra.mxu0 0.0
    %5258 = vmatprep.subr.mxu0 0.0
    %5259 = vmatpush1.xpose.msra.mxu0 0.0
    %5260 = vmatprep.mubr.f32.mxu0 0.0
    %5261 = vmatmul.mubr.f32.gmra.mrb[0].mxu0 %v5191
    %v5262 = vpop.f32.mrb[0].mxu0
    %v5263 = vadd.f32 %v4125, %v5262
    %v5264 = vpop.f32.mrb[0].mxu0
    %5265 = vdwg.mxu0
    %v5267 = vsel %vm1103, %v4475, 0
    %v5270 = vsel %vm1103, %v4755, 0
    %5272 = vmatprep.subr.mxu0 0.0
    %5273 = vmatpush1.xpose.msra.mxu0 %v5270
    %5274 = vmatprep.subr.mxu0 0.0
    %5275 = vmatpush1.xpose.msra.mxu0 0.0
    %5276 = vmatprep.subr.mxu0 0.0
    %5277 = vmatpush1.xpose.msra.mxu0 0.0
    %5278 = vmatprep.subr.mxu0 0.0
    %5279 = vmatpush1.xpose.msra.mxu0 0.0
    %5280 = vmatprep.subr.mxu0 0.0
    %5281 = vmatpush1.xpose.msra.mxu0 0.0
    %5282 = vmatprep.subr.mxu0 0.0
    %5283 = vmatpush1.xpose.msra.mxu0 0.0
    %5284 = vmatprep.subr.mxu0 0.0
    %5285 = vmatpush1.xpose.msra.mxu0 0.0
    %5286 = vmatprep.subr.mxu0 0.0
    %5287 = vmatpush1.xpose.msra.mxu0 0.0
    %5288 = vmatprep.subr.mxu0 0.0
    %5289 = vmatpush1.xpose.msra.mxu0 0.0
    %5290 = vmatprep.subr.mxu0 0.0
    %5291 = vmatpush1.xpose.msra.mxu0 0.0
    %5292 = vmatprep.subr.mxu0 0.0
    %5293 = vmatpush1.xpose.msra.mxu0 0.0
    %5294 = vmatprep.subr.mxu0 0.0
    %5295 = vmatpush1.xpose.msra.mxu0 0.0
    %5296 = vmatprep.subr.mxu0 0.0
    %5297 = vmatpush1.xpose.msra.mxu0 0.0
    %5298 = vmatprep.subr.mxu0 0.0
    %5299 = vmatpush1.xpose.msra.mxu0 0.0
    %5300 = vmatprep.subr.mxu0 0.0
    %5301 = vmatpush1.xpose.msra.mxu0 0.0
    %5302 = vmatprep.subr.mxu0 0.0
    %5303 = vmatpush1.xpose.msra.mxu0 0.0
    %5304 = vmatprep.subr.mxu0 0.0
    %5305 = vmatpush1.xpose.msra.mxu0 0.0
    %5306 = vmatprep.subr.mxu0 0.0
    %5307 = vmatpush1.xpose.msra.mxu0 0.0
    %5308 = vmatprep.subr.mxu0 0.0
    %5309 = vmatpush1.xpose.msra.mxu0 0.0
    %5310 = vmatprep.subr.mxu0 0.0
    %5311 = vmatpush1.xpose.msra.mxu0 0.0
    %5312 = vmatprep.subr.mxu0 0.0
    %5313 = vmatpush1.xpose.msra.mxu0 0.0
    %5314 = vmatprep.subr.mxu0 0.0
    %5315 = vmatpush1.xpose.msra.mxu0 0.0
    %5316 = vmatprep.subr.mxu0 0.0
    %5317 = vmatpush1.xpose.msra.mxu0 0.0
    %5318 = vmatprep.subr.mxu0 0.0
    %5319 = vmatpush1.xpose.msra.mxu0 0.0
    %5320 = vmatprep.subr.mxu0 0.0
    %5321 = vmatpush1.xpose.msra.mxu0 0.0
    %5322 = vmatprep.subr.mxu0 0.0
    %5323 = vmatpush1.xpose.msra.mxu0 0.0
    %5324 = vmatprep.subr.mxu0 0.0
    %5325 = vmatpush1.xpose.msra.mxu0 0.0
    %5326 = vmatprep.subr.mxu0 0.0
    %5327 = vmatpush1.xpose.msra.mxu0 0.0
    %5328 = vmatprep.subr.mxu0 0.0
    %5329 = vmatpush1.xpose.msra.mxu0 0.0
    %5330 = vmatprep.subr.mxu0 0.0
    %5331 = vmatpush1.xpose.msra.mxu0 0.0
    %5332 = vmatprep.subr.mxu0 0.0
    %5333 = vmatpush1.xpose.msra.mxu0 0.0
    %5334 = vmatprep.subr.mxu0 0.0
    %5335 = vmatpush1.xpose.msra.mxu0 0.0
    %5336 = vmatprep.mubr.f32.mxu0 0.0
    %5337 = vmatmul.mubr.f32.gmra.mrb[0].mxu0 %v5267
    %v5338 = vpop.f32.mrb[0].mxu0
    %v5339 = vadd.f32 %v4126, %v5338
    %v5340 = vpop.f32.mrb[0].mxu0
    %5341 = vdwg.mxu0
    %v5342 = vsel %vm1103, %v5111, -inf
    %5343 = vmax.xlane.f32.xlu0 %v5342
    %v5344 = vpop.xlane.xlu0 %5343
    %v5345 = vsel %vm1103, %v5187, -inf
    %5346 = vmax.xlane.f32.xlu0 %v5345
    %v5347 = vpop.xlane.xlu0 %5346
    %v5348 = vsel %vm1103, %v5263, -inf
    %5349 = vmax.xlane.f32.xlu0 %v5348
    %v5350 = vpop.xlane.xlu0 %5349
    %v5351 = vsel %vm1103, %v5339, -inf
    %5352 = vmax.xlane.f32.xlu0 %v5351
    %v5353 = vpop.xlane.xlu0 %5352
    %v5354 = vsub.f32 %v5111, %v5344
    %v5355 = vsub.f32 %v5187, %v5347
    %v5356 = vsub.f32 %v5263, %v5350
    %v5357 = vsub.f32 %v5339, %v5353
    %v5358 = vmul.f32 %v5354, 1.442695
    %v5359 = vpow.pop %v5358
    %v5360 = vmul.f32 %v5355, 1.442695
    %v5361 = vpow.pop %v5360
    %v5362 = vmul.f32 %v5356, 1.442695
    %v5363 = vpow.pop %v5362
    %v5364 = vmul.f32 %v5357, 1.442695
    %v5365 = vpow.pop %v5364
    %v5366 = vsel %vm1103, %v5359, 0.0
    %5367 = vadd.xlane.f32.xlu0 %v5366
    %v5368 = vpop.xlane.xlu0 %5367
    %v5369 = vsel %vm1103, %v5361, 0.0
    %5370 = vadd.xlane.f32.xlu0 %v5369
    %v5371 = vpop.xlane.xlu0 %5370
    %v5372 = vsel %vm1103, %v5363, 0.0
    %5373 = vadd.xlane.f32.xlu0 %v5372
    %v5374 = vpop.xlane.xlu0 %5373
    %v5375 = vsel %vm1103, %v5365, 0.0
    %5376 = vadd.xlane.f32.xlu0 %v5375
    %v5377 = vpop.xlane.xlu0 %5376
    %v5378 = vrcp.pop %v5368
    %v5379 = vrcp.pop %v5371
    %v5380 = vrcp.pop %v5374
    %v5381 = vrcp.pop %v5377
    %v5382 = vmul.f32 %v5359, %v5378
    %v5383 = vmul.f32 %v5361, %v5379
    %v5384 = vmul.f32 %v5363, %v5380
    %v5385 = vmul.f32 %v5365, %v5381
    %v5387 = vsel %vm1103, %v5382, 0
    %5389 = vmatprep.subr.mxu0 0.0
    %5390 = vmatpush1.msra.mxu0 %v4825
    %5391 = vmatprep.subr.mxu0 0.0
    %5392 = vmatpush1.msra.mxu0 0.0
    %5393 = vmatprep.subr.mxu0 0.0
    %5394 = vmatpush1.msra.mxu0 0.0
    %5395 = vmatprep.subr.mxu0 0.0
    %5396 = vmatpush1.msra.mxu0 0.0
    %5397 = vmatprep.subr.mxu0 0.0
    %5398 = vmatpush1.msra.mxu0 0.0
    %5399 = vmatprep.subr.mxu0 0.0
    %5400 = vmatpush1.msra.mxu0 0.0
    %5401 = vmatprep.subr.mxu0 0.0
    %5402 = vmatpush1.msra.mxu0 0.0
    %5403 = vmatprep.subr.mxu0 0.0
    %5404 = vmatpush1.msra.mxu0 0.0
    %5405 = vmatprep.subr.mxu0 0.0
    %5406 = vmatpush1.msra.mxu0 0.0
    %5407 = vmatprep.subr.mxu0 0.0
    %5408 = vmatpush1.msra.mxu0 0.0
    %5409 = vmatprep.subr.mxu0 0.0
    %5410 = vmatpush1.msra.mxu0 0.0
    %5411 = vmatprep.subr.mxu0 0.0
    %5412 = vmatpush1.msra.mxu0 0.0
    %5413 = vmatprep.subr.mxu0 0.0
    %5414 = vmatpush1.msra.mxu0 0.0
    %5415 = vmatprep.subr.mxu0 0.0
    %5416 = vmatpush1.msra.mxu0 0.0
    %5417 = vmatprep.subr.mxu0 0.0
    %5418 = vmatpush1.msra.mxu0 0.0
    %5419 = vmatprep.subr.mxu0 0.0
    %5420 = vmatpush1.msra.mxu0 0.0
    %5421 = vmatprep.subr.mxu0 0.0
    %5422 = vmatpush1.msra.mxu0 0.0
    %5423 = vmatprep.subr.mxu0 0.0
    %5424 = vmatpush1.msra.mxu0 0.0
    %5425 = vmatprep.subr.mxu0 0.0
    %5426 = vmatpush1.msra.mxu0 0.0
    %5427 = vmatprep.subr.mxu0 0.0
    %5428 = vmatpush1.msra.mxu0 0.0
    %5429 = vmatprep.subr.mxu0 0.0
    %5430 = vmatpush1.msra.mxu0 0.0
    %5431 = vmatprep.subr.mxu0 0.0
    %5432 = vmatpush1.msra.mxu0 0.0
    %5433 = vmatprep.subr.mxu0 0.0
    %5434 = vmatpush1.msra.mxu0 0.0
    %5435 = vmatprep.subr.mxu0 0.0
    %5436 = vmatpush1.msra.mxu0 0.0
    %5437 = vmatprep.subr.mxu0 0.0
    %5438 = vmatpush1.msra.mxu0 0.0
    %5439 = vmatprep.subr.mxu0 0.0
    %5440 = vmatpush1.msra.mxu0 0.0
    %5441 = vmatprep.subr.mxu0 0.0
    %5442 = vmatpush1.msra.mxu0 0.0
    %5443 = vmatprep.subr.mxu0 0.0
    %5444 = vmatpush1.msra.mxu0 0.0
    %5445 = vmatprep.subr.mxu0 0.0
    %5446 = vmatpush1.msra.mxu0 0.0
    %5447 = vmatprep.subr.mxu0 0.0
    %5448 = vmatpush1.msra.mxu0 0.0
    %5449 = vmatprep.subr.mxu0 0.0
    %5450 = vmatpush1.msra.mxu0 0.0
    %5451 = vmatprep.subr.mxu0 0.0
    %5452 = vmatpush1.msra.mxu0 0.0
    %5453 = vmatprep.mubr.f32.mxu0 0.0
    %5454 = vmatmul.mubr.f32.gmra.mrb[0].mxu0 %v5387
    %v5455 = vpop.f32.mrb[0].mxu0
    %v5456 = vadd.f32 0.0, %v5455
    %v5457 = vpop.f32.mrb[0].mxu0
    %5458 = vdwg.mxu0
    %v5460 = vsel %vm1103, %v5383, 0
    %5462 = vmatprep.subr.mxu0 0.0
    %5463 = vmatpush1.msra.mxu0 %v4895
    %5464 = vmatprep.subr.mxu0 0.0
    %5465 = vmatpush1.msra.mxu0 0.0
    %5466 = vmatprep.subr.mxu0 0.0
    %5467 = vmatpush1.msra.mxu0 0.0
    %5468 = vmatprep.subr.mxu0 0.0
    %5469 = vmatpush1.msra.mxu0 0.0
    %5470 = vmatprep.subr.mxu0 0.0
    %5471 = vmatpush1.msra.mxu0 0.0
    %5472 = vmatprep.subr.mxu0 0.0
    %5473 = vmatpush1.msra.mxu0 0.0
    %5474 = vmatprep.subr.mxu0 0.0
    %5475 = vmatpush1.msra.mxu0 0.0
    %5476 = vmatprep.subr.mxu0 0.0
    %5477 = vmatpush1.msra.mxu0 0.0
    %5478 = vmatprep.subr.mxu0 0.0
    %5479 = vmatpush1.msra.mxu0 0.0
    %5480 = vmatprep.subr.mxu0 0.0
    %5481 = vmatpush1.msra.mxu0 0.0
    %5482 = vmatprep.subr.mxu0 0.0
    %5483 = vmatpush1.msra.mxu0 0.0
    %5484 = vmatprep.subr.mxu0 0.0
    %5485 = vmatpush1.msra.mxu0 0.0
    %5486 = vmatprep.subr.mxu0 0.0
    %5487 = vmatpush1.msra.mxu0 0.0
    %5488 = vmatprep.subr.mxu0 0.0
    %5489 = vmatpush1.msra.mxu0 0.0
    %5490 = vmatprep.subr.mxu0 0.0
    %5491 = vmatpush1.msra.mxu0 0.0
    %5492 = vmatprep.subr.mxu0 0.0
    %5493 = vmatpush1.msra.mxu0 0.0
    %5494 = vmatprep.subr.mxu0 0.0
    %5495 = vmatpush1.msra.mxu0 0.0
    %5496 = vmatprep.subr.mxu0 0.0
    %5497 = vmatpush1.msra.mxu0 0.0
    %5498 = vmatprep.subr.mxu0 0.0
    %5499 = vmatpush1.msra.mxu0 0.0
    %5500 = vmatprep.subr.mxu0 0.0
    %5501 = vmatpush1.msra.mxu0 0.0
    %5502 = vmatprep.subr.mxu0 0.0
    %5503 = vmatpush1.msra.mxu0 0.0
    %5504 = vmatprep.subr.mxu0 0.0
    %5505 = vmatpush1.msra.mxu0 0.0
    %5506 = vmatprep.subr.mxu0 0.0
    %5507 = vmatpush1.msra.mxu0 0.0
    %5508 = vmatprep.subr.mxu0 0.0
    %5509 = vmatpush1.msra.mxu0 0.0
    %5510 = vmatprep.subr.mxu0 0.0
    %5511 = vmatpush1.msra.mxu0 0.0
    %5512 = vmatprep.subr.mxu0 0.0
    %5513 = vmatpush1.msra.mxu0 0.0
    %5514 = vmatprep.subr.mxu0 0.0
    %5515 = vmatpush1.msra.mxu0 0.0
    %5516 = vmatprep.subr.mxu0 0.0
    %5517 = vmatpush1.msra.mxu0 0.0
    %5518 = vmatprep.subr.mxu0 0.0
    %5519 = vmatpush1.msra.mxu0 0.0
    %5520 = vmatprep.subr.mxu0 0.0
    %5521 = vmatpush1.msra.mxu0 0.0
    %5522 = vmatprep.subr.mxu0 0.0
    %5523 = vmatpush1.msra.mxu0 0.0
    %5524 = vmatprep.subr.mxu0 0.0
    %5525 = vmatpush1.msra.mxu0 0.0
    %5526 = vmatprep.mubr.f32.mxu0 0.0
    %5527 = vmatmul.mubr.f32.gmra.mrb[0].mxu0 %v5460
    %v5528 = vpop.f32.mrb[0].mxu0
    %v5529 = vadd.f32 0.0, %v5528
    %v5530 = vpop.f32.mrb[0].mxu0
    %5531 = vdwg.mxu0
    %v5533 = vsel %vm1103, %v5384, 0
    %5535 = vmatprep.subr.mxu0 0.0
    %5536 = vmatpush1.msra.mxu0 %v4965
    %5537 = vmatprep.subr.mxu0 0.0
    %5538 = vmatpush1.msra.mxu0 0.0
    %5539 = vmatprep.subr.mxu0 0.0
    %5540 = vmatpush1.msra.mxu0 0.0
    %5541 = vmatprep.subr.mxu0 0.0
    %5542 = vmatpush1.msra.mxu0 0.0
    %5543 = vmatprep.subr.mxu0 0.0
    %5544 = vmatpush1.msra.mxu0 0.0
    %5545 = vmatprep.subr.mxu0 0.0
    %5546 = vmatpush1.msra.mxu0 0.0
    %5547 = vmatprep.subr.mxu0 0.0
    %5548 = vmatpush1.msra.mxu0 0.0
    %5549 = vmatprep.subr.mxu0 0.0
    %5550 = vmatpush1.msra.mxu0 0.0
    %5551 = vmatprep.subr.mxu0 0.0
    %5552 = vmatpush1.msra.mxu0 0.0
    %5553 = vmatprep.subr.mxu0 0.0
    %5554 = vmatpush1.msra.mxu0 0.0
    %5555 = vmatprep.subr.mxu0 0.0
    %5556 = vmatpush1.msra.mxu0 0.0
    %5557 = vmatprep.subr.mxu0 0.0
    %5558 = vmatpush1.msra.mxu0 0.0
    %5559 = vmatprep.subr.mxu0 0.0
    %5560 = vmatpush1.msra.mxu0 0.0
    %5561 = vmatprep.subr.mxu0 0.0
    %5562 = vmatpush1.msra.mxu0 0.0
    %5563 = vmatprep.subr.mxu0 0.0
    %5564 = vmatpush1.msra.mxu0 0.0
    %5565 = vmatprep.subr.mxu0 0.0
    %5566 = vmatpush1.msra.mxu0 0.0
    %5567 = vmatprep.subr.mxu0 0.0
    %5568 = vmatpush1.msra.mxu0 0.0
    %5569 = vmatprep.subr.mxu0 0.0
    %5570 = vmatpush1.msra.mxu0 0.0
    %5571 = vmatprep.subr.mxu0 0.0
    %5572 = vmatpush1.msra.mxu0 0.0
    %5573 = vmatprep.subr.mxu0 0.0
    %5574 = vmatpush1.msra.mxu0 0.0
    %5575 = vmatprep.subr.mxu0 0.0
    %5576 = vmatpush1.msra.mxu0 0.0
    %5577 = vmatprep.subr.mxu0 0.0
    %5578 = vmatpush1.msra.mxu0 0.0
    %5579 = vmatprep.subr.mxu0 0.0
    %5580 = vmatpush1.msra.mxu0 0.0
    %5581 = vmatprep.subr.mxu0 0.0
    %5582 = vmatpush1.msra.mxu0 0.0
    %5583 = vmatprep.subr.mxu0 0.0
    %5584 = vmatpush1.msra.mxu0 0.0
    %5585 = vmatprep.subr.mxu0 0.0
    %5586 = vmatpush1.msra.mxu0 0.0
    %5587 = vmatprep.subr.mxu0 0.0
    %5588 = vmatpush1.msra.mxu0 0.0
    %5589 = vmatprep.subr.mxu0 0.0
    %5590 = vmatpush1.msra.mxu0 0.0
    %5591 = vmatprep.subr.mxu0 0.0
    %5592 = vmatpush1.msra.mxu0 0.0
    %5593 = vmatprep.subr.mxu0 0.0
    %5594 = vmatpush1.msra.mxu0 0.0
    %5595 = vmatprep.subr.mxu0 0.0
    %5596 = vmatpush1.msra.mxu0 0.0
    %5597 = vmatprep.subr.mxu0 0.0
    %5598 = vmatpush1.msra.mxu0 0.0
    %5599 = vmatprep.mubr.f32.mxu0 0.0
    %5600 = vmatmul.mubr.f32.gmra.mrb[0].mxu0 %v5533
    %v5601 = vpop.f32.mrb[0].mxu0
    %v5602 = vadd.f32 0.0, %v5601
    %v5603 = vpop.f32.mrb[0].mxu0
    %5604 = vdwg.mxu0
    %v5606 = vsel %vm1103, %v5385, 0
    %5608 = vmatprep.subr.mxu0 0.0
    %5609 = vmatpush1.msra.mxu0 %v5035
    %5610 = vmatprep.subr.mxu0 0.0
    %5611 = vmatpush1.msra.mxu0 0.0
    %5612 = vmatprep.subr.mxu0 0.0
    %5613 = vmatpush1.msra.mxu0 0.0
    %5614 = vmatprep.subr.mxu0 0.0
    %5615 = vmatpush1.msra.mxu0 0.0
    %5616 = vmatprep.subr.mxu0 0.0
    %5617 = vmatpush1.msra.mxu0 0.0
    %5618 = vmatprep.subr.mxu0 0.0
    %5619 = vmatpush1.msra.mxu0 0.0
    %5620 = vmatprep.subr.mxu0 0.0
    %5621 = vmatpush1.msra.mxu0 0.0
    %5622 = vmatprep.subr.mxu0 0.0
    %5623 = vmatpush1.msra.mxu0 0.0
    %5624 = vmatprep.subr.mxu0 0.0
    %5625 = vmatpush1.msra.mxu0 0.0
    %5626 = vmatprep.subr.mxu0 0.0
    %5627 = vmatpush1.msra.mxu0 0.0
    %5628 = vmatprep.subr.mxu0 0.0
    %5629 = vmatpush1.msra.mxu0 0.0
    %5630 = vmatprep.subr.mxu0 0.0
    %5631 = vmatpush1.msra.mxu0 0.0
    %5632 = vmatprep.subr.mxu0 0.0
    %5633 = vmatpush1.msra.mxu0 0.0
    %5634 = vmatprep.subr.mxu0 0.0
    %5635 = vmatpush1.msra.mxu0 0.0
    %5636 = vmatprep.subr.mxu0 0.0
    %5637 = vmatpush1.msra.mxu0 0.0
    %5638 = vmatprep.subr.mxu0 0.0
    %5639 = vmatpush1.msra.mxu0 0.0
    %5640 = vmatprep.subr.mxu0 0.0
    %5641 = vmatpush1.msra.mxu0 0.0
    %5642 = vmatprep.subr.mxu0 0.0
    %5643 = vmatpush1.msra.mxu0 0.0
    %5644 = vmatprep.subr.mxu0 0.0
    %5645 = vmatpush1.msra.mxu0 0.0
    %5646 = vmatprep.subr.mxu0 0.0
    %5647 = vmatpush1.msra.mxu0 0.0
    %5648 = vmatprep.subr.mxu0 0.0
    %5649 = vmatpush1.msra.mxu0 0.0
    %5650 = vmatprep.subr.mxu0 0.0
    %5651 = vmatpush1.msra.mxu0 0.0
    %5652 = vmatprep.subr.mxu0 0.0
    %5653 = vmatpush1.msra.mxu0 0.0
    %5654 = vmatprep.subr.mxu0 0.0
    %5655 = vmatpush1.msra.mxu0 0.0
    %5656 = vmatprep.subr.mxu0 0.0
    %5657 = vmatpush1.msra.mxu0 0.0
    %5658 = vmatprep.subr.mxu0 0.0
    %5659 = vmatpush1.msra.mxu0 0.0
    %5660 = vmatprep.subr.mxu0 0.0
    %5661 = vmatpush1.msra.mxu0 0.0
    %5662 = vmatprep.subr.mxu0 0.0
    %5663 = vmatpush1.msra.mxu0 0.0
    %5664 = vmatprep.subr.mxu0 0.0
    %5665 = vmatpush1.msra.mxu0 0.0
    %5666 = vmatprep.subr.mxu0 0.0
    %5667 = vmatpush1.msra.mxu0 0.0
    %5668 = vmatprep.subr.mxu0 0.0
    %5669 = vmatpush1.msra.mxu0 0.0
    %5670 = vmatprep.subr.mxu0 0.0
    %5671 = vmatpush1.msra.mxu0 0.0
    %5672 = vmatprep.mubr.f32.mxu0 0.0
    %5673 = vmatmul.mubr.f32.gmra.mrb[0].mxu0 %v5606
    %v5674 = vpop.f32.mrb[0].mxu0
    %v5675 = vadd.f32 0.0, %v5674
    %v5676 = vpop.f32.mrb[0].mxu0
    %5677 = vdwg.mxu0
    %v5679 = vsel %vm1103, %v5456, 0
    %v5682 = vsel %vm1103, %v4179, 0
    %v5685 = vsel %vm1103, %v4180, 0
    %v5688 = vsel %vm1103, %v4181, 0
    %v5691 = vsel %vm1103, %v4182, 0
    %5693 = vmatprep.subr.mxu0 0.0
    %5694 = vmatpush1.xpose.msra.mxu0 %v5682
    %5695 = vmatprep.subr.mxu0 0.0
    %5696 = vmatpush1.xpose.msra.mxu0 %v5685
    %5697 = vmatprep.subr.mxu0 0.0
    %5698 = vmatpush1.xpose.msra.mxu0 %v5688
    %5699 = vmatprep.subr.mxu0 0.0
    %5700 = vmatpush1.xpose.msra.mxu0 %v5691
    %5701 = vmatprep.subr.mxu0 0.0
    %5702 = vmatpush1.xpose.msra.mxu0 0.0
    %5703 = vmatprep.subr.mxu0 0.0
    %5704 = vmatpush1.xpose.msra.mxu0 0.0
    %5705 = vmatprep.subr.mxu0 0.0
    %5706 = vmatpush1.xpose.msra.mxu0 0.0
    %5707 = vmatprep.subr.mxu0 0.0
    %5708 = vmatpush1.xpose.msra.mxu0 0.0
    %5709 = vmatprep.subr.mxu0 0.0
    %5710 = vmatpush1.xpose.msra.mxu0 0.0
    %5711 = vmatprep.subr.mxu0 0.0
    %5712 = vmatpush1.xpose.msra.mxu0 0.0
    %5713 = vmatprep.subr.mxu0 0.0
    %5714 = vmatpush1.xpose.msra.mxu0 0.0
    %5715 = vmatprep.subr.mxu0 0.0
    %5716 = vmatpush1.xpose.msra.mxu0 0.0
    %5717 = vmatprep.subr.mxu0 0.0
    %5718 = vmatpush1.xpose.msra.mxu0 0.0
    %5719 = vmatprep.subr.mxu0 0.0
    %5720 = vmatpush1.xpose.msra.mxu0 0.0
    %5721 = vmatprep.subr.mxu0 0.0
    %5722 = vmatpush1.xpose.msra.mxu0 0.0
    %5723 = vmatprep.subr.mxu0 0.0
    %5724 = vmatpush1.xpose.msra.mxu0 0.0
    %5725 = vmatprep.subr.mxu0 0.0
    %5726 = vmatpush1.xpose.msra.mxu0 0.0
    %5727 = vmatprep.subr.mxu0 0.0
    %5728 = vmatpush1.xpose.msra.mxu0 0.0
    %5729 = vmatprep.subr.mxu0 0.0
    %5730 = vmatpush1.xpose.msra.mxu0 0.0
    %5731 = vmatprep.subr.mxu0 0.0
    %5732 = vmatpush1.xpose.msra.mxu0 0.0
    %5733 = vmatprep.subr.mxu0 0.0
    %5734 = vmatpush1.xpose.msra.mxu0 0.0
    %5735 = vmatprep.subr.mxu0 0.0
    %5736 = vmatpush1.xpose.msra.mxu0 0.0
    %5737 = vmatprep.subr.mxu0 0.0
    %5738 = vmatpush1.xpose.msra.mxu0 0.0
    %5739 = vmatprep.subr.mxu0 0.0
    %5740 = vmatpush1.xpose.msra.mxu0 0.0
    %5741 = vmatprep.subr.mxu0 0.0
    %5742 = vmatpush1.xpose.msra.mxu0 0.0
    %5743 = vmatprep.subr.mxu0 0.0
    %5744 = vmatpush1.xpose.msra.mxu0 0.0
    %5745 = vmatprep.subr.mxu0 0.0
    %5746 = vmatpush1.xpose.msra.mxu0 0.0
    %5747 = vmatprep.subr.mxu0 0.0
    %5748 = vmatpush1.xpose.msra.mxu0 0.0
    %5749 = vmatprep.subr.mxu0 0.0
    %5750 = vmatpush1.xpose.msra.mxu0 0.0
    %5751 = vmatprep.subr.mxu0 0.0
    %5752 = vmatpush1.xpose.msra.mxu0 0.0
    %5753 = vmatprep.subr.mxu0 0.0
    %5754 = vmatpush1.xpose.msra.mxu0 0.0
    %5755 = vmatprep.subr.mxu0 0.0
    %5756 = vmatpush1.xpose.msra.mxu0 0.0
    %5757 = vmatprep.mubr.f32.mxu0 0.0
    %5758 = vmatmul.mubr.f32.gmra.mrb[0].mxu0 %v5679
    %v5759 = vpop.f32.mrb[0].mxu0
    %v5760 = vadd.f32 0.0, %v5759
    %v5761 = vpop.f32.mrb[0].mxu0
    %5762 = vdwg.mxu0
    %v5764 = vsel %vm1103, %v5529, 0
    %v5767 = vsel %vm1103, %v4183, 0
    %v5770 = vsel %vm1103, %v4184, 0
    %v5773 = vsel %vm1103, %v4185, 0
    %v5776 = vsel %vm1103, %v4186, 0
    %5778 = vmatprep.subr.mxu0 0.0
    %5779 = vmatpush1.xpose.msra.mxu0 %v5767
    %5780 = vmatprep.subr.mxu0 0.0
    %5781 = vmatpush1.xpose.msra.mxu0 %v5770
    %5782 = vmatprep.subr.mxu0 0.0
    %5783 = vmatpush1.xpose.msra.mxu0 %v5773
    %5784 = vmatprep.subr.mxu0 0.0
    %5785 = vmatpush1.xpose.msra.mxu0 %v5776
    %5786 = vmatprep.subr.mxu0 0.0
    %5787 = vmatpush1.xpose.msra.mxu0 0.0
    %5788 = vmatprep.subr.mxu0 0.0
    %5789 = vmatpush1.xpose.msra.mxu0 0.0
    %5790 = vmatprep.subr.mxu0 0.0
    %5791 = vmatpush1.xpose.msra.mxu0 0.0
    %5792 = vmatprep.subr.mxu0 0.0
    %5793 = vmatpush1.xpose.msra.mxu0 0.0
    %5794 = vmatprep.subr.mxu0 0.0
    %5795 = vmatpush1.xpose.msra.mxu0 0.0
    %5796 = vmatprep.subr.mxu0 0.0
    %5797 = vmatpush1.xpose.msra.mxu0 0.0
    %5798 = vmatprep.subr.mxu0 0.0
    %5799 = vmatpush1.xpose.msra.mxu0 0.0
    %5800 = vmatprep.subr.mxu0 0.0
    %5801 = vmatpush1.xpose.msra.mxu0 0.0
    %5802 = vmatprep.subr.mxu0 0.0
    %5803 = vmatpush1.xpose.msra.mxu0 0.0
    %5804 = vmatprep.subr.mxu0 0.0
    %5805 = vmatpush1.xpose.msra.mxu0 0.0
    %5806 = vmatprep.subr.mxu0 0.0
    %5807 = vmatpush1.xpose.msra.mxu0 0.0
    %5808 = vmatprep.subr.mxu0 0.0
    %5809 = vmatpush1.xpose.msra.mxu0 0.0
    %5810 = vmatprep.subr.mxu0 0.0
    %5811 = vmatpush1.xpose.msra.mxu0 0.0
    %5812 = vmatprep.subr.mxu0 0.0
    %5813 = vmatpush1.xpose.msra.mxu0 0.0
    %5814 = vmatprep.subr.mxu0 0.0
    %5815 = vmatpush1.xpose.msra.mxu0 0.0
    %5816 = vmatprep.subr.mxu0 0.0
    %5817 = vmatpush1.xpose.msra.mxu0 0.0
    %5818 = vmatprep.subr.mxu0 0.0
    %5819 = vmatpush1.xpose.msra.mxu0 0.0
    %5820 = vmatprep.subr.mxu0 0.0
    %5821 = vmatpush1.xpose.msra.mxu0 0.0
    %5822 = vmatprep.subr.mxu0 0.0
    %5823 = vmatpush1.xpose.msra.mxu0 0.0
    %5824 = vmatprep.subr.mxu0 0.0
    %5825 = vmatpush1.xpose.msra.mxu0 0.0
    %5826 = vmatprep.subr.mxu0 0.0
    %5827 = vmatpush1.xpose.msra.mxu0 0.0
    %5828 = vmatprep.subr.mxu0 0.0
    %5829 = vmatpush1.xpose.msra.mxu0 0.0
    %5830 = vmatprep.subr.mxu0 0.0
    %5831 = vmatpush1.xpose.msra.mxu0 0.0
    %5832 = vmatprep.subr.mxu0 0.0
    %5833 = vmatpush1.xpose.msra.mxu0 0.0
    %5834 = vmatprep.subr.mxu0 0.0
    %5835 = vmatpush1.xpose.msra.mxu0 0.0
    %5836 = vmatprep.subr.mxu0 0.0
    %5837 = vmatpush1.xpose.msra.mxu0 0.0
    %5838 = vmatprep.subr.mxu0 0.0
    %5839 = vmatpush1.xpose.msra.mxu0 0.0
    %5840 = vmatprep.subr.mxu0 0.0
    %5841 = vmatpush1.xpose.msra.mxu0 0.0
    %5842 = vmatprep.mubr.f32.mxu0 0.0
    %5843 = vmatmul.mubr.f32.gmra.mrb[0].mxu0 %v5764
    %v5844 = vpop.f32.mrb[0].mxu0
    %v5845 = vadd.f32 0.0, %v5844
    %v5846 = vpop.f32.mrb[0].mxu0
    %5847 = vdwg.mxu0
    %v5849 = vsel %vm1103, %v5602, 0
    %v5852 = vsel %vm1103, %v4187, 0
    %v5855 = vsel %vm1103, %v4188, 0
    %v5858 = vsel %vm1103, %v4189, 0
    %v5861 = vsel %vm1103, %v4190, 0
    %5863 = vmatprep.subr.mxu0 0.0
    %5864 = vmatpush1.xpose.msra.mxu0 %v5852
    %5865 = vmatprep.subr.mxu0 0.0
    %5866 = vmatpush1.xpose.msra.mxu0 %v5855
    %5867 = vmatprep.subr.mxu0 0.0
    %5868 = vmatpush1.xpose.msra.mxu0 %v5858
    %5869 = vmatprep.subr.mxu0 0.0
    %5870 = vmatpush1.xpose.msra.mxu0 %v5861
    %5871 = vmatprep.subr.mxu0 0.0
    %5872 = vmatpush1.xpose.msra.mxu0 0.0
    %5873 = vmatprep.subr.mxu0 0.0
    %5874 = vmatpush1.xpose.msra.mxu0 0.0
    %5875 = vmatprep.subr.mxu0 0.0
    %5876 = vmatpush1.xpose.msra.mxu0 0.0
    %5877 = vmatprep.subr.mxu0 0.0
    %5878 = vmatpush1.xpose.msra.mxu0 0.0
    %5879 = vmatprep.subr.mxu0 0.0
    %5880 = vmatpush1.xpose.msra.mxu0 0.0
    %5881 = vmatprep.subr.mxu0 0.0
    %5882 = vmatpush1.xpose.msra.mxu0 0.0
    %5883 = vmatprep.subr.mxu0 0.0
    %5884 = vmatpush1.xpose.msra.mxu0 0.0
    %5885 = vmatprep.subr.mxu0 0.0
    %5886 = vmatpush1.xpose.msra.mxu0 0.0
    %5887 = vmatprep.subr.mxu0 0.0
    %5888 = vmatpush1.xpose.msra.mxu0 0.0
    %5889 = vmatprep.subr.mxu0 0.0
    %5890 = vmatpush1.xpose.msra.mxu0 0.0
    %5891 = vmatprep.subr.mxu0 0.0
    %5892 = vmatpush1.xpose.msra.mxu0 0.0
    %5893 = vmatprep.subr.mxu0 0.0
    %5894 = vmatpush1.xpose.msra.mxu0 0.0
    %5895 = vmatprep.subr.mxu0 0.0
    %5896 = vmatpush1.xpose.msra.mxu0 0.0
    %5897 = vmatprep.subr.mxu0 0.0
    %5898 = vmatpush1.xpose.msra.mxu0 0.0
    %5899 = vmatprep.subr.mxu0 0.0
    %5900 = vmatpush1.xpose.msra.mxu0 0.0
    %5901 = vmatprep.subr.mxu0 0.0
    %5902 = vmatpush1.xpose.msra.mxu0 0.0
    %5903 = vmatprep.subr.mxu0 0.0
    %5904 = vmatpush1.xpose.msra.mxu0 0.0
    %5905 = vmatprep.subr.mxu0 0.0
    %5906 = vmatpush1.xpose.msra.mxu0 0.0
    %5907 = vmatprep.subr.mxu0 0.0
    %5908 = vmatpush1.xpose.msra.mxu0 0.0
    %5909 = vmatprep.subr.mxu0 0.0
    %5910 = vmatpush1.xpose.msra.mxu0 0.0
    %5911 = vmatprep.subr.mxu0 0.0
    %5912 = vmatpush1.xpose.msra.mxu0 0.0
    %5913 = vmatprep.subr.mxu0 0.0
    %5914 = vmatpush1.xpose.msra.mxu0 0.0
    %5915 = vmatprep.subr.mxu0 0.0
    %5916 = vmatpush1.xpose.msra.mxu0 0.0
    %5917 = vmatprep.subr.mxu0 0.0
    %5918 = vmatpush1.xpose.msra.mxu0 0.0
    %5919 = vmatprep.subr.mxu0 0.0
    %5920 = vmatpush1.xpose.msra.mxu0 0.0
    %5921 = vmatprep.subr.mxu0 0.0
    %5922 = vmatpush1.xpose.msra.mxu0 0.0
    %5923 = vmatprep.subr.mxu0 0.0
    %5924 = vmatpush1.xpose.msra.mxu0 0.0
    %5925 = vmatprep.subr.mxu0 0.0
    %5926 = vmatpush1.xpose.msra.mxu0 0.0
    %5927 = vmatprep.mubr.f32.mxu0 0.0
    %5928 = vmatmul.mubr.f32.gmra.mrb[0].mxu0 %v5849
    %v5929 = vpop.f32.mrb[0].mxu0
    %v5930 = vadd.f32 0.0, %v5929
    %v5931 = vpop.f32.mrb[0].mxu0
    %5932 = vdwg.mxu0
    %v5934 = vsel %vm1103, %v5675, 0
    %v5937 = vsel %vm1103, %v4191, 0
    %v5940 = vsel %vm1103, %v4192, 0
    %v5943 = vsel %vm1103, %v4193, 0
    %v5946 = vsel %vm1103, %v4194, 0
    %5948 = vmatprep.subr.mxu0 0.0
    %5949 = vmatpush1.xpose.msra.mxu0 %v5937
    %5950 = vmatprep.subr.mxu0 0.0
    %5951 = vmatpush1.xpose.msra.mxu0 %v5940
    %5952 = vmatprep.subr.mxu0 0.0
    %5953 = vmatpush1.xpose.msra.mxu0 %v5943
    %5954 = vmatprep.subr.mxu0 0.0
    %5955 = vmatpush1.xpose.msra.mxu0 %v5946
    %5956 = vmatprep.subr.mxu0 0.0
    %5957 = vmatpush1.xpose.msra.mxu0 0.0
    %5958 = vmatprep.subr.mxu0 0.0
    %5959 = vmatpush1.xpose.msra.mxu0 0.0
    %5960 = vmatprep.subr.mxu0 0.0
    %5961 = vmatpush1.xpose.msra.mxu0 0.0
    %5962 = vmatprep.subr.mxu0 0.0
    %5963 = vmatpush1.xpose.msra.mxu0 0.0
    %5964 = vmatprep.subr.mxu0 0.0
    %5965 = vmatpush1.xpose.msra.mxu0 0.0
    %5966 = vmatprep.subr.mxu0 0.0
    %5967 = vmatpush1.xpose.msra.mxu0 0.0
    %5968 = vmatprep.subr.mxu0 0.0
    %5969 = vmatpush1.xpose.msra.mxu0 0.0
    %5970 = vmatprep.subr.mxu0 0.0
    %5971 = vmatpush1.xpose.msra.mxu0 0.0
    %5972 = vmatprep.subr.mxu0 0.0
    %5973 = vmatpush1.xpose.msra.mxu0 0.0
    %5974 = vmatprep.subr.mxu0 0.0
    %5975 = vmatpush1.xpose.msra.mxu0 0.0
    %5976 = vmatprep.subr.mxu0 0.0
    %5977 = vmatpush1.xpose.msra.mxu0 0.0
    %5978 = vmatprep.subr.mxu0 0.0
    %5979 = vmatpush1.xpose.msra.mxu0 0.0
    %5980 = vmatprep.subr.mxu0 0.0
    %5981 = vmatpush1.xpose.msra.mxu0 0.0
    %5982 = vmatprep.subr.mxu0 0.0
    %5983 = vmatpush1.xpose.msra.mxu0 0.0
    %5984 = vmatprep.subr.mxu0 0.0
    %5985 = vmatpush1.xpose.msra.mxu0 0.0
    %5986 = vmatprep.subr.mxu0 0.0
    %5987 = vmatpush1.xpose.msra.mxu0 0.0
    %5988 = vmatprep.subr.mxu0 0.0
    %5989 = vmatpush1.xpose.msra.mxu0 0.0
    %5990 = vmatprep.subr.mxu0 0.0
    %5991 = vmatpush1.xpose.msra.mxu0 0.0
    %5992 = vmatprep.subr.mxu0 0.0
    %5993 = vmatpush1.xpose.msra.mxu0 0.0
    %5994 = vmatprep.subr.mxu0 0.0
    %5995 = vmatpush1.xpose.msra.mxu0 0.0
    %5996 = vmatprep.subr.mxu0 0.0
    %5997 = vmatpush1.xpose.msra.mxu0 0.0
    %5998 = vmatprep.subr.mxu0 0.0
    %5999 = vmatpush1.xpose.msra.mxu0 0.0
    %6000 = vmatprep.subr.mxu0 0.0
    %6001 = vmatpush1.xpose.msra.mxu0 0.0
    %6002 = vmatprep.subr.mxu0 0.0
    %6003 = vmatpush1.xpose.msra.mxu0 0.0
    %6004 = vmatprep.subr.mxu0 0.0
    %6005 = vmatpush1.xpose.msra.mxu0 0.0
    %6006 = vmatprep.subr.mxu0 0.0
    %6007 = vmatpush1.xpose.msra.mxu0 0.0
    %6008 = vmatprep.subr.mxu0 0.0
    %6009 = vmatpush1.xpose.msra.mxu0 0.0
    %6010 = vmatprep.subr.mxu0 0.0
    %6011 = vmatpush1.xpose.msra.mxu0 0.0
    %6012 = vmatprep.mubr.f32.mxu0 0.0
    %6013 = vmatmul.mubr.f32.gmra.mrb[0].mxu0 %v5934
    %v6014 = vpop.f32.mrb[0].mxu0
    %v6015 = vadd.f32 0.0, %v6014
    %v6016 = vpop.f32.mrb[0].mxu0
    %6017 = vdwg.mxu0
    %v6018 = vsel %vm166, %v5760, 0.0
    %v6019 = vsel %vm166, %v5845, 0.0
    %v6020 = vadd.f32 %v6018, %v6019
    %v6021 = vsel %vm166, %v5930, 0.0
    %v6022 = vadd.f32 %v6020, %v6021
    %v6023 = vsel %vm166, %v6015, 0.0
    %v6024 = vadd.f32 %v6022, %v6023
    %v6026 = vsel %vm166, %v4122, 0
    %6028 = vmatprep.subr.mxu0 0.0
    %6029 = vmatpush1.msra.mxu0 %v4128
    %6030 = vmatprep.subr.mxu0 0.0
    %6031 = vmatpush1.msra.mxu0 %v4129
    %6032 = vmatprep.subr.mxu0 0.0
    %6033 = vmatpush1.msra.mxu0 %v4130
    %6034 = vmatprep.subr.mxu0 0.0
    %6035 = vmatpush1.msra.mxu0 %v4131
    %6036 = vmatprep.subr.mxu0 0.0
    %6037 = vmatpush1.msra.mxu0 0.0
    %6038 = vmatprep.subr.mxu0 0.0
    %6039 = vmatpush1.msra.mxu0 0.0
    %6040 = vmatprep.subr.mxu0 0.0
    %6041 = vmatpush1.msra.mxu0 0.0
    %6042 = vmatprep.subr.mxu0 0.0
    %6043 = vmatpush1.msra.mxu0 0.0
    %6044 = vmatprep.subr.mxu0 0.0
    %6045 = vmatpush1.msra.mxu0 0.0
    %6046 = vmatprep.subr.mxu0 0.0
    %6047 = vmatpush1.msra.mxu0 0.0
    %6048 = vmatprep.subr.mxu0 0.0
    %6049 = vmatpush1.msra.mxu0 0.0
    %6050 = vmatprep.subr.mxu0 0.0
    %6051 = vmatpush1.msra.mxu0 0.0
    %6052 = vmatprep.subr.mxu0 0.0
    %6053 = vmatpush1.msra.mxu0 0.0
    %6054 = vmatprep.subr.mxu0 0.0
    %6055 = vmatpush1.msra.mxu0 0.0
    %6056 = vmatprep.subr.mxu0 0.0
    %6057 = vmatpush1.msra.mxu0 0.0
    %6058 = vmatprep.subr.mxu0 0.0
    %6059 = vmatpush1.msra.mxu0 0.0
    %6060 = vmatprep.subr.mxu0 0.0
    %6061 = vmatpush1.msra.mxu0 0.0
    %6062 = vmatprep.subr.mxu0 0.0
    %6063 = vmatpush1.msra.mxu0 0.0
    %6064 = vmatprep.subr.mxu0 0.0
    %6065 = vmatpush1.msra.mxu0 0.0
    %6066 = vmatprep.subr.mxu0 0.0
    %6067 = vmatpush1.msra.mxu0 0.0
    %6068 = vmatprep.subr.mxu0 0.0
    %6069 = vmatpush1.msra.mxu0 0.0
    %6070 = vmatprep.subr.mxu0 0.0
    %6071 = vmatpush1.msra.mxu0 0.0
    %6072 = vmatprep.subr.mxu0 0.0
    %6073 = vmatpush1.msra.mxu0 0.0
    %6074 = vmatprep.subr.mxu0 0.0
    %6075 = vmatpush1.msra.mxu0 0.0
    %6076 = vmatprep.subr.mxu0 0.0
    %6077 = vmatpush1.msra.mxu0 0.0
    %6078 = vmatprep.subr.mxu0 0.0
    %6079 = vmatpush1.msra.mxu0 0.0
    %6080 = vmatprep.subr.mxu0 0.0
    %6081 = vmatpush1.msra.mxu0 0.0
    %6082 = vmatprep.subr.mxu0 0.0
    %6083 = vmatpush1.msra.mxu0 0.0
    %6084 = vmatprep.subr.mxu0 0.0
    %6085 = vmatpush1.msra.mxu0 0.0
    %6086 = vmatprep.subr.mxu0 0.0
    %6087 = vmatpush1.msra.mxu0 0.0
    %6088 = vmatprep.subr.mxu0 0.0
    %6089 = vmatpush1.msra.mxu0 0.0
    %6090 = vmatprep.subr.mxu0 0.0
    %6091 = vmatpush1.msra.mxu0 0.0
    %6092 = vmatprep.mubr.f32.mxu0 0.0
    %6093 = vmatmul.mubr.f32.gmra.mrb[0].mxu0 %v6026
    %v6094 = vpop.f32.mrb[0].mxu0
    %v6095 = vadd.f32 0.0, %v6094
    %v6096 = vpop.f32.mrb[0].mxu0
    %6097 = vdwg.mxu0
    %6098 = vmatprep.subr.mxu0 0.0
    %6099 = vmatpush1.msra.mxu0 %v4132
    %6100 = vmatprep.subr.mxu0 0.0
    %6101 = vmatpush1.msra.mxu0 %v4133
    %6102 = vmatprep.subr.mxu0 0.0
    %6103 = vmatpush1.msra.mxu0 %v4134
    %6104 = vmatprep.subr.mxu0 0.0
    %6105 = vmatpush1.msra.mxu0 %v4135
    %6106 = vmatprep.subr.mxu0 0.0
    %6107 = vmatpush1.msra.mxu0 0.0
    %6108 = vmatprep.subr.mxu0 0.0
    %6109 = vmatpush1.msra.mxu0 0.0
    %6110 = vmatprep.subr.mxu0 0.0
    %6111 = vmatpush1.msra.mxu0 0.0
    %6112 = vmatprep.subr.mxu0 0.0
    %6113 = vmatpush1.msra.mxu0 0.0
    %6114 = vmatprep.subr.mxu0 0.0
    %6115 = vmatpush1.msra.mxu0 0.0
    %6116 = vmatprep.subr.mxu0 0.0
    %6117 = vmatpush1.msra.mxu0 0.0
    %6118 = vmatprep.subr.mxu0 0.0
    %6119 = vmatpush1.msra.mxu0 0.0
    %6120 = vmatprep.subr.mxu0 0.0
    %6121 = vmatpush1.msra.mxu0 0.0
    %6122 = vmatprep.subr.mxu0 0.0
    %6123 = vmatpush1.msra.mxu0 0.0
    %6124 = vmatprep.subr.mxu0 0.0
    %6125 = vmatpush1.msra.mxu0 0.0
    %6126 = vmatprep.subr.mxu0 0.0
    %6127 = vmatpush1.msra.mxu0 0.0
    %6128 = vmatprep.subr.mxu0 0.0
    %6129 = vmatpush1.msra.mxu0 0.0
    %6130 = vmatprep.subr.mxu0 0.0
    %6131 = vmatpush1.msra.mxu0 0.0
    %6132 = vmatprep.subr.mxu0 0.0
    %6133 = vmatpush1.msra.mxu0 0.0
    %6134 = vmatprep.subr.mxu0 0.0
    %6135 = vmatpush1.msra.mxu0 0.0
    %6136 = vmatprep.subr.mxu0 0.0
    %6137 = vmatpush1.msra.mxu0 0.0
    %6138 = vmatprep.subr.mxu0 0.0
    %6139 = vmatpush1.msra.mxu0 0.0
    %6140 = vmatprep.subr.mxu0 0.0
    %6141 = vmatpush1.msra.mxu0 0.0
    %6142 = vmatprep.subr.mxu0 0.0
    %6143 = vmatpush1.msra.mxu0 0.0
    %6144 = vmatprep.subr.mxu0 0.0
    %6145 = vmatpush1.msra.mxu0 0.0
    %6146 = vmatprep.subr.mxu0 0.0
    %6147 = vmatpush1.msra.mxu0 0.0
    %6148 = vmatprep.subr.mxu0 0.0
    %6149 = vmatpush1.msra.mxu0 0.0
    %6150 = vmatprep.subr.mxu0 0.0
    %6151 = vmatpush1.msra.mxu0 0.0
    %6152 = vmatprep.subr.mxu0 0.0
    %6153 = vmatpush1.msra.mxu0 0.0
    %6154 = vmatprep.subr.mxu0 0.0
    %6155 = vmatpush1.msra.mxu0 0.0
    %6156 = vmatprep.subr.mxu0 0.0
    %6157 = vmatpush1.msra.mxu0 0.0
    %6158 = vmatprep.subr.mxu0 0.0
    %6159 = vmatpush1.msra.mxu0 0.0
    %6160 = vmatprep.subr.mxu0 0.0
    %6161 = vmatpush1.msra.mxu0 0.0
    %6162 = vmatprep.mubr.f32.mxu0 0.0
    %6163 = vmatmul.mubr.f32.gmra.mrb[0].mxu0 %v6026
    %v6164 = vpop.f32.mrb[0].mxu0
    %v6165 = vadd.f32 0.0, %v6164
    %v6166 = vpop.f32.mrb[0].mxu0
    %6167 = vdwg.mxu0
    %6168 = vmatprep.subr.mxu0 0.0
    %6169 = vmatpush1.msra.mxu0 %v4136
    %6170 = vmatprep.subr.mxu0 0.0
    %6171 = vmatpush1.msra.mxu0 %v4137
    %6172 = vmatprep.subr.mxu0 0.0
    %6173 = vmatpush1.msra.mxu0 %v4138
    %6174 = vmatprep.subr.mxu0 0.0
    %6175 = vmatpush1.msra.mxu0 %v4139
    %6176 = vmatprep.subr.mxu0 0.0
    %6177 = vmatpush1.msra.mxu0 0.0
    %6178 = vmatprep.subr.mxu0 0.0
    %6179 = vmatpush1.msra.mxu0 0.0
    %6180 = vmatprep.subr.mxu0 0.0
    %6181 = vmatpush1.msra.mxu0 0.0
    %6182 = vmatprep.subr.mxu0 0.0
    %6183 = vmatpush1.msra.mxu0 0.0
    %6184 = vmatprep.subr.mxu0 0.0
    %6185 = vmatpush1.msra.mxu0 0.0
    %6186 = vmatprep.subr.mxu0 0.0
    %6187 = vmatpush1.msra.mxu0 0.0
    %6188 = vmatprep.subr.mxu0 0.0
    %6189 = vmatpush1.msra.mxu0 0.0
    %6190 = vmatprep.subr.mxu0 0.0
    %6191 = vmatpush1.msra.mxu0 0.0
    %6192 = vmatprep.subr.mxu0 0.0
    %6193 = vmatpush1.msra.mxu0 0.0
    %6194 = vmatprep.subr.mxu0 0.0
    %6195 = vmatpush1.msra.mxu0 0.0
    %6196 = vmatprep.subr.mxu0 0.0
    %6197 = vmatpush1.msra.mxu0 0.0
    %6198 = vmatprep.subr.mxu0 0.0
    %6199 = vmatpush1.msra.mxu0 0.0
    %6200 = vmatprep.subr.mxu0 0.0
    %6201 = vmatpush1.msra.mxu0 0.0
    %6202 = vmatprep.subr.mxu0 0.0
    %6203 = vmatpush1.msra.mxu0 0.0
    %6204 = vmatprep.subr.mxu0 0.0
    %6205 = vmatpush1.msra.mxu0 0.0
    %6206 = vmatprep.subr.mxu0 0.0
    %6207 = vmatpush1.msra.mxu0 0.0
    %6208 = vmatprep.subr.mxu0 0.0
    %6209 = vmatpush1.msra.mxu0 0.0
    %6210 = vmatprep.subr.mxu0 0.0
    %6211 = vmatpush1.msra.mxu0 0.0
    %6212 = vmatprep.subr.mxu0 0.0
    %6213 = vmatpush1.msra.mxu0 0.0
    %6214 = vmatprep.subr.mxu0 0.0
    %6215 = vmatpush1.msra.mxu0 0.0
    %6216 = vmatprep.subr.mxu0 0.0
    %6217 = vmatpush1.msra.mxu0 0.0
    %6218 = vmatprep.subr.mxu0 0.0
    %6219 = vmatpush1.msra.mxu0 0.0
    %6220 = vmatprep.subr.mxu0 0.0
    %6221 = vmatpush1.msra.mxu0 0.0
    %6222 = vmatprep.subr.mxu0 0.0
    %6223 = vmatpush1.msra.mxu0 0.0
    %6224 = vmatprep.subr.mxu0 0.0
    %6225 = vmatpush1.msra.mxu0 0.0
    %6226 = vmatprep.subr.mxu0 0.0
    %6227 = vmatpush1.msra.mxu0 0.0
    %6228 = vmatprep.subr.mxu0 0.0
    %6229 = vmatpush1.msra.mxu0 0.0
    %6230 = vmatprep.subr.mxu0 0.0
    %6231 = vmatpush1.msra.mxu0 0.0
    %6232 = vmatprep.mubr.f32.mxu0 0.0
    %6233 = vmatmul.mubr.f32.gmra.mrb[0].mxu0 %v6026
    %v6234 = vpop.f32.mrb[0].mxu0
    %v6235 = vadd.f32 0.0, %v6234
    %v6236 = vpop.f32.mrb[0].mxu0
    %6237 = vdwg.mxu0
    %6238 = vmatprep.subr.mxu0 0.0
    %6239 = vmatpush1.msra.mxu0 %v4140
    %6240 = vmatprep.subr.mxu0 0.0
    %6241 = vmatpush1.msra.mxu0 %v4141
    %6242 = vmatprep.subr.mxu0 0.0
    %6243 = vmatpush1.msra.mxu0 %v4142
    %6244 = vmatprep.subr.mxu0 0.0
    %6245 = vmatpush1.msra.mxu0 %v4143
    %6246 = vmatprep.subr.mxu0 0.0
    %6247 = vmatpush1.msra.mxu0 0.0
    %6248 = vmatprep.subr.mxu0 0.0
    %6249 = vmatpush1.msra.mxu0 0.0
    %6250 = vmatprep.subr.mxu0 0.0
    %6251 = vmatpush1.msra.mxu0 0.0
    %6252 = vmatprep.subr.mxu0 0.0
    %6253 = vmatpush1.msra.mxu0 0.0
    %6254 = vmatprep.subr.mxu0 0.0
    %6255 = vmatpush1.msra.mxu0 0.0
    %6256 = vmatprep.subr.mxu0 0.0
    %6257 = vmatpush1.msra.mxu0 0.0
    %6258 = vmatprep.subr.mxu0 0.0
    %6259 = vmatpush1.msra.mxu0 0.0
    %6260 = vmatprep.subr.mxu0 0.0
    %6261 = vmatpush1.msra.mxu0 0.0
    %6262 = vmatprep.subr.mxu0 0.0
    %6263 = vmatpush1.msra.mxu0 0.0
    %6264 = vmatprep.subr.mxu0 0.0
    %6265 = vmatpush1.msra.mxu0 0.0
    %6266 = vmatprep.subr.mxu0 0.0
    %6267 = vmatpush1.msra.mxu0 0.0
    %6268 = vmatprep.subr.mxu0 0.0
    %6269 = vmatpush1.msra.mxu0 0.0
    %6270 = vmatprep.subr.mxu0 0.0
    %6271 = vmatpush1.msra.mxu0 0.0
    %6272 = vmatprep.subr.mxu0 0.0
    %6273 = vmatpush1.msra.mxu0 0.0
    %6274 = vmatprep.subr.mxu0 0.0
    %6275 = vmatpush1.msra.mxu0 0.0
    %6276 = vmatprep.subr.mxu0 0.0
    %6277 = vmatpush1.msra.mxu0 0.0
    %6278 = vmatprep.subr.mxu0 0.0
    %6279 = vmatpush1.msra.mxu0 0.0
    %6280 = vmatprep.subr.mxu0 0.0
    %6281 = vmatpush1.msra.mxu0 0.0
    %6282 = vmatprep.subr.mxu0 0.0
    %6283 = vmatpush1.msra.mxu0 0.0
    %6284 = vmatprep.subr.mxu0 0.0
    %6285 = vmatpush1.msra.mxu0 0.0
    %6286 = vmatprep.subr.mxu0 0.0
    %6287 = vmatpush1.msra.mxu0 0.0
    %6288 = vmatprep.subr.mxu0 0.0
    %6289 = vmatpush1.msra.mxu0 0.0
    %6290 = vmatprep.subr.mxu0 0.0
    %6291 = vmatpush1.msra.mxu0 0.0
    %6292 = vmatprep.subr.mxu0 0.0
    %6293 = vmatpush1.msra.mxu0 0.0
    %6294 = vmatprep.subr.mxu0 0.0
    %6295 = vmatpush1.msra.mxu0 0.0
    %6296 = vmatprep.subr.mxu0 0.0
    %6297 = vmatpush1.msra.mxu0 0.0
    %6298 = vmatprep.subr.mxu0 0.0
    %6299 = vmatpush1.msra.mxu0 0.0
    %6300 = vmatprep.subr.mxu0 0.0
    %6301 = vmatpush1.msra.mxu0 0.0
    %6302 = vmatprep.mubr.f32.mxu0 0.0
    %6303 = vmatmul.mubr.f32.gmra.mrb[0].mxu0 %v6026
    %v6304 = vpop.f32.mrb[0].mxu0
    %v6305 = vadd.f32 0.0, %v6304
    %v6306 = vpop.f32.mrb[0].mxu0
    %6307 = vdwg.mxu0
    %6308 = vmatprep.subr.mxu0 0.0
    %6309 = vmatpush1.msra.mxu0 %v4145
    %6310 = vmatprep.subr.mxu0 0.0
    %6311 = vmatpush1.msra.mxu0 %v4146
    %6312 = vmatprep.subr.mxu0 0.0
    %6313 = vmatpush1.msra.mxu0 %v4147
    %6314 = vmatprep.subr.mxu0 0.0
    %6315 = vmatpush1.msra.mxu0 %v4148
    %6316 = vmatprep.subr.mxu0 0.0
    %6317 = vmatpush1.msra.mxu0 0.0
    %6318 = vmatprep.subr.mxu0 0.0
    %6319 = vmatpush1.msra.mxu0 0.0
    %6320 = vmatprep.subr.mxu0 0.0
    %6321 = vmatpush1.msra.mxu0 0.0
    %6322 = vmatprep.subr.mxu0 0.0
    %6323 = vmatpush1.msra.mxu0 0.0
    %6324 = vmatprep.subr.mxu0 0.0
    %6325 = vmatpush1.msra.mxu0 0.0
    %6326 = vmatprep.subr.mxu0 0.0
    %6327 = vmatpush1.msra.mxu0 0.0
    %6328 = vmatprep.subr.mxu0 0.0
    %6329 = vmatpush1.msra.mxu0 0.0
    %6330 = vmatprep.subr.mxu0 0.0
    %6331 = vmatpush1.msra.mxu0 0.0
    %6332 = vmatprep.subr.mxu0 0.0
    %6333 = vmatpush1.msra.mxu0 0.0
    %6334 = vmatprep.subr.mxu0 0.0
    %6335 = vmatpush1.msra.mxu0 0.0
    %6336 = vmatprep.subr.mxu0 0.0
    %6337 = vmatpush1.msra.mxu0 0.0
    %6338 = vmatprep.subr.mxu0 0.0
    %6339 = vmatpush1.msra.mxu0 0.0
    %6340 = vmatprep.subr.mxu0 0.0
    %6341 = vmatpush1.msra.mxu0 0.0
    %6342 = vmatprep.subr.mxu0 0.0
    %6343 = vmatpush1.msra.mxu0 0.0
    %6344 = vmatprep.subr.mxu0 0.0
    %6345 = vmatpush1.msra.mxu0 0.0
    %6346 = vmatprep.subr.mxu0 0.0
    %6347 = vmatpush1.msra.mxu0 0.0
    %6348 = vmatprep.subr.mxu0 0.0
    %6349 = vmatpush1.msra.mxu0 0.0
    %6350 = vmatprep.subr.mxu0 0.0
    %6351 = vmatpush1.msra.mxu0 0.0
    %6352 = vmatprep.subr.mxu0 0.0
    %6353 = vmatpush1.msra.mxu0 0.0
    %6354 = vmatprep.subr.mxu0 0.0
    %6355 = vmatpush1.msra.mxu0 0.0
    %6356 = vmatprep.subr.mxu0 0.0
    %6357 = vmatpush1.msra.mxu0 0.0
    %6358 = vmatprep.subr.mxu0 0.0
    %6359 = vmatpush1.msra.mxu0 0.0
    %6360 = vmatprep.subr.mxu0 0.0
    %6361 = vmatpush1.msra.mxu0 0.0
    %6362 = vmatprep.subr.mxu0 0.0
    %6363 = vmatpush1.msra.mxu0 0.0
    %6364 = vmatprep.subr.mxu0 0.0
    %6365 = vmatpush1.msra.mxu0 0.0
    %6366 = vmatprep.subr.mxu0 0.0
    %6367 = vmatpush1.msra.mxu0 0.0
    %6368 = vmatprep.subr.mxu0 0.0
    %6369 = vmatpush1.msra.mxu0 0.0
    %6370 = vmatprep.subr.mxu0 0.0
    %6371 = vmatpush1.msra.mxu0 0.0
    %6372 = vmatprep.mubr.f32.mxu0 0.0
    %6373 = vmatmul.mubr.f32.gmra.mrb[0].mxu0 %v6026
    %v6374 = vpop.f32.mrb[0].mxu0
    %v6375 = vadd.f32 0.0, %v6374
    %v6376 = vpop.f32.mrb[0].mxu0
    %6377 = vdwg.mxu0
    %6378 = vmatprep.subr.mxu0 0.0
    %6379 = vmatpush1.msra.mxu0 %v4149
    %6380 = vmatprep.subr.mxu0 0.0
    %6381 = vmatpush1.msra.mxu0 %v4150
    %6382 = vmatprep.subr.mxu0 0.0
    %6383 = vmatpush1.msra.mxu0 %v4151
    %6384 = vmatprep.subr.mxu0 0.0
    %6385 = vmatpush1.msra.mxu0 %v4152
    %6386 = vmatprep.subr.mxu0 0.0
    %6387 = vmatpush1.msra.mxu0 0.0
    %6388 = vmatprep.subr.mxu0 0.0
    %6389 = vmatpush1.msra.mxu0 0.0
    %6390 = vmatprep.subr.mxu0 0.0
    %6391 = vmatpush1.msra.mxu0 0.0
    %6392 = vmatprep.subr.mxu0 0.0
    %6393 = vmatpush1.msra.mxu0 0.0
    %6394 = vmatprep.subr.mxu0 0.0
    %6395 = vmatpush1.msra.mxu0 0.0
    %6396 = vmatprep.subr.mxu0 0.0
    %6397 = vmatpush1.msra.mxu0 0.0
    %6398 = vmatprep.subr.mxu0 0.0
    %6399 = vmatpush1.msra.mxu0 0.0
    %6400 = vmatprep.subr.mxu0 0.0
    %6401 = vmatpush1.msra.mxu0 0.0
    %6402 = vmatprep.subr.mxu0 0.0
    %6403 = vmatpush1.msra.mxu0 0.0
    %6404 = vmatprep.subr.mxu0 0.0
    %6405 = vmatpush1.msra.mxu0 0.0
    %6406 = vmatprep.subr.mxu0 0.0
    %6407 = vmatpush1.msra.mxu0 0.0
    %6408 = vmatprep.subr.mxu0 0.0
    %6409 = vmatpush1.msra.mxu0 0.0
    %6410 = vmatprep.subr.mxu0 0.0
    %6411 = vmatpush1.msra.mxu0 0.0
    %6412 = vmatprep.subr.mxu0 0.0
    %6413 = vmatpush1.msra.mxu0 0.0
    %6414 = vmatprep.subr.mxu0 0.0
    %6415 = vmatpush1.msra.mxu0 0.0
    %6416 = vmatprep.subr.mxu0 0.0
    %6417 = vmatpush1.msra.mxu0 0.0
    %6418 = vmatprep.subr.mxu0 0.0
    %6419 = vmatpush1.msra.mxu0 0.0
    %6420 = vmatprep.subr.mxu0 0.0
    %6421 = vmatpush1.msra.mxu0 0.0
    %6422 = vmatprep.subr.mxu0 0.0
    %6423 = vmatpush1.msra.mxu0 0.0
    %6424 = vmatprep.subr.mxu0 0.0
    %6425 = vmatpush1.msra.mxu0 0.0
    %6426 = vmatprep.subr.mxu0 0.0
    %6427 = vmatpush1.msra.mxu0 0.0
    %6428 = vmatprep.subr.mxu0 0.0
    %6429 = vmatpush1.msra.mxu0 0.0
    %6430 = vmatprep.subr.mxu0 0.0
    %6431 = vmatpush1.msra.mxu0 0.0
    %6432 = vmatprep.subr.mxu0 0.0
    %6433 = vmatpush1.msra.mxu0 0.0
    %6434 = vmatprep.subr.mxu0 0.0
    %6435 = vmatpush1.msra.mxu0 0.0
    %6436 = vmatprep.subr.mxu0 0.0
    %6437 = vmatpush1.msra.mxu0 0.0
    %6438 = vmatprep.subr.mxu0 0.0
    %6439 = vmatpush1.msra.mxu0 0.0
    %6440 = vmatprep.subr.mxu0 0.0
    %6441 = vmatpush1.msra.mxu0 0.0
    %6442 = vmatprep.mubr.f32.mxu0 0.0
    %6443 = vmatmul.mubr.f32.gmra.mrb[0].mxu0 %v6026
    %v6444 = vpop.f32.mrb[0].mxu0
    %v6445 = vadd.f32 0.0, %v6444
    %v6446 = vpop.f32.mrb[0].mxu0
    %6447 = vdwg.mxu0
    %6448 = vmatprep.subr.mxu0 0.0
    %6449 = vmatpush1.msra.mxu0 %v4153
    %6450 = vmatprep.subr.mxu0 0.0
    %6451 = vmatpush1.msra.mxu0 %v4154
    %6452 = vmatprep.subr.mxu0 0.0
    %6453 = vmatpush1.msra.mxu0 %v4155
    %6454 = vmatprep.subr.mxu0 0.0
    %6455 = vmatpush1.msra.mxu0 %v4156
    %6456 = vmatprep.subr.mxu0 0.0
    %6457 = vmatpush1.msra.mxu0 0.0
    %6458 = vmatprep.subr.mxu0 0.0
    %6459 = vmatpush1.msra.mxu0 0.0
    %6460 = vmatprep.subr.mxu0 0.0
    %6461 = vmatpush1.msra.mxu0 0.0
    %6462 = vmatprep.subr.mxu0 0.0
    %6463 = vmatpush1.msra.mxu0 0.0
    %6464 = vmatprep.subr.mxu0 0.0
    %6465 = vmatpush1.msra.mxu0 0.0
    %6466 = vmatprep.subr.mxu0 0.0
    %6467 = vmatpush1.msra.mxu0 0.0
    %6468 = vmatprep.subr.mxu0 0.0
    %6469 = vmatpush1.msra.mxu0 0.0
    %6470 = vmatprep.subr.mxu0 0.0
    %6471 = vmatpush1.msra.mxu0 0.0
    %6472 = vmatprep.subr.mxu0 0.0
    %6473 = vmatpush1.msra.mxu0 0.0
    %6474 = vmatprep.subr.mxu0 0.0
    %6475 = vmatpush1.msra.mxu0 0.0
    %6476 = vmatprep.subr.mxu0 0.0
    %6477 = vmatpush1.msra.mxu0 0.0
    %6478 = vmatprep.subr.mxu0 0.0
    %6479 = vmatpush1.msra.mxu0 0.0
    %6480 = vmatprep.subr.mxu0 0.0
    %6481 = vmatpush1.msra.mxu0 0.0
    %6482 = vmatprep.subr.mxu0 0.0
    %6483 = vmatpush1.msra.mxu0 0.0
    %6484 = vmatprep.subr.mxu0 0.0
    %6485 = vmatpush1.msra.mxu0 0.0
    %6486 = vmatprep.subr.mxu0 0.0
    %6487 = vmatpush1.msra.mxu0 0.0
    %6488 = vmatprep.subr.mxu0 0.0
    %6489 = vmatpush1.msra.mxu0 0.0
    %6490 = vmatprep.subr.mxu0 0.0
    %6491 = vmatpush1.msra.mxu0 0.0
    %6492 = vmatprep.subr.mxu0 0.0
    %6493 = vmatpush1.msra.mxu0 0.0
    %6494 = vmatprep.subr.mxu0 0.0
    %6495 = vmatpush1.msra.mxu0 0.0
    %6496 = vmatprep.subr.mxu0 0.0
    %6497 = vmatpush1.msra.mxu0 0.0
    %6498 = vmatprep.subr.mxu0 0.0
    %6499 = vmatpush1.msra.mxu0 0.0
    %6500 = vmatprep.subr.mxu0 0.0
    %6501 = vmatpush1.msra.mxu0 0.0
    %6502 = vmatprep.subr.mxu0 0.0
    %6503 = vmatpush1.msra.mxu0 0.0
    %6504 = vmatprep.subr.mxu0 0.0
    %6505 = vmatpush1.msra.mxu0 0.0
    %6506 = vmatprep.subr.mxu0 0.0
    %6507 = vmatpush1.msra.mxu0 0.0
    %6508 = vmatprep.subr.mxu0 0.0
    %6509 = vmatpush1.msra.mxu0 0.0
    %6510 = vmatprep.subr.mxu0 0.0
    %6511 = vmatpush1.msra.mxu0 0.0
    %6512 = vmatprep.mubr.f32.mxu0 0.0
    %6513 = vmatmul.mubr.f32.gmra.mrb[0].mxu0 %v6026
    %v6514 = vpop.f32.mrb[0].mxu0
    %v6515 = vadd.f32 0.0, %v6514
    %v6516 = vpop.f32.mrb[0].mxu0
    %6517 = vdwg.mxu0
    %6518 = vmatprep.subr.mxu0 0.0
    %6519 = vmatpush1.msra.mxu0 %v4157
    %6520 = vmatprep.subr.mxu0 0.0
    %6521 = vmatpush1.msra.mxu0 %v4158
    %6522 = vmatprep.subr.mxu0 0.0
    %6523 = vmatpush1.msra.mxu0 %v4159
    %6524 = vmatprep.subr.mxu0 0.0
    %6525 = vmatpush1.msra.mxu0 %v4160
    %6526 = vmatprep.subr.mxu0 0.0
    %6527 = vmatpush1.msra.mxu0 0.0
    %6528 = vmatprep.subr.mxu0 0.0
    %6529 = vmatpush1.msra.mxu0 0.0
    %6530 = vmatprep.subr.mxu0 0.0
    %6531 = vmatpush1.msra.mxu0 0.0
    %6532 = vmatprep.subr.mxu0 0.0
    %6533 = vmatpush1.msra.mxu0 0.0
    %6534 = vmatprep.subr.mxu0 0.0
    %6535 = vmatpush1.msra.mxu0 0.0
    %6536 = vmatprep.subr.mxu0 0.0
    %6537 = vmatpush1.msra.mxu0 0.0
    %6538 = vmatprep.subr.mxu0 0.0
    %6539 = vmatpush1.msra.mxu0 0.0
    %6540 = vmatprep.subr.mxu0 0.0
    %6541 = vmatpush1.msra.mxu0 0.0
    %6542 = vmatprep.subr.mxu0 0.0
    %6543 = vmatpush1.msra.mxu0 0.0
    %6544 = vmatprep.subr.mxu0 0.0
    %6545 = vmatpush1.msra.mxu0 0.0
    %6546 = vmatprep.subr.mxu0 0.0
    %6547 = vmatpush1.msra.mxu0 0.0
    %6548 = vmatprep.subr.mxu0 0.0
    %6549 = vmatpush1.msra.mxu0 0.0
    %6550 = vmatprep.subr.mxu0 0.0
    %6551 = vmatpush1.msra.mxu0 0.0
    %6552 = vmatprep.subr.mxu0 0.0
    %6553 = vmatpush1.msra.mxu0 0.0
    %6554 = vmatprep.subr.mxu0 0.0
    %6555 = vmatpush1.msra.mxu0 0.0
    %6556 = vmatprep.subr.mxu0 0.0
    %6557 = vmatpush1.msra.mxu0 0.0
    %6558 = vmatprep.subr.mxu0 0.0
    %6559 = vmatpush1.msra.mxu0 0.0
    %6560 = vmatprep.subr.mxu0 0.0
    %6561 = vmatpush1.msra.mxu0 0.0
    %6562 = vmatprep.subr.mxu0 0.0
    %6563 = vmatpush1.msra.mxu0 0.0
    %6564 = vmatprep.subr.mxu0 0.0
    %6565 = vmatpush1.msra.mxu0 0.0
    %6566 = vmatprep.subr.mxu0 0.0
    %6567 = vmatpush1.msra.mxu0 0.0
    %6568 = vmatprep.subr.mxu0 0.0
    %6569 = vmatpush1.msra.mxu0 0.0
    %6570 = vmatprep.subr.mxu0 0.0
    %6571 = vmatpush1.msra.mxu0 0.0
    %6572 = vmatprep.subr.mxu0 0.0
    %6573 = vmatpush1.msra.mxu0 0.0
    %6574 = vmatprep.subr.mxu0 0.0
    %6575 = vmatpush1.msra.mxu0 0.0
    %6576 = vmatprep.subr.mxu0 0.0
    %6577 = vmatpush1.msra.mxu0 0.0
    %6578 = vmatprep.subr.mxu0 0.0
    %6579 = vmatpush1.msra.mxu0 0.0
    %6580 = vmatprep.subr.mxu0 0.0
    %6581 = vmatpush1.msra.mxu0 0.0
    %6582 = vmatprep.mubr.f32.mxu0 0.0
    %6583 = vmatmul.mubr.f32.gmra.mrb[0].mxu0 %v6026
    %v6584 = vpop.f32.mrb[0].mxu0
    %v6585 = vadd.f32 0.0, %v6584
    %v6586 = vpop.f32.mrb[0].mxu0
    %6587 = vdwg.mxu0
    %6588 = vmatprep.subr.mxu0 0.0
    %6589 = vmatpush1.msra.mxu0 %v4162
    %6590 = vmatprep.subr.mxu0 0.0
    %6591 = vmatpush1.msra.mxu0 %v4163
    %6592 = vmatprep.subr.mxu0 0.0
    %6593 = vmatpush1.msra.mxu0 %v4164
    %6594 = vmatprep.subr.mxu0 0.0
    %6595 = vmatpush1.msra.mxu0 %v4165
    %6596 = vmatprep.subr.mxu0 0.0
    %6597 = vmatpush1.msra.mxu0 0.0
    %6598 = vmatprep.subr.mxu0 0.0
    %6599 = vmatpush1.msra.mxu0 0.0
    %6600 = vmatprep.subr.mxu0 0.0
    %6601 = vmatpush1.msra.mxu0 0.0
    %6602 = vmatprep.subr.mxu0 0.0
    %6603 = vmatpush1.msra.mxu0 0.0
    %6604 = vmatprep.subr.mxu0 0.0
    %6605 = vmatpush1.msra.mxu0 0.0
    %6606 = vmatprep.subr.mxu0 0.0
    %6607 = vmatpush1.msra.mxu0 0.0
    %6608 = vmatprep.subr.mxu0 0.0
    %6609 = vmatpush1.msra.mxu0 0.0
    %6610 = vmatprep.subr.mxu0 0.0
    %6611 = vmatpush1.msra.mxu0 0.0
    %6612 = vmatprep.subr.mxu0 0.0
    %6613 = vmatpush1.msra.mxu0 0.0
    %6614 = vmatprep.subr.mxu0 0.0
    %6615 = vmatpush1.msra.mxu0 0.0
    %6616 = vmatprep.subr.mxu0 0.0
    %6617 = vmatpush1.msra.mxu0 0.0
    %6618 = vmatprep.subr.mxu0 0.0
    %6619 = vmatpush1.msra.mxu0 0.0
    %6620 = vmatprep.subr.mxu0 0.0
    %6621 = vmatpush1.msra.mxu0 0.0
    %6622 = vmatprep.subr.mxu0 0.0
    %6623 = vmatpush1.msra.mxu0 0.0
    %6624 = vmatprep.subr.mxu0 0.0
    %6625 = vmatpush1.msra.mxu0 0.0
    %6626 = vmatprep.subr.mxu0 0.0
    %6627 = vmatpush1.msra.mxu0 0.0
    %6628 = vmatprep.subr.mxu0 0.0
    %6629 = vmatpush1.msra.mxu0 0.0
    %6630 = vmatprep.subr.mxu0 0.0
    %6631 = vmatpush1.msra.mxu0 0.0
    %6632 = vmatprep.subr.mxu0 0.0
    %6633 = vmatpush1.msra.mxu0 0.0
    %6634 = vmatprep.subr.mxu0 0.0
    %6635 = vmatpush1.msra.mxu0 0.0
    %6636 = vmatprep.subr.mxu0 0.0
    %6637 = vmatpush1.msra.mxu0 0.0
    %6638 = vmatprep.subr.mxu0 0.0
    %6639 = vmatpush1.msra.mxu0 0.0
    %6640 = vmatprep.subr.mxu0 0.0
    %6641 = vmatpush1.msra.mxu0 0.0
    %6642 = vmatprep.subr.mxu0 0.0
    %6643 = vmatpush1.msra.mxu0 0.0
    %6644 = vmatprep.subr.mxu0 0.0
    %6645 = vmatpush1.msra.mxu0 0.0
    %6646 = vmatprep.subr.mxu0 0.0
    %6647 = vmatpush1.msra.mxu0 0.0
    %6648 = vmatprep.subr.mxu0 0.0
    %6649 = vmatpush1.msra.mxu0 0.0
    %6650 = vmatprep.subr.mxu0 0.0
    %6651 = vmatpush1.msra.mxu0 0.0
    %6652 = vmatprep.mubr.f32.mxu0 0.0
    %6653 = vmatmul.mubr.f32.gmra.mrb[0].mxu0 %v6026
    %v6654 = vpop.f32.mrb[0].mxu0
    %v6655 = vadd.f32 0.0, %v6654
    %v6656 = vpop.f32.mrb[0].mxu0
    %6657 = vdwg.mxu0
    %6658 = vmatprep.subr.mxu0 0.0
    %6659 = vmatpush1.msra.mxu0 %v4166
    %6660 = vmatprep.subr.mxu0 0.0
    %6661 = vmatpush1.msra.mxu0 %v4167
    %6662 = vmatprep.subr.mxu0 0.0
    %6663 = vmatpush1.msra.mxu0 %v4168
    %6664 = vmatprep.subr.mxu0 0.0
    %6665 = vmatpush1.msra.mxu0 %v4169
    %6666 = vmatprep.subr.mxu0 0.0
    %6667 = vmatpush1.msra.mxu0 0.0
    %6668 = vmatprep.subr.mxu0 0.0
    %6669 = vmatpush1.msra.mxu0 0.0
    %6670 = vmatprep.subr.mxu0 0.0
    %6671 = vmatpush1.msra.mxu0 0.0
    %6672 = vmatprep.subr.mxu0 0.0
    %6673 = vmatpush1.msra.mxu0 0.0
    %6674 = vmatprep.subr.mxu0 0.0
    %6675 = vmatpush1.msra.mxu0 0.0
    %6676 = vmatprep.subr.mxu0 0.0
    %6677 = vmatpush1.msra.mxu0 0.0
    %6678 = vmatprep.subr.mxu0 0.0
    %6679 = vmatpush1.msra.mxu0 0.0
    %6680 = vmatprep.subr.mxu0 0.0
    %6681 = vmatpush1.msra.mxu0 0.0
    %6682 = vmatprep.subr.mxu0 0.0
    %6683 = vmatpush1.msra.mxu0 0.0
    %6684 = vmatprep.subr.mxu0 0.0
    %6685 = vmatpush1.msra.mxu0 0.0
    %6686 = vmatprep.subr.mxu0 0.0
    %6687 = vmatpush1.msra.mxu0 0.0
    %6688 = vmatprep.subr.mxu0 0.0
    %6689 = vmatpush1.msra.mxu0 0.0
    %6690 = vmatprep.subr.mxu0 0.0
    %6691 = vmatpush1.msra.mxu0 0.0
    %6692 = vmatprep.subr.mxu0 0.0
    %6693 = vmatpush1.msra.mxu0 0.0
    %6694 = vmatprep.subr.mxu0 0.0
    %6695 = vmatpush1.msra.mxu0 0.0
    %6696 = vmatprep.subr.mxu0 0.0
    %6697 = vmatpush1.msra.mxu0 0.0
    %6698 = vmatprep.subr.mxu0 0.0
    %6699 = vmatpush1.msra.mxu0 0.0
    %6700 = vmatprep.subr.mxu0 0.0
    %6701 = vmatpush1.msra.mxu0 0.0
    %6702 = vmatprep.subr.mxu0 0.0
    %6703 = vmatpush1.msra.mxu0 0.0
    %6704 = vmatprep.subr.mxu0 0.0
    %6705 = vmatpush1.msra.mxu0 0.0
    %6706 = vmatprep.subr.mxu0 0.0
    %6707 = vmatpush1.msra.mxu0 0.0
    %6708 = vmatprep.subr.mxu0 0.0
    %6709 = vmatpush1.msra.mxu0 0.0
    %6710 = vmatprep.subr.mxu0 0.0
    %6711 = vmatpush1.msra.mxu0 0.0
    %6712 = vmatprep.subr.mxu0 0.0
    %6713 = vmatpush1.msra.mxu0 0.0
    %6714 = vmatprep.subr.mxu0 0.0
    %6715 = vmatpush1.msra.mxu0 0.0
    %6716 = vmatprep.subr.mxu0 0.0
    %6717 = vmatpush1.msra.mxu0 0.0
    %6718 = vmatprep.subr.mxu0 0.0
    %6719 = vmatpush1.msra.mxu0 0.0
    %6720 = vmatprep.subr.mxu0 0.0
    %6721 = vmatpush1.msra.mxu0 0.0
    %6722 = vmatprep.mubr.f32.mxu0 0.0
    %6723 = vmatmul.mubr.f32.gmra.mrb[0].mxu0 %v6026
    %v6724 = vpop.f32.mrb[0].mxu0
    %v6725 = vadd.f32 0.0, %v6724
    %v6726 = vpop.f32.mrb[0].mxu0
    %6727 = vdwg.mxu0
    %6728 = vmatprep.subr.mxu0 0.0
    %6729 = vmatpush1.msra.mxu0 %v4170
    %6730 = vmatprep.subr.mxu0 0.0
    %6731 = vmatpush1.msra.mxu0 %v4171
    %6732 = vmatprep.subr.mxu0 0.0
    %6733 = vmatpush1.msra.mxu0 %v4172
    %6734 = vmatprep.subr.mxu0 0.0
    %6735 = vmatpush1.msra.mxu0 %v4173
    %6736 = vmatprep.subr.mxu0 0.0
    %6737 = vmatpush1.msra.mxu0 0.0
    %6738 = vmatprep.subr.mxu0 0.0
    %6739 = vmatpush1.msra.mxu0 0.0
    %6740 = vmatprep.subr.mxu0 0.0
    %6741 = vmatpush1.msra.mxu0 0.0
    %6742 = vmatprep.subr.mxu0 0.0
    %6743 = vmatpush1.msra.mxu0 0.0
    %6744 = vmatprep.subr.mxu0 0.0
    %6745 = vmatpush1.msra.mxu0 0.0
    %6746 = vmatprep.subr.mxu0 0.0
    %6747 = vmatpush1.msra.mxu0 0.0
    %6748 = vmatprep.subr.mxu0 0.0
    %6749 = vmatpush1.msra.mxu0 0.0
    %6750 = vmatprep.subr.mxu0 0.0
    %6751 = vmatpush1.msra.mxu0 0.0
    %6752 = vmatprep.subr.mxu0 0.0
    %6753 = vmatpush1.msra.mxu0 0.0
    %6754 = vmatprep.subr.mxu0 0.0
    %6755 = vmatpush1.msra.mxu0 0.0
    %6756 = vmatprep.subr.mxu0 0.0
    %6757 = vmatpush1.msra.mxu0 0.0
    %6758 = vmatprep.subr.mxu0 0.0
    %6759 = vmatpush1.msra.mxu0 0.0
    %6760 = vmatprep.subr.mxu0 0.0
    %6761 = vmatpush1.msra.mxu0 0.0
    %6762 = vmatprep.subr.mxu0 0.0
    %6763 = vmatpush1.msra.mxu0 0.0
    %6764 = vmatprep.subr.mxu0 0.0
    %6765 = vmatpush1.msra.mxu0 0.0
    %6766 = vmatprep.subr.mxu0 0.0
    %6767 = vmatpush1.msra.mxu0 0.0
    %6768 = vmatprep.subr.mxu0 0.0
    %6769 = vmatpush1.msra.mxu0 0.0
    %6770 = vmatprep.subr.mxu0 0.0
    %6771 = vmatpush1.msra.mxu0 0.0
    %6772 = vmatprep.subr.mxu0 0.0
    %6773 = vmatpush1.msra.mxu0 0.0
    %6774 = vmatprep.subr.mxu0 0.0
    %6775 = vmatpush1.msra.mxu0 0.0
    %6776 = vmatprep.subr.mxu0 0.0
    %6777 = vmatpush1.msra.mxu0 0.0
    %6778 = vmatprep.subr.mxu0 0.0
    %6779 = vmatpush1.msra.mxu0 0.0
    %6780 = vmatprep.subr.mxu0 0.0
    %6781 = vmatpush1.msra.mxu0 0.0
    %6782 = vmatprep.subr.mxu0 0.0
    %6783 = vmatpush1.msra.mxu0 0.0
    %6784 = vmatprep.subr.mxu0 0.0
    %6785 = vmatpush1.msra.mxu0 0.0
    %6786 = vmatprep.subr.mxu0 0.0
    %6787 = vmatpush1.msra.mxu0 0.0
    %6788 = vmatprep.subr.mxu0 0.0
    %6789 = vmatpush1.msra.mxu0 0.0
    %6790 = vmatprep.subr.mxu0 0.0
    %6791 = vmatpush1.msra.mxu0 0.0
    %6792 = vmatprep.mubr.f32.mxu0 0.0
    %6793 = vmatmul.mubr.f32.gmra.mrb[0].mxu0 %v6026
    %v6794 = vpop.f32.mrb[0].mxu0
    %v6795 = vadd.f32 0.0, %v6794
    %v6796 = vpop.f32.mrb[0].mxu0
    %6797 = vdwg.mxu0
    %6798 = vmatprep.subr.mxu0 0.0
    %6799 = vmatpush1.msra.mxu0 %v4174
    %6800 = vmatprep.subr.mxu0 0.0
    %6801 = vmatpush1.msra.mxu0 %v4175
    %6802 = vmatprep.subr.mxu0 0.0
    %6803 = vmatpush1.msra.mxu0 %v4176
    %6804 = vmatprep.subr.mxu0 0.0
    %6805 = vmatpush1.msra.mxu0 %v4177
    %6806 = vmatprep.subr.mxu0 0.0
    %6807 = vmatpush1.msra.mxu0 0.0
    %6808 = vmatprep.subr.mxu0 0.0
    %6809 = vmatpush1.msra.mxu0 0.0
    %6810 = vmatprep.subr.mxu0 0.0
    %6811 = vmatpush1.msra.mxu0 0.0
    %6812 = vmatprep.subr.mxu0 0.0
    %6813 = vmatpush1.msra.mxu0 0.0
    %6814 = vmatprep.subr.mxu0 0.0
    %6815 = vmatpush1.msra.mxu0 0.0
    %6816 = vmatprep.subr.mxu0 0.0
    %6817 = vmatpush1.msra.mxu0 0.0
    %6818 = vmatprep.subr.mxu0 0.0
    %6819 = vmatpush1.msra.mxu0 0.0
    %6820 = vmatprep.subr.mxu0 0.0
    %6821 = vmatpush1.msra.mxu0 0.0
    %6822 = vmatprep.subr.mxu0 0.0
    %6823 = vmatpush1.msra.mxu0 0.0
    %6824 = vmatprep.subr.mxu0 0.0
    %6825 = vmatpush1.msra.mxu0 0.0
    %6826 = vmatprep.subr.mxu0 0.0
    %6827 = vmatpush1.msra.mxu0 0.0
    %6828 = vmatprep.subr.mxu0 0.0
    %6829 = vmatpush1.msra.mxu0 0.0
    %6830 = vmatprep.subr.mxu0 0.0
    %6831 = vmatpush1.msra.mxu0 0.0
    %6832 = vmatprep.subr.mxu0 0.0
    %6833 = vmatpush1.msra.mxu0 0.0
    %6834 = vmatprep.subr.mxu0 0.0
    %6835 = vmatpush1.msra.mxu0 0.0
    %6836 = vmatprep.subr.mxu0 0.0
    %6837 = vmatpush1.msra.mxu0 0.0
    %6838 = vmatprep.subr.mxu0 0.0
    %6839 = vmatpush1.msra.mxu0 0.0
    %6840 = vmatprep.subr.mxu0 0.0
    %6841 = vmatpush1.msra.mxu0 0.0
    %6842 = vmatprep.subr.mxu0 0.0
    %6843 = vmatpush1.msra.mxu0 0.0
    %6844 = vmatprep.subr.mxu0 0.0
    %6845 = vmatpush1.msra.mxu0 0.0
    %6846 = vmatprep.subr.mxu0 0.0
    %6847 = vmatpush1.msra.mxu0 0.0
    %6848 = vmatprep.subr.mxu0 0.0
    %6849 = vmatpush1.msra.mxu0 0.0
    %6850 = vmatprep.subr.mxu0 0.0
    %6851 = vmatpush1.msra.mxu0 0.0
    %6852 = vmatprep.subr.mxu0 0.0
    %6853 = vmatpush1.msra.mxu0 0.0
    %6854 = vmatprep.subr.mxu0 0.0
    %6855 = vmatpush1.msra.mxu0 0.0
    %6856 = vmatprep.subr.mxu0 0.0
    %6857 = vmatpush1.msra.mxu0 0.0
    %6858 = vmatprep.subr.mxu0 0.0
    %6859 = vmatpush1.msra.mxu0 0.0
    %6860 = vmatprep.subr.mxu0 0.0
    %6861 = vmatpush1.msra.mxu0 0.0
    %6862 = vmatprep.mubr.f32.mxu0 0.0
    %6863 = vmatmul.mubr.f32.gmra.mrb[0].mxu0 %v6026
    %v6864 = vpop.f32.mrb[0].mxu0
    %v6865 = vadd.f32 0.0, %v6864
    %v6866 = vpop.f32.mrb[0].mxu0
    %6867 = vdwg.mxu0
    %v6869 = vsel %vm1103, %v6095, 0
    %v6872 = vsel %vm1103, %v6375, 0
    %6874 = vmatprep.subr.mxu0 0.0
    %6875 = vmatpush1.xpose.msra.mxu0 %v6872
    %6876 = vmatprep.subr.mxu0 0.0
    %6877 = vmatpush1.xpose.msra.mxu0 0.0
    %6878 = vmatprep.subr.mxu0 0.0
    %6879 = vmatpush1.xpose.msra.mxu0 0.0
    %6880 = vmatprep.subr.mxu0 0.0
    %6881 = vmatpush1.xpose.msra.mxu0 0.0
    %6882 = vmatprep.subr.mxu0 0.0
    %6883 = vmatpush1.xpose.msra.mxu0 0.0
    %6884 = vmatprep.subr.mxu0 0.0
    %6885 = vmatpush1.xpose.msra.mxu0 0.0
    %6886 = vmatprep.subr.mxu0 0.0
    %6887 = vmatpush1.xpose.msra.mxu0 0.0
    %6888 = vmatprep.subr.mxu0 0.0
    %6889 = vmatpush1.xpose.msra.mxu0 0.0
    %6890 = vmatprep.subr.mxu0 0.0
    %6891 = vmatpush1.xpose.msra.mxu0 0.0
    %6892 = vmatprep.subr.mxu0 0.0
    %6893 = vmatpush1.xpose.msra.mxu0 0.0
    %6894 = vmatprep.subr.mxu0 0.0
    %6895 = vmatpush1.xpose.msra.mxu0 0.0
    %6896 = vmatprep.subr.mxu0 0.0
    %6897 = vmatpush1.xpose.msra.mxu0 0.0
    %6898 = vmatprep.subr.mxu0 0.0
    %6899 = vmatpush1.xpose.msra.mxu0 0.0
    %6900 = vmatprep.subr.mxu0 0.0
    %6901 = vmatpush1.xpose.msra.mxu0 0.0
    %6902 = vmatprep.subr.mxu0 0.0
    %6903 = vmatpush1.xpose.msra.mxu0 0.0
    %6904 = vmatprep.subr.mxu0 0.0
    %6905 = vmatpush1.xpose.msra.mxu0 0.0
    %6906 = vmatprep.subr.mxu0 0.0
    %6907 = vmatpush1.xpose.msra.mxu0 0.0
    %6908 = vmatprep.subr.mxu0 0.0
    %6909 = vmatpush1.xpose.msra.mxu0 0.0
    %6910 = vmatprep.subr.mxu0 0.0
    %6911 = vmatpush1.xpose.msra.mxu0 0.0
    %6912 = vmatprep.subr.mxu0 0.0
    %6913 = vmatpush1.xpose.msra.mxu0 0.0
    %6914 = vmatprep.subr.mxu0 0.0
    %6915 = vmatpush1.xpose.msra.mxu0 0.0
    %6916 = vmatprep.subr.mxu0 0.0
    %6917 = vmatpush1.xpose.msra.mxu0 0.0
    %6918 = vmatprep.subr.mxu0 0.0
    %6919 = vmatpush1.xpose.msra.mxu0 0.0
    %6920 = vmatprep.subr.mxu0 0.0
    %6921 = vmatpush1.xpose.msra.mxu0 0.0
    %6922 = vmatprep.subr.mxu0 0.0
    %6923 = vmatpush1.xpose.msra.mxu0 0.0
    %6924 = vmatprep.subr.mxu0 0.0
    %6925 = vmatpush1.xpose.msra.mxu0 0.0
    %6926 = vmatprep.subr.mxu0 0.0
    %6927 = vmatpush1.xpose.msra.mxu0 0.0
    %6928 = vmatprep.subr.mxu0 0.0
    %6929 = vmatpush1.xpose.msra.mxu0 0.0
    %6930 = vmatprep.subr.mxu0 0.0
    %6931 = vmatpush1.xpose.msra.mxu0 0.0
    %6932 = vmatprep.subr.mxu0 0.0
    %6933 = vmatpush1.xpose.msra.mxu0 0.0
    %6934 = vmatprep.subr.mxu0 0.0
    %6935 = vmatpush1.xpose.msra.mxu0 0.0
    %6936 = vmatprep.subr.mxu0 0.0
    %6937 = vmatpush1.xpose.msra.mxu0 0.0
    %6938 = vmatprep.mubr.f32.mxu0 0.0
    %6939 = vmatmul.mubr.f32.gmra.mrb[0].mxu0 %v6869
    %v6940 = vpop.f32.mrb[0].mxu0
    %v6941 = vadd.f32 %v4123, %v6940
    %v6942 = vpop.f32.mrb[0].mxu0
    %6943 = vdwg.mxu0
    %v6945 = vsel %vm1103, %v6165, 0
    %v6948 = vsel %vm1103, %v6445, 0
    %6950 = vmatprep.subr.mxu0 0.0
    %6951 = vmatpush1.xpose.msra.mxu0 %v6948
    %6952 = vmatprep.subr.mxu0 0.0
    %6953 = vmatpush1.xpose.msra.mxu0 0.0
    %6954 = vmatprep.subr.mxu0 0.0
    %6955 = vmatpush1.xpose.msra.mxu0 0.0
    %6956 = vmatprep.subr.mxu0 0.0
    %6957 = vmatpush1.xpose.msra.mxu0 0.0
    %6958 = vmatprep.subr.mxu0 0.0
    %6959 = vmatpush1.xpose.msra.mxu0 0.0
    %6960 = vmatprep.subr.mxu0 0.0
    %6961 = vmatpush1.xpose.msra.mxu0 0.0
    %6962 = vmatprep.subr.mxu0 0.0
    %6963 = vmatpush1.xpose.msra.mxu0 0.0
    %6964 = vmatprep.subr.mxu0 0.0
    %6965 = vmatpush1.xpose.msra.mxu0 0.0
    %6966 = vmatprep.subr.mxu0 0.0
    %6967 = vmatpush1.xpose.msra.mxu0 0.0
    %6968 = vmatprep.subr.mxu0 0.0
    %6969 = vmatpush1.xpose.msra.mxu0 0.0
    %6970 = vmatprep.subr.mxu0 0.0
    %6971 = vmatpush1.xpose.msra.mxu0 0.0
    %6972 = vmatprep.subr.mxu0 0.0
    %6973 = vmatpush1.xpose.msra.mxu0 0.0
    %6974 = vmatprep.subr.mxu0 0.0
    %6975 = vmatpush1.xpose.msra.mxu0 0.0
    %6976 = vmatprep.subr.mxu0 0.0
    %6977 = vmatpush1.xpose.msra.mxu0 0.0
    %6978 = vmatprep.subr.mxu0 0.0
    %6979 = vmatpush1.xpose.msra.mxu0 0.0
    %6980 = vmatprep.subr.mxu0 0.0
    %6981 = vmatpush1.xpose.msra.mxu0 0.0
    %6982 = vmatprep.subr.mxu0 0.0
    %6983 = vmatpush1.xpose.msra.mxu0 0.0
    %6984 = vmatprep.subr.mxu0 0.0
    %6985 = vmatpush1.xpose.msra.mxu0 0.0
    %6986 = vmatprep.subr.mxu0 0.0
    %6987 = vmatpush1.xpose.msra.mxu0 0.0
    %6988 = vmatprep.subr.mxu0 0.0
    %6989 = vmatpush1.xpose.msra.mxu0 0.0
    %6990 = vmatprep.subr.mxu0 0.0
    %6991 = vmatpush1.xpose.msra.mxu0 0.0
    %6992 = vmatprep.subr.mxu0 0.0
    %6993 = vmatpush1.xpose.msra.mxu0 0.0
    %6994 = vmatprep.subr.mxu0 0.0
    %6995 = vmatpush1.xpose.msra.mxu0 0.0
    %6996 = vmatprep.subr.mxu0 0.0
    %6997 = vmatpush1.xpose.msra.mxu0 0.0
    %6998 = vmatprep.subr.mxu0 0.0
    %6999 = vmatpush1.xpose.msra.mxu0 0.0
    %7000 = vmatprep.subr.mxu0 0.0
    %7001 = vmatpush1.xpose.msra.mxu0 0.0
    %7002 = vmatprep.subr.mxu0 0.0
    %7003 = vmatpush1.xpose.msra.mxu0 0.0
    %7004 = vmatprep.subr.mxu0 0.0
    %7005 = vmatpush1.xpose.msra.mxu0 0.0
    %7006 = vmatprep.subr.mxu0 0.0
    %7007 = vmatpush1.xpose.msra.mxu0 0.0
    %7008 = vmatprep.subr.mxu0 0.0
    %7009 = vmatpush1.xpose.msra.mxu0 0.0
    %7010 = vmatprep.subr.mxu0 0.0
    %7011 = vmatpush1.xpose.msra.mxu0 0.0
    %7012 = vmatprep.subr.mxu0 0.0
    %7013 = vmatpush1.xpose.msra.mxu0 0.0
    %7014 = vmatprep.mubr.f32.mxu0 0.0
    %7015 = vmatmul.mubr.f32.gmra.mrb[0].mxu0 %v6945
    %v7016 = vpop.f32.mrb[0].mxu0
    %v7017 = vadd.f32 %v4124, %v7016
    %v7018 = vpop.f32.mrb[0].mxu0
    %7019 = vdwg.mxu0
    %v7021 = vsel %vm1103, %v6235, 0
    %v7024 = vsel %vm1103, %v6515, 0
    %7026 = vmatprep.subr.mxu0 0.0
    %7027 = vmatpush1.xpose.msra.mxu0 %v7024
    %7028 = vmatprep.subr.mxu0 0.0
    %7029 = vmatpush1.xpose.msra.mxu0 0.0
    %7030 = vmatprep.subr.mxu0 0.0
    %7031 = vmatpush1.xpose.msra.mxu0 0.0
    %7032 = vmatprep.subr.mxu0 0.0
    %7033 = vmatpush1.xpose.msra.mxu0 0.0
    %7034 = vmatprep.subr.mxu0 0.0
    %7035 = vmatpush1.xpose.msra.mxu0 0.0
    %7036 = vmatprep.subr.mxu0 0.0
    %7037 = vmatpush1.xpose.msra.mxu0 0.0
    %7038 = vmatprep.subr.mxu0 0.0
    %7039 = vmatpush1.xpose.msra.mxu0 0.0
    %7040 = vmatprep.subr.mxu0 0.0
    %7041 = vmatpush1.xpose.msra.mxu0 0.0
    %7042 = vmatprep.subr.mxu0 0.0
    %7043 = vmatpush1.xpose.msra.mxu0 0.0
    %7044 = vmatprep.subr.mxu0 0.0
    %7045 = vmatpush1.xpose.msra.mxu0 0.0
    %7046 = vmatprep.subr.mxu0 0.0
    %7047 = vmatpush1.xpose.msra.mxu0 0.0
    %7048 = vmatprep.subr.mxu0 0.0
    %7049 = vmatpush1.xpose.msra.mxu0 0.0
    %7050 = vmatprep.subr.mxu0 0.0
    %7051 = vmatpush1.xpose.msra.mxu0 0.0
    %7052 = vmatprep.subr.mxu0 0.0
    %7053 = vmatpush1.xpose.msra.mxu0 0.0
    %7054 = vmatprep.subr.mxu0 0.0
    %7055 = vmatpush1.xpose.msra.mxu0 0.0
    %7056 = vmatprep.subr.mxu0 0.0
    %7057 = vmatpush1.xpose.msra.mxu0 0.0
    %7058 = vmatprep.subr.mxu0 0.0
    %7059 = vmatpush1.xpose.msra.mxu0 0.0
    %7060 = vmatprep.subr.mxu0 0.0
    %7061 = vmatpush1.xpose.msra.mxu0 0.0
    %7062 = vmatprep.subr.mxu0 0.0
    %7063 = vmatpush1.xpose.msra.mxu0 0.0
    %7064 = vmatprep.subr.mxu0 0.0
    %7065 = vmatpush1.xpose.msra.mxu0 0.0
    %7066 = vmatprep.subr.mxu0 0.0
    %7067 = vmatpush1.xpose.msra.mxu0 0.0
    %7068 = vmatprep.subr.mxu0 0.0
    %7069 = vmatpush1.xpose.msra.mxu0 0.0
    %7070 = vmatprep.subr.mxu0 0.0
    %7071 = vmatpush1.xpose.msra.mxu0 0.0
    %7072 = vmatprep.subr.mxu0 0.0
    %7073 = vmatpush1.xpose.msra.mxu0 0.0
    %7074 = vmatprep.subr.mxu0 0.0
    %7075 = vmatpush1.xpose.msra.mxu0 0.0
    %7076 = vmatprep.subr.mxu0 0.0
    %7077 = vmatpush1.xpose.msra.mxu0 0.0
    %7078 = vmatprep.subr.mxu0 0.0
    %7079 = vmatpush1.xpose.msra.mxu0 0.0
    %7080 = vmatprep.subr.mxu0 0.0
    %7081 = vmatpush1.xpose.msra.mxu0 0.0
    %7082 = vmatprep.subr.mxu0 0.0
    %7083 = vmatpush1.xpose.msra.mxu0 0.0
    %7084 = vmatprep.subr.mxu0 0.0
    %7085 = vmatpush1.xpose.msra.mxu0 0.0
    %7086 = vmatprep.subr.mxu0 0.0
    %7087 = vmatpush1.xpose.msra.mxu0 0.0
    %7088 = vmatprep.subr.mxu0 0.0
    %7089 = vmatpush1.xpose.msra.mxu0 0.0
    %7090 = vmatprep.mubr.f32.mxu0 0.0
    %7091 = vmatmul.mubr.f32.gmra.mrb[0].mxu0 %v7021
    %v7092 = vpop.f32.mrb[0].mxu0
    %v7093 = vadd.f32 %v4125, %v7092
    %v7094 = vpop.f32.mrb[0].mxu0
    %7095 = vdwg.mxu0
    %v7097 = vsel %vm1103, %v6305, 0
    %v7100 = vsel %vm1103, %v6585, 0
    %7102 = vmatprep.subr.mxu0 0.0
    %7103 = vmatpush1.xpose.msra.mxu0 %v7100
    %7104 = vmatprep.subr.mxu0 0.0
    %7105 = vmatpush1.xpose.msra.mxu0 0.0
    %7106 = vmatprep.subr.mxu0 0.0
    %7107 = vmatpush1.xpose.msra.mxu0 0.0
    %7108 = vmatprep.subr.mxu0 0.0
    %7109 = vmatpush1.xpose.msra.mxu0 0.0
    %7110 = vmatprep.subr.mxu0 0.0
    %7111 = vmatpush1.xpose.msra.mxu0 0.0
    %7112 = vmatprep.subr.mxu0 0.0
    %7113 = vmatpush1.xpose.msra.mxu0 0.0
    %7114 = vmatprep.subr.mxu0 0.0
    %7115 = vmatpush1.xpose.msra.mxu0 0.0
    %7116 = vmatprep.subr.mxu0 0.0
    %7117 = vmatpush1.xpose.msra.mxu0 0.0
    %7118 = vmatprep.subr.mxu0 0.0
    %7119 = vmatpush1.xpose.msra.mxu0 0.0
    %7120 = vmatprep.subr.mxu0 0.0
    %7121 = vmatpush1.xpose.msra.mxu0 0.0
    %7122 = vmatprep.subr.mxu0 0.0
    %7123 = vmatpush1.xpose.msra.mxu0 0.0
    %7124 = vmatprep.subr.mxu0 0.0
    %7125 = vmatpush1.xpose.msra.mxu0 0.0
    %7126 = vmatprep.subr.mxu0 0.0
    %7127 = vmatpush1.xpose.msra.mxu0 0.0
    %7128 = vmatprep.subr.mxu0 0.0
    %7129 = vmatpush1.xpose.msra.mxu0 0.0
    %7130 = vmatprep.subr.mxu0 0.0
    %7131 = vmatpush1.xpose.msra.mxu0 0.0
    %7132 = vmatprep.subr.mxu0 0.0
    %7133 = vmatpush1.xpose.msra.mxu0 0.0
    %7134 = vmatprep.subr.mxu0 0.0
    %7135 = vmatpush1.xpose.msra.mxu0 0.0
    %7136 = vmatprep.subr.mxu0 0.0
    %7137 = vmatpush1.xpose.msra.mxu0 0.0
    %7138 = vmatprep.subr.mxu0 0.0
    %7139 = vmatpush1.xpose.msra.mxu0 0.0
    %7140 = vmatprep.subr.mxu0 0.0
    %7141 = vmatpush1.xpose.msra.mxu0 0.0
    %7142 = vmatprep.subr.mxu0 0.0
    %7143 = vmatpush1.xpose.msra.mxu0 0.0
    %7144 = vmatprep.subr.mxu0 0.0
    %7145 = vmatpush1.xpose.msra.mxu0 0.0
    %7146 = vmatprep.subr.mxu0 0.0
    %7147 = vmatpush1.xpose.msra.mxu0 0.0
    %7148 = vmatprep.subr.mxu0 0.0
    %7149 = vmatpush1.xpose.msra.mxu0 0.0
    %7150 = vmatprep.subr.mxu0 0.0
    %7151 = vmatpush1.xpose.msra.mxu0 0.0
    %7152 = vmatprep.subr.mxu0 0.0
    %7153 = vmatpush1.xpose.msra.mxu0 0.0
    %7154 = vmatprep.subr.mxu0 0.0
    %7155 = vmatpush1.xpose.msra.mxu0 0.0
    %7156 = vmatprep.subr.mxu0 0.0
    %7157 = vmatpush1.xpose.msra.mxu0 0.0
    %7158 = vmatprep.subr.mxu0 0.0
    %7159 = vmatpush1.xpose.msra.mxu0 0.0
    %7160 = vmatprep.subr.mxu0 0.0
    %7161 = vmatpush1.xpose.msra.mxu0 0.0
    %7162 = vmatprep.subr.mxu0 0.0
    %7163 = vmatpush1.xpose.msra.mxu0 0.0
    %7164 = vmatprep.subr.mxu0 0.0
    %7165 = vmatpush1.xpose.msra.mxu0 0.0
    %7166 = vmatprep.mubr.f32.mxu0 0.0
    %7167 = vmatmul.mubr.f32.gmra.mrb[0].mxu0 %v7097
    %v7168 = vpop.f32.mrb[0].mxu0
    %v7169 = vadd.f32 %v4126, %v7168
    %v7170 = vpop.f32.mrb[0].mxu0
    %7171 = vdwg.mxu0
    %v7172 = vsel %vm1103, %v6941, -inf
    %7173 = vmax.xlane.f32.xlu0 %v7172
    %v7174 = vpop.xlane.xlu0 %7173
    %v7175 = vsel %vm1103, %v7017, -inf
    %7176 = vmax.xlane.f32.xlu0 %v7175
    %v7177 = vpop.xlane.xlu0 %7176
    %v7178 = vsel %vm1103, %v7093, -inf
    %7179 = vmax.xlane.f32.xlu0 %v7178
    %v7180 = vpop.xlane.xlu0 %7179
    %v7181 = vsel %vm1103, %v7169, -inf
    %7182 = vmax.xlane.f32.xlu0 %v7181
    %v7183 = vpop.xlane.xlu0 %7182
    %v7184 = vsub.f32 %v6941, %v7174
    %v7185 = vsub.f32 %v7017, %v7177
    %v7186 = vsub.f32 %v7093, %v7180
    %v7187 = vsub.f32 %v7169, %v7183
    %v7188 = vmul.f32 %v7184, 1.442695
    %v7189 = vpow.pop %v7188
    %v7190 = vmul.f32 %v7185, 1.442695
    %v7191 = vpow.pop %v7190
    %v7192 = vmul.f32 %v7186, 1.442695
    %v7193 = vpow.pop %v7192
    %v7194 = vmul.f32 %v7187, 1.442695
    %v7195 = vpow.pop %v7194
    %v7196 = vsel %vm1103, %v7189, 0.0
    %7197 = vadd.xlane.f32.xlu0 %v7196
    %v7198 = vpop.xlane.xlu0 %7197
    %v7199 = vsel %vm1103, %v7191, 0.0
    %7200 = vadd.xlane.f32.xlu0 %v7199
    %v7201 = vpop.xlane.xlu0 %7200
    %v7202 = vsel %vm1103, %v7193, 0.0
    %7203 = vadd.xlane.f32.xlu0 %v7202
    %v7204 = vpop.xlane.xlu0 %7203
    %v7205 = vsel %vm1103, %v7195, 0.0
    %7206 = vadd.xlane.f32.xlu0 %v7205
    %v7207 = vpop.xlane.xlu0 %7206
    %v7208 = vrcp.pop %v7198
    %v7209 = vrcp.pop %v7201
    %v7210 = vrcp.pop %v7204
    %v7211 = vrcp.pop %v7207
    %v7212 = vmul.f32 %v7189, %v7208
    %v7213 = vmul.f32 %v7191, %v7209
    %v7214 = vmul.f32 %v7193, %v7210
    %v7215 = vmul.f32 %v7195, %v7211
    %v7217 = vsel %vm1103, %v7212, 0
    %7219 = vmatprep.subr.mxu0 0.0
    %7220 = vmatpush1.msra.mxu0 %v6655
    %7221 = vmatprep.subr.mxu0 0.0
    %7222 = vmatpush1.msra.mxu0 0.0
    %7223 = vmatprep.subr.mxu0 0.0
    %7224 = vmatpush1.msra.mxu0 0.0
    %7225 = vmatprep.subr.mxu0 0.0
    %7226 = vmatpush1.msra.mxu0 0.0
    %7227 = vmatprep.subr.mxu0 0.0
    %7228 = vmatpush1.msra.mxu0 0.0
    %7229 = vmatprep.subr.mxu0 0.0
    %7230 = vmatpush1.msra.mxu0 0.0
    %7231 = vmatprep.subr.mxu0 0.0
    %7232 = vmatpush1.msra.mxu0 0.0
    %7233 = vmatprep.subr.mxu0 0.0
    %7234 = vmatpush1.msra.mxu0 0.0
    %7235 = vmatprep.subr.mxu0 0.0
    %7236 = vmatpush1.msra.mxu0 0.0
    %7237 = vmatprep.subr.mxu0 0.0
    %7238 = vmatpush1.msra.mxu0 0.0
    %7239 = vmatprep.subr.mxu0 0.0
    %7240 = vmatpush1.msra.mxu0 0.0
    %7241 = vmatprep.subr.mxu0 0.0
    %7242 = vmatpush1.msra.mxu0 0.0
    %7243 = vmatprep.subr.mxu0 0.0
    %7244 = vmatpush1.msra.mxu0 0.0
    %7245 = vmatprep.subr.mxu0 0.0
    %7246 = vmatpush1.msra.mxu0 0.0
    %7247 = vmatprep.subr.mxu0 0.0
    %7248 = vmatpush1.msra.mxu0 0.0
    %7249 = vmatprep.subr.mxu0 0.0
    %7250 = vmatpush1.msra.mxu0 0.0
    %7251 = vmatprep.subr.mxu0 0.0
    %7252 = vmatpush1.msra.mxu0 0.0
    %7253 = vmatprep.subr.mxu0 0.0
    %7254 = vmatpush1.msra.mxu0 0.0
    %7255 = vmatprep.subr.mxu0 0.0
    %7256 = vmatpush1.msra.mxu0 0.0
    %7257 = vmatprep.subr.mxu0 0.0
    %7258 = vmatpush1.msra.mxu0 0.0
    %7259 = vmatprep.subr.mxu0 0.0
    %7260 = vmatpush1.msra.mxu0 0.0
    %7261 = vmatprep.subr.mxu0 0.0
    %7262 = vmatpush1.msra.mxu0 0.0
    %7263 = vmatprep.subr.mxu0 0.0
    %7264 = vmatpush1.msra.mxu0 0.0
    %7265 = vmatprep.subr.mxu0 0.0
    %7266 = vmatpush1.msra.mxu0 0.0
    %7267 = vmatprep.subr.mxu0 0.0
    %7268 = vmatpush1.msra.mxu0 0.0
    %7269 = vmatprep.subr.mxu0 0.0
    %7270 = vmatpush1.msra.mxu0 0.0
    %7271 = vmatprep.subr.mxu0 0.0
    %7272 = vmatpush1.msra.mxu0 0.0
    %7273 = vmatprep.subr.mxu0 0.0
    %7274 = vmatpush1.msra.mxu0 0.0
    %7275 = vmatprep.subr.mxu0 0.0
    %7276 = vmatpush1.msra.mxu0 0.0
    %7277 = vmatprep.subr.mxu0 0.0
    %7278 = vmatpush1.msra.mxu0 0.0
    %7279 = vmatprep.subr.mxu0 0.0
    %7280 = vmatpush1.msra.mxu0 0.0
    %7281 = vmatprep.subr.mxu0 0.0
    %7282 = vmatpush1.msra.mxu0 0.0
    %7283 = vmatprep.mubr.f32.mxu0 0.0
    %7284 = vmatmul.mubr.f32.gmra.mrb[0].mxu0 %v7217
    %v7285 = vpop.f32.mrb[0].mxu0
    %v7286 = vadd.f32 0.0, %v7285
    %v7287 = vpop.f32.mrb[0].mxu0
    %7288 = vdwg.mxu0
    %v7290 = vsel %vm1103, %v7213, 0
    %7292 = vmatprep.subr.mxu0 0.0
    %7293 = vmatpush1.msra.mxu0 %v6725
    %7294 = vmatprep.subr.mxu0 0.0
    %7295 = vmatpush1.msra.mxu0 0.0
    %7296 = vmatprep.subr.mxu0 0.0
    %7297 = vmatpush1.msra.mxu0 0.0
    %7298 = vmatprep.subr.mxu0 0.0
    %7299 = vmatpush1.msra.mxu0 0.0
    %7300 = vmatprep.subr.mxu0 0.0
    %7301 = vmatpush1.msra.mxu0 0.0
    %7302 = vmatprep.subr.mxu0 0.0
    %7303 = vmatpush1.msra.mxu0 0.0
    %7304 = vmatprep.subr.mxu0 0.0
    %7305 = vmatpush1.msra.mxu0 0.0
    %7306 = vmatprep.subr.mxu0 0.0
    %7307 = vmatpush1.msra.mxu0 0.0
    %7308 = vmatprep.subr.mxu0 0.0
    %7309 = vmatpush1.msra.mxu0 0.0
    %7310 = vmatprep.subr.mxu0 0.0
    %7311 = vmatpush1.msra.mxu0 0.0
    %7312 = vmatprep.subr.mxu0 0.0
    %7313 = vmatpush1.msra.mxu0 0.0
    %7314 = vmatprep.subr.mxu0 0.0
    %7315 = vmatpush1.msra.mxu0 0.0
    %7316 = vmatprep.subr.mxu0 0.0
    %7317 = vmatpush1.msra.mxu0 0.0
    %7318 = vmatprep.subr.mxu0 0.0
    %7319 = vmatpush1.msra.mxu0 0.0
    %7320 = vmatprep.subr.mxu0 0.0
    %7321 = vmatpush1.msra.mxu0 0.0
    %7322 = vmatprep.subr.mxu0 0.0
    %7323 = vmatpush1.msra.mxu0 0.0
    %7324 = vmatprep.subr.mxu0 0.0
    %7325 = vmatpush1.msra.mxu0 0.0
    %7326 = vmatprep.subr.mxu0 0.0
    %7327 = vmatpush1.msra.mxu0 0.0
    %7328 = vmatprep.subr.mxu0 0.0
    %7329 = vmatpush1.msra.mxu0 0.0
    %7330 = vmatprep.subr.mxu0 0.0
    %7331 = vmatpush1.msra.mxu0 0.0
    %7332 = vmatprep.subr.mxu0 0.0
    %7333 = vmatpush1.msra.mxu0 0.0
    %7334 = vmatprep.subr.mxu0 0.0
    %7335 = vmatpush1.msra.mxu0 0.0
    %7336 = vmatprep.subr.mxu0 0.0
    %7337 = vmatpush1.msra.mxu0 0.0
    %7338 = vmatprep.subr.mxu0 0.0
    %7339 = vmatpush1.msra.mxu0 0.0
    %7340 = vmatprep.subr.mxu0 0.0
    %7341 = vmatpush1.msra.mxu0 0.0
    %7342 = vmatprep.subr.mxu0 0.0
    %7343 = vmatpush1.msra.mxu0 0.0
    %7344 = vmatprep.subr.mxu0 0.0
    %7345 = vmatpush1.msra.mxu0 0.0
    %7346 = vmatprep.subr.mxu0 0.0
    %7347 = vmatpush1.msra.mxu0 0.0
    %7348 = vmatprep.subr.mxu0 0.0
    %7349 = vmatpush1.msra.mxu0 0.0
    %7350 = vmatprep.subr.mxu0 0.0
    %7351 = vmatpush1.msra.mxu0 0.0
    %7352 = vmatprep.subr.mxu0 0.0
    %7353 = vmatpush1.msra.mxu0 0.0
    %7354 = vmatprep.subr.mxu0 0.0
    %7355 = vmatpush1.msra.mxu0 0.0
    %7356 = vmatprep.mubr.f32.mxu0 0.0
    %7357 = vmatmul.mubr.f32.gmra.mrb[0].mxu0 %v7290
    %v7358 = vpop.f32.mrb[0].mxu0
    %v7359 = vadd.f32 0.0, %v7358
    %v7360 = vpop.f32.mrb[0].mxu0
    %7361 = vdwg.mxu0
    %v7363 = vsel %vm1103, %v7214, 0
    %7365 = vmatprep.subr.mxu0 0.0
    %7366 = vmatpush1.msra.mxu0 %v6795
    %7367 = vmatprep.subr.mxu0 0.0
    %7368 = vmatpush1.msra.mxu0 0.0
    %7369 = vmatprep.subr.mxu0 0.0
    %7370 = vmatpush1.msra.mxu0 0.0
    %7371 = vmatprep.subr.mxu0 0.0
    %7372 = vmatpush1.msra.mxu0 0.0
    %7373 = vmatprep.subr.mxu0 0.0
    %7374 = vmatpush1.msra.mxu0 0.0
    %7375 = vmatprep.subr.mxu0 0.0
    %7376 = vmatpush1.msra.mxu0 0.0
    %7377 = vmatprep.subr.mxu0 0.0
    %7378 = vmatpush1.msra.mxu0 0.0
    %7379 = vmatprep.subr.mxu0 0.0
    %7380 = vmatpush1.msra.mxu0 0.0
    %7381 = vmatprep.subr.mxu0 0.0
    %7382 = vmatpush1.msra.mxu0 0.0
    %7383 = vmatprep.subr.mxu0 0.0
    %7384 = vmatpush1.msra.mxu0 0.0
    %7385 = vmatprep.subr.mxu0 0.0
    %7386 = vmatpush1.msra.mxu0 0.0
    %7387 = vmatprep.subr.mxu0 0.0
    %7388 = vmatpush1.msra.mxu0 0.0
    %7389 = vmatprep.subr.mxu0 0.0
    %7390 = vmatpush1.msra.mxu0 0.0
    %7391 = vmatprep.subr.mxu0 0.0
    %7392 = vmatpush1.msra.mxu0 0.0
    %7393 = vmatprep.subr.mxu0 0.0
    %7394 = vmatpush1.msra.mxu0 0.0
    %7395 = vmatprep.subr.mxu0 0.0
    %7396 = vmatpush1.msra.mxu0 0.0
    %7397 = vmatprep.subr.mxu0 0.0
    %7398 = vmatpush1.msra.mxu0 0.0
    %7399 = vmatprep.subr.mxu0 0.0
    %7400 = vmatpush1.msra.mxu0 0.0
    %7401 = vmatprep.subr.mxu0 0.0
    %7402 = vmatpush1.msra.mxu0 0.0
    %7403 = vmatprep.subr.mxu0 0.0
    %7404 = vmatpush1.msra.mxu0 0.0
    %7405 = vmatprep.subr.mxu0 0.0
    %7406 = vmatpush1.msra.mxu0 0.0
    %7407 = vmatprep.subr.mxu0 0.0
    %7408 = vmatpush1.msra.mxu0 0.0
    %7409 = vmatprep.subr.mxu0 0.0
    %7410 = vmatpush1.msra.mxu0 0.0
    %7411 = vmatprep.subr.mxu0 0.0
    %7412 = vmatpush1.msra.mxu0 0.0
    %7413 = vmatprep.subr.mxu0 0.0
    %7414 = vmatpush1.msra.mxu0 0.0
    %7415 = vmatprep.subr.mxu0 0.0
    %7416 = vmatpush1.msra.mxu0 0.0
    %7417 = vmatprep.subr.mxu0 0.0
    %7418 = vmatpush1.msra.mxu0 0.0
    %7419 = vmatprep.subr.mxu0 0.0
    %7420 = vmatpush1.msra.mxu0 0.0
    %7421 = vmatprep.subr.mxu0 0.0
    %7422 = vmatpush1.msra.mxu0 0.0
    %7423 = vmatprep.subr.mxu0 0.0
    %7424 = vmatpush1.msra.mxu0 0.0
    %7425 = vmatprep.subr.mxu0 0.0
    %7426 = vmatpush1.msra.mxu0 0.0
    %7427 = vmatprep.subr.mxu0 0.0
    %7428 = vmatpush1.msra.mxu0 0.0
    %7429 = vmatprep.mubr.f32.mxu0 0.0
    %7430 = vmatmul.mubr.f32.gmra.mrb[0].mxu0 %v7363
    %v7431 = vpop.f32.mrb[0].mxu0
    %v7432 = vadd.f32 0.0, %v7431
    %v7433 = vpop.f32.mrb[0].mxu0
    %7434 = vdwg.mxu0
    %v7436 = vsel %vm1103, %v7215, 0
    %7438 = vmatprep.subr.mxu0 0.0
    %7439 = vmatpush1.msra.mxu0 %v6865
    %7440 = vmatprep.subr.mxu0 0.0
    %7441 = vmatpush1.msra.mxu0 0.0
    %7442 = vmatprep.subr.mxu0 0.0
    %7443 = vmatpush1.msra.mxu0 0.0
    %7444 = vmatprep.subr.mxu0 0.0
    %7445 = vmatpush1.msra.mxu0 0.0
    %7446 = vmatprep.subr.mxu0 0.0
    %7447 = vmatpush1.msra.mxu0 0.0
    %7448 = vmatprep.subr.mxu0 0.0
    %7449 = vmatpush1.msra.mxu0 0.0
    %7450 = vmatprep.subr.mxu0 0.0
    %7451 = vmatpush1.msra.mxu0 0.0
    %7452 = vmatprep.subr.mxu0 0.0
    %7453 = vmatpush1.msra.mxu0 0.0
    %7454 = vmatprep.subr.mxu0 0.0
    %7455 = vmatpush1.msra.mxu0 0.0
    %7456 = vmatprep.subr.mxu0 0.0
    %7457 = vmatpush1.msra.mxu0 0.0
    %7458 = vmatprep.subr.mxu0 0.0
    %7459 = vmatpush1.msra.mxu0 0.0
    %7460 = vmatprep.subr.mxu0 0.0
    %7461 = vmatpush1.msra.mxu0 0.0
    %7462 = vmatprep.subr.mxu0 0.0
    %7463 = vmatpush1.msra.mxu0 0.0
    %7464 = vmatprep.subr.mxu0 0.0
    %7465 = vmatpush1.msra.mxu0 0.0
    %7466 = vmatprep.subr.mxu0 0.0
    %7467 = vmatpush1.msra.mxu0 0.0
    %7468 = vmatprep.subr.mxu0 0.0
    %7469 = vmatpush1.msra.mxu0 0.0
    %7470 = vmatprep.subr.mxu0 0.0
    %7471 = vmatpush1.msra.mxu0 0.0
    %7472 = vmatprep.subr.mxu0 0.0
    %7473 = vmatpush1.msra.mxu0 0.0
    %7474 = vmatprep.subr.mxu0 0.0
    %7475 = vmatpush1.msra.mxu0 0.0
    %7476 = vmatprep.subr.mxu0 0.0
    %7477 = vmatpush1.msra.mxu0 0.0
    %7478 = vmatprep.subr.mxu0 0.0
    %7479 = vmatpush1.msra.mxu0 0.0
    %7480 = vmatprep.subr.mxu0 0.0
    %7481 = vmatpush1.msra.mxu0 0.0
    %7482 = vmatprep.subr.mxu0 0.0
    %7483 = vmatpush1.msra.mxu0 0.0
    %7484 = vmatprep.subr.mxu0 0.0
    %7485 = vmatpush1.msra.mxu0 0.0
    %7486 = vmatprep.subr.mxu0 0.0
    %7487 = vmatpush1.msra.mxu0 0.0
    %7488 = vmatprep.subr.mxu0 0.0
    %7489 = vmatpush1.msra.mxu0 0.0
    %7490 = vmatprep.subr.mxu0 0.0
    %7491 = vmatpush1.msra.mxu0 0.0
    %7492 = vmatprep.subr.mxu0 0.0
    %7493 = vmatpush1.msra.mxu0 0.0
    %7494 = vmatprep.subr.mxu0 0.0
    %7495 = vmatpush1.msra.mxu0 0.0
    %7496 = vmatprep.subr.mxu0 0.0
    %7497 = vmatpush1.msra.mxu0 0.0
    %7498 = vmatprep.subr.mxu0 0.0
    %7499 = vmatpush1.msra.mxu0 0.0
    %7500 = vmatprep.subr.mxu0 0.0
    %7501 = vmatpush1.msra.mxu0 0.0
    %7502 = vmatprep.mubr.f32.mxu0 0.0
    %7503 = vmatmul.mubr.f32.gmra.mrb[0].mxu0 %v7436
    %v7504 = vpop.f32.mrb[0].mxu0
    %v7505 = vadd.f32 0.0, %v7504
    %v7506 = vpop.f32.mrb[0].mxu0
    %7507 = vdwg.mxu0
    %v7509 = vsel %vm1103, %v7286, 0
    %7511 = vmatprep.subr.mxu0 0.0
    %7512 = vmatpush1.xpose.msra.mxu0 %v5682
    %7513 = vmatprep.subr.mxu0 0.0
    %7514 = vmatpush1.xpose.msra.mxu0 %v5685
    %7515 = vmatprep.subr.mxu0 0.0
    %7516 = vmatpush1.xpose.msra.mxu0 %v5688
    %7517 = vmatprep.subr.mxu0 0.0
    %7518 = vmatpush1.xpose.msra.mxu0 %v5691
    %7519 = vmatprep.subr.mxu0 0.0
    %7520 = vmatpush1.xpose.msra.mxu0 0.0
    %7521 = vmatprep.subr.mxu0 0.0
    %7522 = vmatpush1.xpose.msra.mxu0 0.0
    %7523 = vmatprep.subr.mxu0 0.0
    %7524 = vmatpush1.xpose.msra.mxu0 0.0
    %7525 = vmatprep.subr.mxu0 0.0
    %7526 = vmatpush1.xpose.msra.mxu0 0.0
    %7527 = vmatprep.subr.mxu0 0.0
    %7528 = vmatpush1.xpose.msra.mxu0 0.0
    %7529 = vmatprep.subr.mxu0 0.0
    %7530 = vmatpush1.xpose.msra.mxu0 0.0
    %7531 = vmatprep.subr.mxu0 0.0
    %7532 = vmatpush1.xpose.msra.mxu0 0.0
    %7533 = vmatprep.subr.mxu0 0.0
    %7534 = vmatpush1.xpose.msra.mxu0 0.0
    %7535 = vmatprep.subr.mxu0 0.0
    %7536 = vmatpush1.xpose.msra.mxu0 0.0
    %7537 = vmatprep.subr.mxu0 0.0
    %7538 = vmatpush1.xpose.msra.mxu0 0.0
    %7539 = vmatprep.subr.mxu0 0.0
    %7540 = vmatpush1.xpose.msra.mxu0 0.0
    %7541 = vmatprep.subr.mxu0 0.0
    %7542 = vmatpush1.xpose.msra.mxu0 0.0
    %7543 = vmatprep.subr.mxu0 0.0
    %7544 = vmatpush1.xpose.msra.mxu0 0.0
    %7545 = vmatprep.subr.mxu0 0.0
    %7546 = vmatpush1.xpose.msra.mxu0 0.0
    %7547 = vmatprep.subr.mxu0 0.0
    %7548 = vmatpush1.xpose.msra.mxu0 0.0
    %7549 = vmatprep.subr.mxu0 0.0
    %7550 = vmatpush1.xpose.msra.mxu0 0.0
    %7551 = vmatprep.subr.mxu0 0.0
    %7552 = vmatpush1.xpose.msra.mxu0 0.0
    %7553 = vmatprep.subr.mxu0 0.0
    %7554 = vmatpush1.xpose.msra.mxu0 0.0
    %7555 = vmatprep.subr.mxu0 0.0
    %7556 = vmatpush1.xpose.msra.mxu0 0.0
    %7557 = vmatprep.subr.mxu0 0.0
    %7558 = vmatpush1.xpose.msra.mxu0 0.0
    %7559 = vmatprep.subr.mxu0 0.0
    %7560 = vmatpush1.xpose.msra.mxu0 0.0
    %7561 = vmatprep.subr.mxu0 0.0
    %7562 = vmatpush1.xpose.msra.mxu0 0.0
    %7563 = vmatprep.subr.mxu0 0.0
    %7564 = vmatpush1.xpose.msra.mxu0 0.0
    %7565 = vmatprep.subr.mxu0 0.0
    %7566 = vmatpush1.xpose.msra.mxu0 0.0
    %7567 = vmatprep.subr.mxu0 0.0
    %7568 = vmatpush1.xpose.msra.mxu0 0.0
    %7569 = vmatprep.subr.mxu0 0.0
    %7570 = vmatpush1.xpose.msra.mxu0 0.0
    %7571 = vmatprep.subr.mxu0 0.0
    %7572 = vmatpush1.xpose.msra.mxu0 0.0
    %7573 = vmatprep.subr.mxu0 0.0
    %7574 = vmatpush1.xpose.msra.mxu0 0.0
    %7575 = vmatprep.mubr.f32.mxu0 0.0
    %7576 = vmatmul.mubr.f32.gmra.mrb[0].mxu0 %v7509
    %v7577 = vpop.f32.mrb[0].mxu0
    %v7578 = vadd.f32 0.0, %v7577
    %v7579 = vpop.f32.mrb[0].mxu0
    %7580 = vdwg.mxu0
    %v7582 = vsel %vm1103, %v7359, 0
    %7584 = vmatprep.subr.mxu0 0.0
    %7585 = vmatpush1.xpose.msra.mxu0 %v5767
    %7586 = vmatprep.subr.mxu0 0.0
    %7587 = vmatpush1.xpose.msra.mxu0 %v5770
    %7588 = vmatprep.subr.mxu0 0.0
    %7589 = vmatpush1.xpose.msra.mxu0 %v5773
    %7590 = vmatprep.subr.mxu0 0.0
    %7591 = vmatpush1.xpose.msra.mxu0 %v5776
    %7592 = vmatprep.subr.mxu0 0.0
    %7593 = vmatpush1.xpose.msra.mxu0 0.0
    %7594 = vmatprep.subr.mxu0 0.0
    %7595 = vmatpush1.xpose.msra.mxu0 0.0
    %7596 = vmatprep.subr.mxu0 0.0
    %7597 = vmatpush1.xpose.msra.mxu0 0.0
    %7598 = vmatprep.subr.mxu0 0.0
    %7599 = vmatpush1.xpose.msra.mxu0 0.0
    %7600 = vmatprep.subr.mxu0 0.0
    %7601 = vmatpush1.xpose.msra.mxu0 0.0
    %7602 = vmatprep.subr.mxu0 0.0
    %7603 = vmatpush1.xpose.msra.mxu0 0.0
    %7604 = vmatprep.subr.mxu0 0.0
    %7605 = vmatpush1.xpose.msra.mxu0 0.0
    %7606 = vmatprep.subr.mxu0 0.0
    %7607 = vmatpush1.xpose.msra.mxu0 0.0
    %7608 = vmatprep.subr.mxu0 0.0
    %7609 = vmatpush1.xpose.msra.mxu0 0.0
    %7610 = vmatprep.subr.mxu0 0.0
    %7611 = vmatpush1.xpose.msra.mxu0 0.0
    %7612 = vmatprep.subr.mxu0 0.0
    %7613 = vmatpush1.xpose.msra.mxu0 0.0
    %7614 = vmatprep.subr.mxu0 0.0
    %7615 = vmatpush1.xpose.msra.mxu0 0.0
    %7616 = vmatprep.subr.mxu0 0.0
    %7617 = vmatpush1.xpose.msra.mxu0 0.0
    %7618 = vmatprep.subr.mxu0 0.0
    %7619 = vmatpush1.xpose.msra.mxu0 0.0
    %7620 = vmatprep.subr.mxu0 0.0
    %7621 = vmatpush1.xpose.msra.mxu0 0.0
    %7622 = vmatprep.subr.mxu0 0.0
    %7623 = vmatpush1.xpose.msra.mxu0 0.0
    %7624 = vmatprep.subr.mxu0 0.0
    %7625 = vmatpush1.xpose.msra.mxu0 0.0
    %7626 = vmatprep.subr.mxu0 0.0
    %7627 = vmatpush1.xpose.msra.mxu0 0.0
    %7628 = vmatprep.subr.mxu0 0.0
    %7629 = vmatpush1.xpose.msra.mxu0 0.0
    %7630 = vmatprep.subr.mxu0 0.0
    %7631 = vmatpush1.xpose.msra.mxu0 0.0
    %7632 = vmatprep.subr.mxu0 0.0
    %7633 = vmatpush1.xpose.msra.mxu0 0.0
    %7634 = vmatprep.subr.mxu0 0.0
    %7635 = vmatpush1.xpose.msra.mxu0 0.0
    %7636 = vmatprep.subr.mxu0 0.0
    %7637 = vmatpush1.xpose.msra.mxu0 0.0
    %7638 = vmatprep.subr.mxu0 0.0
    %7639 = vmatpush1.xpose.msra.mxu0 0.0
    %7640 = vmatprep.subr.mxu0 0.0
    %7641 = vmatpush1.xpose.msra.mxu0 0.0
    %7642 = vmatprep.subr.mxu0 0.0
    %7643 = vmatpush1.xpose.msra.mxu0 0.0
    %7644 = vmatprep.subr.mxu0 0.0
    %7645 = vmatpush1.xpose.msra.mxu0 0.0
    %7646 = vmatprep.subr.mxu0 0.0
    %7647 = vmatpush1.xpose.msra.mxu0 0.0
    %7648 = vmatprep.mubr.f32.mxu0 0.0
    %7649 = vmatmul.mubr.f32.gmra.mrb[0].mxu0 %v7582
    %v7650 = vpop.f32.mrb[0].mxu0
    %v7651 = vadd.f32 0.0, %v7650
    %v7652 = vpop.f32.mrb[0].mxu0
    %7653 = vdwg.mxu0
    %v7655 = vsel %vm1103, %v7432, 0
    %7657 = vmatprep.subr.mxu0 0.0
    %7658 = vmatpush1.xpose.msra.mxu0 %v5852
    %7659 = vmatprep.subr.mxu0 0.0
    %7660 = vmatpush1.xpose.msra.mxu0 %v5855
    %7661 = vmatprep.subr.mxu0 0.0
    %7662 = vmatpush1.xpose.msra.mxu0 %v5858
    %7663 = vmatprep.subr.mxu0 0.0
    %7664 = vmatpush1.xpose.msra.mxu0 %v5861
    %7665 = vmatprep.subr.mxu0 0.0
    %7666 = vmatpush1.xpose.msra.mxu0 0.0
    %7667 = vmatprep.subr.mxu0 0.0
    %7668 = vmatpush1.xpose.msra.mxu0 0.0
    %7669 = vmatprep.subr.mxu0 0.0
    %7670 = vmatpush1.xpose.msra.mxu0 0.0
    %7671 = vmatprep.subr.mxu0 0.0
    %7672 = vmatpush1.xpose.msra.mxu0 0.0
    %7673 = vmatprep.subr.mxu0 0.0
    %7674 = vmatpush1.xpose.msra.mxu0 0.0
    %7675 = vmatprep.subr.mxu0 0.0
    %7676 = vmatpush1.xpose.msra.mxu0 0.0
    %7677 = vmatprep.subr.mxu0 0.0
    %7678 = vmatpush1.xpose.msra.mxu0 0.0
    %7679 = vmatprep.subr.mxu0 0.0
    %7680 = vmatpush1.xpose.msra.mxu0 0.0
    %7681 = vmatprep.subr.mxu0 0.0
    %7682 = vmatpush1.xpose.msra.mxu0 0.0
    %7683 = vmatprep.subr.mxu0 0.0
    %7684 = vmatpush1.xpose.msra.mxu0 0.0
    %7685 = vmatprep.subr.mxu0 0.0
    %7686 = vmatpush1.xpose.msra.mxu0 0.0
    %7687 = vmatprep.subr.mxu0 0.0
    %7688 = vmatpush1.xpose.msra.mxu0 0.0
    %7689 = vmatprep.subr.mxu0 0.0
    %7690 = vmatpush1.xpose.msra.mxu0 0.0
    %7691 = vmatprep.subr.mxu0 0.0
    %7692 = vmatpush1.xpose.msra.mxu0 0.0
    %7693 = vmatprep.subr.mxu0 0.0
    %7694 = vmatpush1.xpose.msra.mxu0 0.0
    %7695 = vmatprep.subr.mxu0 0.0
    %7696 = vmatpush1.xpose.msra.mxu0 0.0
    %7697 = vmatprep.subr.mxu0 0.0
    %7698 = vmatpush1.xpose.msra.mxu0 0.0
    %7699 = vmatprep.subr.mxu0 0.0
    %7700 = vmatpush1.xpose.msra.mxu0 0.0
    %7701 = vmatprep.subr.mxu0 0.0
    %7702 = vmatpush1.xpose.msra.mxu0 0.0
    %7703 = vmatprep.subr.mxu0 0.0
    %7704 = vmatpush1.xpose.msra.mxu0 0.0
    %7705 = vmatprep.subr.mxu0 0.0
    %7706 = vmatpush1.xpose.msra.mxu0 0.0
    %7707 = vmatprep.subr.mxu0 0.0
    %7708 = vmatpush1.xpose.msra.mxu0 0.0
    %7709 = vmatprep.subr.mxu0 0.0
    %7710 = vmatpush1.xpose.msra.mxu0 0.0
    %7711 = vmatprep.subr.mxu0 0.0
    %7712 = vmatpush1.xpose.msra.mxu0 0.0
    %7713 = vmatprep.subr.mxu0 0.0
    %7714 = vmatpush1.xpose.msra.mxu0 0.0
    %7715 = vmatprep.subr.mxu0 0.0
    %7716 = vmatpush1.xpose.msra.mxu0 0.0
    %7717 = vmatprep.subr.mxu0 0.0
    %7718 = vmatpush1.xpose.msra.mxu0 0.0
    %7719 = vmatprep.subr.mxu0 0.0
    %7720 = vmatpush1.xpose.msra.mxu0 0.0
    %7721 = vmatprep.mubr.f32.mxu0 0.0
    %7722 = vmatmul.mubr.f32.gmra.mrb[0].mxu0 %v7655
    %v7723 = vpop.f32.mrb[0].mxu0
    %v7724 = vadd.f32 0.0, %v7723
    %v7725 = vpop.f32.mrb[0].mxu0
    %7726 = vdwg.mxu0
    %v7728 = vsel %vm1103, %v7505, 0
    %7730 = vmatprep.subr.mxu0 0.0
    %7731 = vmatpush1.xpose.msra.mxu0 %v5937
    %7732 = vmatprep.subr.mxu0 0.0
    %7733 = vmatpush1.xpose.msra.mxu0 %v5940
    %7734 = vmatprep.subr.mxu0 0.0
    %7735 = vmatpush1.xpose.msra.mxu0 %v5943
    %7736 = vmatprep.subr.mxu0 0.0
    %7737 = vmatpush1.xpose.msra.mxu0 %v5946
    %7738 = vmatprep.subr.mxu0 0.0
    %7739 = vmatpush1.xpose.msra.mxu0 0.0
    %7740 = vmatprep.subr.mxu0 0.0
    %7741 = vmatpush1.xpose.msra.mxu0 0.0
    %7742 = vmatprep.subr.mxu0 0.0
    %7743 = vmatpush1.xpose.msra.mxu0 0.0
    %7744 = vmatprep.subr.mxu0 0.0
    %7745 = vmatpush1.xpose.msra.mxu0 0.0
    %7746 = vmatprep.subr.mxu0 0.0
    %7747 = vmatpush1.xpose.msra.mxu0 0.0
    %7748 = vmatprep.subr.mxu0 0.0
    %7749 = vmatpush1.xpose.msra.mxu0 0.0
    %7750 = vmatprep.subr.mxu0 0.0
    %7751 = vmatpush1.xpose.msra.mxu0 0.0
    %7752 = vmatprep.subr.mxu0 0.0
    %7753 = vmatpush1.xpose.msra.mxu0 0.0
    %7754 = vmatprep.subr.mxu0 0.0
    %7755 = vmatpush1.xpose.msra.mxu0 0.0
    %7756 = vmatprep.subr.mxu0 0.0
    %7757 = vmatpush1.xpose.msra.mxu0 0.0
    %7758 = vmatprep.subr.mxu0 0.0
    %7759 = vmatpush1.xpose.msra.mxu0 0.0
    %7760 = vmatprep.subr.mxu0 0.0
    %7761 = vmatpush1.xpose.msra.mxu0 0.0
    %7762 = vmatprep.subr.mxu0 0.0
    %7763 = vmatpush1.xpose.msra.mxu0 0.0
    %7764 = vmatprep.subr.mxu0 0.0
    %7765 = vmatpush1.xpose.msra.mxu0 0.0
    %7766 = vmatprep.subr.mxu0 0.0
    %7767 = vmatpush1.xpose.msra.mxu0 0.0
    %7768 = vmatprep.subr.mxu0 0.0
    %7769 = vmatpush1.xpose.msra.mxu0 0.0
    %7770 = vmatprep.subr.mxu0 0.0
    %7771 = vmatpush1.xpose.msra.mxu0 0.0
    %7772 = vmatprep.subr.mxu0 0.0
    %7773 = vmatpush1.xpose.msra.mxu0 0.0
    %7774 = vmatprep.subr.mxu0 0.0
    %7775 = vmatpush1.xpose.msra.mxu0 0.0
    %7776 = vmatprep.subr.mxu0 0.0
    %7777 = vmatpush1.xpose.msra.mxu0 0.0
    %7778 = vmatprep.subr.mxu0 0.0
    %7779 = vmatpush1.xpose.msra.mxu0 0.0
    %7780 = vmatprep.subr.mxu0 0.0
    %7781 = vmatpush1.xpose.msra.mxu0 0.0
    %7782 = vmatprep.subr.mxu0 0.0
    %7783 = vmatpush1.xpose.msra.mxu0 0.0
    %7784 = vmatprep.subr.mxu0 0.0
    %7785 = vmatpush1.xpose.msra.mxu0 0.0
    %7786 = vmatprep.subr.mxu0 0.0
    %7787 = vmatpush1.xpose.msra.mxu0 0.0
    %7788 = vmatprep.subr.mxu0 0.0
    %7789 = vmatpush1.xpose.msra.mxu0 0.0
    %7790 = vmatprep.subr.mxu0 0.0
    %7791 = vmatpush1.xpose.msra.mxu0 0.0
    %7792 = vmatprep.subr.mxu0 0.0
    %7793 = vmatpush1.xpose.msra.mxu0 0.0
    %7794 = vmatprep.mubr.f32.mxu0 0.0
    %7795 = vmatmul.mubr.f32.gmra.mrb[0].mxu0 %v7728
    %v7796 = vpop.f32.mrb[0].mxu0
    %v7797 = vadd.f32 0.0, %v7796
    %v7798 = vpop.f32.mrb[0].mxu0
    %7799 = vdwg.mxu0
    %v7800 = vsel %vm166, %v7578, 0.0
    %v7801 = vsel %vm166, %v7651, 0.0
    %v7802 = vadd.f32 %v7800, %v7801
    %v7803 = vsel %vm166, %v7724, 0.0
    %v7804 = vadd.f32 %v7802, %v7803
    %v7805 = vsel %vm166, %v7797, 0.0
    %v7806 = vadd.f32 %v7804, %v7805
    %v7807 = vadd.f32 %v156, %v6024
    %v7808 = vadd.f32 %v161, %v7806
    %v7809 = vmul.f32 %v7807, %v7807
    %v7810 = vmul.f32 %v7808, %v7808
    %v7811 = vsel %vm166, %v7809, 0.0
    %7812 = vadd.xlane.f32.xlu0 %v7811
    %v7813 = vpop.xlane.xlu0 %7812
    %v7814 = vsel %vm166, %v7810, 0.0
    %7815 = vadd.xlane.f32.xlu0 %v7814
    %v7816 = vpop.xlane.xlu0 %7815
    %v7817 = vmul.f32 %v7813, %v173
    %v7818 = vmul.f32 %v7816, %v173
    %v7819 = vadd.f32 %v7817, 1e-06
    %v7820 = vadd.f32 %v7818, 1e-06
    %v7821 = vrsqrt.pop %v7819
    %v7822 = vrsqrt.pop %v7820
    %v7823 = vmul.f32 %v7807, %v7821
    %v7824 = vmul.f32 %v7808, %v7822
    %v7825 = vld [vmem:[%s2 + $0x4] sm:$0x1]
    %v7826 = vlaneseq
    %v7827 = vshrl.u32 %v7826, 7
    %v7828 = vsub.s32 0, %v7827
    %v7829 = vrot.slane %v7825, %v7828
    %v7830 = vmul.f32 %v7823, %v7829
    %v7831 = vmul.f32 %v7824, %v7829
    %s7832 = scalar_lea.vmem %s3, 1024
    %v7833 = vld [vmem:[%s7832] sm:$0xff]
    %v7834 = vld [vmem:[%s7832 + $0x8] sm:$0xff]
    %v7835 = vld [vmem:[%s7832 + $0x10] sm:$0xff]
    %v7836 = vld [vmem:[%s7832 + $0x18] sm:$0xff]
    %v7837 = vld [vmem:[%s7832 + $0x20] sm:$0xff]
    %v7838 = vld [vmem:[%s7832 + $0x28] sm:$0xff]
    %v7839 = vld [vmem:[%s7832 + $0x30] sm:$0xff]
    %v7840 = vld [vmem:[%s7832 + $0x38] sm:$0xff]
    %v7841 = vld [vmem:[%s7832 + $0x40] sm:$0xff]
    %v7842 = vld [vmem:[%s7832 + $0x48] sm:$0xff]
    %v7843 = vld [vmem:[%s7832 + $0x50] sm:$0xff]
    %v7844 = vld [vmem:[%s7832 + $0x58] sm:$0xff]
    %v7845 = vld [vmem:[%s7832 + $0x60] sm:$0xff]
    %v7846 = vld [vmem:[%s7832 + $0x68] sm:$0xff]
    %v7847 = vld [vmem:[%s7832 + $0x70] sm:$0xff]
    %v7848 = vld [vmem:[%s7832 + $0x78] sm:$0xff]
    %s7849 = scalar_lea.vmem %s3, 1152
    %v7850 = vld [vmem:[%s7849] sm:$0xff]
    %v7851 = vld [vmem:[%s7849 + $0x8] sm:$0xff]
    %v7852 = vld [vmem:[%s7849 + $0x10] sm:$0xff]
    %v7853 = vld [vmem:[%s7849 + $0x18] sm:$0xff]
    %v7854 = vld [vmem:[%s7849 + $0x20] sm:$0xff]
    %v7855 = vld [vmem:[%s7849 + $0x28] sm:$0xff]
    %v7856 = vld [vmem:[%s7849 + $0x30] sm:$0xff]
    %v7857 = vld [vmem:[%s7849 + $0x38] sm:$0xff]
    %v7858 = vld [vmem:[%s7849 + $0x40] sm:$0xff]
    %v7859 = vld [vmem:[%s7849 + $0x48] sm:$0xff]
    %v7860 = vld [vmem:[%s7849 + $0x50] sm:$0xff]
    %v7861 = vld [vmem:[%s7849 + $0x58] sm:$0xff]
    %v7862 = vld [vmem:[%s7849 + $0x60] sm:$0xff]
    %v7863 = vld [vmem:[%s7849 + $0x68] sm:$0xff]
    %v7864 = vld [vmem:[%s7849 + $0x70] sm:$0xff]
    %v7865 = vld [vmem:[%s7849 + $0x78] sm:$0xff]
    %s7866 = scalar_lea.vmem %s3, 1280
    %v7867 = vld [vmem:[%s7866] sm:$0xff]
    %v7868 = vld [vmem:[%s7866 + $0x8] sm:$0xff]
    %v7869 = vld [vmem:[%s7866 + $0x10] sm:$0xff]
    %v7870 = vld [vmem:[%s7866 + $0x18] sm:$0xff]
    %v7871 = vld [vmem:[%s7866 + $0x20] sm:$0xff]
    %v7872 = vld [vmem:[%s7866 + $0x28] sm:$0xff]
    %v7873 = vld [vmem:[%s7866 + $0x30] sm:$0xff]
    %v7874 = vld [vmem:[%s7866 + $0x38] sm:$0xff]
    %v7875 = vld [vmem:[%s7866 + $0x40] sm:$0xff]
    %v7876 = vld [vmem:[%s7866 + $0x48] sm:$0xff]
    %v7877 = vld [vmem:[%s7866 + $0x50] sm:$0xff]
    %v7878 = vld [vmem:[%s7866 + $0x58] sm:$0xff]
    %v7879 = vld [vmem:[%s7866 + $0x60] sm:$0xff]
    %v7880 = vld [vmem:[%s7866 + $0x68] sm:$0xff]
    %v7881 = vld [vmem:[%s7866 + $0x70] sm:$0xff]
    %v7882 = vld [vmem:[%s7866 + $0x78] sm:$0xff]
    %s7883 = scalar_lea.vmem %s3, 1408
    %v7884 = vld [vmem:[%s7883] sm:$0xff]
    %v7885 = vld [vmem:[%s7883 + $0x8] sm:$0xff]
    %v7886 = vld [vmem:[%s7883 + $0x10] sm:$0xff]
    %v7887 = vld [vmem:[%s7883 + $0x18] sm:$0xff]
    %v7888 = vld [vmem:[%s7883 + $0x20] sm:$0xff]
    %v7889 = vld [vmem:[%s7883 + $0x28] sm:$0xff]
    %v7890 = vld [vmem:[%s7883 + $0x30] sm:$0xff]
    %v7891 = vld [vmem:[%s7883 + $0x38] sm:$0xff]
    %v7892 = vld [vmem:[%s7883 + $0x40] sm:$0xff]
    %v7893 = vld [vmem:[%s7883 + $0x48] sm:$0xff]
    %v7894 = vld [vmem:[%s7883 + $0x50] sm:$0xff]
    %v7895 = vld [vmem:[%s7883 + $0x58] sm:$0xff]
    %v7896 = vld [vmem:[%s7883 + $0x60] sm:$0xff]
    %v7897 = vld [vmem:[%s7883 + $0x68] sm:$0xff]
    %v7898 = vld [vmem:[%s7883 + $0x70] sm:$0xff]
    %v7899 = vld [vmem:[%s7883 + $0x78] sm:$0xff]
    %v7901 = vsel %vm166, %v7830, 0
    %7903 = vmatprep.subr.mxu0 0.0
    %7904 = vmatpush1.msra.mxu0 %v7833
    %7905 = vmatprep.subr.mxu0 0.0
    %7906 = vmatpush1.msra.mxu0 %v7834
    %7907 = vmatprep.subr.mxu0 0.0
    %7908 = vmatpush1.msra.mxu0 %v7835
    %7909 = vmatprep.subr.mxu0 0.0
    %7910 = vmatpush1.msra.mxu0 %v7836
    %7911 = vmatprep.subr.mxu0 0.0
    %7912 = vmatpush1.msra.mxu0 0.0
    %7913 = vmatprep.subr.mxu0 0.0
    %7914 = vmatpush1.msra.mxu0 0.0
    %7915 = vmatprep.subr.mxu0 0.0
    %7916 = vmatpush1.msra.mxu0 0.0
    %7917 = vmatprep.subr.mxu0 0.0
    %7918 = vmatpush1.msra.mxu0 0.0
    %7919 = vmatprep.subr.mxu0 0.0
    %7920 = vmatpush1.msra.mxu0 0.0
    %7921 = vmatprep.subr.mxu0 0.0
    %7922 = vmatpush1.msra.mxu0 0.0
    %7923 = vmatprep.subr.mxu0 0.0
    %7924 = vmatpush1.msra.mxu0 0.0
    %7925 = vmatprep.subr.mxu0 0.0
    %7926 = vmatpush1.msra.mxu0 0.0
    %7927 = vmatprep.subr.mxu0 0.0
    %7928 = vmatpush1.msra.mxu0 0.0
    %7929 = vmatprep.subr.mxu0 0.0
    %7930 = vmatpush1.msra.mxu0 0.0
    %7931 = vmatprep.subr.mxu0 0.0
    %7932 = vmatpush1.msra.mxu0 0.0
    %7933 = vmatprep.subr.mxu0 0.0
    %7934 = vmatpush1.msra.mxu0 0.0
    %7935 = vmatprep.subr.mxu0 0.0
    %7936 = vmatpush1.msra.mxu0 0.0
    %7937 = vmatprep.subr.mxu0 0.0
    %7938 = vmatpush1.msra.mxu0 0.0
    %7939 = vmatprep.subr.mxu0 0.0
    %7940 = vmatpush1.msra.mxu0 0.0
    %7941 = vmatprep.subr.mxu0 0.0
    %7942 = vmatpush1.msra.mxu0 0.0
    %7943 = vmatprep.subr.mxu0 0.0
    %7944 = vmatpush1.msra.mxu0 0.0
    %7945 = vmatprep.subr.mxu0 0.0
    %7946 = vmatpush1.msra.mxu0 0.0
    %7947 = vmatprep.subr.mxu0 0.0
    %7948 = vmatpush1.msra.mxu0 0.0
    %7949 = vmatprep.subr.mxu0 0.0
    %7950 = vmatpush1.msra.mxu0 0.0
    %7951 = vmatprep.subr.mxu0 0.0
    %7952 = vmatpush1.msra.mxu0 0.0
    %7953 = vmatprep.subr.mxu0 0.0
    %7954 = vmatpush1.msra.mxu0 0.0
    %7955 = vmatprep.subr.mxu0 0.0
    %7956 = vmatpush1.msra.mxu0 0.0
    %7957 = vmatprep.subr.mxu0 0.0
    %7958 = vmatpush1.msra.mxu0 0.0
    %7959 = vmatprep.subr.mxu0 0.0
    %7960 = vmatpush1.msra.mxu0 0.0
    %7961 = vmatprep.subr.mxu0 0.0
    %7962 = vmatpush1.msra.mxu0 0.0
    %7963 = vmatprep.subr.mxu0 0.0
    %7964 = vmatpush1.msra.mxu0 0.0
    %7965 = vmatprep.subr.mxu0 0.0
    %7966 = vmatpush1.msra.mxu0 0.0
    %7967 = vmatprep.mubr.f32.mxu0 0.0
    %7968 = vmatmul.mubr.f32.gmra.mrb[0].mxu0 %v7901
    %v7969 = vpop.f32.mrb[0].mxu0
    %v7970 = vadd.f32 0.0, %v7969
    %v7971 = vpop.f32.mrb[0].mxu0
    %7972 = vdwg.mxu0
    %7973 = vmatprep.subr.mxu0 0.0
    %7974 = vmatpush1.msra.mxu0 %v7837
    %7975 = vmatprep.subr.mxu0 0.0
    %7976 = vmatpush1.msra.mxu0 %v7838
    %7977 = vmatprep.subr.mxu0 0.0
    %7978 = vmatpush1.msra.mxu0 %v7839
    %7979 = vmatprep.subr.mxu0 0.0
    %7980 = vmatpush1.msra.mxu0 %v7840
    %7981 = vmatprep.subr.mxu0 0.0
    %7982 = vmatpush1.msra.mxu0 0.0
    %7983 = vmatprep.subr.mxu0 0.0
    %7984 = vmatpush1.msra.mxu0 0.0
    %7985 = vmatprep.subr.mxu0 0.0
    %7986 = vmatpush1.msra.mxu0 0.0
    %7987 = vmatprep.subr.mxu0 0.0
    %7988 = vmatpush1.msra.mxu0 0.0
    %7989 = vmatprep.subr.mxu0 0.0
    %7990 = vmatpush1.msra.mxu0 0.0
    %7991 = vmatprep.subr.mxu0 0.0
    %7992 = vmatpush1.msra.mxu0 0.0
    %7993 = vmatprep.subr.mxu0 0.0
    %7994 = vmatpush1.msra.mxu0 0.0
    %7995 = vmatprep.subr.mxu0 0.0
    %7996 = vmatpush1.msra.mxu0 0.0
    %7997 = vmatprep.subr.mxu0 0.0
    %7998 = vmatpush1.msra.mxu0 0.0
    %7999 = vmatprep.subr.mxu0 0.0
    %8000 = vmatpush1.msra.mxu0 0.0
    %8001 = vmatprep.subr.mxu0 0.0
    %8002 = vmatpush1.msra.mxu0 0.0
    %8003 = vmatprep.subr.mxu0 0.0
    %8004 = vmatpush1.msra.mxu0 0.0
    %8005 = vmatprep.subr.mxu0 0.0
    %8006 = vmatpush1.msra.mxu0 0.0
    %8007 = vmatprep.subr.mxu0 0.0
    %8008 = vmatpush1.msra.mxu0 0.0
    %8009 = vmatprep.subr.mxu0 0.0
    %8010 = vmatpush1.msra.mxu0 0.0
    %8011 = vmatprep.subr.mxu0 0.0
    %8012 = vmatpush1.msra.mxu0 0.0
    %8013 = vmatprep.subr.mxu0 0.0
    %8014 = vmatpush1.msra.mxu0 0.0
    %8015 = vmatprep.subr.mxu0 0.0
    %8016 = vmatpush1.msra.mxu0 0.0
    %8017 = vmatprep.subr.mxu0 0.0
    %8018 = vmatpush1.msra.mxu0 0.0
    %8019 = vmatprep.subr.mxu0 0.0
    %8020 = vmatpush1.msra.mxu0 0.0
    %8021 = vmatprep.subr.mxu0 0.0
    %8022 = vmatpush1.msra.mxu0 0.0
    %8023 = vmatprep.subr.mxu0 0.0
    %8024 = vmatpush1.msra.mxu0 0.0
    %8025 = vmatprep.subr.mxu0 0.0
    %8026 = vmatpush1.msra.mxu0 0.0
    %8027 = vmatprep.subr.mxu0 0.0
    %8028 = vmatpush1.msra.mxu0 0.0
    %8029 = vmatprep.subr.mxu0 0.0
    %8030 = vmatpush1.msra.mxu0 0.0
    %8031 = vmatprep.subr.mxu0 0.0
    %8032 = vmatpush1.msra.mxu0 0.0
    %8033 = vmatprep.subr.mxu0 0.0
    %8034 = vmatpush1.msra.mxu0 0.0
    %8035 = vmatprep.subr.mxu0 0.0
    %8036 = vmatpush1.msra.mxu0 0.0
    %8037 = vmatprep.mubr.f32.mxu0 0.0
    %8038 = vmatmul.mubr.f32.gmra.mrb[0].mxu0 %v7901
    %v8039 = vpop.f32.mrb[0].mxu0
    %v8040 = vadd.f32 0.0, %v8039
    %v8041 = vpop.f32.mrb[0].mxu0
    %8042 = vdwg.mxu0
    %8043 = vmatprep.subr.mxu0 0.0
    %8044 = vmatpush1.msra.mxu0 %v7841
    %8045 = vmatprep.subr.mxu0 0.0
    %8046 = vmatpush1.msra.mxu0 %v7842
    %8047 = vmatprep.subr.mxu0 0.0
    %8048 = vmatpush1.msra.mxu0 %v7843
    %8049 = vmatprep.subr.mxu0 0.0
    %8050 = vmatpush1.msra.mxu0 %v7844
    %8051 = vmatprep.subr.mxu0 0.0
    %8052 = vmatpush1.msra.mxu0 0.0
    %8053 = vmatprep.subr.mxu0 0.0
    %8054 = vmatpush1.msra.mxu0 0.0
    %8055 = vmatprep.subr.mxu0 0.0
    %8056 = vmatpush1.msra.mxu0 0.0
    %8057 = vmatprep.subr.mxu0 0.0
    %8058 = vmatpush1.msra.mxu0 0.0
    %8059 = vmatprep.subr.mxu0 0.0
    %8060 = vmatpush1.msra.mxu0 0.0
    %8061 = vmatprep.subr.mxu0 0.0
    %8062 = vmatpush1.msra.mxu0 0.0
    %8063 = vmatprep.subr.mxu0 0.0
    %8064 = vmatpush1.msra.mxu0 0.0
    %8065 = vmatprep.subr.mxu0 0.0
    %8066 = vmatpush1.msra.mxu0 0.0
    %8067 = vmatprep.subr.mxu0 0.0
    %8068 = vmatpush1.msra.mxu0 0.0
    %8069 = vmatprep.subr.mxu0 0.0
    %8070 = vmatpush1.msra.mxu0 0.0
    %8071 = vmatprep.subr.mxu0 0.0
    %8072 = vmatpush1.msra.mxu0 0.0
    %8073 = vmatprep.subr.mxu0 0.0
    %8074 = vmatpush1.msra.mxu0 0.0
    %8075 = vmatprep.subr.mxu0 0.0
    %8076 = vmatpush1.msra.mxu0 0.0
    %8077 = vmatprep.subr.mxu0 0.0
    %8078 = vmatpush1.msra.mxu0 0.0
    %8079 = vmatprep.subr.mxu0 0.0
    %8080 = vmatpush1.msra.mxu0 0.0
    %8081 = vmatprep.subr.mxu0 0.0
    %8082 = vmatpush1.msra.mxu0 0.0
    %8083 = vmatprep.subr.mxu0 0.0
    %8084 = vmatpush1.msra.mxu0 0.0
    %8085 = vmatprep.subr.mxu0 0.0
    %8086 = vmatpush1.msra.mxu0 0.0
    %8087 = vmatprep.subr.mxu0 0.0
    %8088 = vmatpush1.msra.mxu0 0.0
    %8089 = vmatprep.subr.mxu0 0.0
    %8090 = vmatpush1.msra.mxu0 0.0
    %8091 = vmatprep.subr.mxu0 0.0
    %8092 = vmatpush1.msra.mxu0 0.0
    %8093 = vmatprep.subr.mxu0 0.0
    %8094 = vmatpush1.msra.mxu0 0.0
    %8095 = vmatprep.subr.mxu0 0.0
    %8096 = vmatpush1.msra.mxu0 0.0
    %8097 = vmatprep.subr.mxu0 0.0
    %8098 = vmatpush1.msra.mxu0 0.0
    %8099 = vmatprep.subr.mxu0 0.0
    %8100 = vmatpush1.msra.mxu0 0.0
    %8101 = vmatprep.subr.mxu0 0.0
    %8102 = vmatpush1.msra.mxu0 0.0
    %8103 = vmatprep.subr.mxu0 0.0
    %8104 = vmatpush1.msra.mxu0 0.0
    %8105 = vmatprep.subr.mxu0 0.0
    %8106 = vmatpush1.msra.mxu0 0.0
    %8107 = vmatprep.mubr.f32.mxu0 0.0
    %8108 = vmatmul.mubr.f32.gmra.mrb[0].mxu0 %v7901
    %v8109 = vpop.f32.mrb[0].mxu0
    %v8110 = vadd.f32 0.0, %v8109
    %v8111 = vpop.f32.mrb[0].mxu0
    %8112 = vdwg.mxu0
    %8113 = vmatprep.subr.mxu0 0.0
    %8114 = vmatpush1.msra.mxu0 %v7845
    %8115 = vmatprep.subr.mxu0 0.0
    %8116 = vmatpush1.msra.mxu0 %v7846
    %8117 = vmatprep.subr.mxu0 0.0
    %8118 = vmatpush1.msra.mxu0 %v7847
    %8119 = vmatprep.subr.mxu0 0.0
    %8120 = vmatpush1.msra.mxu0 %v7848
    %8121 = vmatprep.subr.mxu0 0.0
    %8122 = vmatpush1.msra.mxu0 0.0
    %8123 = vmatprep.subr.mxu0 0.0
    %8124 = vmatpush1.msra.mxu0 0.0
    %8125 = vmatprep.subr.mxu0 0.0
    %8126 = vmatpush1.msra.mxu0 0.0
    %8127 = vmatprep.subr.mxu0 0.0
    %8128 = vmatpush1.msra.mxu0 0.0
    %8129 = vmatprep.subr.mxu0 0.0
    %8130 = vmatpush1.msra.mxu0 0.0
    %8131 = vmatprep.subr.mxu0 0.0
    %8132 = vmatpush1.msra.mxu0 0.0
    %8133 = vmatprep.subr.mxu0 0.0
    %8134 = vmatpush1.msra.mxu0 0.0
    %8135 = vmatprep.subr.mxu0 0.0
    %8136 = vmatpush1.msra.mxu0 0.0
    %8137 = vmatprep.subr.mxu0 0.0
    %8138 = vmatpush1.msra.mxu0 0.0
    %8139 = vmatprep.subr.mxu0 0.0
    %8140 = vmatpush1.msra.mxu0 0.0
    %8141 = vmatprep.subr.mxu0 0.0
    %8142 = vmatpush1.msra.mxu0 0.0
    %8143 = vmatprep.subr.mxu0 0.0
    %8144 = vmatpush1.msra.mxu0 0.0
    %8145 = vmatprep.subr.mxu0 0.0
    %8146 = vmatpush1.msra.mxu0 0.0
    %8147 = vmatprep.subr.mxu0 0.0
    %8148 = vmatpush1.msra.mxu0 0.0
    %8149 = vmatprep.subr.mxu0 0.0
    %8150 = vmatpush1.msra.mxu0 0.0
    %8151 = vmatprep.subr.mxu0 0.0
    %8152 = vmatpush1.msra.mxu0 0.0
    %8153 = vmatprep.subr.mxu0 0.0
    %8154 = vmatpush1.msra.mxu0 0.0
    %8155 = vmatprep.subr.mxu0 0.0
    %8156 = vmatpush1.msra.mxu0 0.0
    %8157 = vmatprep.subr.mxu0 0.0
    %8158 = vmatpush1.msra.mxu0 0.0
    %8159 = vmatprep.subr.mxu0 0.0
    %8160 = vmatpush1.msra.mxu0 0.0
    %8161 = vmatprep.subr.mxu0 0.0
    %8162 = vmatpush1.msra.mxu0 0.0
    %8163 = vmatprep.subr.mxu0 0.0
    %8164 = vmatpush1.msra.mxu0 0.0
    %8165 = vmatprep.subr.mxu0 0.0
    %8166 = vmatpush1.msra.mxu0 0.0
    %8167 = vmatprep.subr.mxu0 0.0
    %8168 = vmatpush1.msra.mxu0 0.0
    %8169 = vmatprep.subr.mxu0 0.0
    %8170 = vmatpush1.msra.mxu0 0.0
    %8171 = vmatprep.subr.mxu0 0.0
    %8172 = vmatpush1.msra.mxu0 0.0
    %8173 = vmatprep.subr.mxu0 0.0
    %8174 = vmatpush1.msra.mxu0 0.0
    %8175 = vmatprep.subr.mxu0 0.0
    %8176 = vmatpush1.msra.mxu0 0.0
    %8177 = vmatprep.mubr.f32.mxu0 0.0
    %8178 = vmatmul.mubr.f32.gmra.mrb[0].mxu0 %v7901
    %v8179 = vpop.f32.mrb[0].mxu0
    %v8180 = vadd.f32 0.0, %v8179
    %v8181 = vpop.f32.mrb[0].mxu0
    %8182 = vdwg.mxu0
    %v8184 = vsel %vm166, %v4098, 0
    %8186 = vmatprep.subr.mxu0 0.0
    %8187 = vmatpush1.msra.mxu0 %v7850
    %8188 = vmatprep.subr.mxu0 0.0
    %8189 = vmatpush1.msra.mxu0 %v7851
    %8190 = vmatprep.subr.mxu0 0.0
    %8191 = vmatpush1.msra.mxu0 %v7852
    %8192 = vmatprep.subr.mxu0 0.0
    %8193 = vmatpush1.msra.mxu0 %v7853
    %8194 = vmatprep.subr.mxu0 0.0
    %8195 = vmatpush1.msra.mxu0 0.0
    %8196 = vmatprep.subr.mxu0 0.0
    %8197 = vmatpush1.msra.mxu0 0.0
    %8198 = vmatprep.subr.mxu0 0.0
    %8199 = vmatpush1.msra.mxu0 0.0
    %8200 = vmatprep.subr.mxu0 0.0
    %8201 = vmatpush1.msra.mxu0 0.0
    %8202 = vmatprep.subr.mxu0 0.0
    %8203 = vmatpush1.msra.mxu0 0.0
    %8204 = vmatprep.subr.mxu0 0.0
    %8205 = vmatpush1.msra.mxu0 0.0
    %8206 = vmatprep.subr.mxu0 0.0
    %8207 = vmatpush1.msra.mxu0 0.0
    %8208 = vmatprep.subr.mxu0 0.0
    %8209 = vmatpush1.msra.mxu0 0.0
    %8210 = vmatprep.subr.mxu0 0.0
    %8211 = vmatpush1.msra.mxu0 0.0
    %8212 = vmatprep.subr.mxu0 0.0
    %8213 = vmatpush1.msra.mxu0 0.0
    %8214 = vmatprep.subr.mxu0 0.0
    %8215 = vmatpush1.msra.mxu0 0.0
    %8216 = vmatprep.subr.mxu0 0.0
    %8217 = vmatpush1.msra.mxu0 0.0
    %8218 = vmatprep.subr.mxu0 0.0
    %8219 = vmatpush1.msra.mxu0 0.0
    %8220 = vmatprep.subr.mxu0 0.0
    %8221 = vmatpush1.msra.mxu0 0.0
    %8222 = vmatprep.subr.mxu0 0.0
    %8223 = vmatpush1.msra.mxu0 0.0
    %8224 = vmatprep.subr.mxu0 0.0
    %8225 = vmatpush1.msra.mxu0 0.0
    %8226 = vmatprep.subr.mxu0 0.0
    %8227 = vmatpush1.msra.mxu0 0.0
    %8228 = vmatprep.subr.mxu0 0.0
    %8229 = vmatpush1.msra.mxu0 0.0
    %8230 = vmatprep.subr.mxu0 0.0
    %8231 = vmatpush1.msra.mxu0 0.0
    %8232 = vmatprep.subr.mxu0 0.0
    %8233 = vmatpush1.msra.mxu0 0.0
    %8234 = vmatprep.subr.mxu0 0.0
    %8235 = vmatpush1.msra.mxu0 0.0
    %8236 = vmatprep.subr.mxu0 0.0
    %8237 = vmatpush1.msra.mxu0 0.0
    %8238 = vmatprep.subr.mxu0 0.0
    %8239 = vmatpush1.msra.mxu0 0.0
    %8240 = vmatprep.subr.mxu0 0.0
    %8241 = vmatpush1.msra.mxu0 0.0
    %8242 = vmatprep.subr.mxu0 0.0
    %8243 = vmatpush1.msra.mxu0 0.0
    %8244 = vmatprep.subr.mxu0 0.0
    %8245 = vmatpush1.msra.mxu0 0.0
    %8246 = vmatprep.subr.mxu0 0.0
    %8247 = vmatpush1.msra.mxu0 0.0
    %8248 = vmatprep.subr.mxu0 0.0
    %8249 = vmatpush1.msra.mxu0 0.0
    %8250 = vmatprep.mubr.f32.mxu0 0.0
    %8251 = vmatmul.mubr.f32.gmra.mrb[0].mxu0 %v8184
    %v8252 = vpop.f32.mrb[0].mxu0
    %v8253 = vadd.f32 0.0, %v8252
    %v8254 = vpop.f32.mrb[0].mxu0
    %8255 = vdwg.mxu0
    %8256 = vmatprep.subr.mxu0 0.0
    %8257 = vmatpush1.msra.mxu0 %v7854
    %8258 = vmatprep.subr.mxu0 0.0
    %8259 = vmatpush1.msra.mxu0 %v7855
    %8260 = vmatprep.subr.mxu0 0.0
    %8261 = vmatpush1.msra.mxu0 %v7856
    %8262 = vmatprep.subr.mxu0 0.0
    %8263 = vmatpush1.msra.mxu0 %v7857
    %8264 = vmatprep.subr.mxu0 0.0
    %8265 = vmatpush1.msra.mxu0 0.0
    %8266 = vmatprep.subr.mxu0 0.0
    %8267 = vmatpush1.msra.mxu0 0.0
    %8268 = vmatprep.subr.mxu0 0.0
    %8269 = vmatpush1.msra.mxu0 0.0
    %8270 = vmatprep.subr.mxu0 0.0
    %8271 = vmatpush1.msra.mxu0 0.0
    %8272 = vmatprep.subr.mxu0 0.0
    %8273 = vmatpush1.msra.mxu0 0.0
    %8274 = vmatprep.subr.mxu0 0.0
    %8275 = vmatpush1.msra.mxu0 0.0
    %8276 = vmatprep.subr.mxu0 0.0
    %8277 = vmatpush1.msra.mxu0 0.0
    %8278 = vmatprep.subr.mxu0 0.0
    %8279 = vmatpush1.msra.mxu0 0.0
    %8280 = vmatprep.subr.mxu0 0.0
    %8281 = vmatpush1.msra.mxu0 0.0
    %8282 = vmatprep.subr.mxu0 0.0
    %8283 = vmatpush1.msra.mxu0 0.0
    %8284 = vmatprep.subr.mxu0 0.0
    %8285 = vmatpush1.msra.mxu0 0.0
    %8286 = vmatprep.subr.mxu0 0.0
    %8287 = vmatpush1.msra.mxu0 0.0
    %8288 = vmatprep.subr.mxu0 0.0
    %8289 = vmatpush1.msra.mxu0 0.0
    %8290 = vmatprep.subr.mxu0 0.0
    %8291 = vmatpush1.msra.mxu0 0.0
    %8292 = vmatprep.subr.mxu0 0.0
    %8293 = vmatpush1.msra.mxu0 0.0
    %8294 = vmatprep.subr.mxu0 0.0
    %8295 = vmatpush1.msra.mxu0 0.0
    %8296 = vmatprep.subr.mxu0 0.0
    %8297 = vmatpush1.msra.mxu0 0.0
    %8298 = vmatprep.subr.mxu0 0.0
    %8299 = vmatpush1.msra.mxu0 0.0
    %8300 = vmatprep.subr.mxu0 0.0
    %8301 = vmatpush1.msra.mxu0 0.0
    %8302 = vmatprep.subr.mxu0 0.0
    %8303 = vmatpush1.msra.mxu0 0.0
    %8304 = vmatprep.subr.mxu0 0.0
    %8305 = vmatpush1.msra.mxu0 0.0
    %8306 = vmatprep.subr.mxu0 0.0
    %8307 = vmatpush1.msra.mxu0 0.0
    %8308 = vmatprep.subr.mxu0 0.0
    %8309 = vmatpush1.msra.mxu0 0.0
    %8310 = vmatprep.subr.mxu0 0.0
    %8311 = vmatpush1.msra.mxu0 0.0
    %8312 = vmatprep.subr.mxu0 0.0
    %8313 = vmatpush1.msra.mxu0 0.0
    %8314 = vmatprep.subr.mxu0 0.0
    %8315 = vmatpush1.msra.mxu0 0.0
    %8316 = vmatprep.subr.mxu0 0.0
    %8317 = vmatpush1.msra.mxu0 0.0
    %8318 = vmatprep.subr.mxu0 0.0
    %8319 = vmatpush1.msra.mxu0 0.0
    %8320 = vmatprep.mubr.f32.mxu0 0.0
    %8321 = vmatmul.mubr.f32.gmra.mrb[0].mxu0 %v8184
    %v8322 = vpop.f32.mrb[0].mxu0
    %v8323 = vadd.f32 0.0, %v8322
    %v8324 = vpop.f32.mrb[0].mxu0
    %8325 = vdwg.mxu0
    %8326 = vmatprep.subr.mxu0 0.0
    %8327 = vmatpush1.msra.mxu0 %v7858
    %8328 = vmatprep.subr.mxu0 0.0
    %8329 = vmatpush1.msra.mxu0 %v7859
    %8330 = vmatprep.subr.mxu0 0.0
    %8331 = vmatpush1.msra.mxu0 %v7860
    %8332 = vmatprep.subr.mxu0 0.0
    %8333 = vmatpush1.msra.mxu0 %v7861
    %8334 = vmatprep.subr.mxu0 0.0
    %8335 = vmatpush1.msra.mxu0 0.0
    %8336 = vmatprep.subr.mxu0 0.0
    %8337 = vmatpush1.msra.mxu0 0.0
    %8338 = vmatprep.subr.mxu0 0.0
    %8339 = vmatpush1.msra.mxu0 0.0
    %8340 = vmatprep.subr.mxu0 0.0
    %8341 = vmatpush1.msra.mxu0 0.0
    %8342 = vmatprep.subr.mxu0 0.0
    %8343 = vmatpush1.msra.mxu0 0.0
    %8344 = vmatprep.subr.mxu0 0.0
    %8345 = vmatpush1.msra.mxu0 0.0
    %8346 = vmatprep.subr.mxu0 0.0
    %8347 = vmatpush1.msra.mxu0 0.0
    %8348 = vmatprep.subr.mxu0 0.0
    %8349 = vmatpush1.msra.mxu0 0.0
    %8350 = vmatprep.subr.mxu0 0.0
    %8351 = vmatpush1.msra.mxu0 0.0
    %8352 = vmatprep.subr.mxu0 0.0
    %8353 = vmatpush1.msra.mxu0 0.0
    %8354 = vmatprep.subr.mxu0 0.0
    %8355 = vmatpush1.msra.mxu0 0.0
    %8356 = vmatprep.subr.mxu0 0.0
    %8357 = vmatpush1.msra.mxu0 0.0
    %8358 = vmatprep.subr.mxu0 0.0
    %8359 = vmatpush1.msra.mxu0 0.0
    %8360 = vmatprep.subr.mxu0 0.0
    %8361 = vmatpush1.msra.mxu0 0.0
    %8362 = vmatprep.subr.mxu0 0.0
    %8363 = vmatpush1.msra.mxu0 0.0
    %8364 = vmatprep.subr.mxu0 0.0
    %8365 = vmatpush1.msra.mxu0 0.0
    %8366 = vmatprep.subr.mxu0 0.0
    %8367 = vmatpush1.msra.mxu0 0.0
    %8368 = vmatprep.subr.mxu0 0.0
    %8369 = vmatpush1.msra.mxu0 0.0
    %8370 = vmatprep.subr.mxu0 0.0
    %8371 = vmatpush1.msra.mxu0 0.0
    %8372 = vmatprep.subr.mxu0 0.0
    %8373 = vmatpush1.msra.mxu0 0.0
    %8374 = vmatprep.subr.mxu0 0.0
    %8375 = vmatpush1.msra.mxu0 0.0
    %8376 = vmatprep.subr.mxu0 0.0
    %8377 = vmatpush1.msra.mxu0 0.0
    %8378 = vmatprep.subr.mxu0 0.0
    %8379 = vmatpush1.msra.mxu0 0.0
    %8380 = vmatprep.subr.mxu0 0.0
    %8381 = vmatpush1.msra.mxu0 0.0
    %8382 = vmatprep.subr.mxu0 0.0
    %8383 = vmatpush1.msra.mxu0 0.0
    %8384 = vmatprep.subr.mxu0 0.0
    %8385 = vmatpush1.msra.mxu0 0.0
    %8386 = vmatprep.subr.mxu0 0.0
    %8387 = vmatpush1.msra.mxu0 0.0
    %8388 = vmatprep.subr.mxu0 0.0
    %8389 = vmatpush1.msra.mxu0 0.0
    %8390 = vmatprep.mubr.f32.mxu0 0.0
    %8391 = vmatmul.mubr.f32.gmra.mrb[0].mxu0 %v8184
    %v8392 = vpop.f32.mrb[0].mxu0
    %v8393 = vadd.f32 0.0, %v8392
    %v8394 = vpop.f32.mrb[0].mxu0
    %8395 = vdwg.mxu0
    %8396 = vmatprep.subr.mxu0 0.0
    %8397 = vmatpush1.msra.mxu0 %v7862
    %8398 = vmatprep.subr.mxu0 0.0
    %8399 = vmatpush1.msra.mxu0 %v7863
    %8400 = vmatprep.subr.mxu0 0.0
    %8401 = vmatpush1.msra.mxu0 %v7864
    %8402 = vmatprep.subr.mxu0 0.0
    %8403 = vmatpush1.msra.mxu0 %v7865
    %8404 = vmatprep.subr.mxu0 0.0
    %8405 = vmatpush1.msra.mxu0 0.0
    %8406 = vmatprep.subr.mxu0 0.0
    %8407 = vmatpush1.msra.mxu0 0.0
    %8408 = vmatprep.subr.mxu0 0.0
    %8409 = vmatpush1.msra.mxu0 0.0
    %8410 = vmatprep.subr.mxu0 0.0
    %8411 = vmatpush1.msra.mxu0 0.0
    %8412 = vmatprep.subr.mxu0 0.0
    %8413 = vmatpush1.msra.mxu0 0.0
    %8414 = vmatprep.subr.mxu0 0.0
    %8415 = vmatpush1.msra.mxu0 0.0
    %8416 = vmatprep.subr.mxu0 0.0
    %8417 = vmatpush1.msra.mxu0 0.0
    %8418 = vmatprep.subr.mxu0 0.0
    %8419 = vmatpush1.msra.mxu0 0.0
    %8420 = vmatprep.subr.mxu0 0.0
    %8421 = vmatpush1.msra.mxu0 0.0
    %8422 = vmatprep.subr.mxu0 0.0
    %8423 = vmatpush1.msra.mxu0 0.0
    %8424 = vmatprep.subr.mxu0 0.0
    %8425 = vmatpush1.msra.mxu0 0.0
    %8426 = vmatprep.subr.mxu0 0.0
    %8427 = vmatpush1.msra.mxu0 0.0
    %8428 = vmatprep.subr.mxu0 0.0
    %8429 = vmatpush1.msra.mxu0 0.0
    %8430 = vmatprep.subr.mxu0 0.0
    %8431 = vmatpush1.msra.mxu0 0.0
    %8432 = vmatprep.subr.mxu0 0.0
    %8433 = vmatpush1.msra.mxu0 0.0
    %8434 = vmatprep.subr.mxu0 0.0
    %8435 = vmatpush1.msra.mxu0 0.0
    %8436 = vmatprep.subr.mxu0 0.0
    %8437 = vmatpush1.msra.mxu0 0.0
    %8438 = vmatprep.subr.mxu0 0.0
    %8439 = vmatpush1.msra.mxu0 0.0
    %8440 = vmatprep.subr.mxu0 0.0
    %8441 = vmatpush1.msra.mxu0 0.0
    %8442 = vmatprep.subr.mxu0 0.0
    %8443 = vmatpush1.msra.mxu0 0.0
    %8444 = vmatprep.subr.mxu0 0.0
    %8445 = vmatpush1.msra.mxu0 0.0
    %8446 = vmatprep.subr.mxu0 0.0
    %8447 = vmatpush1.msra.mxu0 0.0
    %8448 = vmatprep.subr.mxu0 0.0
    %8449 = vmatpush1.msra.mxu0 0.0
    %8450 = vmatprep.subr.mxu0 0.0
    %8451 = vmatpush1.msra.mxu0 0.0
    %8452 = vmatprep.subr.mxu0 0.0
    %8453 = vmatpush1.msra.mxu0 0.0
    %8454 = vmatprep.subr.mxu0 0.0
    %8455 = vmatpush1.msra.mxu0 0.0
    %8456 = vmatprep.subr.mxu0 0.0
    %8457 = vmatpush1.msra.mxu0 0.0
    %8458 = vmatprep.subr.mxu0 0.0
    %8459 = vmatpush1.msra.mxu0 0.0
    %8460 = vmatprep.mubr.f32.mxu0 0.0
    %8461 = vmatmul.mubr.f32.gmra.mrb[0].mxu0 %v8184
    %v8462 = vpop.f32.mrb[0].mxu0
    %v8463 = vadd.f32 0.0, %v8462
    %v8464 = vpop.f32.mrb[0].mxu0
    %8465 = vdwg.mxu0
    %8466 = vmatprep.subr.mxu0 0.0
    %8467 = vmatpush1.msra.mxu0 %v7867
    %8468 = vmatprep.subr.mxu0 0.0
    %8469 = vmatpush1.msra.mxu0 %v7868
    %8470 = vmatprep.subr.mxu0 0.0
    %8471 = vmatpush1.msra.mxu0 %v7869
    %8472 = vmatprep.subr.mxu0 0.0
    %8473 = vmatpush1.msra.mxu0 %v7870
    %8474 = vmatprep.subr.mxu0 0.0
    %8475 = vmatpush1.msra.mxu0 0.0
    %8476 = vmatprep.subr.mxu0 0.0
    %8477 = vmatpush1.msra.mxu0 0.0
    %8478 = vmatprep.subr.mxu0 0.0
    %8479 = vmatpush1.msra.mxu0 0.0
    %8480 = vmatprep.subr.mxu0 0.0
    %8481 = vmatpush1.msra.mxu0 0.0
    %8482 = vmatprep.subr.mxu0 0.0
    %8483 = vmatpush1.msra.mxu0 0.0
    %8484 = vmatprep.subr.mxu0 0.0
    %8485 = vmatpush1.msra.mxu0 0.0
    %8486 = vmatprep.subr.mxu0 0.0
    %8487 = vmatpush1.msra.mxu0 0.0
    %8488 = vmatprep.subr.mxu0 0.0
    %8489 = vmatpush1.msra.mxu0 0.0
    %8490 = vmatprep.subr.mxu0 0.0
    %8491 = vmatpush1.msra.mxu0 0.0
    %8492 = vmatprep.subr.mxu0 0.0
    %8493 = vmatpush1.msra.mxu0 0.0
    %8494 = vmatprep.subr.mxu0 0.0
    %8495 = vmatpush1.msra.mxu0 0.0
    %8496 = vmatprep.subr.mxu0 0.0
    %8497 = vmatpush1.msra.mxu0 0.0
    %8498 = vmatprep.subr.mxu0 0.0
    %8499 = vmatpush1.msra.mxu0 0.0
    %8500 = vmatprep.subr.mxu0 0.0
    %8501 = vmatpush1.msra.mxu0 0.0
    %8502 = vmatprep.subr.mxu0 0.0
    %8503 = vmatpush1.msra.mxu0 0.0
    %8504 = vmatprep.subr.mxu0 0.0
    %8505 = vmatpush1.msra.mxu0 0.0
    %8506 = vmatprep.subr.mxu0 0.0
    %8507 = vmatpush1.msra.mxu0 0.0
    %8508 = vmatprep.subr.mxu0 0.0
    %8509 = vmatpush1.msra.mxu0 0.0
    %8510 = vmatprep.subr.mxu0 0.0
    %8511 = vmatpush1.msra.mxu0 0.0
    %8512 = vmatprep.subr.mxu0 0.0
    %8513 = vmatpush1.msra.mxu0 0.0
    %8514 = vmatprep.subr.mxu0 0.0
    %8515 = vmatpush1.msra.mxu0 0.0
    %8516 = vmatprep.subr.mxu0 0.0
    %8517 = vmatpush1.msra.mxu0 0.0
    %8518 = vmatprep.subr.mxu0 0.0
    %8519 = vmatpush1.msra.mxu0 0.0
    %8520 = vmatprep.subr.mxu0 0.0
    %8521 = vmatpush1.msra.mxu0 0.0
    %8522 = vmatprep.subr.mxu0 0.0
    %8523 = vmatpush1.msra.mxu0 0.0
    %8524 = vmatprep.subr.mxu0 0.0
    %8525 = vmatpush1.msra.mxu0 0.0
    %8526 = vmatprep.subr.mxu0 0.0
    %8527 = vmatpush1.msra.mxu0 0.0
    %8528 = vmatprep.subr.mxu0 0.0
    %8529 = vmatpush1.msra.mxu0 0.0
    %8530 = vmatprep.mubr.f32.mxu0 0.0
    %8531 = vmatmul.mubr.f32.gmra.mrb[0].mxu0 %v8184
    %v8532 = vpop.f32.mrb[0].mxu0
    %v8533 = vadd.f32 0.0, %v8532
    %v8534 = vpop.f32.mrb[0].mxu0
    %8535 = vdwg.mxu0
    %8536 = vmatprep.subr.mxu0 0.0
    %8537 = vmatpush1.msra.mxu0 %v7871
    %8538 = vmatprep.subr.mxu0 0.0
    %8539 = vmatpush1.msra.mxu0 %v7872
    %8540 = vmatprep.subr.mxu0 0.0
    %8541 = vmatpush1.msra.mxu0 %v7873
    %8542 = vmatprep.subr.mxu0 0.0
    %8543 = vmatpush1.msra.mxu0 %v7874
    %8544 = vmatprep.subr.mxu0 0.0
    %8545 = vmatpush1.msra.mxu0 0.0
    %8546 = vmatprep.subr.mxu0 0.0
    %8547 = vmatpush1.msra.mxu0 0.0
    %8548 = vmatprep.subr.mxu0 0.0
    %8549 = vmatpush1.msra.mxu0 0.0
    %8550 = vmatprep.subr.mxu0 0.0
    %8551 = vmatpush1.msra.mxu0 0.0
    %8552 = vmatprep.subr.mxu0 0.0
    %8553 = vmatpush1.msra.mxu0 0.0
    %8554 = vmatprep.subr.mxu0 0.0
    %8555 = vmatpush1.msra.mxu0 0.0
    %8556 = vmatprep.subr.mxu0 0.0
    %8557 = vmatpush1.msra.mxu0 0.0
    %8558 = vmatprep.subr.mxu0 0.0
    %8559 = vmatpush1.msra.mxu0 0.0
    %8560 = vmatprep.subr.mxu0 0.0
    %8561 = vmatpush1.msra.mxu0 0.0
    %8562 = vmatprep.subr.mxu0 0.0
    %8563 = vmatpush1.msra.mxu0 0.0
    %8564 = vmatprep.subr.mxu0 0.0
    %8565 = vmatpush1.msra.mxu0 0.0
    %8566 = vmatprep.subr.mxu0 0.0
    %8567 = vmatpush1.msra.mxu0 0.0
    %8568 = vmatprep.subr.mxu0 0.0
    %8569 = vmatpush1.msra.mxu0 0.0
    %8570 = vmatprep.subr.mxu0 0.0
    %8571 = vmatpush1.msra.mxu0 0.0
    %8572 = vmatprep.subr.mxu0 0.0
    %8573 = vmatpush1.msra.mxu0 0.0
    %8574 = vmatprep.subr.mxu0 0.0
    %8575 = vmatpush1.msra.mxu0 0.0
    %8576 = vmatprep.subr.mxu0 0.0
    %8577 = vmatpush1.msra.mxu0 0.0
    %8578 = vmatprep.subr.mxu0 0.0
    %8579 = vmatpush1.msra.mxu0 0.0
    %8580 = vmatprep.subr.mxu0 0.0
    %8581 = vmatpush1.msra.mxu0 0.0
    %8582 = vmatprep.subr.mxu0 0.0
    %8583 = vmatpush1.msra.mxu0 0.0
    %8584 = vmatprep.subr.mxu0 0.0
    %8585 = vmatpush1.msra.mxu0 0.0
    %8586 = vmatprep.subr.mxu0 0.0
    %8587 = vmatpush1.msra.mxu0 0.0
    %8588 = vmatprep.subr.mxu0 0.0
    %8589 = vmatpush1.msra.mxu0 0.0
    %8590 = vmatprep.subr.mxu0 0.0
    %8591 = vmatpush1.msra.mxu0 0.0
    %8592 = vmatprep.subr.mxu0 0.0
    %8593 = vmatpush1.msra.mxu0 0.0
    %8594 = vmatprep.subr.mxu0 0.0
    %8595 = vmatpush1.msra.mxu0 0.0
    %8596 = vmatprep.subr.mxu0 0.0
    %8597 = vmatpush1.msra.mxu0 0.0
    %8598 = vmatprep.subr.mxu0 0.0
    %8599 = vmatpush1.msra.mxu0 0.0
    %8600 = vmatprep.mubr.f32.mxu0 0.0
    %8601 = vmatmul.mubr.f32.gmra.mrb[0].mxu0 %v8184
    %v8602 = vpop.f32.mrb[0].mxu0
    %v8603 = vadd.f32 0.0, %v8602
    %v8604 = vpop.f32.mrb[0].mxu0
    %8605 = vdwg.mxu0
    %8606 = vmatprep.subr.mxu0 0.0
    %8607 = vmatpush1.msra.mxu0 %v7875
    %8608 = vmatprep.subr.mxu0 0.0
    %8609 = vmatpush1.msra.mxu0 %v7876
    %8610 = vmatprep.subr.mxu0 0.0
    %8611 = vmatpush1.msra.mxu0 %v7877
    %8612 = vmatprep.subr.mxu0 0.0
    %8613 = vmatpush1.msra.mxu0 %v7878
    %8614 = vmatprep.subr.mxu0 0.0
    %8615 = vmatpush1.msra.mxu0 0.0
    %8616 = vmatprep.subr.mxu0 0.0
    %8617 = vmatpush1.msra.mxu0 0.0
    %8618 = vmatprep.subr.mxu0 0.0
    %8619 = vmatpush1.msra.mxu0 0.0
    %8620 = vmatprep.subr.mxu0 0.0
    %8621 = vmatpush1.msra.mxu0 0.0
    %8622 = vmatprep.subr.mxu0 0.0
    %8623 = vmatpush1.msra.mxu0 0.0
    %8624 = vmatprep.subr.mxu0 0.0
    %8625 = vmatpush1.msra.mxu0 0.0
    %8626 = vmatprep.subr.mxu0 0.0
    %8627 = vmatpush1.msra.mxu0 0.0
    %8628 = vmatprep.subr.mxu0 0.0
    %8629 = vmatpush1.msra.mxu0 0.0
    %8630 = vmatprep.subr.mxu0 0.0
    %8631 = vmatpush1.msra.mxu0 0.0
    %8632 = vmatprep.subr.mxu0 0.0
    %8633 = vmatpush1.msra.mxu0 0.0
    %8634 = vmatprep.subr.mxu0 0.0
    %8635 = vmatpush1.msra.mxu0 0.0
    %8636 = vmatprep.subr.mxu0 0.0
    %8637 = vmatpush1.msra.mxu0 0.0
    %8638 = vmatprep.subr.mxu0 0.0
    %8639 = vmatpush1.msra.mxu0 0.0
    %8640 = vmatprep.subr.mxu0 0.0
    %8641 = vmatpush1.msra.mxu0 0.0
    %8642 = vmatprep.subr.mxu0 0.0
    %8643 = vmatpush1.msra.mxu0 0.0
    %8644 = vmatprep.subr.mxu0 0.0
    %8645 = vmatpush1.msra.mxu0 0.0
    %8646 = vmatprep.subr.mxu0 0.0
    %8647 = vmatpush1.msra.mxu0 0.0
    %8648 = vmatprep.subr.mxu0 0.0
    %8649 = vmatpush1.msra.mxu0 0.0
    %8650 = vmatprep.subr.mxu0 0.0
    %8651 = vmatpush1.msra.mxu0 0.0
    %8652 = vmatprep.subr.mxu0 0.0
    %8653 = vmatpush1.msra.mxu0 0.0
    %8654 = vmatprep.subr.mxu0 0.0
    %8655 = vmatpush1.msra.mxu0 0.0
    %8656 = vmatprep.subr.mxu0 0.0
    %8657 = vmatpush1.msra.mxu0 0.0
    %8658 = vmatprep.subr.mxu0 0.0
    %8659 = vmatpush1.msra.mxu0 0.0
    %8660 = vmatprep.subr.mxu0 0.0
    %8661 = vmatpush1.msra.mxu0 0.0
    %8662 = vmatprep.subr.mxu0 0.0
    %8663 = vmatpush1.msra.mxu0 0.0
    %8664 = vmatprep.subr.mxu0 0.0
    %8665 = vmatpush1.msra.mxu0 0.0
    %8666 = vmatprep.subr.mxu0 0.0
    %8667 = vmatpush1.msra.mxu0 0.0
    %8668 = vmatprep.subr.mxu0 0.0
    %8669 = vmatpush1.msra.mxu0 0.0
    %8670 = vmatprep.mubr.f32.mxu0 0.0
    %8671 = vmatmul.mubr.f32.gmra.mrb[0].mxu0 %v8184
    %v8672 = vpop.f32.mrb[0].mxu0
    %v8673 = vadd.f32 0.0, %v8672
    %v8674 = vpop.f32.mrb[0].mxu0
    %8675 = vdwg.mxu0
    %8676 = vmatprep.subr.mxu0 0.0
    %8677 = vmatpush1.msra.mxu0 %v7879
    %8678 = vmatprep.subr.mxu0 0.0
    %8679 = vmatpush1.msra.mxu0 %v7880
    %8680 = vmatprep.subr.mxu0 0.0
    %8681 = vmatpush1.msra.mxu0 %v7881
    %8682 = vmatprep.subr.mxu0 0.0
    %8683 = vmatpush1.msra.mxu0 %v7882
    %8684 = vmatprep.subr.mxu0 0.0
    %8685 = vmatpush1.msra.mxu0 0.0
    %8686 = vmatprep.subr.mxu0 0.0
    %8687 = vmatpush1.msra.mxu0 0.0
    %8688 = vmatprep.subr.mxu0 0.0
    %8689 = vmatpush1.msra.mxu0 0.0
    %8690 = vmatprep.subr.mxu0 0.0
    %8691 = vmatpush1.msra.mxu0 0.0
    %8692 = vmatprep.subr.mxu0 0.0
    %8693 = vmatpush1.msra.mxu0 0.0
    %8694 = vmatprep.subr.mxu0 0.0
    %8695 = vmatpush1.msra.mxu0 0.0
    %8696 = vmatprep.subr.mxu0 0.0
    %8697 = vmatpush1.msra.mxu0 0.0
    %8698 = vmatprep.subr.mxu0 0.0
    %8699 = vmatpush1.msra.mxu0 0.0
    %8700 = vmatprep.subr.mxu0 0.0
    %8701 = vmatpush1.msra.mxu0 0.0
    %8702 = vmatprep.subr.mxu0 0.0
    %8703 = vmatpush1.msra.mxu0 0.0
    %8704 = vmatprep.subr.mxu0 0.0
    %8705 = vmatpush1.msra.mxu0 0.0
    %8706 = vmatprep.subr.mxu0 0.0
    %8707 = vmatpush1.msra.mxu0 0.0
    %8708 = vmatprep.subr.mxu0 0.0
    %8709 = vmatpush1.msra.mxu0 0.0
    %8710 = vmatprep.subr.mxu0 0.0
    %8711 = vmatpush1.msra.mxu0 0.0
    %8712 = vmatprep.subr.mxu0 0.0
    %8713 = vmatpush1.msra.mxu0 0.0
    %8714 = vmatprep.subr.mxu0 0.0
    %8715 = vmatpush1.msra.mxu0 0.0
    %8716 = vmatprep.subr.mxu0 0.0
    %8717 = vmatpush1.msra.mxu0 0.0
    %8718 = vmatprep.subr.mxu0 0.0
    %8719 = vmatpush1.msra.mxu0 0.0
    %8720 = vmatprep.subr.mxu0 0.0
    %8721 = vmatpush1.msra.mxu0 0.0
    %8722 = vmatprep.subr.mxu0 0.0
    %8723 = vmatpush1.msra.mxu0 0.0
    %8724 = vmatprep.subr.mxu0 0.0
    %8725 = vmatpush1.msra.mxu0 0.0
    %8726 = vmatprep.subr.mxu0 0.0
    %8727 = vmatpush1.msra.mxu0 0.0
    %8728 = vmatprep.subr.mxu0 0.0
    %8729 = vmatpush1.msra.mxu0 0.0
    %8730 = vmatprep.subr.mxu0 0.0
    %8731 = vmatpush1.msra.mxu0 0.0
    %8732 = vmatprep.subr.mxu0 0.0
    %8733 = vmatpush1.msra.mxu0 0.0
    %8734 = vmatprep.subr.mxu0 0.0
    %8735 = vmatpush1.msra.mxu0 0.0
    %8736 = vmatprep.subr.mxu0 0.0
    %8737 = vmatpush1.msra.mxu0 0.0
    %8738 = vmatprep.subr.mxu0 0.0
    %8739 = vmatpush1.msra.mxu0 0.0
    %8740 = vmatprep.mubr.f32.mxu0 0.0
    %8741 = vmatmul.mubr.f32.gmra.mrb[0].mxu0 %v8184
    %v8742 = vpop.f32.mrb[0].mxu0
    %v8743 = vadd.f32 0.0, %v8742
    %v8744 = vpop.f32.mrb[0].mxu0
    %8745 = vdwg.mxu0
    %v8747 = vsel %vm1103, %v7970, 0
    %v8750 = vsel %vm1103, %v8253, 0
    %8752 = vmatprep.subr.mxu0 0.0
    %8753 = vmatpush1.xpose.msra.mxu0 %v8750
    %8754 = vmatprep.subr.mxu0 0.0
    %8755 = vmatpush1.xpose.msra.mxu0 0.0
    %8756 = vmatprep.subr.mxu0 0.0
    %8757 = vmatpush1.xpose.msra.mxu0 0.0
    %8758 = vmatprep.subr.mxu0 0.0
    %8759 = vmatpush1.xpose.msra.mxu0 0.0
    %8760 = vmatprep.subr.mxu0 0.0
    %8761 = vmatpush1.xpose.msra.mxu0 0.0
    %8762 = vmatprep.subr.mxu0 0.0
    %8763 = vmatpush1.xpose.msra.mxu0 0.0
    %8764 = vmatprep.subr.mxu0 0.0
    %8765 = vmatpush1.xpose.msra.mxu0 0.0
    %8766 = vmatprep.subr.mxu0 0.0
    %8767 = vmatpush1.xpose.msra.mxu0 0.0
    %8768 = vmatprep.subr.mxu0 0.0
    %8769 = vmatpush1.xpose.msra.mxu0 0.0
    %8770 = vmatprep.subr.mxu0 0.0
    %8771 = vmatpush1.xpose.msra.mxu0 0.0
    %8772 = vmatprep.subr.mxu0 0.0
    %8773 = vmatpush1.xpose.msra.mxu0 0.0
    %8774 = vmatprep.subr.mxu0 0.0
    %8775 = vmatpush1.xpose.msra.mxu0 0.0
    %8776 = vmatprep.subr.mxu0 0.0
    %8777 = vmatpush1.xpose.msra.mxu0 0.0
    %8778 = vmatprep.subr.mxu0 0.0
    %8779 = vmatpush1.xpose.msra.mxu0 0.0
    %8780 = vmatprep.subr.mxu0 0.0
    %8781 = vmatpush1.xpose.msra.mxu0 0.0
    %8782 = vmatprep.subr.mxu0 0.0
    %8783 = vmatpush1.xpose.msra.mxu0 0.0
    %8784 = vmatprep.subr.mxu0 0.0
    %8785 = vmatpush1.xpose.msra.mxu0 0.0
    %8786 = vmatprep.subr.mxu0 0.0
    %8787 = vmatpush1.xpose.msra.mxu0 0.0
    %8788 = vmatprep.subr.mxu0 0.0
    %8789 = vmatpush1.xpose.msra.mxu0 0.0
    %8790 = vmatprep.subr.mxu0 0.0
    %8791 = vmatpush1.xpose.msra.mxu0 0.0
    %8792 = vmatprep.subr.mxu0 0.0
    %8793 = vmatpush1.xpose.msra.mxu0 0.0
    %8794 = vmatprep.subr.mxu0 0.0
    %8795 = vmatpush1.xpose.msra.mxu0 0.0
    %8796 = vmatprep.subr.mxu0 0.0
    %8797 = vmatpush1.xpose.msra.mxu0 0.0
    %8798 = vmatprep.subr.mxu0 0.0
    %8799 = vmatpush1.xpose.msra.mxu0 0.0
    %8800 = vmatprep.subr.mxu0 0.0
    %8801 = vmatpush1.xpose.msra.mxu0 0.0
    %8802 = vmatprep.subr.mxu0 0.0
    %8803 = vmatpush1.xpose.msra.mxu0 0.0
    %8804 = vmatprep.subr.mxu0 0.0
    %8805 = vmatpush1.xpose.msra.mxu0 0.0
    %8806 = vmatprep.subr.mxu0 0.0
    %8807 = vmatpush1.xpose.msra.mxu0 0.0
    %8808 = vmatprep.subr.mxu0 0.0
    %8809 = vmatpush1.xpose.msra.mxu0 0.0
    %8810 = vmatprep.subr.mxu0 0.0
    %8811 = vmatpush1.xpose.msra.mxu0 0.0
    %8812 = vmatprep.subr.mxu0 0.0
    %8813 = vmatpush1.xpose.msra.mxu0 0.0
    %8814 = vmatprep.subr.mxu0 0.0
    %8815 = vmatpush1.xpose.msra.mxu0 0.0
    %8816 = vmatprep.mubr.f32.mxu0 0.0
    %8817 = vmatmul.mubr.f32.gmra.mrb[0].mxu0 %v8747
    %v8818 = vpop.f32.mrb[0].mxu0
    %v8819 = vadd.f32 0.0, %v8818
    %v8820 = vpop.f32.mrb[0].mxu0
    %8821 = vdwg.mxu0
    %v8823 = vsel %vm1103, %v8040, 0
    %v8826 = vsel %vm1103, %v8323, 0
    %8828 = vmatprep.subr.mxu0 0.0
    %8829 = vmatpush1.xpose.msra.mxu0 %v8826
    %8830 = vmatprep.subr.mxu0 0.0
    %8831 = vmatpush1.xpose.msra.mxu0 0.0
    %8832 = vmatprep.subr.mxu0 0.0
    %8833 = vmatpush1.xpose.msra.mxu0 0.0
    %8834 = vmatprep.subr.mxu0 0.0
    %8835 = vmatpush1.xpose.msra.mxu0 0.0
    %8836 = vmatprep.subr.mxu0 0.0
    %8837 = vmatpush1.xpose.msra.mxu0 0.0
    %8838 = vmatprep.subr.mxu0 0.0
    %8839 = vmatpush1.xpose.msra.mxu0 0.0
    %8840 = vmatprep.subr.mxu0 0.0
    %8841 = vmatpush1.xpose.msra.mxu0 0.0
    %8842 = vmatprep.subr.mxu0 0.0
    %8843 = vmatpush1.xpose.msra.mxu0 0.0
    %8844 = vmatprep.subr.mxu0 0.0
    %8845 = vmatpush1.xpose.msra.mxu0 0.0
    %8846 = vmatprep.subr.mxu0 0.0
    %8847 = vmatpush1.xpose.msra.mxu0 0.0
    %8848 = vmatprep.subr.mxu0 0.0
    %8849 = vmatpush1.xpose.msra.mxu0 0.0
    %8850 = vmatprep.subr.mxu0 0.0
    %8851 = vmatpush1.xpose.msra.mxu0 0.0
    %8852 = vmatprep.subr.mxu0 0.0
    %8853 = vmatpush1.xpose.msra.mxu0 0.0
    %8854 = vmatprep.subr.mxu0 0.0
    %8855 = vmatpush1.xpose.msra.mxu0 0.0
    %8856 = vmatprep.subr.mxu0 0.0
    %8857 = vmatpush1.xpose.msra.mxu0 0.0
    %8858 = vmatprep.subr.mxu0 0.0
    %8859 = vmatpush1.xpose.msra.mxu0 0.0
    %8860 = vmatprep.subr.mxu0 0.0
    %8861 = vmatpush1.xpose.msra.mxu0 0.0
    %8862 = vmatprep.subr.mxu0 0.0
    %8863 = vmatpush1.xpose.msra.mxu0 0.0
    %8864 = vmatprep.subr.mxu0 0.0
    %8865 = vmatpush1.xpose.msra.mxu0 0.0
    %8866 = vmatprep.subr.mxu0 0.0
    %8867 = vmatpush1.xpose.msra.mxu0 0.0
    %8868 = vmatprep.subr.mxu0 0.0
    %8869 = vmatpush1.xpose.msra.mxu0 0.0
    %8870 = vmatprep.subr.mxu0 0.0
    %8871 = vmatpush1.xpose.msra.mxu0 0.0
    %8872 = vmatprep.subr.mxu0 0.0
    %8873 = vmatpush1.xpose.msra.mxu0 0.0
    %8874 = vmatprep.subr.mxu0 0.0
    %8875 = vmatpush1.xpose.msra.mxu0 0.0
    %8876 = vmatprep.subr.mxu0 0.0
    %8877 = vmatpush1.xpose.msra.mxu0 0.0
    %8878 = vmatprep.subr.mxu0 0.0
    %8879 = vmatpush1.xpose.msra.mxu0 0.0
    %8880 = vmatprep.subr.mxu0 0.0
    %8881 = vmatpush1.xpose.msra.mxu0 0.0
    %8882 = vmatprep.subr.mxu0 0.0
    %8883 = vmatpush1.xpose.msra.mxu0 0.0
    %8884 = vmatprep.subr.mxu0 0.0
    %8885 = vmatpush1.xpose.msra.mxu0 0.0
    %8886 = vmatprep.subr.mxu0 0.0
    %8887 = vmatpush1.xpose.msra.mxu0 0.0
    %8888 = vmatprep.subr.mxu0 0.0
    %8889 = vmatpush1.xpose.msra.mxu0 0.0
    %8890 = vmatprep.subr.mxu0 0.0
    %8891 = vmatpush1.xpose.msra.mxu0 0.0
    %8892 = vmatprep.mubr.f32.mxu0 0.0
    %8893 = vmatmul.mubr.f32.gmra.mrb[0].mxu0 %v8823
    %v8894 = vpop.f32.mrb[0].mxu0
    %v8895 = vadd.f32 0.0, %v8894
    %v8896 = vpop.f32.mrb[0].mxu0
    %8897 = vdwg.mxu0
    %v8899 = vsel %vm1103, %v8110, 0
    %v8902 = vsel %vm1103, %v8393, 0
    %8904 = vmatprep.subr.mxu0 0.0
    %8905 = vmatpush1.xpose.msra.mxu0 %v8902
    %8906 = vmatprep.subr.mxu0 0.0
    %8907 = vmatpush1.xpose.msra.mxu0 0.0
    %8908 = vmatprep.subr.mxu0 0.0
    %8909 = vmatpush1.xpose.msra.mxu0 0.0
    %8910 = vmatprep.subr.mxu0 0.0
    %8911 = vmatpush1.xpose.msra.mxu0 0.0
    %8912 = vmatprep.subr.mxu0 0.0
    %8913 = vmatpush1.xpose.msra.mxu0 0.0
    %8914 = vmatprep.subr.mxu0 0.0
    %8915 = vmatpush1.xpose.msra.mxu0 0.0
    %8916 = vmatprep.subr.mxu0 0.0
    %8917 = vmatpush1.xpose.msra.mxu0 0.0
    %8918 = vmatprep.subr.mxu0 0.0
    %8919 = vmatpush1.xpose.msra.mxu0 0.0
    %8920 = vmatprep.subr.mxu0 0.0
    %8921 = vmatpush1.xpose.msra.mxu0 0.0
    %8922 = vmatprep.subr.mxu0 0.0
    %8923 = vmatpush1.xpose.msra.mxu0 0.0
    %8924 = vmatprep.subr.mxu0 0.0
    %8925 = vmatpush1.xpose.msra.mxu0 0.0
    %8926 = vmatprep.subr.mxu0 0.0
    %8927 = vmatpush1.xpose.msra.mxu0 0.0
    %8928 = vmatprep.subr.mxu0 0.0
    %8929 = vmatpush1.xpose.msra.mxu0 0.0
    %8930 = vmatprep.subr.mxu0 0.0
    %8931 = vmatpush1.xpose.msra.mxu0 0.0
    %8932 = vmatprep.subr.mxu0 0.0
    %8933 = vmatpush1.xpose.msra.mxu0 0.0
    %8934 = vmatprep.subr.mxu0 0.0
    %8935 = vmatpush1.xpose.msra.mxu0 0.0
    %8936 = vmatprep.subr.mxu0 0.0
    %8937 = vmatpush1.xpose.msra.mxu0 0.0
    %8938 = vmatprep.subr.mxu0 0.0
    %8939 = vmatpush1.xpose.msra.mxu0 0.0
    %8940 = vmatprep.subr.mxu0 0.0
    %8941 = vmatpush1.xpose.msra.mxu0 0.0
    %8942 = vmatprep.subr.mxu0 0.0
    %8943 = vmatpush1.xpose.msra.mxu0 0.0
    %8944 = vmatprep.subr.mxu0 0.0
    %8945 = vmatpush1.xpose.msra.mxu0 0.0
    %8946 = vmatprep.subr.mxu0 0.0
    %8947 = vmatpush1.xpose.msra.mxu0 0.0
    %8948 = vmatprep.subr.mxu0 0.0
    %8949 = vmatpush1.xpose.msra.mxu0 0.0
    %8950 = vmatprep.subr.mxu0 0.0
    %8951 = vmatpush1.xpose.msra.mxu0 0.0
    %8952 = vmatprep.subr.mxu0 0.0
    %8953 = vmatpush1.xpose.msra.mxu0 0.0
    %8954 = vmatprep.subr.mxu0 0.0
    %8955 = vmatpush1.xpose.msra.mxu0 0.0
    %8956 = vmatprep.subr.mxu0 0.0
    %8957 = vmatpush1.xpose.msra.mxu0 0.0
    %8958 = vmatprep.subr.mxu0 0.0
    %8959 = vmatpush1.xpose.msra.mxu0 0.0
    %8960 = vmatprep.subr.mxu0 0.0
    %8961 = vmatpush1.xpose.msra.mxu0 0.0
    %8962 = vmatprep.subr.mxu0 0.0
    %8963 = vmatpush1.xpose.msra.mxu0 0.0
    %8964 = vmatprep.subr.mxu0 0.0
    %8965 = vmatpush1.xpose.msra.mxu0 0.0
    %8966 = vmatprep.subr.mxu0 0.0
    %8967 = vmatpush1.xpose.msra.mxu0 0.0
    %8968 = vmatprep.mubr.f32.mxu0 0.0
    %8969 = vmatmul.mubr.f32.gmra.mrb[0].mxu0 %v8899
    %v8970 = vpop.f32.mrb[0].mxu0
    %v8971 = vadd.f32 0.0, %v8970
    %v8972 = vpop.f32.mrb[0].mxu0
    %8973 = vdwg.mxu0
    %v8975 = vsel %vm1103, %v8180, 0
    %v8978 = vsel %vm1103, %v8463, 0
    %8980 = vmatprep.subr.mxu0 0.0
    %8981 = vmatpush1.xpose.msra.mxu0 %v8978
    %8982 = vmatprep.subr.mxu0 0.0
    %8983 = vmatpush1.xpose.msra.mxu0 0.0
    %8984 = vmatprep.subr.mxu0 0.0
    %8985 = vmatpush1.xpose.msra.mxu0 0.0
    %8986 = vmatprep.subr.mxu0 0.0
    %8987 = vmatpush1.xpose.msra.mxu0 0.0
    %8988 = vmatprep.subr.mxu0 0.0
    %8989 = vmatpush1.xpose.msra.mxu0 0.0
    %8990 = vmatprep.subr.mxu0 0.0
    %8991 = vmatpush1.xpose.msra.mxu0 0.0
    %8992 = vmatprep.subr.mxu0 0.0
    %8993 = vmatpush1.xpose.msra.mxu0 0.0
    %8994 = vmatprep.subr.mxu0 0.0
    %8995 = vmatpush1.xpose.msra.mxu0 0.0
    %8996 = vmatprep.subr.mxu0 0.0
    %8997 = vmatpush1.xpose.msra.mxu0 0.0
    %8998 = vmatprep.subr.mxu0 0.0
    %8999 = vmatpush1.xpose.msra.mxu0 0.0
    %9000 = vmatprep.subr.mxu0 0.0
    %9001 = vmatpush1.xpose.msra.mxu0 0.0
    %9002 = vmatprep.subr.mxu0 0.0
    %9003 = vmatpush1.xpose.msra.mxu0 0.0
    %9004 = vmatprep.subr.mxu0 0.0
    %9005 = vmatpush1.xpose.msra.mxu0 0.0
    %9006 = vmatprep.subr.mxu0 0.0
    %9007 = vmatpush1.xpose.msra.mxu0 0.0
    %9008 = vmatprep.subr.mxu0 0.0
    %9009 = vmatpush1.xpose.msra.mxu0 0.0
    %9010 = vmatprep.subr.mxu0 0.0
    %9011 = vmatpush1.xpose.msra.mxu0 0.0
    %9012 = vmatprep.subr.mxu0 0.0
    %9013 = vmatpush1.xpose.msra.mxu0 0.0
    %9014 = vmatprep.subr.mxu0 0.0
    %9015 = vmatpush1.xpose.msra.mxu0 0.0
    %9016 = vmatprep.subr.mxu0 0.0
    %9017 = vmatpush1.xpose.msra.mxu0 0.0
    %9018 = vmatprep.subr.mxu0 0.0
    %9019 = vmatpush1.xpose.msra.mxu0 0.0
    %9020 = vmatprep.subr.mxu0 0.0
    %9021 = vmatpush1.xpose.msra.mxu0 0.0
    %9022 = vmatprep.subr.mxu0 0.0
    %9023 = vmatpush1.xpose.msra.mxu0 0.0
    %9024 = vmatprep.subr.mxu0 0.0
    %9025 = vmatpush1.xpose.msra.mxu0 0.0
    %9026 = vmatprep.subr.mxu0 0.0
    %9027 = vmatpush1.xpose.msra.mxu0 0.0
    %9028 = vmatprep.subr.mxu0 0.0
    %9029 = vmatpush1.xpose.msra.mxu0 0.0
    %9030 = vmatprep.subr.mxu0 0.0
    %9031 = vmatpush1.xpose.msra.mxu0 0.0
    %9032 = vmatprep.subr.mxu0 0.0
    %9033 = vmatpush1.xpose.msra.mxu0 0.0
    %9034 = vmatprep.subr.mxu0 0.0
    %9035 = vmatpush1.xpose.msra.mxu0 0.0
    %9036 = vmatprep.subr.mxu0 0.0
    %9037 = vmatpush1.xpose.msra.mxu0 0.0
    %9038 = vmatprep.subr.mxu0 0.0
    %9039 = vmatpush1.xpose.msra.mxu0 0.0
    %9040 = vmatprep.subr.mxu0 0.0
    %9041 = vmatpush1.xpose.msra.mxu0 0.0
    %9042 = vmatprep.subr.mxu0 0.0
    %9043 = vmatpush1.xpose.msra.mxu0 0.0
    %9044 = vmatprep.mubr.f32.mxu0 0.0
    %9045 = vmatmul.mubr.f32.gmra.mrb[0].mxu0 %v8975
    %v9046 = vpop.f32.mrb[0].mxu0
    %v9047 = vadd.f32 0.0, %v9046
    %v9048 = vpop.f32.mrb[0].mxu0
    %9049 = vdwg.mxu0
    %v9050 = vsel %vm1103, %v8819, -inf
    %9051 = vmax.xlane.f32.xlu0 %v9050
    %v9052 = vpop.xlane.xlu0 %9051
    %v9053 = vsel %vm1103, %v8895, -inf
    %9054 = vmax.xlane.f32.xlu0 %v9053
    %v9055 = vpop.xlane.xlu0 %9054
    %v9056 = vsel %vm1103, %v8971, -inf
    %9057 = vmax.xlane.f32.xlu0 %v9056
    %v9058 = vpop.xlane.xlu0 %9057
    %v9059 = vsel %vm1103, %v9047, -inf
    %9060 = vmax.xlane.f32.xlu0 %v9059
    %v9061 = vpop.xlane.xlu0 %9060
    %v9062 = vsub.f32 %v8819, %v9052
    %v9063 = vsub.f32 %v8895, %v9055
    %v9064 = vsub.f32 %v8971, %v9058
    %v9065 = vsub.f32 %v9047, %v9061
    %v9066 = vmul.f32 %v9062, 1.442695
    %v9067 = vpow.pop %v9066
    %v9068 = vmul.f32 %v9063, 1.442695
    %v9069 = vpow.pop %v9068
    %v9070 = vmul.f32 %v9064, 1.442695
    %v9071 = vpow.pop %v9070
    %v9072 = vmul.f32 %v9065, 1.442695
    %v9073 = vpow.pop %v9072
    %v9074 = vsel %vm1103, %v9067, 0.0
    %9075 = vadd.xlane.f32.xlu0 %v9074
    %v9076 = vpop.xlane.xlu0 %9075
    %v9077 = vsel %vm1103, %v9069, 0.0
    %9078 = vadd.xlane.f32.xlu0 %v9077
    %v9079 = vpop.xlane.xlu0 %9078
    %v9080 = vsel %vm1103, %v9071, 0.0
    %9081 = vadd.xlane.f32.xlu0 %v9080
    %v9082 = vpop.xlane.xlu0 %9081
    %v9083 = vsel %vm1103, %v9073, 0.0
    %9084 = vadd.xlane.f32.xlu0 %v9083
    %v9085 = vpop.xlane.xlu0 %9084
    %v9086 = vrcp.pop %v9076
    %v9087 = vrcp.pop %v9079
    %v9088 = vrcp.pop %v9082
    %v9089 = vrcp.pop %v9085
    %v9090 = vmul.f32 %v9067, %v9086
    %v9091 = vmul.f32 %v9069, %v9087
    %v9092 = vmul.f32 %v9071, %v9088
    %v9093 = vmul.f32 %v9073, %v9089
    %v9095 = vsel %vm1103, %v9090, 0
    %9097 = vmatprep.subr.mxu0 0.0
    %9098 = vmatpush1.msra.mxu0 %v8533
    %9099 = vmatprep.subr.mxu0 0.0
    %9100 = vmatpush1.msra.mxu0 0.0
    %9101 = vmatprep.subr.mxu0 0.0
    %9102 = vmatpush1.msra.mxu0 0.0
    %9103 = vmatprep.subr.mxu0 0.0
    %9104 = vmatpush1.msra.mxu0 0.0
    %9105 = vmatprep.subr.mxu0 0.0
    %9106 = vmatpush1.msra.mxu0 0.0
    %9107 = vmatprep.subr.mxu0 0.0
    %9108 = vmatpush1.msra.mxu0 0.0
    %9109 = vmatprep.subr.mxu0 0.0
    %9110 = vmatpush1.msra.mxu0 0.0
    %9111 = vmatprep.subr.mxu0 0.0
    %9112 = vmatpush1.msra.mxu0 0.0
    %9113 = vmatprep.subr.mxu0 0.0
    %9114 = vmatpush1.msra.mxu0 0.0
    %9115 = vmatprep.subr.mxu0 0.0
    %9116 = vmatpush1.msra.mxu0 0.0
    %9117 = vmatprep.subr.mxu0 0.0
    %9118 = vmatpush1.msra.mxu0 0.0
    %9119 = vmatprep.subr.mxu0 0.0
    %9120 = vmatpush1.msra.mxu0 0.0
    %9121 = vmatprep.subr.mxu0 0.0
    %9122 = vmatpush1.msra.mxu0 0.0
    %9123 = vmatprep.subr.mxu0 0.0
    %9124 = vmatpush1.msra.mxu0 0.0
    %9125 = vmatprep.subr.mxu0 0.0
    %9126 = vmatpush1.msra.mxu0 0.0
    %9127 = vmatprep.subr.mxu0 0.0
    %9128 = vmatpush1.msra.mxu0 0.0
    %9129 = vmatprep.subr.mxu0 0.0
    %9130 = vmatpush1.msra.mxu0 0.0
    %9131 = vmatprep.subr.mxu0 0.0
    %9132 = vmatpush1.msra.mxu0 0.0
    %9133 = vmatprep.subr.mxu0 0.0
    %9134 = vmatpush1.msra.mxu0 0.0
    %9135 = vmatprep.subr.mxu0 0.0
    %9136 = vmatpush1.msra.mxu0 0.0
    %9137 = vmatprep.subr.mxu0 0.0
    %9138 = vmatpush1.msra.mxu0 0.0
    %9139 = vmatprep.subr.mxu0 0.0
    %9140 = vmatpush1.msra.mxu0 0.0
    %9141 = vmatprep.subr.mxu0 0.0
    %9142 = vmatpush1.msra.mxu0 0.0
    %9143 = vmatprep.subr.mxu0 0.0
    %9144 = vmatpush1.msra.mxu0 0.0
    %9145 = vmatprep.subr.mxu0 0.0
    %9146 = vmatpush1.msra.mxu0 0.0
    %9147 = vmatprep.subr.mxu0 0.0
    %9148 = vmatpush1.msra.mxu0 0.0
    %9149 = vmatprep.subr.mxu0 0.0
    %9150 = vmatpush1.msra.mxu0 0.0
    %9151 = vmatprep.subr.mxu0 0.0
    %9152 = vmatpush1.msra.mxu0 0.0
    %9153 = vmatprep.subr.mxu0 0.0
    %9154 = vmatpush1.msra.mxu0 0.0
    %9155 = vmatprep.subr.mxu0 0.0
    %9156 = vmatpush1.msra.mxu0 0.0
    %9157 = vmatprep.subr.mxu0 0.0
    %9158 = vmatpush1.msra.mxu0 0.0
    %9159 = vmatprep.subr.mxu0 0.0
    %9160 = vmatpush1.msra.mxu0 0.0
    %9161 = vmatprep.mubr.f32.mxu0 0.0
    %9162 = vmatmul.mubr.f32.gmra.mrb[0].mxu0 %v9095
    %v9163 = vpop.f32.mrb[0].mxu0
    %v9164 = vadd.f32 0.0, %v9163
    %v9165 = vpop.f32.mrb[0].mxu0
    %9166 = vdwg.mxu0
    %v9168 = vsel %vm1103, %v9091, 0
    %9170 = vmatprep.subr.mxu0 0.0
    %9171 = vmatpush1.msra.mxu0 %v8603
    %9172 = vmatprep.subr.mxu0 0.0
    %9173 = vmatpush1.msra.mxu0 0.0
    %9174 = vmatprep.subr.mxu0 0.0
    %9175 = vmatpush1.msra.mxu0 0.0
    %9176 = vmatprep.subr.mxu0 0.0
    %9177 = vmatpush1.msra.mxu0 0.0
    %9178 = vmatprep.subr.mxu0 0.0
    %9179 = vmatpush1.msra.mxu0 0.0
    %9180 = vmatprep.subr.mxu0 0.0
    %9181 = vmatpush1.msra.mxu0 0.0
    %9182 = vmatprep.subr.mxu0 0.0
    %9183 = vmatpush1.msra.mxu0 0.0
    %9184 = vmatprep.subr.mxu0 0.0
    %9185 = vmatpush1.msra.mxu0 0.0
    %9186 = vmatprep.subr.mxu0 0.0
    %9187 = vmatpush1.msra.mxu0 0.0
    %9188 = vmatprep.subr.mxu0 0.0
    %9189 = vmatpush1.msra.mxu0 0.0
    %9190 = vmatprep.subr.mxu0 0.0
    %9191 = vmatpush1.msra.mxu0 0.0
    %9192 = vmatprep.subr.mxu0 0.0
    %9193 = vmatpush1.msra.mxu0 0.0
    %9194 = vmatprep.subr.mxu0 0.0
    %9195 = vmatpush1.msra.mxu0 0.0
    %9196 = vmatprep.subr.mxu0 0.0
    %9197 = vmatpush1.msra.mxu0 0.0
    %9198 = vmatprep.subr.mxu0 0.0
    %9199 = vmatpush1.msra.mxu0 0.0
    %9200 = vmatprep.subr.mxu0 0.0
    %9201 = vmatpush1.msra.mxu0 0.0
    %9202 = vmatprep.subr.mxu0 0.0
    %9203 = vmatpush1.msra.mxu0 0.0
    %9204 = vmatprep.subr.mxu0 0.0
    %9205 = vmatpush1.msra.mxu0 0.0
    %9206 = vmatprep.subr.mxu0 0.0
    %9207 = vmatpush1.msra.mxu0 0.0
    %9208 = vmatprep.subr.mxu0 0.0
    %9209 = vmatpush1.msra.mxu0 0.0
    %9210 = vmatprep.subr.mxu0 0.0
    %9211 = vmatpush1.msra.mxu0 0.0
    %9212 = vmatprep.subr.mxu0 0.0
    %9213 = vmatpush1.msra.mxu0 0.0
    %9214 = vmatprep.subr.mxu0 0.0
    %9215 = vmatpush1.msra.mxu0 0.0
    %9216 = vmatprep.subr.mxu0 0.0
    %9217 = vmatpush1.msra.mxu0 0.0
    %9218 = vmatprep.subr.mxu0 0.0
    %9219 = vmatpush1.msra.mxu0 0.0
    %9220 = vmatprep.subr.mxu0 0.0
    %9221 = vmatpush1.msra.mxu0 0.0
    %9222 = vmatprep.subr.mxu0 0.0
    %9223 = vmatpush1.msra.mxu0 0.0
    %9224 = vmatprep.subr.mxu0 0.0
    %9225 = vmatpush1.msra.mxu0 0.0
    %9226 = vmatprep.subr.mxu0 0.0
    %9227 = vmatpush1.msra.mxu0 0.0
    %9228 = vmatprep.subr.mxu0 0.0
    %9229 = vmatpush1.msra.mxu0 0.0
    %9230 = vmatprep.subr.mxu0 0.0
    %9231 = vmatpush1.msra.mxu0 0.0
    %9232 = vmatprep.subr.mxu0 0.0
    %9233 = vmatpush1.msra.mxu0 0.0
    %9234 = vmatprep.mubr.f32.mxu0 0.0
    %9235 = vmatmul.mubr.f32.gmra.mrb[0].mxu0 %v9168
    %v9236 = vpop.f32.mrb[0].mxu0
    %v9237 = vadd.f32 0.0, %v9236
    %v9238 = vpop.f32.mrb[0].mxu0
    %9239 = vdwg.mxu0
    %v9241 = vsel %vm1103, %v9092, 0
    %9243 = vmatprep.subr.mxu0 0.0
    %9244 = vmatpush1.msra.mxu0 %v8673
    %9245 = vmatprep.subr.mxu0 0.0
    %9246 = vmatpush1.msra.mxu0 0.0
    %9247 = vmatprep.subr.mxu0 0.0
    %9248 = vmatpush1.msra.mxu0 0.0
    %9249 = vmatprep.subr.mxu0 0.0
    %9250 = vmatpush1.msra.mxu0 0.0
    %9251 = vmatprep.subr.mxu0 0.0
    %9252 = vmatpush1.msra.mxu0 0.0
    %9253 = vmatprep.subr.mxu0 0.0
    %9254 = vmatpush1.msra.mxu0 0.0
    %9255 = vmatprep.subr.mxu0 0.0
    %9256 = vmatpush1.msra.mxu0 0.0
    %9257 = vmatprep.subr.mxu0 0.0
    %9258 = vmatpush1.msra.mxu0 0.0
    %9259 = vmatprep.subr.mxu0 0.0
    %9260 = vmatpush1.msra.mxu0 0.0
    %9261 = vmatprep.subr.mxu0 0.0
    %9262 = vmatpush1.msra.mxu0 0.0
    %9263 = vmatprep.subr.mxu0 0.0
    %9264 = vmatpush1.msra.mxu0 0.0
    %9265 = vmatprep.subr.mxu0 0.0
    %9266 = vmatpush1.msra.mxu0 0.0
    %9267 = vmatprep.subr.mxu0 0.0
    %9268 = vmatpush1.msra.mxu0 0.0
    %9269 = vmatprep.subr.mxu0 0.0
    %9270 = vmatpush1.msra.mxu0 0.0
    %9271 = vmatprep.subr.mxu0 0.0
    %9272 = vmatpush1.msra.mxu0 0.0
    %9273 = vmatprep.subr.mxu0 0.0
    %9274 = vmatpush1.msra.mxu0 0.0
    %9275 = vmatprep.subr.mxu0 0.0
    %9276 = vmatpush1.msra.mxu0 0.0
    %9277 = vmatprep.subr.mxu0 0.0
    %9278 = vmatpush1.msra.mxu0 0.0
    %9279 = vmatprep.subr.mxu0 0.0
    %9280 = vmatpush1.msra.mxu0 0.0
    %9281 = vmatprep.subr.mxu0 0.0
    %9282 = vmatpush1.msra.mxu0 0.0
    %9283 = vmatprep.subr.mxu0 0.0
    %9284 = vmatpush1.msra.mxu0 0.0
    %9285 = vmatprep.subr.mxu0 0.0
    %9286 = vmatpush1.msra.mxu0 0.0
    %9287 = vmatprep.subr.mxu0 0.0
    %9288 = vmatpush1.msra.mxu0 0.0
    %9289 = vmatprep.subr.mxu0 0.0
    %9290 = vmatpush1.msra.mxu0 0.0
    %9291 = vmatprep.subr.mxu0 0.0
    %9292 = vmatpush1.msra.mxu0 0.0
    %9293 = vmatprep.subr.mxu0 0.0
    %9294 = vmatpush1.msra.mxu0 0.0
    %9295 = vmatprep.subr.mxu0 0.0
    %9296 = vmatpush1.msra.mxu0 0.0
    %9297 = vmatprep.subr.mxu0 0.0
    %9298 = vmatpush1.msra.mxu0 0.0
    %9299 = vmatprep.subr.mxu0 0.0
    %9300 = vmatpush1.msra.mxu0 0.0
    %9301 = vmatprep.subr.mxu0 0.0
    %9302 = vmatpush1.msra.mxu0 0.0
    %9303 = vmatprep.subr.mxu0 0.0
    %9304 = vmatpush1.msra.mxu0 0.0
    %9305 = vmatprep.subr.mxu0 0.0
    %9306 = vmatpush1.msra.mxu0 0.0
    %9307 = vmatprep.mubr.f32.mxu0 0.0
    %9308 = vmatmul.mubr.f32.gmra.mrb[0].mxu0 %v9241
    %v9309 = vpop.f32.mrb[0].mxu0
    %v9310 = vadd.f32 0.0, %v9309
    %v9311 = vpop.f32.mrb[0].mxu0
    %9312 = vdwg.mxu0
    %v9314 = vsel %vm1103, %v9093, 0
    %9316 = vmatprep.subr.mxu0 0.0
    %9317 = vmatpush1.msra.mxu0 %v8743
    %9318 = vmatprep.subr.mxu0 0.0
    %9319 = vmatpush1.msra.mxu0 0.0
    %9320 = vmatprep.subr.mxu0 0.0
    %9321 = vmatpush1.msra.mxu0 0.0
    %9322 = vmatprep.subr.mxu0 0.0
    %9323 = vmatpush1.msra.mxu0 0.0
    %9324 = vmatprep.subr.mxu0 0.0
    %9325 = vmatpush1.msra.mxu0 0.0
    %9326 = vmatprep.subr.mxu0 0.0
    %9327 = vmatpush1.msra.mxu0 0.0
    %9328 = vmatprep.subr.mxu0 0.0
    %9329 = vmatpush1.msra.mxu0 0.0
    %9330 = vmatprep.subr.mxu0 0.0
    %9331 = vmatpush1.msra.mxu0 0.0
    %9332 = vmatprep.subr.mxu0 0.0
    %9333 = vmatpush1.msra.mxu0 0.0
    %9334 = vmatprep.subr.mxu0 0.0
    %9335 = vmatpush1.msra.mxu0 0.0
    %9336 = vmatprep.subr.mxu0 0.0
    %9337 = vmatpush1.msra.mxu0 0.0
    %9338 = vmatprep.subr.mxu0 0.0
    %9339 = vmatpush1.msra.mxu0 0.0
    %9340 = vmatprep.subr.mxu0 0.0
    %9341 = vmatpush1.msra.mxu0 0.0
    %9342 = vmatprep.subr.mxu0 0.0
    %9343 = vmatpush1.msra.mxu0 0.0
    %9344 = vmatprep.subr.mxu0 0.0
    %9345 = vmatpush1.msra.mxu0 0.0
    %9346 = vmatprep.subr.mxu0 0.0
    %9347 = vmatpush1.msra.mxu0 0.0
    %9348 = vmatprep.subr.mxu0 0.0
    %9349 = vmatpush1.msra.mxu0 0.0
    %9350 = vmatprep.subr.mxu0 0.0
    %9351 = vmatpush1.msra.mxu0 0.0
    %9352 = vmatprep.subr.mxu0 0.0
    %9353 = vmatpush1.msra.mxu0 0.0
    %9354 = vmatprep.subr.mxu0 0.0
    %9355 = vmatpush1.msra.mxu0 0.0
    %9356 = vmatprep.subr.mxu0 0.0
    %9357 = vmatpush1.msra.mxu0 0.0
    %9358 = vmatprep.subr.mxu0 0.0
    %9359 = vmatpush1.msra.mxu0 0.0
    %9360 = vmatprep.subr.mxu0 0.0
    %9361 = vmatpush1.msra.mxu0 0.0
    %9362 = vmatprep.subr.mxu0 0.0
    %9363 = vmatpush1.msra.mxu0 0.0
    %9364 = vmatprep.subr.mxu0 0.0
    %9365 = vmatpush1.msra.mxu0 0.0
    %9366 = vmatprep.subr.mxu0 0.0
    %9367 = vmatpush1.msra.mxu0 0.0
    %9368 = vmatprep.subr.mxu0 0.0
    %9369 = vmatpush1.msra.mxu0 0.0
    %9370 = vmatprep.subr.mxu0 0.0
    %9371 = vmatpush1.msra.mxu0 0.0
    %9372 = vmatprep.subr.mxu0 0.0
    %9373 = vmatpush1.msra.mxu0 0.0
    %9374 = vmatprep.subr.mxu0 0.0
    %9375 = vmatpush1.msra.mxu0 0.0
    %9376 = vmatprep.subr.mxu0 0.0
    %9377 = vmatpush1.msra.mxu0 0.0
    %9378 = vmatprep.subr.mxu0 0.0
    %9379 = vmatpush1.msra.mxu0 0.0
    %9380 = vmatprep.mubr.f32.mxu0 0.0
    %9381 = vmatmul.mubr.f32.gmra.mrb[0].mxu0 %v9314
    %v9382 = vpop.f32.mrb[0].mxu0
    %v9383 = vadd.f32 0.0, %v9382
    %v9384 = vpop.f32.mrb[0].mxu0
    %9385 = vdwg.mxu0
    %v9387 = vsel %vm1103, %v9164, 0
    %v9390 = vsel %vm1103, %v7884, 0
    %v9393 = vsel %vm1103, %v7885, 0
    %v9396 = vsel %vm1103, %v7886, 0
    %v9399 = vsel %vm1103, %v7887, 0
    %9401 = vmatprep.subr.mxu0 0.0
    %9402 = vmatpush1.xpose.msra.mxu0 %v9390
    %9403 = vmatprep.subr.mxu0 0.0
    %9404 = vmatpush1.xpose.msra.mxu0 %v9393
    %9405 = vmatprep.subr.mxu0 0.0
    %9406 = vmatpush1.xpose.msra.mxu0 %v9396
    %9407 = vmatprep.subr.mxu0 0.0
    %9408 = vmatpush1.xpose.msra.mxu0 %v9399
    %9409 = vmatprep.subr.mxu0 0.0
    %9410 = vmatpush1.xpose.msra.mxu0 0.0
    %9411 = vmatprep.subr.mxu0 0.0
    %9412 = vmatpush1.xpose.msra.mxu0 0.0
    %9413 = vmatprep.subr.mxu0 0.0
    %9414 = vmatpush1.xpose.msra.mxu0 0.0
    %9415 = vmatprep.subr.mxu0 0.0
    %9416 = vmatpush1.xpose.msra.mxu0 0.0
    %9417 = vmatprep.subr.mxu0 0.0
    %9418 = vmatpush1.xpose.msra.mxu0 0.0
    %9419 = vmatprep.subr.mxu0 0.0
    %9420 = vmatpush1.xpose.msra.mxu0 0.0
    %9421 = vmatprep.subr.mxu0 0.0
    %9422 = vmatpush1.xpose.msra.mxu0 0.0
    %9423 = vmatprep.subr.mxu0 0.0
    %9424 = vmatpush1.xpose.msra.mxu0 0.0
    %9425 = vmatprep.subr.mxu0 0.0
    %9426 = vmatpush1.xpose.msra.mxu0 0.0
    %9427 = vmatprep.subr.mxu0 0.0
    %9428 = vmatpush1.xpose.msra.mxu0 0.0
    %9429 = vmatprep.subr.mxu0 0.0
    %9430 = vmatpush1.xpose.msra.mxu0 0.0
    %9431 = vmatprep.subr.mxu0 0.0
    %9432 = vmatpush1.xpose.msra.mxu0 0.0
    %9433 = vmatprep.subr.mxu0 0.0
    %9434 = vmatpush1.xpose.msra.mxu0 0.0
    %9435 = vmatprep.subr.mxu0 0.0
    %9436 = vmatpush1.xpose.msra.mxu0 0.0
    %9437 = vmatprep.subr.mxu0 0.0
    %9438 = vmatpush1.xpose.msra.mxu0 0.0
    %9439 = vmatprep.subr.mxu0 0.0
    %9440 = vmatpush1.xpose.msra.mxu0 0.0
    %9441 = vmatprep.subr.mxu0 0.0
    %9442 = vmatpush1.xpose.msra.mxu0 0.0
    %9443 = vmatprep.subr.mxu0 0.0
    %9444 = vmatpush1.xpose.msra.mxu0 0.0
    %9445 = vmatprep.subr.mxu0 0.0
    %9446 = vmatpush1.xpose.msra.mxu0 0.0
    %9447 = vmatprep.subr.mxu0 0.0
    %9448 = vmatpush1.xpose.msra.mxu0 0.0
    %9449 = vmatprep.subr.mxu0 0.0
    %9450 = vmatpush1.xpose.msra.mxu0 0.0
    %9451 = vmatprep.subr.mxu0 0.0
    %9452 = vmatpush1.xpose.msra.mxu0 0.0
    %9453 = vmatprep.subr.mxu0 0.0
    %9454 = vmatpush1.xpose.msra.mxu0 0.0
    %9455 = vmatprep.subr.mxu0 0.0
    %9456 = vmatpush1.xpose.msra.mxu0 0.0
    %9457 = vmatprep.subr.mxu0 0.0
    %9458 = vmatpush1.xpose.msra.mxu0 0.0
    %9459 = vmatprep.subr.mxu0 0.0
    %9460 = vmatpush1.xpose.msra.mxu0 0.0
    %9461 = vmatprep.subr.mxu0 0.0
    %9462 = vmatpush1.xpose.msra.mxu0 0.0
    %9463 = vmatprep.subr.mxu0 0.0
    %9464 = vmatpush1.xpose.msra.mxu0 0.0
    %9465 = vmatprep.mubr.f32.mxu0 0.0
    %9466 = vmatmul.mubr.f32.gmra.mrb[0].mxu0 %v9387
    %v9467 = vpop.f32.mrb[0].mxu0
    %v9468 = vadd.f32 0.0, %v9467
    %v9469 = vpop.f32.mrb[0].mxu0
    %9470 = vdwg.mxu0
    %v9472 = vsel %vm1103, %v9237, 0
    %v9475 = vsel %vm1103, %v7888, 0
    %v9478 = vsel %vm1103, %v7889, 0
    %v9481 = vsel %vm1103, %v7890, 0
    %v9484 = vsel %vm1103, %v7891, 0
    %9486 = vmatprep.subr.mxu0 0.0
    %9487 = vmatpush1.xpose.msra.mxu0 %v9475
    %9488 = vmatprep.subr.mxu0 0.0
    %9489 = vmatpush1.xpose.msra.mxu0 %v9478
    %9490 = vmatprep.subr.mxu0 0.0
    %9491 = vmatpush1.xpose.msra.mxu0 %v9481
    %9492 = vmatprep.subr.mxu0 0.0
    %9493 = vmatpush1.xpose.msra.mxu0 %v9484
    %9494 = vmatprep.subr.mxu0 0.0
    %9495 = vmatpush1.xpose.msra.mxu0 0.0
    %9496 = vmatprep.subr.mxu0 0.0
    %9497 = vmatpush1.xpose.msra.mxu0 0.0
    %9498 = vmatprep.subr.mxu0 0.0
    %9499 = vmatpush1.xpose.msra.mxu0 0.0
    %9500 = vmatprep.subr.mxu0 0.0
    %9501 = vmatpush1.xpose.msra.mxu0 0.0
    %9502 = vmatprep.subr.mxu0 0.0
    %9503 = vmatpush1.xpose.msra.mxu0 0.0
    %9504 = vmatprep.subr.mxu0 0.0
    %9505 = vmatpush1.xpose.msra.mxu0 0.0
    %9506 = vmatprep.subr.mxu0 0.0
    %9507 = vmatpush1.xpose.msra.mxu0 0.0
    %9508 = vmatprep.subr.mxu0 0.0
    %9509 = vmatpush1.xpose.msra.mxu0 0.0
    %9510 = vmatprep.subr.mxu0 0.0
    %9511 = vmatpush1.xpose.msra.mxu0 0.0
    %9512 = vmatprep.subr.mxu0 0.0
    %9513 = vmatpush1.xpose.msra.mxu0 0.0
    %9514 = vmatprep.subr.mxu0 0.0
    %9515 = vmatpush1.xpose.msra.mxu0 0.0
    %9516 = vmatprep.subr.mxu0 0.0
    %9517 = vmatpush1.xpose.msra.mxu0 0.0
    %9518 = vmatprep.subr.mxu0 0.0
    %9519 = vmatpush1.xpose.msra.mxu0 0.0
    %9520 = vmatprep.subr.mxu0 0.0
    %9521 = vmatpush1.xpose.msra.mxu0 0.0
    %9522 = vmatprep.subr.mxu0 0.0
    %9523 = vmatpush1.xpose.msra.mxu0 0.0
    %9524 = vmatprep.subr.mxu0 0.0
    %9525 = vmatpush1.xpose.msra.mxu0 0.0
    %9526 = vmatprep.subr.mxu0 0.0
    %9527 = vmatpush1.xpose.msra.mxu0 0.0
    %9528 = vmatprep.subr.mxu0 0.0
    %9529 = vmatpush1.xpose.msra.mxu0 0.0
    %9530 = vmatprep.subr.mxu0 0.0
    %9531 = vmatpush1.xpose.msra.mxu0 0.0
    %9532 = vmatprep.subr.mxu0 0.0
    %9533 = vmatpush1.xpose.msra.mxu0 0.0
    %9534 = vmatprep.subr.mxu0 0.0
    %9535 = vmatpush1.xpose.msra.mxu0 0.0
    %9536 = vmatprep.subr.mxu0 0.0
    %9537 = vmatpush1.xpose.msra.mxu0 0.0
    %9538 = vmatprep.subr.mxu0 0.0
    %9539 = vmatpush1.xpose.msra.mxu0 0.0
    %9540 = vmatprep.subr.mxu0 0.0
    %9541 = vmatpush1.xpose.msra.mxu0 0.0
    %9542 = vmatprep.subr.mxu0 0.0
    %9543 = vmatpush1.xpose.msra.mxu0 0.0
    %9544 = vmatprep.subr.mxu0 0.0
    %9545 = vmatpush1.xpose.msra.mxu0 0.0
    %9546 = vmatprep.subr.mxu0 0.0
    %9547 = vmatpush1.xpose.msra.mxu0 0.0
    %9548 = vmatprep.subr.mxu0 0.0
    %9549 = vmatpush1.xpose.msra.mxu0 0.0
    %9550 = vmatprep.mubr.f32.mxu0 0.0
    %9551 = vmatmul.mubr.f32.gmra.mrb[0].mxu0 %v9472
    %v9552 = vpop.f32.mrb[0].mxu0
    %v9553 = vadd.f32 0.0, %v9552
    %v9554 = vpop.f32.mrb[0].mxu0
    %9555 = vdwg.mxu0
    %v9557 = vsel %vm1103, %v9310, 0
    %v9560 = vsel %vm1103, %v7892, 0
    %v9563 = vsel %vm1103, %v7893, 0
    %v9566 = vsel %vm1103, %v7894, 0
    %v9569 = vsel %vm1103, %v7895, 0
    %9571 = vmatprep.subr.mxu0 0.0
    %9572 = vmatpush1.xpose.msra.mxu0 %v9560
    %9573 = vmatprep.subr.mxu0 0.0
    %9574 = vmatpush1.xpose.msra.mxu0 %v9563
    %9575 = vmatprep.subr.mxu0 0.0
    %9576 = vmatpush1.xpose.msra.mxu0 %v9566
    %9577 = vmatprep.subr.mxu0 0.0
    %9578 = vmatpush1.xpose.msra.mxu0 %v9569
    %9579 = vmatprep.subr.mxu0 0.0
    %9580 = vmatpush1.xpose.msra.mxu0 0.0
    %9581 = vmatprep.subr.mxu0 0.0
    %9582 = vmatpush1.xpose.msra.mxu0 0.0
    %9583 = vmatprep.subr.mxu0 0.0
    %9584 = vmatpush1.xpose.msra.mxu0 0.0
    %9585 = vmatprep.subr.mxu0 0.0
    %9586 = vmatpush1.xpose.msra.mxu0 0.0
    %9587 = vmatprep.subr.mxu0 0.0
    %9588 = vmatpush1.xpose.msra.mxu0 0.0
    %9589 = vmatprep.subr.mxu0 0.0
    %9590 = vmatpush1.xpose.msra.mxu0 0.0
    %9591 = vmatprep.subr.mxu0 0.0
    %9592 = vmatpush1.xpose.msra.mxu0 0.0
    %9593 = vmatprep.subr.mxu0 0.0
    %9594 = vmatpush1.xpose.msra.mxu0 0.0
    %9595 = vmatprep.subr.mxu0 0.0
    %9596 = vmatpush1.xpose.msra.mxu0 0.0
    %9597 = vmatprep.subr.mxu0 0.0
    %9598 = vmatpush1.xpose.msra.mxu0 0.0
    %9599 = vmatprep.subr.mxu0 0.0
    %9600 = vmatpush1.xpose.msra.mxu0 0.0
    %9601 = vmatprep.subr.mxu0 0.0
    %9602 = vmatpush1.xpose.msra.mxu0 0.0
    %9603 = vmatprep.subr.mxu0 0.0
    %9604 = vmatpush1.xpose.msra.mxu0 0.0
    %9605 = vmatprep.subr.mxu0 0.0
    %9606 = vmatpush1.xpose.msra.mxu0 0.0
    %9607 = vmatprep.subr.mxu0 0.0
    %9608 = vmatpush1.xpose.msra.mxu0 0.0
    %9609 = vmatprep.subr.mxu0 0.0
    %9610 = vmatpush1.xpose.msra.mxu0 0.0
    %9611 = vmatprep.subr.mxu0 0.0
    %9612 = vmatpush1.xpose.msra.mxu0 0.0
    %9613 = vmatprep.subr.mxu0 0.0
    %9614 = vmatpush1.xpose.msra.mxu0 0.0
    %9615 = vmatprep.subr.mxu0 0.0
    %9616 = vmatpush1.xpose.msra.mxu0 0.0
    %9617 = vmatprep.subr.mxu0 0.0
    %9618 = vmatpush1.xpose.msra.mxu0 0.0
    %9619 = vmatprep.subr.mxu0 0.0
    %9620 = vmatpush1.xpose.msra.mxu0 0.0
    %9621 = vmatprep.subr.mxu0 0.0
    %9622 = vmatpush1.xpose.msra.mxu0 0.0
    %9623 = vmatprep.subr.mxu0 0.0
    %9624 = vmatpush1.xpose.msra.mxu0 0.0
    %9625 = vmatprep.subr.mxu0 0.0
    %9626 = vmatpush1.xpose.msra.mxu0 0.0
    %9627 = vmatprep.subr.mxu0 0.0
    %9628 = vmatpush1.xpose.msra.mxu0 0.0
    %9629 = vmatprep.subr.mxu0 0.0
    %9630 = vmatpush1.xpose.msra.mxu0 0.0
    %9631 = vmatprep.subr.mxu0 0.0
    %9632 = vmatpush1.xpose.msra.mxu0 0.0
    %9633 = vmatprep.subr.mxu0 0.0
    %9634 = vmatpush1.xpose.msra.mxu0 0.0
    %9635 = vmatprep.mubr.f32.mxu0 0.0
    %9636 = vmatmul.mubr.f32.gmra.mrb[0].mxu0 %v9557
    %v9637 = vpop.f32.mrb[0].mxu0
    %v9638 = vadd.f32 0.0, %v9637
    %v9639 = vpop.f32.mrb[0].mxu0
    %9640 = vdwg.mxu0
    %v9642 = vsel %vm1103, %v9383, 0
    %v9645 = vsel %vm1103, %v7896, 0
    %v9648 = vsel %vm1103, %v7897, 0
    %v9651 = vsel %vm1103, %v7898, 0
    %v9654 = vsel %vm1103, %v7899, 0
    %9656 = vmatprep.subr.mxu0 0.0
    %9657 = vmatpush1.xpose.msra.mxu0 %v9645
    %9658 = vmatprep.subr.mxu0 0.0
    %9659 = vmatpush1.xpose.msra.mxu0 %v9648
    %9660 = vmatprep.subr.mxu0 0.0
    %9661 = vmatpush1.xpose.msra.mxu0 %v9651
    %9662 = vmatprep.subr.mxu0 0.0
    %9663 = vmatpush1.xpose.msra.mxu0 %v9654
    %9664 = vmatprep.subr.mxu0 0.0
    %9665 = vmatpush1.xpose.msra.mxu0 0.0
    %9666 = vmatprep.subr.mxu0 0.0
    %9667 = vmatpush1.xpose.msra.mxu0 0.0
    %9668 = vmatprep.subr.mxu0 0.0
    %9669 = vmatpush1.xpose.msra.mxu0 0.0
    %9670 = vmatprep.subr.mxu0 0.0
    %9671 = vmatpush1.xpose.msra.mxu0 0.0
    %9672 = vmatprep.subr.mxu0 0.0
    %9673 = vmatpush1.xpose.msra.mxu0 0.0
    %9674 = vmatprep.subr.mxu0 0.0
    %9675 = vmatpush1.xpose.msra.mxu0 0.0
    %9676 = vmatprep.subr.mxu0 0.0
    %9677 = vmatpush1.xpose.msra.mxu0 0.0
    %9678 = vmatprep.subr.mxu0 0.0
    %9679 = vmatpush1.xpose.msra.mxu0 0.0
    %9680 = vmatprep.subr.mxu0 0.0
    %9681 = vmatpush1.xpose.msra.mxu0 0.0
    %9682 = vmatprep.subr.mxu0 0.0
    %9683 = vmatpush1.xpose.msra.mxu0 0.0
    %9684 = vmatprep.subr.mxu0 0.0
    %9685 = vmatpush1.xpose.msra.mxu0 0.0
    %9686 = vmatprep.subr.mxu0 0.0
    %9687 = vmatpush1.xpose.msra.mxu0 0.0
    %9688 = vmatprep.subr.mxu0 0.0
    %9689 = vmatpush1.xpose.msra.mxu0 0.0
    %9690 = vmatprep.subr.mxu0 0.0
    %9691 = vmatpush1.xpose.msra.mxu0 0.0
    %9692 = vmatprep.subr.mxu0 0.0
    %9693 = vmatpush1.xpose.msra.mxu0 0.0
    %9694 = vmatprep.subr.mxu0 0.0
    %9695 = vmatpush1.xpose.msra.mxu0 0.0
    %9696 = vmatprep.subr.mxu0 0.0
    %9697 = vmatpush1.xpose.msra.mxu0 0.0
    %9698 = vmatprep.subr.mxu0 0.0
    %9699 = vmatpush1.xpose.msra.mxu0 0.0
    %9700 = vmatprep.subr.mxu0 0.0
    %9701 = vmatpush1.xpose.msra.mxu0 0.0
    %9702 = vmatprep.subr.mxu0 0.0
    %9703 = vmatpush1.xpose.msra.mxu0 0.0
    %9704 = vmatprep.subr.mxu0 0.0
    %9705 = vmatpush1.xpose.msra.mxu0 0.0
    %9706 = vmatprep.subr.mxu0 0.0
    %9707 = vmatpush1.xpose.msra.mxu0 0.0
    %9708 = vmatprep.subr.mxu0 0.0
    %9709 = vmatpush1.xpose.msra.mxu0 0.0
    %9710 = vmatprep.subr.mxu0 0.0
    %9711 = vmatpush1.xpose.msra.mxu0 0.0
    %9712 = vmatprep.subr.mxu0 0.0
    %9713 = vmatpush1.xpose.msra.mxu0 0.0
    %9714 = vmatprep.subr.mxu0 0.0
    %9715 = vmatpush1.xpose.msra.mxu0 0.0
    %9716 = vmatprep.subr.mxu0 0.0
    %9717 = vmatpush1.xpose.msra.mxu0 0.0
    %9718 = vmatprep.subr.mxu0 0.0
    %9719 = vmatpush1.xpose.msra.mxu0 0.0
    %9720 = vmatprep.mubr.f32.mxu0 0.0
    %9721 = vmatmul.mubr.f32.gmra.mrb[0].mxu0 %v9642
    %v9722 = vpop.f32.mrb[0].mxu0
    %v9723 = vadd.f32 0.0, %v9722
    %v9724 = vpop.f32.mrb[0].mxu0
    %9725 = vdwg.mxu0
    %v9726 = vsel %vm166, %v9468, 0.0
    %v9727 = vsel %vm166, %v9553, 0.0
    %v9728 = vadd.f32 %v9726, %v9727
    %v9729 = vsel %vm166, %v9638, 0.0
    %v9730 = vadd.f32 %v9728, %v9729
    %v9731 = vsel %vm166, %v9723, 0.0
    %v9732 = vadd.f32 %v9730, %v9731
    %v9734 = vsel %vm166, %v7831, 0
    %9736 = vmatprep.subr.mxu0 0.0
    %9737 = vmatpush1.msra.mxu0 %v7833
    %9738 = vmatprep.subr.mxu0 0.0
    %9739 = vmatpush1.msra.mxu0 %v7834
    %9740 = vmatprep.subr.mxu0 0.0
    %9741 = vmatpush1.msra.mxu0 %v7835
    %9742 = vmatprep.subr.mxu0 0.0
    %9743 = vmatpush1.msra.mxu0 %v7836
    %9744 = vmatprep.subr.mxu0 0.0
    %9745 = vmatpush1.msra.mxu0 0.0
    %9746 = vmatprep.subr.mxu0 0.0
    %9747 = vmatpush1.msra.mxu0 0.0
    %9748 = vmatprep.subr.mxu0 0.0
    %9749 = vmatpush1.msra.mxu0 0.0
    %9750 = vmatprep.subr.mxu0 0.0
    %9751 = vmatpush1.msra.mxu0 0.0
    %9752 = vmatprep.subr.mxu0 0.0
    %9753 = vmatpush1.msra.mxu0 0.0
    %9754 = vmatprep.subr.mxu0 0.0
    %9755 = vmatpush1.msra.mxu0 0.0
    %9756 = vmatprep.subr.mxu0 0.0
    %9757 = vmatpush1.msra.mxu0 0.0
    %9758 = vmatprep.subr.mxu0 0.0
    %9759 = vmatpush1.msra.mxu0 0.0
    %9760 = vmatprep.subr.mxu0 0.0
    %9761 = vmatpush1.msra.mxu0 0.0
    %9762 = vmatprep.subr.mxu0 0.0
    %9763 = vmatpush1.msra.mxu0 0.0
    %9764 = vmatprep.subr.mxu0 0.0
    %9765 = vmatpush1.msra.mxu0 0.0
    %9766 = vmatprep.subr.mxu0 0.0
    %9767 = vmatpush1.msra.mxu0 0.0
    %9768 = vmatprep.subr.mxu0 0.0
    %9769 = vmatpush1.msra.mxu0 0.0
    %9770 = vmatprep.subr.mxu0 0.0
    %9771 = vmatpush1.msra.mxu0 0.0
    %9772 = vmatprep.subr.mxu0 0.0
    %9773 = vmatpush1.msra.mxu0 0.0
    %9774 = vmatprep.subr.mxu0 0.0
    %9775 = vmatpush1.msra.mxu0 0.0
    %9776 = vmatprep.subr.mxu0 0.0
    %9777 = vmatpush1.msra.mxu0 0.0
    %9778 = vmatprep.subr.mxu0 0.0
    %9779 = vmatpush1.msra.mxu0 0.0
    %9780 = vmatprep.subr.mxu0 0.0
    %9781 = vmatpush1.msra.mxu0 0.0
    %9782 = vmatprep.subr.mxu0 0.0
    %9783 = vmatpush1.msra.mxu0 0.0
    %9784 = vmatprep.subr.mxu0 0.0
    %9785 = vmatpush1.msra.mxu0 0.0
    %9786 = vmatprep.subr.mxu0 0.0
    %9787 = vmatpush1.msra.mxu0 0.0
    %9788 = vmatprep.subr.mxu0 0.0
    %9789 = vmatpush1.msra.mxu0 0.0
    %9790 = vmatprep.subr.mxu0 0.0
    %9791 = vmatpush1.msra.mxu0 0.0
    %9792 = vmatprep.subr.mxu0 0.0
    %9793 = vmatpush1.msra.mxu0 0.0
    %9794 = vmatprep.subr.mxu0 0.0
    %9795 = vmatpush1.msra.mxu0 0.0
    %9796 = vmatprep.subr.mxu0 0.0
    %9797 = vmatpush1.msra.mxu0 0.0
    %9798 = vmatprep.subr.mxu0 0.0
    %9799 = vmatpush1.msra.mxu0 0.0
    %9800 = vmatprep.mubr.f32.mxu0 0.0
    %9801 = vmatmul.mubr.f32.gmra.mrb[0].mxu0 %v9734
    %v9802 = vpop.f32.mrb[0].mxu0
    %v9803 = vadd.f32 0.0, %v9802
    %v9804 = vpop.f32.mrb[0].mxu0
    %9805 = vdwg.mxu0
    %9806 = vmatprep.subr.mxu0 0.0
    %9807 = vmatpush1.msra.mxu0 %v7837
    %9808 = vmatprep.subr.mxu0 0.0
    %9809 = vmatpush1.msra.mxu0 %v7838
    %9810 = vmatprep.subr.mxu0 0.0
    %9811 = vmatpush1.msra.mxu0 %v7839
    %9812 = vmatprep.subr.mxu0 0.0
    %9813 = vmatpush1.msra.mxu0 %v7840
    %9814 = vmatprep.subr.mxu0 0.0
    %9815 = vmatpush1.msra.mxu0 0.0
    %9816 = vmatprep.subr.mxu0 0.0
    %9817 = vmatpush1.msra.mxu0 0.0
    %9818 = vmatprep.subr.mxu0 0.0
    %9819 = vmatpush1.msra.mxu0 0.0
    %9820 = vmatprep.subr.mxu0 0.0
    %9821 = vmatpush1.msra.mxu0 0.0
    %9822 = vmatprep.subr.mxu0 0.0
    %9823 = vmatpush1.msra.mxu0 0.0
    %9824 = vmatprep.subr.mxu0 0.0
    %9825 = vmatpush1.msra.mxu0 0.0
    %9826 = vmatprep.subr.mxu0 0.0
    %9827 = vmatpush1.msra.mxu0 0.0
    %9828 = vmatprep.subr.mxu0 0.0
    %9829 = vmatpush1.msra.mxu0 0.0
    %9830 = vmatprep.subr.mxu0 0.0
    %9831 = vmatpush1.msra.mxu0 0.0
    %9832 = vmatprep.subr.mxu0 0.0
    %9833 = vmatpush1.msra.mxu0 0.0
    %9834 = vmatprep.subr.mxu0 0.0
    %9835 = vmatpush1.msra.mxu0 0.0
    %9836 = vmatprep.subr.mxu0 0.0
    %9837 = vmatpush1.msra.mxu0 0.0
    %9838 = vmatprep.subr.mxu0 0.0
    %9839 = vmatpush1.msra.mxu0 0.0
    %9840 = vmatprep.subr.mxu0 0.0
    %9841 = vmatpush1.msra.mxu0 0.0
    %9842 = vmatprep.subr.mxu0 0.0
    %9843 = vmatpush1.msra.mxu0 0.0
    %9844 = vmatprep.subr.mxu0 0.0
    %9845 = vmatpush1.msra.mxu0 0.0
    %9846 = vmatprep.subr.mxu0 0.0
    %9847 = vmatpush1.msra.mxu0 0.0
    %9848 = vmatprep.subr.mxu0 0.0
    %9849 = vmatpush1.msra.mxu0 0.0
    %9850 = vmatprep.subr.mxu0 0.0
    %9851 = vmatpush1.msra.mxu0 0.0
    %9852 = vmatprep.subr.mxu0 0.0
    %9853 = vmatpush1.msra.mxu0 0.0
    %9854 = vmatprep.subr.mxu0 0.0
    %9855 = vmatpush1.msra.mxu0 0.0
    %9856 = vmatprep.subr.mxu0 0.0
    %9857 = vmatpush1.msra.mxu0 0.0
    %9858 = vmatprep.subr.mxu0 0.0
    %9859 = vmatpush1.msra.mxu0 0.0
    %9860 = vmatprep.subr.mxu0 0.0
    %9861 = vmatpush1.msra.mxu0 0.0
    %9862 = vmatprep.subr.mxu0 0.0
    %9863 = vmatpush1.msra.mxu0 0.0
    %9864 = vmatprep.subr.mxu0 0.0
    %9865 = vmatpush1.msra.mxu0 0.0
    %9866 = vmatprep.subr.mxu0 0.0
    %9867 = vmatpush1.msra.mxu0 0.0
    %9868 = vmatprep.subr.mxu0 0.0
    %9869 = vmatpush1.msra.mxu0 0.0
    %9870 = vmatprep.mubr.f32.mxu0 0.0
    %9871 = vmatmul.mubr.f32.gmra.mrb[0].mxu0 %v9734
    %v9872 = vpop.f32.mrb[0].mxu0
    %v9873 = vadd.f32 0.0, %v9872
    %v9874 = vpop.f32.mrb[0].mxu0
    %9875 = vdwg.mxu0
    %9876 = vmatprep.subr.mxu0 0.0
    %9877 = vmatpush1.msra.mxu0 %v7841
    %9878 = vmatprep.subr.mxu0 0.0
    %9879 = vmatpush1.msra.mxu0 %v7842
    %9880 = vmatprep.subr.mxu0 0.0
    %9881 = vmatpush1.msra.mxu0 %v7843
    %9882 = vmatprep.subr.mxu0 0.0
    %9883 = vmatpush1.msra.mxu0 %v7844
    %9884 = vmatprep.subr.mxu0 0.0
    %9885 = vmatpush1.msra.mxu0 0.0
    %9886 = vmatprep.subr.mxu0 0.0
    %9887 = vmatpush1.msra.mxu0 0.0
    %9888 = vmatprep.subr.mxu0 0.0
    %9889 = vmatpush1.msra.mxu0 0.0
    %9890 = vmatprep.subr.mxu0 0.0
    %9891 = vmatpush1.msra.mxu0 0.0
    %9892 = vmatprep.subr.mxu0 0.0
    %9893 = vmatpush1.msra.mxu0 0.0
    %9894 = vmatprep.subr.mxu0 0.0
    %9895 = vmatpush1.msra.mxu0 0.0
    %9896 = vmatprep.subr.mxu0 0.0
    %9897 = vmatpush1.msra.mxu0 0.0
    %9898 = vmatprep.subr.mxu0 0.0
    %9899 = vmatpush1.msra.mxu0 0.0
    %9900 = vmatprep.subr.mxu0 0.0
    %9901 = vmatpush1.msra.mxu0 0.0
    %9902 = vmatprep.subr.mxu0 0.0
    %9903 = vmatpush1.msra.mxu0 0.0
    %9904 = vmatprep.subr.mxu0 0.0
    %9905 = vmatpush1.msra.mxu0 0.0
    %9906 = vmatprep.subr.mxu0 0.0
    %9907 = vmatpush1.msra.mxu0 0.0
    %9908 = vmatprep.subr.mxu0 0.0
    %9909 = vmatpush1.msra.mxu0 0.0
    %9910 = vmatprep.subr.mxu0 0.0
    %9911 = vmatpush1.msra.mxu0 0.0
    %9912 = vmatprep.subr.mxu0 0.0
    %9913 = vmatpush1.msra.mxu0 0.0
    %9914 = vmatprep.subr.mxu0 0.0
    %9915 = vmatpush1.msra.mxu0 0.0
    %9916 = vmatprep.subr.mxu0 0.0
    %9917 = vmatpush1.msra.mxu0 0.0
    %9918 = vmatprep.subr.mxu0 0.0
    %9919 = vmatpush1.msra.mxu0 0.0
    %9920 = vmatprep.subr.mxu0 0.0
    %9921 = vmatpush1.msra.mxu0 0.0
    %9922 = vmatprep.subr.mxu0 0.0
    %9923 = vmatpush1.msra.mxu0 0.0
    %9924 = vmatprep.subr.mxu0 0.0
    %9925 = vmatpush1.msra.mxu0 0.0
    %9926 = vmatprep.subr.mxu0 0.0
    %9927 = vmatpush1.msra.mxu0 0.0
    %9928 = vmatprep.subr.mxu0 0.0
    %9929 = vmatpush1.msra.mxu0 0.0
    %9930 = vmatprep.subr.mxu0 0.0
    %9931 = vmatpush1.msra.mxu0 0.0
    %9932 = vmatprep.subr.mxu0 0.0
    %9933 = vmatpush1.msra.mxu0 0.0
    %9934 = vmatprep.subr.mxu0 0.0
    %9935 = vmatpush1.msra.mxu0 0.0
    %9936 = vmatprep.subr.mxu0 0.0
    %9937 = vmatpush1.msra.mxu0 0.0
    %9938 = vmatprep.subr.mxu0 0.0
    %9939 = vmatpush1.msra.mxu0 0.0
    %9940 = vmatprep.mubr.f32.mxu0 0.0
    %9941 = vmatmul.mubr.f32.gmra.mrb[0].mxu0 %v9734
    %v9942 = vpop.f32.mrb[0].mxu0
    %v9943 = vadd.f32 0.0, %v9942
    %v9944 = vpop.f32.mrb[0].mxu0
    %9945 = vdwg.mxu0
    %9946 = vmatprep.subr.mxu0 0.0
    %9947 = vmatpush1.msra.mxu0 %v7845
    %9948 = vmatprep.subr.mxu0 0.0
    %9949 = vmatpush1.msra.mxu0 %v7846
    %9950 = vmatprep.subr.mxu0 0.0
    %9951 = vmatpush1.msra.mxu0 %v7847
    %9952 = vmatprep.subr.mxu0 0.0
    %9953 = vmatpush1.msra.mxu0 %v7848
    %9954 = vmatprep.subr.mxu0 0.0
    %9955 = vmatpush1.msra.mxu0 0.0
    %9956 = vmatprep.subr.mxu0 0.0
    %9957 = vmatpush1.msra.mxu0 0.0
    %9958 = vmatprep.subr.mxu0 0.0
    %9959 = vmatpush1.msra.mxu0 0.0
    %9960 = vmatprep.subr.mxu0 0.0
    %9961 = vmatpush1.msra.mxu0 0.0
    %9962 = vmatprep.subr.mxu0 0.0
    %9963 = vmatpush1.msra.mxu0 0.0
    %9964 = vmatprep.subr.mxu0 0.0
    %9965 = vmatpush1.msra.mxu0 0.0
    %9966 = vmatprep.subr.mxu0 0.0
    %9967 = vmatpush1.msra.mxu0 0.0
    %9968 = vmatprep.subr.mxu0 0.0
    %9969 = vmatpush1.msra.mxu0 0.0
    %9970 = vmatprep.subr.mxu0 0.0
    %9971 = vmatpush1.msra.mxu0 0.0
    %9972 = vmatprep.subr.mxu0 0.0
    %9973 = vmatpush1.msra.mxu0 0.0
    %9974 = vmatprep.subr.mxu0 0.0
    %9975 = vmatpush1.msra.mxu0 0.0
    %9976 = vmatprep.subr.mxu0 0.0
    %9977 = vmatpush1.msra.mxu0 0.0
    %9978 = vmatprep.subr.mxu0 0.0
    %9979 = vmatpush1.msra.mxu0 0.0
    %9980 = vmatprep.subr.mxu0 0.0
    %9981 = vmatpush1.msra.mxu0 0.0
    %9982 = vmatprep.subr.mxu0 0.0
    %9983 = vmatpush1.msra.mxu0 0.0
    %9984 = vmatprep.subr.mxu0 0.0
    %9985 = vmatpush1.msra.mxu0 0.0
    %9986 = vmatprep.subr.mxu0 0.0
    %9987 = vmatpush1.msra.mxu0 0.0
    %9988 = vmatprep.subr.mxu0 0.0
    %9989 = vmatpush1.msra.mxu0 0.0
    %9990 = vmatprep.subr.mxu0 0.0
    %9991 = vmatpush1.msra.mxu0 0.0
    %9992 = vmatprep.subr.mxu0 0.0
    %9993 = vmatpush1.msra.mxu0 0.0
    %9994 = vmatprep.subr.mxu0 0.0
    %9995 = vmatpush1.msra.mxu0 0.0
    %9996 = vmatprep.subr.mxu0 0.0
    %9997 = vmatpush1.msra.mxu0 0.0
    %9998 = vmatprep.subr.mxu0 0.0
    %9999 = vmatpush1.msra.mxu0 0.0
    %10000 = vmatprep.subr.mxu0 0.0
    %10001 = vmatpush1.msra.mxu0 0.0
    %10002 = vmatprep.subr.mxu0 0.0
    %10003 = vmatpush1.msra.mxu0 0.0
    %10004 = vmatprep.subr.mxu0 0.0
    %10005 = vmatpush1.msra.mxu0 0.0
    %10006 = vmatprep.subr.mxu0 0.0
    %10007 = vmatpush1.msra.mxu0 0.0
    %10008 = vmatprep.subr.mxu0 0.0
    %10009 = vmatpush1.msra.mxu0 0.0
    %10010 = vmatprep.mubr.f32.mxu0 0.0
    %10011 = vmatmul.mubr.f32.gmra.mrb[0].mxu0 %v9734
    %v10012 = vpop.f32.mrb[0].mxu0
    %v10013 = vadd.f32 0.0, %v10012
    %v10014 = vpop.f32.mrb[0].mxu0
    %10015 = vdwg.mxu0
    %v10017 = vsel %vm166, %v4099, 0
    %10019 = vmatprep.subr.mxu0 0.0
    %10020 = vmatpush1.msra.mxu0 %v7850
    %10021 = vmatprep.subr.mxu0 0.0
    %10022 = vmatpush1.msra.mxu0 %v7851
    %10023 = vmatprep.subr.mxu0 0.0
    %10024 = vmatpush1.msra.mxu0 %v7852
    %10025 = vmatprep.subr.mxu0 0.0
    %10026 = vmatpush1.msra.mxu0 %v7853
    %10027 = vmatprep.subr.mxu0 0.0
    %10028 = vmatpush1.msra.mxu0 0.0
    %10029 = vmatprep.subr.mxu0 0.0
    %10030 = vmatpush1.msra.mxu0 0.0
    %10031 = vmatprep.subr.mxu0 0.0
    %10032 = vmatpush1.msra.mxu0 0.0
    %10033 = vmatprep.subr.mxu0 0.0
    %10034 = vmatpush1.msra.mxu0 0.0
    %10035 = vmatprep.subr.mxu0 0.0
    %10036 = vmatpush1.msra.mxu0 0.0
    %10037 = vmatprep.subr.mxu0 0.0
    %10038 = vmatpush1.msra.mxu0 0.0
    %10039 = vmatprep.subr.mxu0 0.0
    %10040 = vmatpush1.msra.mxu0 0.0
    %10041 = vmatprep.subr.mxu0 0.0
    %10042 = vmatpush1.msra.mxu0 0.0
    %10043 = vmatprep.subr.mxu0 0.0
    %10044 = vmatpush1.msra.mxu0 0.0
    %10045 = vmatprep.subr.mxu0 0.0
    %10046 = vmatpush1.msra.mxu0 0.0
    %10047 = vmatprep.subr.mxu0 0.0
    %10048 = vmatpush1.msra.mxu0 0.0
    %10049 = vmatprep.subr.mxu0 0.0
    %10050 = vmatpush1.msra.mxu0 0.0
    %10051 = vmatprep.subr.mxu0 0.0
    %10052 = vmatpush1.msra.mxu0 0.0
    %10053 = vmatprep.subr.mxu0 0.0
    %10054 = vmatpush1.msra.mxu0 0.0
    %10055 = vmatprep.subr.mxu0 0.0
    %10056 = vmatpush1.msra.mxu0 0.0
    %10057 = vmatprep.subr.mxu0 0.0
    %10058 = vmatpush1.msra.mxu0 0.0
    %10059 = vmatprep.subr.mxu0 0.0
    %10060 = vmatpush1.msra.mxu0 0.0
    %10061 = vmatprep.subr.mxu0 0.0
    %10062 = vmatpush1.msra.mxu0 0.0
    %10063 = vmatprep.subr.mxu0 0.0
    %10064 = vmatpush1.msra.mxu0 0.0
    %10065 = vmatprep.subr.mxu0 0.0
    %10066 = vmatpush1.msra.mxu0 0.0
    %10067 = vmatprep.subr.mxu0 0.0
    %10068 = vmatpush1.msra.mxu0 0.0
    %10069 = vmatprep.subr.mxu0 0.0
    %10070 = vmatpush1.msra.mxu0 0.0
    %10071 = vmatprep.subr.mxu0 0.0
    %10072 = vmatpush1.msra.mxu0 0.0
    %10073 = vmatprep.subr.mxu0 0.0
    %10074 = vmatpush1.msra.mxu0 0.0
    %10075 = vmatprep.subr.mxu0 0.0
    %10076 = vmatpush1.msra.mxu0 0.0
    %10077 = vmatprep.subr.mxu0 0.0
    %10078 = vmatpush1.msra.mxu0 0.0
    %10079 = vmatprep.subr.mxu0 0.0
    %10080 = vmatpush1.msra.mxu0 0.0
    %10081 = vmatprep.subr.mxu0 0.0
    %10082 = vmatpush1.msra.mxu0 0.0
    %10083 = vmatprep.mubr.f32.mxu0 0.0
    %10084 = vmatmul.mubr.f32.gmra.mrb[0].mxu0 %v10017
    %v10085 = vpop.f32.mrb[0].mxu0
    %v10086 = vadd.f32 0.0, %v10085
    %v10087 = vpop.f32.mrb[0].mxu0
    %10088 = vdwg.mxu0
    %10089 = vmatprep.subr.mxu0 0.0
    %10090 = vmatpush1.msra.mxu0 %v7854
    %10091 = vmatprep.subr.mxu0 0.0
    %10092 = vmatpush1.msra.mxu0 %v7855
    %10093 = vmatprep.subr.mxu0 0.0
    %10094 = vmatpush1.msra.mxu0 %v7856
    %10095 = vmatprep.subr.mxu0 0.0
    %10096 = vmatpush1.msra.mxu0 %v7857
    %10097 = vmatprep.subr.mxu0 0.0
    %10098 = vmatpush1.msra.mxu0 0.0
    %10099 = vmatprep.subr.mxu0 0.0
    %10100 = vmatpush1.msra.mxu0 0.0
    %10101 = vmatprep.subr.mxu0 0.0
    %10102 = vmatpush1.msra.mxu0 0.0
    %10103 = vmatprep.subr.mxu0 0.0
    %10104 = vmatpush1.msra.mxu0 0.0
    %10105 = vmatprep.subr.mxu0 0.0
    %10106 = vmatpush1.msra.mxu0 0.0
    %10107 = vmatprep.subr.mxu0 0.0
    %10108 = vmatpush1.msra.mxu0 0.0
    %10109 = vmatprep.subr.mxu0 0.0
    %10110 = vmatpush1.msra.mxu0 0.0
    %10111 = vmatprep.subr.mxu0 0.0
    %10112 = vmatpush1.msra.mxu0 0.0
    %10113 = vmatprep.subr.mxu0 0.0
    %10114 = vmatpush1.msra.mxu0 0.0
    %10115 = vmatprep.subr.mxu0 0.0
    %10116 = vmatpush1.msra.mxu0 0.0
    %10117 = vmatprep.subr.mxu0 0.0
    %10118 = vmatpush1.msra.mxu0 0.0
    %10119 = vmatprep.subr.mxu0 0.0
    %10120 = vmatpush1.msra.mxu0 0.0
    %10121 = vmatprep.subr.mxu0 0.0
    %10122 = vmatpush1.msra.mxu0 0.0
    %10123 = vmatprep.subr.mxu0 0.0
    %10124 = vmatpush1.msra.mxu0 0.0
    %10125 = vmatprep.subr.mxu0 0.0
    %10126 = vmatpush1.msra.mxu0 0.0
    %10127 = vmatprep.subr.mxu0 0.0
    %10128 = vmatpush1.msra.mxu0 0.0
    %10129 = vmatprep.subr.mxu0 0.0
    %10130 = vmatpush1.msra.mxu0 0.0
    %10131 = vmatprep.subr.mxu0 0.0
    %10132 = vmatpush1.msra.mxu0 0.0
    %10133 = vmatprep.subr.mxu0 0.0
    %10134 = vmatpush1.msra.mxu0 0.0
    %10135 = vmatprep.subr.mxu0 0.0
    %10136 = vmatpush1.msra.mxu0 0.0
    %10137 = vmatprep.subr.mxu0 0.0
    %10138 = vmatpush1.msra.mxu0 0.0
    %10139 = vmatprep.subr.mxu0 0.0
    %10140 = vmatpush1.msra.mxu0 0.0
    %10141 = vmatprep.subr.mxu0 0.0
    %10142 = vmatpush1.msra.mxu0 0.0
    %10143 = vmatprep.subr.mxu0 0.0
    %10144 = vmatpush1.msra.mxu0 0.0
    %10145 = vmatprep.subr.mxu0 0.0
    %10146 = vmatpush1.msra.mxu0 0.0
    %10147 = vmatprep.subr.mxu0 0.0
    %10148 = vmatpush1.msra.mxu0 0.0
    %10149 = vmatprep.subr.mxu0 0.0
    %10150 = vmatpush1.msra.mxu0 0.0
    %10151 = vmatprep.subr.mxu0 0.0
    %10152 = vmatpush1.msra.mxu0 0.0
    %10153 = vmatprep.mubr.f32.mxu0 0.0
    %10154 = vmatmul.mubr.f32.gmra.mrb[0].mxu0 %v10017
    %v10155 = vpop.f32.mrb[0].mxu0
    %v10156 = vadd.f32 0.0, %v10155
    %v10157 = vpop.f32.mrb[0].mxu0
    %10158 = vdwg.mxu0
    %10159 = vmatprep.subr.mxu0 0.0
    %10160 = vmatpush1.msra.mxu0 %v7858
    %10161 = vmatprep.subr.mxu0 0.0
    %10162 = vmatpush1.msra.mxu0 %v7859
    %10163 = vmatprep.subr.mxu0 0.0
    %10164 = vmatpush1.msra.mxu0 %v7860
    %10165 = vmatprep.subr.mxu0 0.0
    %10166 = vmatpush1.msra.mxu0 %v7861
    %10167 = vmatprep.subr.mxu0 0.0
    %10168 = vmatpush1.msra.mxu0 0.0
    %10169 = vmatprep.subr.mxu0 0.0
    %10170 = vmatpush1.msra.mxu0 0.0
    %10171 = vmatprep.subr.mxu0 0.0
    %10172 = vmatpush1.msra.mxu0 0.0
    %10173 = vmatprep.subr.mxu0 0.0
    %10174 = vmatpush1.msra.mxu0 0.0
    %10175 = vmatprep.subr.mxu0 0.0
    %10176 = vmatpush1.msra.mxu0 0.0
    %10177 = vmatprep.subr.mxu0 0.0
    %10178 = vmatpush1.msra.mxu0 0.0
    %10179 = vmatprep.subr.mxu0 0.0
    %10180 = vmatpush1.msra.mxu0 0.0
    %10181 = vmatprep.subr.mxu0 0.0
    %10182 = vmatpush1.msra.mxu0 0.0
    %10183 = vmatprep.subr.mxu0 0.0
    %10184 = vmatpush1.msra.mxu0 0.0
    %10185 = vmatprep.subr.mxu0 0.0
    %10186 = vmatpush1.msra.mxu0 0.0
    %10187 = vmatprep.subr.mxu0 0.0
    %10188 = vmatpush1.msra.mxu0 0.0
    %10189 = vmatprep.subr.mxu0 0.0
    %10190 = vmatpush1.msra.mxu0 0.0
    %10191 = vmatprep.subr.mxu0 0.0
    %10192 = vmatpush1.msra.mxu0 0.0
    %10193 = vmatprep.subr.mxu0 0.0
    %10194 = vmatpush1.msra.mxu0 0.0
    %10195 = vmatprep.subr.mxu0 0.0
    %10196 = vmatpush1.msra.mxu0 0.0
    %10197 = vmatprep.subr.mxu0 0.0
    %10198 = vmatpush1.msra.mxu0 0.0
    %10199 = vmatprep.subr.mxu0 0.0
    %10200 = vmatpush1.msra.mxu0 0.0
    %10201 = vmatprep.subr.mxu0 0.0
    %10202 = vmatpush1.msra.mxu0 0.0
    %10203 = vmatprep.subr.mxu0 0.0
    %10204 = vmatpush1.msra.mxu0 0.0
    %10205 = vmatprep.subr.mxu0 0.0
    %10206 = vmatpush1.msra.mxu0 0.0
    %10207 = vmatprep.subr.mxu0 0.0
    %10208 = vmatpush1.msra.mxu0 0.0
    %10209 = vmatprep.subr.mxu0 0.0
    %10210 = vmatpush1.msra.mxu0 0.0
    %10211 = vmatprep.subr.mxu0 0.0
    %10212 = vmatpush1.msra.mxu0 0.0
    %10213 = vmatprep.subr.mxu0 0.0
    %10214 = vmatpush1.msra.mxu0 0.0
    %10215 = vmatprep.subr.mxu0 0.0
    %10216 = vmatpush1.msra.mxu0 0.0
    %10217 = vmatprep.subr.mxu0 0.0
    %10218 = vmatpush1.msra.mxu0 0.0
    %10219 = vmatprep.subr.mxu0 0.0
    %10220 = vmatpush1.msra.mxu0 0.0
    %10221 = vmatprep.subr.mxu0 0.0
    %10222 = vmatpush1.msra.mxu0 0.0
    %10223 = vmatprep.mubr.f32.mxu0 0.0
    %10224 = vmatmul.mubr.f32.gmra.mrb[0].mxu0 %v10017
    %v10225 = vpop.f32.mrb[0].mxu0
    %v10226 = vadd.f32 0.0, %v10225
    %v10227 = vpop.f32.mrb[0].mxu0
    %10228 = vdwg.mxu0
    %10229 = vmatprep.subr.mxu0 0.0
    %10230 = vmatpush1.msra.mxu0 %v7862
    %10231 = vmatprep.subr.mxu0 0.0
    %10232 = vmatpush1.msra.mxu0 %v7863
    %10233 = vmatprep.subr.mxu0 0.0
    %10234 = vmatpush1.msra.mxu0 %v7864
    %10235 = vmatprep.subr.mxu0 0.0
    %10236 = vmatpush1.msra.mxu0 %v7865
    %10237 = vmatprep.subr.mxu0 0.0
    %10238 = vmatpush1.msra.mxu0 0.0
    %10239 = vmatprep.subr.mxu0 0.0
    %10240 = vmatpush1.msra.mxu0 0.0
    %10241 = vmatprep.subr.mxu0 0.0
    %10242 = vmatpush1.msra.mxu0 0.0
    %10243 = vmatprep.subr.mxu0 0.0
    %10244 = vmatpush1.msra.mxu0 0.0
    %10245 = vmatprep.subr.mxu0 0.0
    %10246 = vmatpush1.msra.mxu0 0.0
    %10247 = vmatprep.subr.mxu0 0.0
    %10248 = vmatpush1.msra.mxu0 0.0
    %10249 = vmatprep.subr.mxu0 0.0
    %10250 = vmatpush1.msra.mxu0 0.0
    %10251 = vmatprep.subr.mxu0 0.0
    %10252 = vmatpush1.msra.mxu0 0.0
    %10253 = vmatprep.subr.mxu0 0.0
    %10254 = vmatpush1.msra.mxu0 0.0
    %10255 = vmatprep.subr.mxu0 0.0
    %10256 = vmatpush1.msra.mxu0 0.0
    %10257 = vmatprep.subr.mxu0 0.0
    %10258 = vmatpush1.msra.mxu0 0.0
    %10259 = vmatprep.subr.mxu0 0.0
    %10260 = vmatpush1.msra.mxu0 0.0
    %10261 = vmatprep.subr.mxu0 0.0
    %10262 = vmatpush1.msra.mxu0 0.0
    %10263 = vmatprep.subr.mxu0 0.0
    %10264 = vmatpush1.msra.mxu0 0.0
    %10265 = vmatprep.subr.mxu0 0.0
    %10266 = vmatpush1.msra.mxu0 0.0
    %10267 = vmatprep.subr.mxu0 0.0
    %10268 = vmatpush1.msra.mxu0 0.0
    %10269 = vmatprep.subr.mxu0 0.0
    %10270 = vmatpush1.msra.mxu0 0.0
    %10271 = vmatprep.subr.mxu0 0.0
    %10272 = vmatpush1.msra.mxu0 0.0
    %10273 = vmatprep.subr.mxu0 0.0
    %10274 = vmatpush1.msra.mxu0 0.0
    %10275 = vmatprep.subr.mxu0 0.0
    %10276 = vmatpush1.msra.mxu0 0.0
    %10277 = vmatprep.subr.mxu0 0.0
    %10278 = vmatpush1.msra.mxu0 0.0
    %10279 = vmatprep.subr.mxu0 0.0
    %10280 = vmatpush1.msra.mxu0 0.0
    %10281 = vmatprep.subr.mxu0 0.0
    %10282 = vmatpush1.msra.mxu0 0.0
    %10283 = vmatprep.subr.mxu0 0.0
    %10284 = vmatpush1.msra.mxu0 0.0
    %10285 = vmatprep.subr.mxu0 0.0
    %10286 = vmatpush1.msra.mxu0 0.0
    %10287 = vmatprep.subr.mxu0 0.0
    %10288 = vmatpush1.msra.mxu0 0.0
    %10289 = vmatprep.subr.mxu0 0.0
    %10290 = vmatpush1.msra.mxu0 0.0
    %10291 = vmatprep.subr.mxu0 0.0
    %10292 = vmatpush1.msra.mxu0 0.0
    %10293 = vmatprep.mubr.f32.mxu0 0.0
    %10294 = vmatmul.mubr.f32.gmra.mrb[0].mxu0 %v10017
    %v10295 = vpop.f32.mrb[0].mxu0
    %v10296 = vadd.f32 0.0, %v10295
    %v10297 = vpop.f32.mrb[0].mxu0
    %10298 = vdwg.mxu0
    %10299 = vmatprep.subr.mxu0 0.0
    %10300 = vmatpush1.msra.mxu0 %v7867
    %10301 = vmatprep.subr.mxu0 0.0
    %10302 = vmatpush1.msra.mxu0 %v7868
    %10303 = vmatprep.subr.mxu0 0.0
    %10304 = vmatpush1.msra.mxu0 %v7869
    %10305 = vmatprep.subr.mxu0 0.0
    %10306 = vmatpush1.msra.mxu0 %v7870
    %10307 = vmatprep.subr.mxu0 0.0
    %10308 = vmatpush1.msra.mxu0 0.0
    %10309 = vmatprep.subr.mxu0 0.0
    %10310 = vmatpush1.msra.mxu0 0.0
    %10311 = vmatprep.subr.mxu0 0.0
    %10312 = vmatpush1.msra.mxu0 0.0
    %10313 = vmatprep.subr.mxu0 0.0
    %10314 = vmatpush1.msra.mxu0 0.0
    %10315 = vmatprep.subr.mxu0 0.0
    %10316 = vmatpush1.msra.mxu0 0.0
    %10317 = vmatprep.subr.mxu0 0.0
    %10318 = vmatpush1.msra.mxu0 0.0
    %10319 = vmatprep.subr.mxu0 0.0
    %10320 = vmatpush1.msra.mxu0 0.0
    %10321 = vmatprep.subr.mxu0 0.0
    %10322 = vmatpush1.msra.mxu0 0.0
    %10323 = vmatprep.subr.mxu0 0.0
    %10324 = vmatpush1.msra.mxu0 0.0
    %10325 = vmatprep.subr.mxu0 0.0
    %10326 = vmatpush1.msra.mxu0 0.0
    %10327 = vmatprep.subr.mxu0 0.0
    %10328 = vmatpush1.msra.mxu0 0.0
    %10329 = vmatprep.subr.mxu0 0.0
    %10330 = vmatpush1.msra.mxu0 0.0
    %10331 = vmatprep.subr.mxu0 0.0
    %10332 = vmatpush1.msra.mxu0 0.0
    %10333 = vmatprep.subr.mxu0 0.0
    %10334 = vmatpush1.msra.mxu0 0.0
    %10335 = vmatprep.subr.mxu0 0.0
    %10336 = vmatpush1.msra.mxu0 0.0
    %10337 = vmatprep.subr.mxu0 0.0
    %10338 = vmatpush1.msra.mxu0 0.0
    %10339 = vmatprep.subr.mxu0 0.0
    %10340 = vmatpush1.msra.mxu0 0.0
    %10341 = vmatprep.subr.mxu0 0.0
    %10342 = vmatpush1.msra.mxu0 0.0
    %10343 = vmatprep.subr.mxu0 0.0
    %10344 = vmatpush1.msra.mxu0 0.0
    %10345 = vmatprep.subr.mxu0 0.0
    %10346 = vmatpush1.msra.mxu0 0.0
    %10347 = vmatprep.subr.mxu0 0.0
    %10348 = vmatpush1.msra.mxu0 0.0
    %10349 = vmatprep.subr.mxu0 0.0
    %10350 = vmatpush1.msra.mxu0 0.0
    %10351 = vmatprep.subr.mxu0 0.0
    %10352 = vmatpush1.msra.mxu0 0.0
    %10353 = vmatprep.subr.mxu0 0.0
    %10354 = vmatpush1.msra.mxu0 0.0
    %10355 = vmatprep.subr.mxu0 0.0
    %10356 = vmatpush1.msra.mxu0 0.0
    %10357 = vmatprep.subr.mxu0 0.0
    %10358 = vmatpush1.msra.mxu0 0.0
    %10359 = vmatprep.subr.mxu0 0.0
    %10360 = vmatpush1.msra.mxu0 0.0
    %10361 = vmatprep.subr.mxu0 0.0
    %10362 = vmatpush1.msra.mxu0 0.0
    %10363 = vmatprep.mubr.f32.mxu0 0.0
    %10364 = vmatmul.mubr.f32.gmra.mrb[0].mxu0 %v10017
    %v10365 = vpop.f32.mrb[0].mxu0
    %v10366 = vadd.f32 0.0, %v10365
    %v10367 = vpop.f32.mrb[0].mxu0
    %10368 = vdwg.mxu0
    %10369 = vmatprep.subr.mxu0 0.0
    %10370 = vmatpush1.msra.mxu0 %v7871
    %10371 = vmatprep.subr.mxu0 0.0
    %10372 = vmatpush1.msra.mxu0 %v7872
    %10373 = vmatprep.subr.mxu0 0.0
    %10374 = vmatpush1.msra.mxu0 %v7873
    %10375 = vmatprep.subr.mxu0 0.0
    %10376 = vmatpush1.msra.mxu0 %v7874
    %10377 = vmatprep.subr.mxu0 0.0
    %10378 = vmatpush1.msra.mxu0 0.0
    %10379 = vmatprep.subr.mxu0 0.0
    %10380 = vmatpush1.msra.mxu0 0.0
    %10381 = vmatprep.subr.mxu0 0.0
    %10382 = vmatpush1.msra.mxu0 0.0
    %10383 = vmatprep.subr.mxu0 0.0
    %10384 = vmatpush1.msra.mxu0 0.0
    %10385 = vmatprep.subr.mxu0 0.0
    %10386 = vmatpush1.msra.mxu0 0.0
    %10387 = vmatprep.subr.mxu0 0.0
    %10388 = vmatpush1.msra.mxu0 0.0
    %10389 = vmatprep.subr.mxu0 0.0
    %10390 = vmatpush1.msra.mxu0 0.0
    %10391 = vmatprep.subr.mxu0 0.0
    %10392 = vmatpush1.msra.mxu0 0.0
    %10393 = vmatprep.subr.mxu0 0.0
    %10394 = vmatpush1.msra.mxu0 0.0
    %10395 = vmatprep.subr.mxu0 0.0
    %10396 = vmatpush1.msra.mxu0 0.0
    %10397 = vmatprep.subr.mxu0 0.0
    %10398 = vmatpush1.msra.mxu0 0.0
    %10399 = vmatprep.subr.mxu0 0.0
    %10400 = vmatpush1.msra.mxu0 0.0
    %10401 = vmatprep.subr.mxu0 0.0
    %10402 = vmatpush1.msra.mxu0 0.0
    %10403 = vmatprep.subr.mxu0 0.0
    %10404 = vmatpush1.msra.mxu0 0.0
    %10405 = vmatprep.subr.mxu0 0.0
    %10406 = vmatpush1.msra.mxu0 0.0
    %10407 = vmatprep.subr.mxu0 0.0
    %10408 = vmatpush1.msra.mxu0 0.0
    %10409 = vmatprep.subr.mxu0 0.0
    %10410 = vmatpush1.msra.mxu0 0.0
    %10411 = vmatprep.subr.mxu0 0.0
    %10412 = vmatpush1.msra.mxu0 0.0
    %10413 = vmatprep.subr.mxu0 0.0
    %10414 = vmatpush1.msra.mxu0 0.0
    %10415 = vmatprep.subr.mxu0 0.0
    %10416 = vmatpush1.msra.mxu0 0.0
    %10417 = vmatprep.subr.mxu0 0.0
    %10418 = vmatpush1.msra.mxu0 0.0
    %10419 = vmatprep.subr.mxu0 0.0
    %10420 = vmatpush1.msra.mxu0 0.0
    %10421 = vmatprep.subr.mxu0 0.0
    %10422 = vmatpush1.msra.mxu0 0.0
    %10423 = vmatprep.subr.mxu0 0.0
    %10424 = vmatpush1.msra.mxu0 0.0
    %10425 = vmatprep.subr.mxu0 0.0
    %10426 = vmatpush1.msra.mxu0 0.0
    %10427 = vmatprep.subr.mxu0 0.0
    %10428 = vmatpush1.msra.mxu0 0.0
    %10429 = vmatprep.subr.mxu0 0.0
    %10430 = vmatpush1.msra.mxu0 0.0
    %10431 = vmatprep.subr.mxu0 0.0
    %10432 = vmatpush1.msra.mxu0 0.0
    %10433 = vmatprep.mubr.f32.mxu0 0.0
    %10434 = vmatmul.mubr.f32.gmra.mrb[0].mxu0 %v10017
    %v10435 = vpop.f32.mrb[0].mxu0
    %v10436 = vadd.f32 0.0, %v10435
    %v10437 = vpop.f32.mrb[0].mxu0
    %10438 = vdwg.mxu0
    %10439 = vmatprep.subr.mxu0 0.0
    %10440 = vmatpush1.msra.mxu0 %v7875
    %10441 = vmatprep.subr.mxu0 0.0
    %10442 = vmatpush1.msra.mxu0 %v7876
    %10443 = vmatprep.subr.mxu0 0.0
    %10444 = vmatpush1.msra.mxu0 %v7877
    %10445 = vmatprep.subr.mxu0 0.0
    %10446 = vmatpush1.msra.mxu0 %v7878
    %10447 = vmatprep.subr.mxu0 0.0
    %10448 = vmatpush1.msra.mxu0 0.0
    %10449 = vmatprep.subr.mxu0 0.0
    %10450 = vmatpush1.msra.mxu0 0.0
    %10451 = vmatprep.subr.mxu0 0.0
    %10452 = vmatpush1.msra.mxu0 0.0
    %10453 = vmatprep.subr.mxu0 0.0
    %10454 = vmatpush1.msra.mxu0 0.0
    %10455 = vmatprep.subr.mxu0 0.0
    %10456 = vmatpush1.msra.mxu0 0.0
    %10457 = vmatprep.subr.mxu0 0.0
    %10458 = vmatpush1.msra.mxu0 0.0
    %10459 = vmatprep.subr.mxu0 0.0
    %10460 = vmatpush1.msra.mxu0 0.0
    %10461 = vmatprep.subr.mxu0 0.0
    %10462 = vmatpush1.msra.mxu0 0.0
    %10463 = vmatprep.subr.mxu0 0.0
    %10464 = vmatpush1.msra.mxu0 0.0
    %10465 = vmatprep.subr.mxu0 0.0
    %10466 = vmatpush1.msra.mxu0 0.0
    %10467 = vmatprep.subr.mxu0 0.0
    %10468 = vmatpush1.msra.mxu0 0.0
    %10469 = vmatprep.subr.mxu0 0.0
    %10470 = vmatpush1.msra.mxu0 0.0
    %10471 = vmatprep.subr.mxu0 0.0
    %10472 = vmatpush1.msra.mxu0 0.0
    %10473 = vmatprep.subr.mxu0 0.0
    %10474 = vmatpush1.msra.mxu0 0.0
    %10475 = vmatprep.subr.mxu0 0.0
    %10476 = vmatpush1.msra.mxu0 0.0
    %10477 = vmatprep.subr.mxu0 0.0
    %10478 = vmatpush1.msra.mxu0 0.0
    %10479 = vmatprep.subr.mxu0 0.0
    %10480 = vmatpush1.msra.mxu0 0.0
    %10481 = vmatprep.subr.mxu0 0.0
    %10482 = vmatpush1.msra.mxu0 0.0
    %10483 = vmatprep.subr.mxu0 0.0
    %10484 = vmatpush1.msra.mxu0 0.0
    %10485 = vmatprep.subr.mxu0 0.0
    %10486 = vmatpush1.msra.mxu0 0.0
    %10487 = vmatprep.subr.mxu0 0.0
    %10488 = vmatpush1.msra.mxu0 0.0
    %10489 = vmatprep.subr.mxu0 0.0
    %10490 = vmatpush1.msra.mxu0 0.0
    %10491 = vmatprep.subr.mxu0 0.0
    %10492 = vmatpush1.msra.mxu0 0.0
    %10493 = vmatprep.subr.mxu0 0.0
    %10494 = vmatpush1.msra.mxu0 0.0
    %10495 = vmatprep.subr.mxu0 0.0
    %10496 = vmatpush1.msra.mxu0 0.0
    %10497 = vmatprep.subr.mxu0 0.0
    %10498 = vmatpush1.msra.mxu0 0.0
    %10499 = vmatprep.subr.mxu0 0.0
    %10500 = vmatpush1.msra.mxu0 0.0
    %10501 = vmatprep.subr.mxu0 0.0
    %10502 = vmatpush1.msra.mxu0 0.0
    %10503 = vmatprep.mubr.f32.mxu0 0.0
    %10504 = vmatmul.mubr.f32.gmra.mrb[0].mxu0 %v10017
    %v10505 = vpop.f32.mrb[0].mxu0
    %v10506 = vadd.f32 0.0, %v10505
    %v10507 = vpop.f32.mrb[0].mxu0
    %10508 = vdwg.mxu0
    %10509 = vmatprep.subr.mxu0 0.0
    %10510 = vmatpush1.msra.mxu0 %v7879
    %10511 = vmatprep.subr.mxu0 0.0
    %10512 = vmatpush1.msra.mxu0 %v7880
    %10513 = vmatprep.subr.mxu0 0.0
    %10514 = vmatpush1.msra.mxu0 %v7881
    %10515 = vmatprep.subr.mxu0 0.0
    %10516 = vmatpush1.msra.mxu0 %v7882
    %10517 = vmatprep.subr.mxu0 0.0
    %10518 = vmatpush1.msra.mxu0 0.0
    %10519 = vmatprep.subr.mxu0 0.0
    %10520 = vmatpush1.msra.mxu0 0.0
    %10521 = vmatprep.subr.mxu0 0.0
    %10522 = vmatpush1.msra.mxu0 0.0
    %10523 = vmatprep.subr.mxu0 0.0
    %10524 = vmatpush1.msra.mxu0 0.0
    %10525 = vmatprep.subr.mxu0 0.0
    %10526 = vmatpush1.msra.mxu0 0.0
    %10527 = vmatprep.subr.mxu0 0.0
    %10528 = vmatpush1.msra.mxu0 0.0
    %10529 = vmatprep.subr.mxu0 0.0
    %10530 = vmatpush1.msra.mxu0 0.0
    %10531 = vmatprep.subr.mxu0 0.0
    %10532 = vmatpush1.msra.mxu0 0.0
    %10533 = vmatprep.subr.mxu0 0.0
    %10534 = vmatpush1.msra.mxu0 0.0
    %10535 = vmatprep.subr.mxu0 0.0
    %10536 = vmatpush1.msra.mxu0 0.0
    %10537 = vmatprep.subr.mxu0 0.0
    %10538 = vmatpush1.msra.mxu0 0.0
    %10539 = vmatprep.subr.mxu0 0.0
    %10540 = vmatpush1.msra.mxu0 0.0
    %10541 = vmatprep.subr.mxu0 0.0
    %10542 = vmatpush1.msra.mxu0 0.0
    %10543 = vmatprep.subr.mxu0 0.0
    %10544 = vmatpush1.msra.mxu0 0.0
    %10545 = vmatprep.subr.mxu0 0.0
    %10546 = vmatpush1.msra.mxu0 0.0
    %10547 = vmatprep.subr.mxu0 0.0
    %10548 = vmatpush1.msra.mxu0 0.0
    %10549 = vmatprep.subr.mxu0 0.0
    %10550 = vmatpush1.msra.mxu0 0.0
    %10551 = vmatprep.subr.mxu0 0.0
    %10552 = vmatpush1.msra.mxu0 0.0
    %10553 = vmatprep.subr.mxu0 0.0
    %10554 = vmatpush1.msra.mxu0 0.0
    %10555 = vmatprep.subr.mxu0 0.0
    %10556 = vmatpush1.msra.mxu0 0.0
    %10557 = vmatprep.subr.mxu0 0.0
    %10558 = vmatpush1.msra.mxu0 0.0
    %10559 = vmatprep.subr.mxu0 0.0
    %10560 = vmatpush1.msra.mxu0 0.0
    %10561 = vmatprep.subr.mxu0 0.0
    %10562 = vmatpush1.msra.mxu0 0.0
    %10563 = vmatprep.subr.mxu0 0.0
    %10564 = vmatpush1.msra.mxu0 0.0
    %10565 = vmatprep.subr.mxu0 0.0
    %10566 = vmatpush1.msra.mxu0 0.0
    %10567 = vmatprep.subr.mxu0 0.0
    %10568 = vmatpush1.msra.mxu0 0.0
    %10569 = vmatprep.subr.mxu0 0.0
    %10570 = vmatpush1.msra.mxu0 0.0
    %10571 = vmatprep.subr.mxu0 0.0
    %10572 = vmatpush1.msra.mxu0 0.0
    %10573 = vmatprep.mubr.f32.mxu0 0.0
    %10574 = vmatmul.mubr.f32.gmra.mrb[0].mxu0 %v10017
    %v10575 = vpop.f32.mrb[0].mxu0
    %v10576 = vadd.f32 0.0, %v10575
    %v10577 = vpop.f32.mrb[0].mxu0
    %10578 = vdwg.mxu0
    %v10580 = vsel %vm1103, %v9803, 0
    %v10583 = vsel %vm1103, %v10086, 0
    %10585 = vmatprep.subr.mxu0 0.0
    %10586 = vmatpush1.xpose.msra.mxu0 %v10583
    %10587 = vmatprep.subr.mxu0 0.0
    %10588 = vmatpush1.xpose.msra.mxu0 0.0
    %10589 = vmatprep.subr.mxu0 0.0
    %10590 = vmatpush1.xpose.msra.mxu0 0.0
    %10591 = vmatprep.subr.mxu0 0.0
    %10592 = vmatpush1.xpose.msra.mxu0 0.0
    %10593 = vmatprep.subr.mxu0 0.0
    %10594 = vmatpush1.xpose.msra.mxu0 0.0
    %10595 = vmatprep.subr.mxu0 0.0
    %10596 = vmatpush1.xpose.msra.mxu0 0.0
    %10597 = vmatprep.subr.mxu0 0.0
    %10598 = vmatpush1.xpose.msra.mxu0 0.0
    %10599 = vmatprep.subr.mxu0 0.0
    %10600 = vmatpush1.xpose.msra.mxu0 0.0
    %10601 = vmatprep.subr.mxu0 0.0
    %10602 = vmatpush1.xpose.msra.mxu0 0.0
    %10603 = vmatprep.subr.mxu0 0.0
    %10604 = vmatpush1.xpose.msra.mxu0 0.0
    %10605 = vmatprep.subr.mxu0 0.0
    %10606 = vmatpush1.xpose.msra.mxu0 0.0
    %10607 = vmatprep.subr.mxu0 0.0
    %10608 = vmatpush1.xpose.msra.mxu0 0.0
    %10609 = vmatprep.subr.mxu0 0.0
    %10610 = vmatpush1.xpose.msra.mxu0 0.0
    %10611 = vmatprep.subr.mxu0 0.0
    %10612 = vmatpush1.xpose.msra.mxu0 0.0
    %10613 = vmatprep.subr.mxu0 0.0
    %10614 = vmatpush1.xpose.msra.mxu0 0.0
    %10615 = vmatprep.subr.mxu0 0.0
    %10616 = vmatpush1.xpose.msra.mxu0 0.0
    %10617 = vmatprep.subr.mxu0 0.0
    %10618 = vmatpush1.xpose.msra.mxu0 0.0
    %10619 = vmatprep.subr.mxu0 0.0
    %10620 = vmatpush1.xpose.msra.mxu0 0.0
    %10621 = vmatprep.subr.mxu0 0.0
    %10622 = vmatpush1.xpose.msra.mxu0 0.0
    %10623 = vmatprep.subr.mxu0 0.0
    %10624 = vmatpush1.xpose.msra.mxu0 0.0
    %10625 = vmatprep.subr.mxu0 0.0
    %10626 = vmatpush1.xpose.msra.mxu0 0.0
    %10627 = vmatprep.subr.mxu0 0.0
    %10628 = vmatpush1.xpose.msra.mxu0 0.0
    %10629 = vmatprep.subr.mxu0 0.0
    %10630 = vmatpush1.xpose.msra.mxu0 0.0
    %10631 = vmatprep.subr.mxu0 0.0
    %10632 = vmatpush1.xpose.msra.mxu0 0.0
    %10633 = vmatprep.subr.mxu0 0.0
    %10634 = vmatpush1.xpose.msra.mxu0 0.0
    %10635 = vmatprep.subr.mxu0 0.0
    %10636 = vmatpush1.xpose.msra.mxu0 0.0
    %10637 = vmatprep.subr.mxu0 0.0
    %10638 = vmatpush1.xpose.msra.mxu0 0.0
    %10639 = vmatprep.subr.mxu0 0.0
    %10640 = vmatpush1.xpose.msra.mxu0 0.0
    %10641 = vmatprep.subr.mxu0 0.0
    %10642 = vmatpush1.xpose.msra.mxu0 0.0
    %10643 = vmatprep.subr.mxu0 0.0
    %10644 = vmatpush1.xpose.msra.mxu0 0.0
    %10645 = vmatprep.subr.mxu0 0.0
    %10646 = vmatpush1.xpose.msra.mxu0 0.0
    %10647 = vmatprep.subr.mxu0 0.0
    %10648 = vmatpush1.xpose.msra.mxu0 0.0
    %10649 = vmatprep.mubr.f32.mxu0 0.0
    %10650 = vmatmul.mubr.f32.gmra.mrb[0].mxu0 %v10580
    %v10651 = vpop.f32.mrb[0].mxu0
    %v10652 = vadd.f32 0.0, %v10651
    %v10653 = vpop.f32.mrb[0].mxu0
    %10654 = vdwg.mxu0
    %v10656 = vsel %vm1103, %v9873, 0
    %v10659 = vsel %vm1103, %v10156, 0
    %10661 = vmatprep.subr.mxu0 0.0
    %10662 = vmatpush1.xpose.msra.mxu0 %v10659
    %10663 = vmatprep.subr.mxu0 0.0
    %10664 = vmatpush1.xpose.msra.mxu0 0.0
    %10665 = vmatprep.subr.mxu0 0.0
    %10666 = vmatpush1.xpose.msra.mxu0 0.0
    %10667 = vmatprep.subr.mxu0 0.0
    %10668 = vmatpush1.xpose.msra.mxu0 0.0
    %10669 = vmatprep.subr.mxu0 0.0
    %10670 = vmatpush1.xpose.msra.mxu0 0.0
    %10671 = vmatprep.subr.mxu0 0.0
    %10672 = vmatpush1.xpose.msra.mxu0 0.0
    %10673 = vmatprep.subr.mxu0 0.0
    %10674 = vmatpush1.xpose.msra.mxu0 0.0
    %10675 = vmatprep.subr.mxu0 0.0
    %10676 = vmatpush1.xpose.msra.mxu0 0.0
    %10677 = vmatprep.subr.mxu0 0.0
    %10678 = vmatpush1.xpose.msra.mxu0 0.0
    %10679 = vmatprep.subr.mxu0 0.0
    %10680 = vmatpush1.xpose.msra.mxu0 0.0
    %10681 = vmatprep.subr.mxu0 0.0
    %10682 = vmatpush1.xpose.msra.mxu0 0.0
    %10683 = vmatprep.subr.mxu0 0.0
    %10684 = vmatpush1.xpose.msra.mxu0 0.0
    %10685 = vmatprep.subr.mxu0 0.0
    %10686 = vmatpush1.xpose.msra.mxu0 0.0
    %10687 = vmatprep.subr.mxu0 0.0
    %10688 = vmatpush1.xpose.msra.mxu0 0.0
    %10689 = vmatprep.subr.mxu0 0.0
    %10690 = vmatpush1.xpose.msra.mxu0 0.0
    %10691 = vmatprep.subr.mxu0 0.0
    %10692 = vmatpush1.xpose.msra.mxu0 0.0
    %10693 = vmatprep.subr.mxu0 0.0
    %10694 = vmatpush1.xpose.msra.mxu0 0.0
    %10695 = vmatprep.subr.mxu0 0.0
    %10696 = vmatpush1.xpose.msra.mxu0 0.0
    %10697 = vmatprep.subr.mxu0 0.0
    %10698 = vmatpush1.xpose.msra.mxu0 0.0
    %10699 = vmatprep.subr.mxu0 0.0
    %10700 = vmatpush1.xpose.msra.mxu0 0.0
    %10701 = vmatprep.subr.mxu0 0.0
    %10702 = vmatpush1.xpose.msra.mxu0 0.0
    %10703 = vmatprep.subr.mxu0 0.0
    %10704 = vmatpush1.xpose.msra.mxu0 0.0
    %10705 = vmatprep.subr.mxu0 0.0
    %10706 = vmatpush1.xpose.msra.mxu0 0.0
    %10707 = vmatprep.subr.mxu0 0.0
    %10708 = vmatpush1.xpose.msra.mxu0 0.0
    %10709 = vmatprep.subr.mxu0 0.0
    %10710 = vmatpush1.xpose.msra.mxu0 0.0
    %10711 = vmatprep.subr.mxu0 0.0
    %10712 = vmatpush1.xpose.msra.mxu0 0.0
    %10713 = vmatprep.subr.mxu0 0.0
    %10714 = vmatpush1.xpose.msra.mxu0 0.0
    %10715 = vmatprep.subr.mxu0 0.0
    %10716 = vmatpush1.xpose.msra.mxu0 0.0
    %10717 = vmatprep.subr.mxu0 0.0
    %10718 = vmatpush1.xpose.msra.mxu0 0.0
    %10719 = vmatprep.subr.mxu0 0.0
    %10720 = vmatpush1.xpose.msra.mxu0 0.0
    %10721 = vmatprep.subr.mxu0 0.0
    %10722 = vmatpush1.xpose.msra.mxu0 0.0
    %10723 = vmatprep.subr.mxu0 0.0
    %10724 = vmatpush1.xpose.msra.mxu0 0.0
    %10725 = vmatprep.mubr.f32.mxu0 0.0
    %10726 = vmatmul.mubr.f32.gmra.mrb[0].mxu0 %v10656
    %v10727 = vpop.f32.mrb[0].mxu0
    %v10728 = vadd.f32 0.0, %v10727
    %v10729 = vpop.f32.mrb[0].mxu0
    %10730 = vdwg.mxu0
    %v10732 = vsel %vm1103, %v9943, 0
    %v10735 = vsel %vm1103, %v10226, 0
    %10737 = vmatprep.subr.mxu0 0.0
    %10738 = vmatpush1.xpose.msra.mxu0 %v10735
    %10739 = vmatprep.subr.mxu0 0.0
    %10740 = vmatpush1.xpose.msra.mxu0 0.0
    %10741 = vmatprep.subr.mxu0 0.0
    %10742 = vmatpush1.xpose.msra.mxu0 0.0
    %10743 = vmatprep.subr.mxu0 0.0
    %10744 = vmatpush1.xpose.msra.mxu0 0.0
    %10745 = vmatprep.subr.mxu0 0.0
    %10746 = vmatpush1.xpose.msra.mxu0 0.0
    %10747 = vmatprep.subr.mxu0 0.0
    %10748 = vmatpush1.xpose.msra.mxu0 0.0
    %10749 = vmatprep.subr.mxu0 0.0
    %10750 = vmatpush1.xpose.msra.mxu0 0.0
    %10751 = vmatprep.subr.mxu0 0.0
    %10752 = vmatpush1.xpose.msra.mxu0 0.0
    %10753 = vmatprep.subr.mxu0 0.0
    %10754 = vmatpush1.xpose.msra.mxu0 0.0
    %10755 = vmatprep.subr.mxu0 0.0
    %10756 = vmatpush1.xpose.msra.mxu0 0.0
    %10757 = vmatprep.subr.mxu0 0.0
    %10758 = vmatpush1.xpose.msra.mxu0 0.0
    %10759 = vmatprep.subr.mxu0 0.0
    %10760 = vmatpush1.xpose.msra.mxu0 0.0
    %10761 = vmatprep.subr.mxu0 0.0
    %10762 = vmatpush1.xpose.msra.mxu0 0.0
    %10763 = vmatprep.subr.mxu0 0.0
    %10764 = vmatpush1.xpose.msra.mxu0 0.0
    %10765 = vmatprep.subr.mxu0 0.0
    %10766 = vmatpush1.xpose.msra.mxu0 0.0
    %10767 = vmatprep.subr.mxu0 0.0
    %10768 = vmatpush1.xpose.msra.mxu0 0.0
    %10769 = vmatprep.subr.mxu0 0.0
    %10770 = vmatpush1.xpose.msra.mxu0 0.0
    %10771 = vmatprep.subr.mxu0 0.0
    %10772 = vmatpush1.xpose.msra.mxu0 0.0
    %10773 = vmatprep.subr.mxu0 0.0
    %10774 = vmatpush1.xpose.msra.mxu0 0.0
    %10775 = vmatprep.subr.mxu0 0.0
    %10776 = vmatpush1.xpose.msra.mxu0 0.0
    %10777 = vmatprep.subr.mxu0 0.0
    %10778 = vmatpush1.xpose.msra.mxu0 0.0
    %10779 = vmatprep.subr.mxu0 0.0
    %10780 = vmatpush1.xpose.msra.mxu0 0.0
    %10781 = vmatprep.subr.mxu0 0.0
    %10782 = vmatpush1.xpose.msra.mxu0 0.0
    %10783 = vmatprep.subr.mxu0 0.0
    %10784 = vmatpush1.xpose.msra.mxu0 0.0
    %10785 = vmatprep.subr.mxu0 0.0
    %10786 = vmatpush1.xpose.msra.mxu0 0.0
    %10787 = vmatprep.subr.mxu0 0.0
    %10788 = vmatpush1.xpose.msra.mxu0 0.0
    %10789 = vmatprep.subr.mxu0 0.0
    %10790 = vmatpush1.xpose.msra.mxu0 0.0
    %10791 = vmatprep.subr.mxu0 0.0
    %10792 = vmatpush1.xpose.msra.mxu0 0.0
    %10793 = vmatprep.subr.mxu0 0.0
    %10794 = vmatpush1.xpose.msra.mxu0 0.0
    %10795 = vmatprep.subr.mxu0 0.0
    %10796 = vmatpush1.xpose.msra.mxu0 0.0
    %10797 = vmatprep.subr.mxu0 0.0
    %10798 = vmatpush1.xpose.msra.mxu0 0.0
    %10799 = vmatprep.subr.mxu0 0.0
    %10800 = vmatpush1.xpose.msra.mxu0 0.0
    %10801 = vmatprep.mubr.f32.mxu0 0.0
    %10802 = vmatmul.mubr.f32.gmra.mrb[0].mxu0 %v10732
    %v10803 = vpop.f32.mrb[0].mxu0
    %v10804 = vadd.f32 0.0, %v10803
    %v10805 = vpop.f32.mrb[0].mxu0
    %10806 = vdwg.mxu0
    %v10808 = vsel %vm1103, %v10013, 0
    %v10811 = vsel %vm1103, %v10296, 0
    %10813 = vmatprep.subr.mxu0 0.0
    %10814 = vmatpush1.xpose.msra.mxu0 %v10811
    %10815 = vmatprep.subr.mxu0 0.0
    %10816 = vmatpush1.xpose.msra.mxu0 0.0
    %10817 = vmatprep.subr.mxu0 0.0
    %10818 = vmatpush1.xpose.msra.mxu0 0.0
    %10819 = vmatprep.subr.mxu0 0.0
    %10820 = vmatpush1.xpose.msra.mxu0 0.0
    %10821 = vmatprep.subr.mxu0 0.0
    %10822 = vmatpush1.xpose.msra.mxu0 0.0
    %10823 = vmatprep.subr.mxu0 0.0
    %10824 = vmatpush1.xpose.msra.mxu0 0.0
    %10825 = vmatprep.subr.mxu0 0.0
    %10826 = vmatpush1.xpose.msra.mxu0 0.0
    %10827 = vmatprep.subr.mxu0 0.0
    %10828 = vmatpush1.xpose.msra.mxu0 0.0
    %10829 = vmatprep.subr.mxu0 0.0
    %10830 = vmatpush1.xpose.msra.mxu0 0.0
    %10831 = vmatprep.subr.mxu0 0.0
    %10832 = vmatpush1.xpose.msra.mxu0 0.0
    %10833 = vmatprep.subr.mxu0 0.0
    %10834 = vmatpush1.xpose.msra.mxu0 0.0
    %10835 = vmatprep.subr.mxu0 0.0
    %10836 = vmatpush1.xpose.msra.mxu0 0.0
    %10837 = vmatprep.subr.mxu0 0.0
    %10838 = vmatpush1.xpose.msra.mxu0 0.0
    %10839 = vmatprep.subr.mxu0 0.0
    %10840 = vmatpush1.xpose.msra.mxu0 0.0
    %10841 = vmatprep.subr.mxu0 0.0
    %10842 = vmatpush1.xpose.msra.mxu0 0.0
    %10843 = vmatprep.subr.mxu0 0.0
    %10844 = vmatpush1.xpose.msra.mxu0 0.0
    %10845 = vmatprep.subr.mxu0 0.0
    %10846 = vmatpush1.xpose.msra.mxu0 0.0
    %10847 = vmatprep.subr.mxu0 0.0
    %10848 = vmatpush1.xpose.msra.mxu0 0.0
    %10849 = vmatprep.subr.mxu0 0.0
    %10850 = vmatpush1.xpose.msra.mxu0 0.0
    %10851 = vmatprep.subr.mxu0 0.0
    %10852 = vmatpush1.xpose.msra.mxu0 0.0
    %10853 = vmatprep.subr.mxu0 0.0
    %10854 = vmatpush1.xpose.msra.mxu0 0.0
    %10855 = vmatprep.subr.mxu0 0.0
    %10856 = vmatpush1.xpose.msra.mxu0 0.0
    %10857 = vmatprep.subr.mxu0 0.0
    %10858 = vmatpush1.xpose.msra.mxu0 0.0
    %10859 = vmatprep.subr.mxu0 0.0
    %10860 = vmatpush1.xpose.msra.mxu0 0.0
    %10861 = vmatprep.subr.mxu0 0.0
    %10862 = vmatpush1.xpose.msra.mxu0 0.0
    %10863 = vmatprep.subr.mxu0 0.0
    %10864 = vmatpush1.xpose.msra.mxu0 0.0
    %10865 = vmatprep.subr.mxu0 0.0
    %10866 = vmatpush1.xpose.msra.mxu0 0.0
    %10867 = vmatprep.subr.mxu0 0.0
    %10868 = vmatpush1.xpose.msra.mxu0 0.0
    %10869 = vmatprep.subr.mxu0 0.0
    %10870 = vmatpush1.xpose.msra.mxu0 0.0
    %10871 = vmatprep.subr.mxu0 0.0
    %10872 = vmatpush1.xpose.msra.mxu0 0.0
    %10873 = vmatprep.subr.mxu0 0.0
    %10874 = vmatpush1.xpose.msra.mxu0 0.0
    %10875 = vmatprep.subr.mxu0 0.0
    %10876 = vmatpush1.xpose.msra.mxu0 0.0
    %10877 = vmatprep.mubr.f32.mxu0 0.0
    %10878 = vmatmul.mubr.f32.gmra.mrb[0].mxu0 %v10808
    %v10879 = vpop.f32.mrb[0].mxu0
    %v10880 = vadd.f32 0.0, %v10879
    %v10881 = vpop.f32.mrb[0].mxu0
    %10882 = vdwg.mxu0
    %v10883 = vsel %vm1103, %v10652, -inf
    %10884 = vmax.xlane.f32.xlu0 %v10883
    %v10885 = vpop.xlane.xlu0 %10884
    %v10886 = vsel %vm1103, %v10728, -inf
    %10887 = vmax.xlane.f32.xlu0 %v10886
    %v10888 = vpop.xlane.xlu0 %10887
    %v10889 = vsel %vm1103, %v10804, -inf
    %10890 = vmax.xlane.f32.xlu0 %v10889
    %v10891 = vpop.xlane.xlu0 %10890
    %v10892 = vsel %vm1103, %v10880, -inf
    %10893 = vmax.xlane.f32.xlu0 %v10892
    %v10894 = vpop.xlane.xlu0 %10893
    %v10895 = vsub.f32 %v10652, %v10885
    %v10896 = vsub.f32 %v10728, %v10888
    %v10897 = vsub.f32 %v10804, %v10891
    %v10898 = vsub.f32 %v10880, %v10894
    %v10899 = vmul.f32 %v10895, 1.442695
    %v10900 = vpow.pop %v10899
    %v10901 = vmul.f32 %v10896, 1.442695
    %v10902 = vpow.pop %v10901
    %v10903 = vmul.f32 %v10897, 1.442695
    %v10904 = vpow.pop %v10903
    %v10905 = vmul.f32 %v10898, 1.442695
    %v10906 = vpow.pop %v10905
    %v10907 = vsel %vm1103, %v10900, 0.0
    %10908 = vadd.xlane.f32.xlu0 %v10907
    %v10909 = vpop.xlane.xlu0 %10908
    %v10910 = vsel %vm1103, %v10902, 0.0
    %10911 = vadd.xlane.f32.xlu0 %v10910
    %v10912 = vpop.xlane.xlu0 %10911
    %v10913 = vsel %vm1103, %v10904, 0.0
    %10914 = vadd.xlane.f32.xlu0 %v10913
    %v10915 = vpop.xlane.xlu0 %10914
    %v10916 = vsel %vm1103, %v10906, 0.0
    %10917 = vadd.xlane.f32.xlu0 %v10916
    %v10918 = vpop.xlane.xlu0 %10917
    %v10919 = vrcp.pop %v10909
    %v10920 = vrcp.pop %v10912
    %v10921 = vrcp.pop %v10915
    %v10922 = vrcp.pop %v10918
    %v10923 = vmul.f32 %v10900, %v10919
    %v10924 = vmul.f32 %v10902, %v10920
    %v10925 = vmul.f32 %v10904, %v10921
    %v10926 = vmul.f32 %v10906, %v10922
    %v10928 = vsel %vm1103, %v10923, 0
    %10930 = vmatprep.subr.mxu0 0.0
    %10931 = vmatpush1.msra.mxu0 %v10366
    %10932 = vmatprep.subr.mxu0 0.0
    %10933 = vmatpush1.msra.mxu0 0.0
    %10934 = vmatprep.subr.mxu0 0.0
    %10935 = vmatpush1.msra.mxu0 0.0
    %10936 = vmatprep.subr.mxu0 0.0
    %10937 = vmatpush1.msra.mxu0 0.0
    %10938 = vmatprep.subr.mxu0 0.0
    %10939 = vmatpush1.msra.mxu0 0.0
    %10940 = vmatprep.subr.mxu0 0.0
    %10941 = vmatpush1.msra.mxu0 0.0
    %10942 = vmatprep.subr.mxu0 0.0
    %10943 = vmatpush1.msra.mxu0 0.0
    %10944 = vmatprep.subr.mxu0 0.0
    %10945 = vmatpush1.msra.mxu0 0.0
    %10946 = vmatprep.subr.mxu0 0.0
    %10947 = vmatpush1.msra.mxu0 0.0
    %10948 = vmatprep.subr.mxu0 0.0
    %10949 = vmatpush1.msra.mxu0 0.0
    %10950 = vmatprep.subr.mxu0 0.0
    %10951 = vmatpush1.msra.mxu0 0.0
    %10952 = vmatprep.subr.mxu0 0.0
    %10953 = vmatpush1.msra.mxu0 0.0
    %10954 = vmatprep.subr.mxu0 0.0
    %10955 = vmatpush1.msra.mxu0 0.0
    %10956 = vmatprep.subr.mxu0 0.0
    %10957 = vmatpush1.msra.mxu0 0.0
    %10958 = vmatprep.subr.mxu0 0.0
    %10959 = vmatpush1.msra.mxu0 0.0
    %10960 = vmatprep.subr.mxu0 0.0
    %10961 = vmatpush1.msra.mxu0 0.0
    %10962 = vmatprep.subr.mxu0 0.0
    %10963 = vmatpush1.msra.mxu0 0.0
    %10964 = vmatprep.subr.mxu0 0.0
    %10965 = vmatpush1.msra.mxu0 0.0
    %10966 = vmatprep.subr.mxu0 0.0
    %10967 = vmatpush1.msra.mxu0 0.0
    %10968 = vmatprep.subr.mxu0 0.0
    %10969 = vmatpush1.msra.mxu0 0.0
    %10970 = vmatprep.subr.mxu0 0.0
    %10971 = vmatpush1.msra.mxu0 0.0
    %10972 = vmatprep.subr.mxu0 0.0
    %10973 = vmatpush1.msra.mxu0 0.0
    %10974 = vmatprep.subr.mxu0 0.0
    %10975 = vmatpush1.msra.mxu0 0.0
    %10976 = vmatprep.subr.mxu0 0.0
    %10977 = vmatpush1.msra.mxu0 0.0
    %10978 = vmatprep.subr.mxu0 0.0
    %10979 = vmatpush1.msra.mxu0 0.0
    %10980 = vmatprep.subr.mxu0 0.0
    %10981 = vmatpush1.msra.mxu0 0.0
    %10982 = vmatprep.subr.mxu0 0.0
    %10983 = vmatpush1.msra.mxu0 0.0
    %10984 = vmatprep.subr.mxu0 0.0
    %10985 = vmatpush1.msra.mxu0 0.0
    %10986 = vmatprep.subr.mxu0 0.0
    %10987 = vmatpush1.msra.mxu0 0.0
    %10988 = vmatprep.subr.mxu0 0.0
    %10989 = vmatpush1.msra.mxu0 0.0
    %10990 = vmatprep.subr.mxu0 0.0
    %10991 = vmatpush1.msra.mxu0 0.0
    %10992 = vmatprep.subr.mxu0 0.0
    %10993 = vmatpush1.msra.mxu0 0.0
    %10994 = vmatprep.mubr.f32.mxu0 0.0
    %10995 = vmatmul.mubr.f32.gmra.mrb[0].mxu0 %v10928
    %v10996 = vpop.f32.mrb[0].mxu0
    %v10997 = vadd.f32 0.0, %v10996
    %v10998 = vpop.f32.mrb[0].mxu0
    %10999 = vdwg.mxu0
    %v11001 = vsel %vm1103, %v10924, 0
    %11003 = vmatprep.subr.mxu0 0.0
    %11004 = vmatpush1.msra.mxu0 %v10436
    %11005 = vmatprep.subr.mxu0 0.0
    %11006 = vmatpush1.msra.mxu0 0.0
    %11007 = vmatprep.subr.mxu0 0.0
    %11008 = vmatpush1.msra.mxu0 0.0
    %11009 = vmatprep.subr.mxu0 0.0
    %11010 = vmatpush1.msra.mxu0 0.0
    %11011 = vmatprep.subr.mxu0 0.0
    %11012 = vmatpush1.msra.mxu0 0.0
    %11013 = vmatprep.subr.mxu0 0.0
    %11014 = vmatpush1.msra.mxu0 0.0
    %11015 = vmatprep.subr.mxu0 0.0
    %11016 = vmatpush1.msra.mxu0 0.0
    %11017 = vmatprep.subr.mxu0 0.0
    %11018 = vmatpush1.msra.mxu0 0.0
    %11019 = vmatprep.subr.mxu0 0.0
    %11020 = vmatpush1.msra.mxu0 0.0
    %11021 = vmatprep.subr.mxu0 0.0
    %11022 = vmatpush1.msra.mxu0 0.0
    %11023 = vmatprep.subr.mxu0 0.0
    %11024 = vmatpush1.msra.mxu0 0.0
    %11025 = vmatprep.subr.mxu0 0.0
    %11026 = vmatpush1.msra.mxu0 0.0
    %11027 = vmatprep.subr.mxu0 0.0
    %11028 = vmatpush1.msra.mxu0 0.0
    %11029 = vmatprep.subr.mxu0 0.0
    %11030 = vmatpush1.msra.mxu0 0.0
    %11031 = vmatprep.subr.mxu0 0.0
    %11032 = vmatpush1.msra.mxu0 0.0
    %11033 = vmatprep.subr.mxu0 0.0
    %11034 = vmatpush1.msra.mxu0 0.0
    %11035 = vmatprep.subr.mxu0 0.0
    %11036 = vmatpush1.msra.mxu0 0.0
    %11037 = vmatprep.subr.mxu0 0.0
    %11038 = vmatpush1.msra.mxu0 0.0
    %11039 = vmatprep.subr.mxu0 0.0
    %11040 = vmatpush1.msra.mxu0 0.0
    %11041 = vmatprep.subr.mxu0 0.0
    %11042 = vmatpush1.msra.mxu0 0.0
    %11043 = vmatprep.subr.mxu0 0.0
    %11044 = vmatpush1.msra.mxu0 0.0
    %11045 = vmatprep.subr.mxu0 0.0
    %11046 = vmatpush1.msra.mxu0 0.0
    %11047 = vmatprep.subr.mxu0 0.0
    %11048 = vmatpush1.msra.mxu0 0.0
    %11049 = vmatprep.subr.mxu0 0.0
    %11050 = vmatpush1.msra.mxu0 0.0
    %11051 = vmatprep.subr.mxu0 0.0
    %11052 = vmatpush1.msra.mxu0 0.0
    %11053 = vmatprep.subr.mxu0 0.0
    %11054 = vmatpush1.msra.mxu0 0.0
    %11055 = vmatprep.subr.mxu0 0.0
    %11056 = vmatpush1.msra.mxu0 0.0
    %11057 = vmatprep.subr.mxu0 0.0
    %11058 = vmatpush1.msra.mxu0 0.0
    %11059 = vmatprep.subr.mxu0 0.0
    %11060 = vmatpush1.msra.mxu0 0.0
    %11061 = vmatprep.subr.mxu0 0.0
    %11062 = vmatpush1.msra.mxu0 0.0
    %11063 = vmatprep.subr.mxu0 0.0
    %11064 = vmatpush1.msra.mxu0 0.0
    %11065 = vmatprep.subr.mxu0 0.0
    %11066 = vmatpush1.msra.mxu0 0.0
    %11067 = vmatprep.mubr.f32.mxu0 0.0
    %11068 = vmatmul.mubr.f32.gmra.mrb[0].mxu0 %v11001
    %v11069 = vpop.f32.mrb[0].mxu0
    %v11070 = vadd.f32 0.0, %v11069
    %v11071 = vpop.f32.mrb[0].mxu0
    %11072 = vdwg.mxu0
    %v11074 = vsel %vm1103, %v10925, 0
    %11076 = vmatprep.subr.mxu0 0.0
    %11077 = vmatpush1.msra.mxu0 %v10506
    %11078 = vmatprep.subr.mxu0 0.0
    %11079 = vmatpush1.msra.mxu0 0.0
    %11080 = vmatprep.subr.mxu0 0.0
    %11081 = vmatpush1.msra.mxu0 0.0
    %11082 = vmatprep.subr.mxu0 0.0
    %11083 = vmatpush1.msra.mxu0 0.0
    %11084 = vmatprep.subr.mxu0 0.0
    %11085 = vmatpush1.msra.mxu0 0.0
    %11086 = vmatprep.subr.mxu0 0.0
    %11087 = vmatpush1.msra.mxu0 0.0
    %11088 = vmatprep.subr.mxu0 0.0
    %11089 = vmatpush1.msra.mxu0 0.0
    %11090 = vmatprep.subr.mxu0 0.0
    %11091 = vmatpush1.msra.mxu0 0.0
    %11092 = vmatprep.subr.mxu0 0.0
    %11093 = vmatpush1.msra.mxu0 0.0
    %11094 = vmatprep.subr.mxu0 0.0
    %11095 = vmatpush1.msra.mxu0 0.0
    %11096 = vmatprep.subr.mxu0 0.0
    %11097 = vmatpush1.msra.mxu0 0.0
    %11098 = vmatprep.subr.mxu0 0.0
    %11099 = vmatpush1.msra.mxu0 0.0
    %11100 = vmatprep.subr.mxu0 0.0
    %11101 = vmatpush1.msra.mxu0 0.0
    %11102 = vmatprep.subr.mxu0 0.0
    %11103 = vmatpush1.msra.mxu0 0.0
    %11104 = vmatprep.subr.mxu0 0.0
    %11105 = vmatpush1.msra.mxu0 0.0
    %11106 = vmatprep.subr.mxu0 0.0
    %11107 = vmatpush1.msra.mxu0 0.0
    %11108 = vmatprep.subr.mxu0 0.0
    %11109 = vmatpush1.msra.mxu0 0.0
    %11110 = vmatprep.subr.mxu0 0.0
    %11111 = vmatpush1.msra.mxu0 0.0
    %11112 = vmatprep.subr.mxu0 0.0
    %11113 = vmatpush1.msra.mxu0 0.0
    %11114 = vmatprep.subr.mxu0 0.0
    %11115 = vmatpush1.msra.mxu0 0.0
    %11116 = vmatprep.subr.mxu0 0.0
    %11117 = vmatpush1.msra.mxu0 0.0
    %11118 = vmatprep.subr.mxu0 0.0
    %11119 = vmatpush1.msra.mxu0 0.0
    %11120 = vmatprep.subr.mxu0 0.0
    %11121 = vmatpush1.msra.mxu0 0.0
    %11122 = vmatprep.subr.mxu0 0.0
    %11123 = vmatpush1.msra.mxu0 0.0
    %11124 = vmatprep.subr.mxu0 0.0
    %11125 = vmatpush1.msra.mxu0 0.0
    %11126 = vmatprep.subr.mxu0 0.0
    %11127 = vmatpush1.msra.mxu0 0.0
    %11128 = vmatprep.subr.mxu0 0.0
    %11129 = vmatpush1.msra.mxu0 0.0
    %11130 = vmatprep.subr.mxu0 0.0
    %11131 = vmatpush1.msra.mxu0 0.0
    %11132 = vmatprep.subr.mxu0 0.0
    %11133 = vmatpush1.msra.mxu0 0.0
    %11134 = vmatprep.subr.mxu0 0.0
    %11135 = vmatpush1.msra.mxu0 0.0
    %11136 = vmatprep.subr.mxu0 0.0
    %11137 = vmatpush1.msra.mxu0 0.0
    %11138 = vmatprep.subr.mxu0 0.0
    %11139 = vmatpush1.msra.mxu0 0.0
    %11140 = vmatprep.mubr.f32.mxu0 0.0
    %11141 = vmatmul.mubr.f32.gmra.mrb[0].mxu0 %v11074
    %v11142 = vpop.f32.mrb[0].mxu0
    %v11143 = vadd.f32 0.0, %v11142
    %v11144 = vpop.f32.mrb[0].mxu0
    %11145 = vdwg.mxu0
    %v11147 = vsel %vm1103, %v10926, 0
    %11149 = vmatprep.subr.mxu0 0.0
    %11150 = vmatpush1.msra.mxu0 %v10576
    %11151 = vmatprep.subr.mxu0 0.0
    %11152 = vmatpush1.msra.mxu0 0.0
    %11153 = vmatprep.subr.mxu0 0.0
    %11154 = vmatpush1.msra.mxu0 0.0
    %11155 = vmatprep.subr.mxu0 0.0
    %11156 = vmatpush1.msra.mxu0 0.0
    %11157 = vmatprep.subr.mxu0 0.0
    %11158 = vmatpush1.msra.mxu0 0.0
    %11159 = vmatprep.subr.mxu0 0.0
    %11160 = vmatpush1.msra.mxu0 0.0
    %11161 = vmatprep.subr.mxu0 0.0
    %11162 = vmatpush1.msra.mxu0 0.0
    %11163 = vmatprep.subr.mxu0 0.0
    %11164 = vmatpush1.msra.mxu0 0.0
    %11165 = vmatprep.subr.mxu0 0.0
    %11166 = vmatpush1.msra.mxu0 0.0
    %11167 = vmatprep.subr.mxu0 0.0
    %11168 = vmatpush1.msra.mxu0 0.0
    %11169 = vmatprep.subr.mxu0 0.0
    %11170 = vmatpush1.msra.mxu0 0.0
    %11171 = vmatprep.subr.mxu0 0.0
    %11172 = vmatpush1.msra.mxu0 0.0
    %11173 = vmatprep.subr.mxu0 0.0
    %11174 = vmatpush1.msra.mxu0 0.0
    %11175 = vmatprep.subr.mxu0 0.0
    %11176 = vmatpush1.msra.mxu0 0.0
    %11177 = vmatprep.subr.mxu0 0.0
    %11178 = vmatpush1.msra.mxu0 0.0
    %11179 = vmatprep.subr.mxu0 0.0
    %11180 = vmatpush1.msra.mxu0 0.0
    %11181 = vmatprep.subr.mxu0 0.0
    %11182 = vmatpush1.msra.mxu0 0.0
    %11183 = vmatprep.subr.mxu0 0.0
    %11184 = vmatpush1.msra.mxu0 0.0
    %11185 = vmatprep.subr.mxu0 0.0
    %11186 = vmatpush1.msra.mxu0 0.0
    %11187 = vmatprep.subr.mxu0 0.0
    %11188 = vmatpush1.msra.mxu0 0.0
    %11189 = vmatprep.subr.mxu0 0.0
    %11190 = vmatpush1.msra.mxu0 0.0
    %11191 = vmatprep.subr.mxu0 0.0
    %11192 = vmatpush1.msra.mxu0 0.0
    %11193 = vmatprep.subr.mxu0 0.0
    %11194 = vmatpush1.msra.mxu0 0.0
    %11195 = vmatprep.subr.mxu0 0.0
    %11196 = vmatpush1.msra.mxu0 0.0
    %11197 = vmatprep.subr.mxu0 0.0
    %11198 = vmatpush1.msra.mxu0 0.0
    %11199 = vmatprep.subr.mxu0 0.0
    %11200 = vmatpush1.msra.mxu0 0.0
    %11201 = vmatprep.subr.mxu0 0.0
    %11202 = vmatpush1.msra.mxu0 0.0
    %11203 = vmatprep.subr.mxu0 0.0
    %11204 = vmatpush1.msra.mxu0 0.0
    %11205 = vmatprep.subr.mxu0 0.0
    %11206 = vmatpush1.msra.mxu0 0.0
    %11207 = vmatprep.subr.mxu0 0.0
    %11208 = vmatpush1.msra.mxu0 0.0
    %11209 = vmatprep.subr.mxu0 0.0
    %11210 = vmatpush1.msra.mxu0 0.0
    %11211 = vmatprep.subr.mxu0 0.0
    %11212 = vmatpush1.msra.mxu0 0.0
    %11213 = vmatprep.mubr.f32.mxu0 0.0
    %11214 = vmatmul.mubr.f32.gmra.mrb[0].mxu0 %v11147
    %v11215 = vpop.f32.mrb[0].mxu0
    %v11216 = vadd.f32 0.0, %v11215
    %v11217 = vpop.f32.mrb[0].mxu0
    %11218 = vdwg.mxu0
    %v11220 = vsel %vm1103, %v10997, 0
    %11222 = vmatprep.subr.mxu0 0.0
    %11223 = vmatpush1.xpose.msra.mxu0 %v9390
    %11224 = vmatprep.subr.mxu0 0.0
    %11225 = vmatpush1.xpose.msra.mxu0 %v9393
    %11226 = vmatprep.subr.mxu0 0.0
    %11227 = vmatpush1.xpose.msra.mxu0 %v9396
    %11228 = vmatprep.subr.mxu0 0.0
    %11229 = vmatpush1.xpose.msra.mxu0 %v9399
    %11230 = vmatprep.subr.mxu0 0.0
    %11231 = vmatpush1.xpose.msra.mxu0 0.0
    %11232 = vmatprep.subr.mxu0 0.0
    %11233 = vmatpush1.xpose.msra.mxu0 0.0
    %11234 = vmatprep.subr.mxu0 0.0
    %11235 = vmatpush1.xpose.msra.mxu0 0.0
    %11236 = vmatprep.subr.mxu0 0.0
    %11237 = vmatpush1.xpose.msra.mxu0 0.0
    %11238 = vmatprep.subr.mxu0 0.0
    %11239 = vmatpush1.xpose.msra.mxu0 0.0
    %11240 = vmatprep.subr.mxu0 0.0
    %11241 = vmatpush1.xpose.msra.mxu0 0.0
    %11242 = vmatprep.subr.mxu0 0.0
    %11243 = vmatpush1.xpose.msra.mxu0 0.0
    %11244 = vmatprep.subr.mxu0 0.0
    %11245 = vmatpush1.xpose.msra.mxu0 0.0
    %11246 = vmatprep.subr.mxu0 0.0
    %11247 = vmatpush1.xpose.msra.mxu0 0.0
    %11248 = vmatprep.subr.mxu0 0.0
    %11249 = vmatpush1.xpose.msra.mxu0 0.0
    %11250 = vmatprep.subr.mxu0 0.0
    %11251 = vmatpush1.xpose.msra.mxu0 0.0
    %11252 = vmatprep.subr.mxu0 0.0
    %11253 = vmatpush1.xpose.msra.mxu0 0.0
    %11254 = vmatprep.subr.mxu0 0.0
    %11255 = vmatpush1.xpose.msra.mxu0 0.0
    %11256 = vmatprep.subr.mxu0 0.0
    %11257 = vmatpush1.xpose.msra.mxu0 0.0
    %11258 = vmatprep.subr.mxu0 0.0
    %11259 = vmatpush1.xpose.msra.mxu0 0.0
    %11260 = vmatprep.subr.mxu0 0.0
    %11261 = vmatpush1.xpose.msra.mxu0 0.0
    %11262 = vmatprep.subr.mxu0 0.0
    %11263 = vmatpush1.xpose.msra.mxu0 0.0
    %11264 = vmatprep.subr.mxu0 0.0
    %11265 = vmatpush1.xpose.msra.mxu0 0.0
    %11266 = vmatprep.subr.mxu0 0.0
    %11267 = vmatpush1.xpose.msra.mxu0 0.0
    %11268 = vmatprep.subr.mxu0 0.0
    %11269 = vmatpush1.xpose.msra.mxu0 0.0
    %11270 = vmatprep.subr.mxu0 0.0
    %11271 = vmatpush1.xpose.msra.mxu0 0.0
    %11272 = vmatprep.subr.mxu0 0.0
    %11273 = vmatpush1.xpose.msra.mxu0 0.0
    %11274 = vmatprep.subr.mxu0 0.0
    %11275 = vmatpush1.xpose.msra.mxu0 0.0
    %11276 = vmatprep.subr.mxu0 0.0
    %11277 = vmatpush1.xpose.msra.mxu0 0.0
    %11278 = vmatprep.subr.mxu0 0.0
    %11279 = vmatpush1.xpose.msra.mxu0 0.0
    %11280 = vmatprep.subr.mxu0 0.0
    %11281 = vmatpush1.xpose.msra.mxu0 0.0
    %11282 = vmatprep.subr.mxu0 0.0
    %11283 = vmatpush1.xpose.msra.mxu0 0.0
    %11284 = vmatprep.subr.mxu0 0.0
    %11285 = vmatpush1.xpose.msra.mxu0 0.0
    %11286 = vmatprep.mubr.f32.mxu0 0.0
    %11287 = vmatmul.mubr.f32.gmra.mrb[0].mxu0 %v11220
    %v11288 = vpop.f32.mrb[0].mxu0
    %v11289 = vadd.f32 0.0, %v11288
    %v11290 = vpop.f32.mrb[0].mxu0
    %11291 = vdwg.mxu0
    %v11293 = vsel %vm1103, %v11070, 0
    %11295 = vmatprep.subr.mxu0 0.0
    %11296 = vmatpush1.xpose.msra.mxu0 %v9475
    %11297 = vmatprep.subr.mxu0 0.0
    %11298 = vmatpush1.xpose.msra.mxu0 %v9478
    %11299 = vmatprep.subr.mxu0 0.0
    %11300 = vmatpush1.xpose.msra.mxu0 %v9481
    %11301 = vmatprep.subr.mxu0 0.0
    %11302 = vmatpush1.xpose.msra.mxu0 %v9484
    %11303 = vmatprep.subr.mxu0 0.0
    %11304 = vmatpush1.xpose.msra.mxu0 0.0
    %11305 = vmatprep.subr.mxu0 0.0
    %11306 = vmatpush1.xpose.msra.mxu0 0.0
    %11307 = vmatprep.subr.mxu0 0.0
    %11308 = vmatpush1.xpose.msra.mxu0 0.0
    %11309 = vmatprep.subr.mxu0 0.0
    %11310 = vmatpush1.xpose.msra.mxu0 0.0
    %11311 = vmatprep.subr.mxu0 0.0
    %11312 = vmatpush1.xpose.msra.mxu0 0.0
    %11313 = vmatprep.subr.mxu0 0.0
    %11314 = vmatpush1.xpose.msra.mxu0 0.0
    %11315 = vmatprep.subr.mxu0 0.0
    %11316 = vmatpush1.xpose.msra.mxu0 0.0
    %11317 = vmatprep.subr.mxu0 0.0
    %11318 = vmatpush1.xpose.msra.mxu0 0.0
    %11319 = vmatprep.subr.mxu0 0.0
    %11320 = vmatpush1.xpose.msra.mxu0 0.0
    %11321 = vmatprep.subr.mxu0 0.0
    %11322 = vmatpush1.xpose.msra.mxu0 0.0
    %11323 = vmatprep.subr.mxu0 0.0
    %11324 = vmatpush1.xpose.msra.mxu0 0.0
    %11325 = vmatprep.subr.mxu0 0.0
    %11326 = vmatpush1.xpose.msra.mxu0 0.0
    %11327 = vmatprep.subr.mxu0 0.0
    %11328 = vmatpush1.xpose.msra.mxu0 0.0
    %11329 = vmatprep.subr.mxu0 0.0
    %11330 = vmatpush1.xpose.msra.mxu0 0.0
    %11331 = vmatprep.subr.mxu0 0.0
    %11332 = vmatpush1.xpose.msra.mxu0 0.0
    %11333 = vmatprep.subr.mxu0 0.0
    %11334 = vmatpush1.xpose.msra.mxu0 0.0
    %11335 = vmatprep.subr.mxu0 0.0
    %11336 = vmatpush1.xpose.msra.mxu0 0.0
    %11337 = vmatprep.subr.mxu0 0.0
    %11338 = vmatpush1.xpose.msra.mxu0 0.0
    %11339 = vmatprep.subr.mxu0 0.0
    %11340 = vmatpush1.xpose.msra.mxu0 0.0
    %11341 = vmatprep.subr.mxu0 0.0
    %11342 = vmatpush1.xpose.msra.mxu0 0.0
    %11343 = vmatprep.subr.mxu0 0.0
    %11344 = vmatpush1.xpose.msra.mxu0 0.0
    %11345 = vmatprep.subr.mxu0 0.0
    %11346 = vmatpush1.xpose.msra.mxu0 0.0
    %11347 = vmatprep.subr.mxu0 0.0
    %11348 = vmatpush1.xpose.msra.mxu0 0.0
    %11349 = vmatprep.subr.mxu0 0.0
    %11350 = vmatpush1.xpose.msra.mxu0 0.0
    %11351 = vmatprep.subr.mxu0 0.0
    %11352 = vmatpush1.xpose.msra.mxu0 0.0
    %11353 = vmatprep.subr.mxu0 0.0
    %11354 = vmatpush1.xpose.msra.mxu0 0.0
    %11355 = vmatprep.subr.mxu0 0.0
    %11356 = vmatpush1.xpose.msra.mxu0 0.0
    %11357 = vmatprep.subr.mxu0 0.0
    %11358 = vmatpush1.xpose.msra.mxu0 0.0
    %11359 = vmatprep.mubr.f32.mxu0 0.0
    %11360 = vmatmul.mubr.f32.gmra.mrb[0].mxu0 %v11293
    %v11361 = vpop.f32.mrb[0].mxu0
    %v11362 = vadd.f32 0.0, %v11361
    %v11363 = vpop.f32.mrb[0].mxu0
    %11364 = vdwg.mxu0
    %v11366 = vsel %vm1103, %v11143, 0
    %11368 = vmatprep.subr.mxu0 0.0
    %11369 = vmatpush1.xpose.msra.mxu0 %v9560
    %11370 = vmatprep.subr.mxu0 0.0
    %11371 = vmatpush1.xpose.msra.mxu0 %v9563
    %11372 = vmatprep.subr.mxu0 0.0
    %11373 = vmatpush1.xpose.msra.mxu0 %v9566
    %11374 = vmatprep.subr.mxu0 0.0
    %11375 = vmatpush1.xpose.msra.mxu0 %v9569
    %11376 = vmatprep.subr.mxu0 0.0
    %11377 = vmatpush1.xpose.msra.mxu0 0.0
    %11378 = vmatprep.subr.mxu0 0.0
    %11379 = vmatpush1.xpose.msra.mxu0 0.0
    %11380 = vmatprep.subr.mxu0 0.0
    %11381 = vmatpush1.xpose.msra.mxu0 0.0
    %11382 = vmatprep.subr.mxu0 0.0
    %11383 = vmatpush1.xpose.msra.mxu0 0.0
    %11384 = vmatprep.subr.mxu0 0.0
    %11385 = vmatpush1.xpose.msra.mxu0 0.0
    %11386 = vmatprep.subr.mxu0 0.0
    %11387 = vmatpush1.xpose.msra.mxu0 0.0
    %11388 = vmatprep.subr.mxu0 0.0
    %11389 = vmatpush1.xpose.msra.mxu0 0.0
    %11390 = vmatprep.subr.mxu0 0.0
    %11391 = vmatpush1.xpose.msra.mxu0 0.0
    %11392 = vmatprep.subr.mxu0 0.0
    %11393 = vmatpush1.xpose.msra.mxu0 0.0
    %11394 = vmatprep.subr.mxu0 0.0
    %11395 = vmatpush1.xpose.msra.mxu0 0.0
    %11396 = vmatprep.subr.mxu0 0.0
    %11397 = vmatpush1.xpose.msra.mxu0 0.0
    %11398 = vmatprep.subr.mxu0 0.0
    %11399 = vmatpush1.xpose.msra.mxu0 0.0
    %11400 = vmatprep.subr.mxu0 0.0
    %11401 = vmatpush1.xpose.msra.mxu0 0.0
    %11402 = vmatprep.subr.mxu0 0.0
    %11403 = vmatpush1.xpose.msra.mxu0 0.0
    %11404 = vmatprep.subr.mxu0 0.0
    %11405 = vmatpush1.xpose.msra.mxu0 0.0
    %11406 = vmatprep.subr.mxu0 0.0
    %11407 = vmatpush1.xpose.msra.mxu0 0.0
    %11408 = vmatprep.subr.mxu0 0.0
    %11409 = vmatpush1.xpose.msra.mxu0 0.0
    %11410 = vmatprep.subr.mxu0 0.0
    %11411 = vmatpush1.xpose.msra.mxu0 0.0
    %11412 = vmatprep.subr.mxu0 0.0
    %11413 = vmatpush1.xpose.msra.mxu0 0.0
    %11414 = vmatprep.subr.mxu0 0.0
    %11415 = vmatpush1.xpose.msra.mxu0 0.0
    %11416 = vmatprep.subr.mxu0 0.0
    %11417 = vmatpush1.xpose.msra.mxu0 0.0
    %11418 = vmatprep.subr.mxu0 0.0
    %11419 = vmatpush1.xpose.msra.mxu0 0.0
    %11420 = vmatprep.subr.mxu0 0.0
    %11421 = vmatpush1.xpose.msra.mxu0 0.0
    %11422 = vmatprep.subr.mxu0 0.0
    %11423 = vmatpush1.xpose.msra.mxu0 0.0
    %11424 = vmatprep.subr.mxu0 0.0
    %11425 = vmatpush1.xpose.msra.mxu0 0.0
    %11426 = vmatprep.subr.mxu0 0.0
    %11427 = vmatpush1.xpose.msra.mxu0 0.0
    %11428 = vmatprep.subr.mxu0 0.0
    %11429 = vmatpush1.xpose.msra.mxu0 0.0
    %11430 = vmatprep.subr.mxu0 0.0
    %11431 = vmatpush1.xpose.msra.mxu0 0.0
    %11432 = vmatprep.mubr.f32.mxu0 0.0
    %11433 = vmatmul.mubr.f32.gmra.mrb[0].mxu0 %v11366
    %v11434 = vpop.f32.mrb[0].mxu0
    %v11435 = vadd.f32 0.0, %v11434
    %v11436 = vpop.f32.mrb[0].mxu0
    %11437 = vdwg.mxu0
    %v11439 = vsel %vm1103, %v11216, 0
    %11441 = vmatprep.subr.mxu0 0.0
    %11442 = vmatpush1.xpose.msra.mxu0 %v9645
    %11443 = vmatprep.subr.mxu0 0.0
    %11444 = vmatpush1.xpose.msra.mxu0 %v9648
    %11445 = vmatprep.subr.mxu0 0.0
    %11446 = vmatpush1.xpose.msra.mxu0 %v9651
    %11447 = vmatprep.subr.mxu0 0.0
    %11448 = vmatpush1.xpose.msra.mxu0 %v9654
    %11449 = vmatprep.subr.mxu0 0.0
    %11450 = vmatpush1.xpose.msra.mxu0 0.0
    %11451 = vmatprep.subr.mxu0 0.0
    %11452 = vmatpush1.xpose.msra.mxu0 0.0
    %11453 = vmatprep.subr.mxu0 0.0
    %11454 = vmatpush1.xpose.msra.mxu0 0.0
    %11455 = vmatprep.subr.mxu0 0.0
    %11456 = vmatpush1.xpose.msra.mxu0 0.0
    %11457 = vmatprep.subr.mxu0 0.0
    %11458 = vmatpush1.xpose.msra.mxu0 0.0
    %11459 = vmatprep.subr.mxu0 0.0
    %11460 = vmatpush1.xpose.msra.mxu0 0.0
    %11461 = vmatprep.subr.mxu0 0.0
    %11462 = vmatpush1.xpose.msra.mxu0 0.0
    %11463 = vmatprep.subr.mxu0 0.0
    %11464 = vmatpush1.xpose.msra.mxu0 0.0
    %11465 = vmatprep.subr.mxu0 0.0
    %11466 = vmatpush1.xpose.msra.mxu0 0.0
    %11467 = vmatprep.subr.mxu0 0.0
    %11468 = vmatpush1.xpose.msra.mxu0 0.0
    %11469 = vmatprep.subr.mxu0 0.0
    %11470 = vmatpush1.xpose.msra.mxu0 0.0
    %11471 = vmatprep.subr.mxu0 0.0
    %11472 = vmatpush1.xpose.msra.mxu0 0.0
    %11473 = vmatprep.subr.mxu0 0.0
    %11474 = vmatpush1.xpose.msra.mxu0 0.0
    %11475 = vmatprep.subr.mxu0 0.0
    %11476 = vmatpush1.xpose.msra.mxu0 0.0
    %11477 = vmatprep.subr.mxu0 0.0
    %11478 = vmatpush1.xpose.msra.mxu0 0.0
    %11479 = vmatprep.subr.mxu0 0.0
    %11480 = vmatpush1.xpose.msra.mxu0 0.0
    %11481 = vmatprep.subr.mxu0 0.0
    %11482 = vmatpush1.xpose.msra.mxu0 0.0
    %11483 = vmatprep.subr.mxu0 0.0
    %11484 = vmatpush1.xpose.msra.mxu0 0.0
    %11485 = vmatprep.subr.mxu0 0.0
    %11486 = vmatpush1.xpose.msra.mxu0 0.0
    %11487 = vmatprep.subr.mxu0 0.0
    %11488 = vmatpush1.xpose.msra.mxu0 0.0
    %11489 = vmatprep.subr.mxu0 0.0
    %11490 = vmatpush1.xpose.msra.mxu0 0.0
    %11491 = vmatprep.subr.mxu0 0.0
    %11492 = vmatpush1.xpose.msra.mxu0 0.0
    %11493 = vmatprep.subr.mxu0 0.0
    %11494 = vmatpush1.xpose.msra.mxu0 0.0
    %11495 = vmatprep.subr.mxu0 0.0
    %11496 = vmatpush1.xpose.msra.mxu0 0.0
    %11497 = vmatprep.subr.mxu0 0.0
    %11498 = vmatpush1.xpose.msra.mxu0 0.0
    %11499 = vmatprep.subr.mxu0 0.0
    %11500 = vmatpush1.xpose.msra.mxu0 0.0
    %11501 = vmatprep.subr.mxu0 0.0
    %11502 = vmatpush1.xpose.msra.mxu0 0.0
    %11503 = vmatprep.subr.mxu0 0.0
    %11504 = vmatpush1.xpose.msra.mxu0 0.0
    %11505 = vmatprep.mubr.f32.mxu0 0.0
    %11506 = vmatmul.mubr.f32.gmra.mrb[0].mxu0 %v11439
    %v11507 = vpop.f32.mrb[0].mxu0
    %v11508 = vadd.f32 0.0, %v11507
    %v11509 = vpop.f32.mrb[0].mxu0
    %11510 = vdwg.mxu0
    %v11511 = vsel %vm166, %v11289, 0.0
    %v11512 = vsel %vm166, %v11362, 0.0
    %v11513 = vadd.f32 %v11511, %v11512
    %v11514 = vsel %vm166, %v11435, 0.0
    %v11515 = vadd.f32 %v11513, %v11514
    %v11516 = vsel %vm166, %v11508, 0.0
    %v11517 = vadd.f32 %v11515, %v11516
    %v11518 = vadd.f32 %v7807, %v9732
    %v11519 = vadd.f32 %v7808, %v11517
    %v11520 = vmul.f32 %v11518, %v11518
    %v11521 = vmul.f32 %v11519, %v11519
    %v11522 = vsel %vm166, %v11520, 0.0
    %11523 = vadd.xlane.f32.xlu0 %v11522
    %v11524 = vpop.xlane.xlu0 %11523
    %v11525 = vsel %vm166, %v11521, 0.0
    %11526 = vadd.xlane.f32.xlu0 %v11525
    %v11527 = vpop.xlane.xlu0 %11526
    %v11528 = vmul.f32 %v11524, %v173
    %v11529 = vmul.f32 %v11527, %v173
    %v11530 = vadd.f32 %v11528, 1e-06
    %v11531 = vadd.f32 %v11529, 1e-06
    %v11532 = vrsqrt.pop %v11530
    %v11533 = vrsqrt.pop %v11531
    %v11534 = vmul.f32 %v11518, %v11532
    %v11535 = vmul.f32 %v11519, %v11533
    %v11536 = vld [vmem:[%s2 + $0x5] sm:$0x1]
    %v11537 = vlaneseq
    %v11538 = vshrl.u32 %v11537, 7
    %v11539 = vsub.s32 0, %v11538
    %v11540 = vrot.slane %v11536, %v11539
    %v11541 = vmul.f32 %v11534, %v11540
    %v11542 = vmul.f32 %v11535, %v11540
    %s11543 = scalar_lea.vmem %s4, 32
    %v11544 = vld [vmem:[%s11543] sm:$0xff]
    %v11545 = vld [vmem:[%s11543 + $0x8] sm:$0xff]
    %v11546 = vld [vmem:[%s11543 + $0x10] sm:$0xff]
    %v11547 = vld [vmem:[%s11543 + $0x18] sm:$0xff]
    %v11549 = vsel %vm166, %v11541, 0
    %v11552 = vsel %vm166, %v11542, 0
    %11554 = vmatprep.subr.mxu0 0.0
    %11555 = vmatpush1.msra.mxu0 %v11544
    %11556 = vmatprep.subr.mxu0 0.0
    %11557 = vmatpush1.msra.mxu0 %v11545
    %11558 = vmatprep.subr.mxu0 0.0
    %11559 = vmatpush1.msra.mxu0 %v11546
    %11560 = vmatprep.subr.mxu0 0.0
    %11561 = vmatpush1.msra.mxu0 %v11547
    %11562 = vmatprep.subr.mxu0 0.0
    %11563 = vmatpush1.msra.mxu0 0.0
    %11564 = vmatprep.subr.mxu0 0.0
    %11565 = vmatpush1.msra.mxu0 0.0
    %11566 = vmatprep.subr.mxu0 0.0
    %11567 = vmatpush1.msra.mxu0 0.0
    %11568 = vmatprep.subr.mxu0 0.0
    %11569 = vmatpush1.msra.mxu0 0.0
    %11570 = vmatprep.subr.mxu0 0.0
    %11571 = vmatpush1.msra.mxu0 0.0
    %11572 = vmatprep.subr.mxu0 0.0
    %11573 = vmatpush1.msra.mxu0 0.0
    %11574 = vmatprep.subr.mxu0 0.0
    %11575 = vmatpush1.msra.mxu0 0.0
    %11576 = vmatprep.subr.mxu0 0.0
    %11577 = vmatpush1.msra.mxu0 0.0
    %11578 = vmatprep.subr.mxu0 0.0
    %11579 = vmatpush1.msra.mxu0 0.0
    %11580 = vmatprep.subr.mxu0 0.0
    %11581 = vmatpush1.msra.mxu0 0.0
    %11582 = vmatprep.subr.mxu0 0.0
    %11583 = vmatpush1.msra.mxu0 0.0
    %11584 = vmatprep.subr.mxu0 0.0
    %11585 = vmatpush1.msra.mxu0 0.0
    %11586 = vmatprep.subr.mxu0 0.0
    %11587 = vmatpush1.msra.mxu0 0.0
    %11588 = vmatprep.subr.mxu0 0.0
    %11589 = vmatpush1.msra.mxu0 0.0
    %11590 = vmatprep.subr.mxu0 0.0
    %11591 = vmatpush1.msra.mxu0 0.0
    %11592 = vmatprep.subr.mxu0 0.0
    %11593 = vmatpush1.msra.mxu0 0.0
    %11594 = vmatprep.subr.mxu0 0.0
    %11595 = vmatpush1.msra.mxu0 0.0
    %11596 = vmatprep.subr.mxu0 0.0
    %11597 = vmatpush1.msra.mxu0 0.0
    %11598 = vmatprep.subr.mxu0 0.0
    %11599 = vmatpush1.msra.mxu0 0.0
    %11600 = vmatprep.subr.mxu0 0.0
    %11601 = vmatpush1.msra.mxu0 0.0
    %11602 = vmatprep.subr.mxu0 0.0
    %11603 = vmatpush1.msra.mxu0 0.0
    %11604 = vmatprep.subr.mxu0 0.0
    %11605 = vmatpush1.msra.mxu0 0.0
    %11606 = vmatprep.subr.mxu0 0.0
    %11607 = vmatpush1.msra.mxu0 0.0
    %11608 = vmatprep.subr.mxu0 0.0
    %11609 = vmatpush1.msra.mxu0 0.0
    %11610 = vmatprep.subr.mxu0 0.0
    %11611 = vmatpush1.msra.mxu0 0.0
    %11612 = vmatprep.subr.mxu0 0.0
    %11613 = vmatpush1.msra.mxu0 0.0
    %11614 = vmatprep.subr.mxu0 0.0
    %11615 = vmatpush1.msra.mxu0 0.0
    %11616 = vmatprep.subr.mxu0 0.0
    %11617 = vmatpush1.msra.mxu0 0.0
    %11618 = vmatprep.mubr.f32.mxu0 0.0
    %11619 = vmatmul.mubr.f32.gmra.mrb[0].mxu0 %v11549
    %v11620 = vpop.f32.mrb[0].mxu0
    %v11621 = vadd.f32 0.0, %v11620
    %v11622 = vpop.f32.mrb[0].mxu0
    %11623 = vmatprep.mubr.f32.mxu0 0.0
    %11624 = vmatmul.mubr.f32.gmra.mrb[0].mxu0 %v11552
    %v11625 = vpop.f32.mrb[0].mxu0
    %v11626 = vadd.f32 0.0, %v11625
    %v11627 = vpop.f32.mrb[0].mxu0
    %11628 = vdwg.mxu0
    %v11629 = vmax.f32 %v11621, 0.0
    %v11630 = vmax.f32 %v11626, 0.0
    %s11631 = scalar_lea.vmem %s5, 64
    %v11632 = vld [vmem:[%s11631] sm:$0xff]
    %v11633 = vld [vmem:[%s11631 + $0x8] sm:$0xff]
    %v11634 = vld [vmem:[%s11631 + $0x10] sm:$0xff]
    %v11635 = vld [vmem:[%s11631 + $0x18] sm:$0xff]
    %v11636 = vld [vmem:[%s11631 + $0x20] sm:$0xff]
    %v11637 = vld [vmem:[%s11631 + $0x28] sm:$0xff]
    %v11638 = vld [vmem:[%s11631 + $0x30] sm:$0xff]
    %v11639 = vld [vmem:[%s11631 + $0x38] sm:$0xff]
    %v11641 = vsel %vm3993, %v11629, 0
    %v11644 = vsel %vm3993, %v11630, 0
    %11646 = vmatprep.subr.mxu0 0.0
    %11647 = vmatpush1.msra.mxu0 %v11632
    %11648 = vmatprep.subr.mxu0 0.0
    %11649 = vmatpush1.msra.mxu0 %v11633
    %11650 = vmatprep.subr.mxu0 0.0
    %11651 = vmatpush1.msra.mxu0 %v11634
    %11652 = vmatprep.subr.mxu0 0.0
    %11653 = vmatpush1.msra.mxu0 %v11635
    %11654 = vmatprep.subr.mxu0 0.0
    %11655 = vmatpush1.msra.mxu0 %v11636
    %11656 = vmatprep.subr.mxu0 0.0
    %11657 = vmatpush1.msra.mxu0 %v11637
    %11658 = vmatprep.subr.mxu0 0.0
    %11659 = vmatpush1.msra.mxu0 %v11638
    %11660 = vmatprep.subr.mxu0 0.0
    %11661 = vmatpush1.msra.mxu0 %v11639
    %11662 = vmatprep.subr.mxu0 0.0
    %11663 = vmatpush1.msra.mxu0 0.0
    %11664 = vmatprep.subr.mxu0 0.0
    %11665 = vmatpush1.msra.mxu0 0.0
    %11666 = vmatprep.subr.mxu0 0.0
    %11667 = vmatpush1.msra.mxu0 0.0
    %11668 = vmatprep.subr.mxu0 0.0
    %11669 = vmatpush1.msra.mxu0 0.0
    %11670 = vmatprep.subr.mxu0 0.0
    %11671 = vmatpush1.msra.mxu0 0.0
    %11672 = vmatprep.subr.mxu0 0.0
    %11673 = vmatpush1.msra.mxu0 0.0
    %11674 = vmatprep.subr.mxu0 0.0
    %11675 = vmatpush1.msra.mxu0 0.0
    %11676 = vmatprep.subr.mxu0 0.0
    %11677 = vmatpush1.msra.mxu0 0.0
    %11678 = vmatprep.subr.mxu0 0.0
    %11679 = vmatpush1.msra.mxu0 0.0
    %11680 = vmatprep.subr.mxu0 0.0
    %11681 = vmatpush1.msra.mxu0 0.0
    %11682 = vmatprep.subr.mxu0 0.0
    %11683 = vmatpush1.msra.mxu0 0.0
    %11684 = vmatprep.subr.mxu0 0.0
    %11685 = vmatpush1.msra.mxu0 0.0
    %11686 = vmatprep.subr.mxu0 0.0
    %11687 = vmatpush1.msra.mxu0 0.0
    %11688 = vmatprep.subr.mxu0 0.0
    %11689 = vmatpush1.msra.mxu0 0.0
    %11690 = vmatprep.subr.mxu0 0.0
    %11691 = vmatpush1.msra.mxu0 0.0
    %11692 = vmatprep.subr.mxu0 0.0
    %11693 = vmatpush1.msra.mxu0 0.0
    %11694 = vmatprep.subr.mxu0 0.0
    %11695 = vmatpush1.msra.mxu0 0.0
    %11696 = vmatprep.subr.mxu0 0.0
    %11697 = vmatpush1.msra.mxu0 0.0
    %11698 = vmatprep.subr.mxu0 0.0
    %11699 = vmatpush1.msra.mxu0 0.0
    %11700 = vmatprep.subr.mxu0 0.0
    %11701 = vmatpush1.msra.mxu0 0.0
    %11702 = vmatprep.subr.mxu0 0.0
    %11703 = vmatpush1.msra.mxu0 0.0
    %11704 = vmatprep.subr.mxu0 0.0
    %11705 = vmatpush1.msra.mxu0 0.0
    %11706 = vmatprep.subr.mxu0 0.0
    %11707 = vmatpush1.msra.mxu0 0.0
    %11708 = vmatprep.subr.mxu0 0.0
    %11709 = vmatpush1.msra.mxu0 0.0
    %11710 = vmatprep.mubr.f32.mxu0 0.0
    %11711 = vmatmul.mubr.f32.gmra.mrb[0].mxu0 %v11641
    %v11712 = vpop.f32.mrb[0].mxu0
    %v11713 = vadd.f32 0.0, %v11712
    %v11714 = vpop.f32.mrb[0].mxu0
    %11715 = vmatprep.mubr.f32.mxu0 0.0
    %11716 = vmatmul.mubr.f32.gmra.mrb[0].mxu0 %v11644
    %v11717 = vpop.f32.mrb[0].mxu0
    %v11718 = vadd.f32 0.0, %v11717
    %v11719 = vpop.f32.mrb[0].mxu0
    %11720 = vdwg.mxu0
    %v11721 = vadd.f32 %v11518, %v11713
    %v11722 = vadd.f32 %v11519, %v11718
    %v11723 = vmul.f32 %v11721, %v11721
    %v11724 = vmul.f32 %v11722, %v11722
    %v11725 = vsel %vm166, %v11723, 0.0
    %11726 = vadd.xlane.f32.xlu0 %v11725
    %v11727 = vpop.xlane.xlu0 %11726
    %v11728 = vsel %vm166, %v11724, 0.0
    %11729 = vadd.xlane.f32.xlu0 %v11728
    %v11730 = vpop.xlane.xlu0 %11729
    %v11731 = vmul.f32 %v11727, %v173
    %v11732 = vmul.f32 %v11730, %v173
    %v11733 = vadd.f32 %v11731, 1e-06
    %v11734 = vadd.f32 %v11732, 1e-06
    %v11735 = vrsqrt.pop %v11733
    %v11736 = vrsqrt.pop %v11734
    %v11737 = vmul.f32 %v11721, %v11735
    %v11738 = vmul.f32 %v11722, %v11736
    %v11739 = vld [vmem:[%s2 + $0x6] sm:$0x1]
    %v11740 = vlaneseq
    %v11741 = vshrl.u32 %v11740, 7
    %v11742 = vsub.s32 0, %v11741
    %v11743 = vrot.slane %v11739, %v11742
    %v11744 = vmul.f32 %v11737, %v11743
    %v11745 = vmul.f32 %v11738, %v11743
    %v11746 = vmul.f32 %v11744, 0.17677669
    %v11747 = vmul.f32 %v11745, 0.17677669
    %v11749 = vsel %vm166, %v11746, 0
    %v11752 = vsel %vm166, %v11747, 0
    %v11755 = vsel %vm166, %v33, 0
    %v11758 = vsel %vm166, %v34, 0
    %v11761 = vsel %vm166, %v35, 0
    %v11764 = vsel %vm166, %v36, 0
    %v11767 = vsel %vm166, %v37, 0
    %v11770 = vsel %vm166, %v38, 0
    %v11773 = vsel %vm166, %v39, 0
    %v11776 = vsel %vm166, %v40, 0
    %v11779 = vsel %vm166, %v41, 0
    %v11782 = vsel %vm166, %v42, 0
    %v11785 = vsel %vm166, %v43, 0
    %v11788 = vsel %vm166, %v44, 0
    %v11791 = vsel %vm166, %v45, 0
    %v11794 = vsel %vm166, %v46, 0
    %v11797 = vsel %vm166, %v47, 0
    %v11800 = vsel %vm166, %v48, 0
    %11802 = vmatprep.subr.mxu0 0.0
    %11803 = vmatpush1.xpose.msra.mxu0 %v11755
    %11804 = vmatprep.subr.mxu0 0.0
    %11805 = vmatpush1.xpose.msra.mxu0 %v11758
    %11806 = vmatprep.subr.mxu0 0.0
    %11807 = vmatpush1.xpose.msra.mxu0 %v11761
    %11808 = vmatprep.subr.mxu0 0.0
    %11809 = vmatpush1.xpose.msra.mxu0 %v11764
    %11810 = vmatprep.subr.mxu0 0.0
    %11811 = vmatpush1.xpose.msra.mxu0 %v11767
    %11812 = vmatprep.subr.mxu0 0.0
    %11813 = vmatpush1.xpose.msra.mxu0 %v11770
    %11814 = vmatprep.subr.mxu0 0.0
    %11815 = vmatpush1.xpose.msra.mxu0 %v11773
    %11816 = vmatprep.subr.mxu0 0.0
    %11817 = vmatpush1.xpose.msra.mxu0 %v11776
    %11818 = vmatprep.subr.mxu0 0.0
    %11819 = vmatpush1.xpose.msra.mxu0 %v11779
    %11820 = vmatprep.subr.mxu0 0.0
    %11821 = vmatpush1.xpose.msra.mxu0 %v11782
    %11822 = vmatprep.subr.mxu0 0.0
    %11823 = vmatpush1.xpose.msra.mxu0 %v11785
    %11824 = vmatprep.subr.mxu0 0.0
    %11825 = vmatpush1.xpose.msra.mxu0 %v11788
    %11826 = vmatprep.subr.mxu0 0.0
    %11827 = vmatpush1.xpose.msra.mxu0 %v11791
    %11828 = vmatprep.subr.mxu0 0.0
    %11829 = vmatpush1.xpose.msra.mxu0 %v11794
    %11830 = vmatprep.subr.mxu0 0.0
    %11831 = vmatpush1.xpose.msra.mxu0 %v11797
    %11832 = vmatprep.subr.mxu0 0.0
    %11833 = vmatpush1.xpose.msra.mxu0 %v11800
    %11834 = vmatprep.subr.mxu0 0.0
    %11835 = vmatpush1.xpose.msra.mxu0 0.0
    %11836 = vmatprep.subr.mxu0 0.0
    %11837 = vmatpush1.xpose.msra.mxu0 0.0
    %11838 = vmatprep.subr.mxu0 0.0
    %11839 = vmatpush1.xpose.msra.mxu0 0.0
    %11840 = vmatprep.subr.mxu0 0.0
    %11841 = vmatpush1.xpose.msra.mxu0 0.0
    %11842 = vmatprep.subr.mxu0 0.0
    %11843 = vmatpush1.xpose.msra.mxu0 0.0
    %11844 = vmatprep.subr.mxu0 0.0
    %11845 = vmatpush1.xpose.msra.mxu0 0.0
    %11846 = vmatprep.subr.mxu0 0.0
    %11847 = vmatpush1.xpose.msra.mxu0 0.0
    %11848 = vmatprep.subr.mxu0 0.0
    %11849 = vmatpush1.xpose.msra.mxu0 0.0
    %11850 = vmatprep.subr.mxu0 0.0
    %11851 = vmatpush1.xpose.msra.mxu0 0.0
    %11852 = vmatprep.subr.mxu0 0.0
    %11853 = vmatpush1.xpose.msra.mxu0 0.0
    %11854 = vmatprep.subr.mxu0 0.0
    %11855 = vmatpush1.xpose.msra.mxu0 0.0
    %11856 = vmatprep.subr.mxu0 0.0
    %11857 = vmatpush1.xpose.msra.mxu0 0.0
    %11858 = vmatprep.subr.mxu0 0.0
    %11859 = vmatpush1.xpose.msra.mxu0 0.0
    %11860 = vmatprep.subr.mxu0 0.0
    %11861 = vmatpush1.xpose.msra.mxu0 0.0
    %11862 = vmatprep.subr.mxu0 0.0
    %11863 = vmatpush1.xpose.msra.mxu0 0.0
    %11864 = vmatprep.subr.mxu0 0.0
    %11865 = vmatpush1.xpose.msra.mxu0 0.0
    %11866 = vmatprep.mubr.f32.mxu0 0.0
    %11867 = vmatmul.mubr.f32.gmra.mrb[0].mxu0 %v11749
    %v11868 = vpop.f32.mrb[0].mxu0
    %v11869 = vadd.f32 0.0, %v11868
    %v11870 = vpop.f32.mrb[0].mxu0
    %11871 = vmatprep.mubr.f32.mxu0 0.0
    %11872 = vmatmul.mubr.f32.gmra.mrb[0].mxu0 %v11752
    %v11873 = vpop.f32.mrb[0].mxu0
    %v11874 = vadd.f32 0.0, %v11873
    %v11875 = vpop.f32.mrb[0].mxu0
    %11876 = vdwg.mxu0
    %11877 = vst [vmem:[#allocation2] sm:$0xff] %v11869
    %11878 = vst [vmem:[#allocation2 + $0x8] sm:$0xff] %v11874
    %v11879 = vld [vmem:[%s0 + $0x20] sm:$0xff]
    %v11880 = vld [vmem:[%s0 + $0x28] sm:$0xff]
    %11881 = vmax.xlane.f32.xlu0 %v11869
    %v11882 = vpop.xlane.xlu0 %11881
    %11883 = vmax.xlane.f32.xlu0 %v11874
    %v11884 = vpop.xlane.xlu0 %11883
    %v11885 = vsub.f32 %v11869, %v11882
    %v11886 = vsub.f32 %v11874, %v11884
    %v11887 = vmul.f32 %v11885, 1.442695
    %v11888 = vpow.pop %v11887
    %v11889 = vmul.f32 %v11886, 1.442695
    %v11890 = vpow.pop %v11889
    %11891 = vadd.xlane.f32.xlu0 %v11888
    %v11892 = vpop.xlane.xlu0 %11891
    %11893 = vadd.xlane.f32.xlu0 %v11890
    %v11894 = vpop.xlane.xlu0 %11893
    %v11895 = vlog2.pop %v11892
    %v11896 = vmul.f32 %v11895, 0.6931472
    %v11897 = vlog2.pop %v11894
    %v11898 = vmul.f32 %v11897, 0.6931472
    %v11899 = vadd.f32 %v11896, %v11882
    %v11900 = vadd.f32 %v11898, %v11884
    %11901 = vset.pattern.permute.xlu0 0
    %11902 = vperm.xlu0 %11901, %v11879
    %v11903 = vpop.permute.xlu0 %11902
    %11904 = vset.pattern.permute.xlu0 0
    %11905 = vperm.xlu0 %11904, %v11880
    %v11906 = vpop.permute.xlu0 %11905
    %vm11907 = vcmp.eq.s32.totalorder %v54, %v11903
    %vm11908 = vcmp.eq.s32.totalorder %v54, %v11906
    %v11909 = vsel %vm11907, %v11869, 0.0
    %v11910 = vsel %vm11908, %v11874, 0.0
    %11911 = vadd.xlane.f32.xlu0 %v11909
    %v11912 = vpop.xlane.xlu0 %11911
    %11913 = vadd.xlane.f32.xlu0 %v11910
    %v11914 = vpop.xlane.xlu0 %11913
    %vm11915 = vcmp.ne.s32.totalorder %v11879, 4294967196
    %vm11916 = vcmp.ne.s32.totalorder %v11880, 4294967196
    %v11917 = vsel %vm11915, 1, 0
    %v11918 = vsel %vm11916, 1, 0
    %v11919 = vcvt.s32.f32 %v11917
    %v11920 = vcvt.s32.f32 %v11918
    %v11921 = vsub.f32 %v11899, %v11912
    %v11922 = vsub.f32 %v11900, %v11914
    %v11923 = vmul.f32 %v11921, %v11919
    %v11924 = vmul.f32 %v11922, %v11920
    %vm11925 = vcmask 7168
    %v11926 = vsel %vm11925, %v11923, 0.0
    %v11927 = vsel %vm11925, %v11924, 0.0
    %v11928 = vadd.f32 %v11926, %v11927
    %v11929 = vrot.slane %v11928, 4
    %v11930 = vadd.f32 %v11928, %v11929
    %v11931 = vrot.slane %v11930, 2
    %v11932 = vadd.f32 %v11930, %v11931
    %v11933 = vrot.slane %v11932, 1
    %v11934 = vadd.f32 %v11932, %v11933
    %v11935 = vsel %vm11925, %v11919, 0.0
    %v11936 = vsel %vm11925, %v11920, 0.0
    %v11937 = vadd.f32 %v11935, %v11936
    %v11938 = vrot.slane %v11937, 4
    %v11939 = vadd.f32 %v11937, %v11938
    %v11940 = vrot.slane %v11939, 2
    %v11941 = vadd.f32 %v11939, %v11940
    %v11942 = vrot.slane %v11941, 1
    %v11943 = vadd.f32 %v11941, %v11942
    %v11944 = vmax.f32 %v11943, 1.0
    %v11945 = vrcp.pop %v11944
    %v11946 = vmul.f32 %v11934, %v11945
    %vm11947 = vcmask 0
    %11948 = vst.msk [vmem:[#allocation4] sm:$0x1] %vm11947, %v11946
    // Predicated region
    $region34: #{t5_forward.1} parent=1 // pred_check
      _
    $region35: #{t5_forward.1} parent=1 // pred_check_branch
      %11950 = sbr.rel (0) target = $region37
    $region36: #{t5_forward.1} parent=1 // pred_region
      %s11952 = ssub.s32 256, 256
      %11953 = vsyncadd [#allocation3], %s11952
      %s11954 = sshll.u32 [#allocation2], 4
      %s11955 = int_to_ptr.vmem [resolvable:$true] %s11954
      %11960 = dma.vmem_to_hbm [thread:$0]  %s11955, 256, %s8, [#allocation3], 128, 128, 8
    $region37: #{t5_forward.1} parent=1 // pred_fallthru
      _
    // Predicated region
    $region38: #{t5_forward.1} parent=1 // pred_check
      _
    $region39: #{t5_forward.1} parent=1 // pred_check_branch
      %11962 = sbr.rel (0) target = $region41
    $region40: #{t5_forward.1} parent=1 // pred_region
      %s11964 = ssub.s32 16, 16
      %11965 = vsyncadd [#allocation5], %s11964
      %s11967 = sshll.u32 [#allocation4], 4
      %s11968 = int_to_ptr.vmem [resolvable:$true] %s11967
      %11970 = dma.vmem_to_hbm [thread:$0]  %s11968, 16, %s9, [#allocation5]
    $region41: #{t5_forward.1} parent=1 // pred_fallthru
      _
    // Predicated region
    $region42: #{t5_forward.1} parent=1 // pred_check
      _
    $region43: #{t5_forward.1} parent=1 // pred_check_branch
      %11972 = sbr.rel (0) target = $region45
    $region44: #{t5_forward.1} parent=1 // pred_region
      %11973 = dma.done [#allocation3], 256
    $region45: #{t5_forward.1} parent=1 // pred_fallthru
      _
    // Predicated region
    $region46: #{t5_forward.1} parent=1 // pred_check
      _
    $region47: #{t5_forward.1} parent=1 // pred_check_branch
      %11975 = sbr.rel (0) target = $region49
    $region48: #{t5_forward.1} parent=1 // pred_region
      %11976 = dma.done [#allocation5], 16
    $region49: #{t5_forward.1} parent=1 // pred_fallthru
      _
    %11977 = vsyncpa [#allocation3], 1
    %11978 = vsyncpa [#allocation5], 1

</llo_original>
